<compile_context>
chip_gen: v7x
topology: tpu7x:2x2x1
jax: 0.10.0
libtpu: 0.0.40
codegen_flags: <defaults>
</compile_context>

<pallas_src>
import functools

import jax
import jax.numpy as jnp
from jax.experimental import pallas as pl
from jax.experimental.pallas import tpu as pltpu

KW = 4                    # kernel_size
PADW = 2                  # ceil((4 - 1) / 2)
NEG_SLOPE = 0.2           # LeakyReLU slope
BN_EPS = 1e-5             # nn.BatchNorm3d default eps

LANE = 128                # channel padding target (lane-dense outputs)
TM = 256                  # voxel-tile rows   (safe for 32 MiB scoped VMEM)
TK = 2048                 # reduction-tile (K) size


def round_up(x, m):
    return (x + m - 1) // m * m


def choose_k_tiling(k_raw, tk_max=TK):
    """Return (K_pad, tk) with tk | K_pad and tk a multiple of 128."""
    k_pad = round_up(k_raw, LANE)
    if k_pad <= tk_max:
        return k_pad, k_pad            # single K step
    return round_up(k_raw, tk_max), tk_max


# ---------------------------------------------------------------------------
# Pallas kernels
# ---------------------------------------------------------------------------
def _conv_bias_kernel(p_ref, w_ref, b_ref, o_ref, *rest,
                      n_k, tm, m_real, lrelu, want_stats):
    """Tiled im2col conv: acc += patches[tm,tk] @ weight[tk,Cp] (bf16 -> f32 MXU).

    Epilogue at the last K step adds bias, optionally applies LeakyReLU, writes
    the lane-dense output tile (cast to o_ref.dtype) and (if want_stats)
    per-tile channel sum / sum-of-squares masked to the m_real valid rows, for
    a later global BatchNorm finalize.
    """
    if want_stats:
        stats_ref, acc_ref = rest
    else:
        (acc_ref,) = rest

    # NOTE: program_id must be read OUTSIDE the pl.when bodies (the CPU/interpret
    # fallback does not substitute it inside cond sub-jaxprs).
    i = pl.program_id(0)
    k = pl.program_id(1)
    row_base = i * tm

    @pl.when(k == 0)
    def _init():
        acc_ref[...] = jnp.zeros_like(acc_ref)

    acc_ref[...] += jnp.dot(p_ref[...], w_ref[...],
                            preferred_element_type=jnp.float32)

    @pl.when(k == n_k - 1)
    def _epilogue():
        y = acc_ref[...] + b_ref[...]                    # f32 bias add
        if lrelu:
            y = jnp.where(y >= 0, y, NEG_SLOPE * y)
        o_ref[...] = y.astype(o_ref.dtype)
        if want_stats:
            row = row_base + jax.lax.broadcasted_iota(jnp.int32, (tm, 1), 0)
            yv = jnp.where(row < m_real, y, 0.0)         # mask padded rows
            s1 = jnp.sum(yv, axis=0, keepdims=True)      # (1, Cp)
            s2 = jnp.sum(yv * yv, axis=0, keepdims=True)  # (1, Cp)
            zpad = jnp.zeros((6, y.shape[1]), jnp.float32)
            stats_ref[0, :, :] = jnp.concatenate([s1, s2, zpad], axis=0)


def _bn_lrelu_kernel(x_ref, scale_ref, shift_ref, o_ref):
    """Tiled BatchNorm3d normalize (precomputed scale/shift) + LeakyReLU(0.2)."""
    y = x_ref[...].astype(jnp.float32) * scale_ref[...] + shift_ref[...]
    y = jnp.where(y >= 0, y, NEG_SLOPE * y)
    o_ref[...] = y.astype(o_ref.dtype)


# ---------------------------------------------------------------------------
# Pallas wrappers
# ---------------------------------------------------------------------------
def pallas_conv_matmul(patches, w2d, bias2d, *, tm, tk, m_real, lrelu,
                       want_stats, out_dtype):
    M_pad, K_pad = patches.shape
    Cp = w2d.shape[1]
    n_m, n_k = M_pad // tm, K_pad // tk

    kernel = functools.partial(_conv_bias_kernel, n_k=n_k, tm=tm, m_real=m_real,
                               lrelu=lrelu, want_stats=want_stats)

    y_shape = jax.ShapeDtypeStruct((M_pad, Cp), out_dtype)
    y_spec = pl.BlockSpec((tm, Cp), lambda i, k: (i, 0))
    if want_stats:
        out_shape = (y_shape, jax.ShapeDtypeStruct((n_m, 8, Cp), jnp.float32))
        out_specs = (y_spec, pl.BlockSpec((1, 8, Cp), lambda i, k: (i, 0, 0)))
    else:
        out_shape = y_shape
        out_specs = y_spec

    return pl.pallas_call(
        kernel,
        grid=(n_m, n_k),
        in_specs=[
            pl.BlockSpec((tm, tk), lambda i, k: (i, k)),     # patches
            pl.BlockSpec((tk, Cp), lambda i, k: (k, 0)),     # weights
            pl.BlockSpec((1, Cp), lambda i, k: (0, 0)),      # bias
        ],
        out_specs=out_specs,
        out_shape=out_shape,
        scratch_shapes=[pltpu.VMEM((tm, Cp), jnp.float32)],  # f32 accumulator
        compiler_params=pltpu.CompilerParams(
            dimension_semantics=("parallel", "arbitrary")),
    )(patches, w2d, bias2d)


def pallas_bn_lrelu(x2d, scale2d, shift2d, *, tm, out_dtype):
    M_pad, Cp = x2d.shape
    n_m = M_pad // tm
    return pl.pallas_call(
        _bn_lrelu_kernel,
        grid=(n_m,),
        in_specs=[
            pl.BlockSpec((tm, Cp), lambda i: (i, 0)),
            pl.BlockSpec((1, Cp), lambda i: (0, 0)),
            pl.BlockSpec((1, Cp), lambda i: (0, 0)),
        ],
        out_specs=pl.BlockSpec((tm, Cp), lambda i: (i, 0)),
        out_shape=jax.ShapeDtypeStruct((M_pad, Cp), out_dtype),
        compiler_params=pltpu.CompilerParams(dimension_semantics=("parallel",)),
    )(x2d, scale2d, shift2d)


# ---------------------------------------------------------------------------
# JAX glue: channels-last im2col + weight layout
# ---------------------------------------------------------------------------
def im2col3d_cl(x, k, stride, pad):
    """Channels-last im2col: x (N,D,H,W,C) -> bf16 patches (N*Do*Ho*Wo, k^3*C).

    Patch column order is (kd, kh, kw, c) with channel fastest, matching
    prep_weight's (kd,kh,kw,cin,cout) reshape. No 8-D transpose needed.
    """
    # TODO(synk): further optimization — DMA shifted input windows inside the conv
    # kernel (memory_space=pl.ANY) and accumulate the k^3 shifted matmuls there,
    # instead of materializing the k^3-expanded patch matrix in HBM.
    N, D, H, W, C = x.shape
    xp = jnp.pad(x.astype(jnp.bfloat16),
                 ((0, 0), (pad, pad), (pad, pad), (pad, pad), (0, 0)))
    Do = (D + 2 * pad - k) // stride + 1
    Ho = (H + 2 * pad - k) // stride + 1
    Wo = (W + 2 * pad - k) // stride + 1
    cols = []
    for kd in range(k):
        for kh in range(k):
            for kw in range(k):
                cols.append(xp[:,
                               kd:kd + (Do - 1) * stride + 1:stride,
                               kh:kh + (Ho - 1) * stride + 1:stride,
                               kw:kw + (Wo - 1) * stride + 1:stride, :])
    patches = jnp.concatenate(cols, axis=-1)              # (N,Do,Ho,Wo,k^3*C)
    return patches.reshape(N * Do * Ho * Wo, k * k * k * C), (N, Do, Ho, Wo)


def prep_weight(w, cinp, coutp, k_pad):
    """PyTorch Conv3d weight (Cout,Cin,kd,kh,kw) -> bf16 matmul operand (K_pad,Coutp)."""
    cout, cin, k, _, _ = w.shape
    wp = jnp.zeros((coutp, cinp, k, k, k), jnp.float32).at[:cout, :cin].set(w)
    w2d = wp.transpose(2, 3, 4, 1, 0).reshape(k * k * k * cinp, coutp)
    if k_pad > w2d.shape[0]:
        w2d = jnp.pad(w2d, ((0, k_pad - w2d.shape[0]), (0, 0)))
    return w2d.astype(jnp.bfloat16)


# ---------------------------------------------------------------------------
# Parameter construction (deterministic, synthetic) and forward pass
# ---------------------------------------------------------------------------
def build_layer_configs(input_nc, ndf, n_layers):
    """(cin, cout, stride, has_bn, has_lrelu) per conv layer, as in __init__."""
    cfgs = [(input_nc, ndf, 2, False, True)]
    nf = ndf
    for _ in range(1, n_layers):
        nf_prev, nf = nf, min(nf * 2, 512)
        cfgs.append((nf_prev, nf, 2, True, True))
    nf_prev, nf = nf, min(nf * 2, 512)
    cfgs.append((nf_prev, nf, 1, True, True))
    cfgs.append((nf, 1, 1, False, False))
    return cfgs


def init_params(key, cfgs):
    params = []
    for (cin, cout, stride, has_bn, has_lrelu) in cfgs:
        key, kw_key = jax.random.split(key)
        w = jax.random.normal(kw_key, (cout, cin, KW, KW, KW), jnp.float32) * 0.02
        b = jnp.zeros((cout,), jnp.float32)
        gamma = jnp.ones((cout,), jnp.float32) if has_bn else None
        beta = jnp.zeros((cout,), jnp.float32) if has_bn else None
        params.append(dict(w=w, b=b, gamma=gamma, beta=beta,
                           stride=stride, has_bn=has_bn, has_lrelu=has_lrelu))
    return params


def nlayer_discriminator_forward(params, x_ncdhw):
    """self.model(input) for getIntermFeat=False, use_sigmoid=False.

    Activations stay channels-last (NDHWC) with channels zero-padded to 128
    multiples between layers; zero channels propagate exactly (zero weights,
    zero bias, BN shift 0, LeakyReLU(0)=0), so results match the unpadded net.
    """
    x = jnp.transpose(x_ncdhw, (0, 2, 3, 4, 1)).astype(jnp.float32)   # NDHWC
    n_layers_total = len(params)
    for idx, layer in enumerate(params):
        is_last = idx == n_layers_total - 1
        w, b = layer["w"], layer["b"]
        stride = layer["stride"]
        cout = w.shape[0]
        coutp = round_up(cout, LANE)
        cinp = x.shape[-1]                         # already padded (except layer 1)

        patches, (N, Do, Ho, Wo) = im2col3d_cl(x, KW, stride, PADW)
        M, K_raw = patches.shape
        tm = min(TM, round_up(M, 8))
        M_pad = round_up(M, tm)
        K_pad, tk = choose_k_tiling(K_raw)
        patches = jnp.pad(patches, ((0, M_pad - M), (0, K_pad - K_raw)))

        w2d = prep_weight(w, cinp, coutp, K_pad)
        b2d = jnp.zeros((1, coutp), jnp.float32).at[0, :cout].set(b)

        fuse_lrelu = layer["has_lrelu"] and not layer["has_bn"]
        if layer["has_bn"]:
            conv_dtype = jnp.float32           # keep f32 for exact BN normalize
        elif is_last:
            conv_dtype = jnp.float32           # final logits stay f32
        else:
            conv_dtype = jnp.bfloat16          # feeds next layer's im2col
        outs = pallas_conv_matmul(patches, w2d, b2d, tm=tm, tk=tk, m_real=M,
                                  lrelu=fuse_lrelu, want_stats=layer["has_bn"],
                                  out_dtype=conv_dtype)

        if layer["has_bn"]:
            y2d, stats = outs
            cnt = jnp.float32(M)                                   # N*D*H*W count
            mean = jnp.sum(stats[:, 0, :], axis=0) / cnt
            var = jnp.maximum(jnp.sum(stats[:, 1, :], axis=0) / cnt - mean * mean,
                              0.0)                                 # biased var
            gamma = jnp.ones((coutp,), jnp.float32).at[:cout].set(layer["gamma"])
            beta = jnp.zeros((coutp,), jnp.float32).at[:cout].set(layer["beta"])
            scale = gamma * jax.lax.rsqrt(var + BN_EPS)
            shift = beta - mean * scale
            y2d = pallas_bn_lrelu(y2d, scale.reshape(1, coutp),
                                  shift.reshape(1, coutp), tm=tm,
                                  out_dtype=jnp.bfloat16)
        else:
            y2d = outs

        x = y2d[:M].reshape(N, Do, Ho, Wo, coutp)

    # Final conv has Cout=1 (padded to 128): keep channel 0, back to NCDHW.
    return jnp.transpose(x[..., :1], (0, 4, 1, 2, 3)).astype(jnp.float32)


# ---------------------------------------------------------------------------
if __name__ == "__main__":
    # Small instantiation: NLayerDiscriminator(input_nc=4, ndf=8, n_layers=3)
    input_nc, ndf, n_layers = 4, 8, 3
    cfgs = build_layer_configs(input_nc, ndf, n_layers)

    key = jax.random.PRNGKey(0)
    key, pkey, xkey = jax.random.split(key, 3)
    params = init_params(pkey, cfgs)

    # Input: (N, C, D, H, W) = (2, 4, 8, 8, 8)
    x = jax.random.normal(xkey, (2, input_nc, 8, 8, 8), jnp.float32)

    fwd = jax.jit(lambda inp: nlayer_discriminator_forward(params, inp))
    out = jax.block_until_ready(fwd(x))

    # Expected spatial trace: 8 -> 5 -> 3 -> 2 -> 3 -> 4, channels -> 1
    assert out.shape == (2, 1, 4, 4, 4), out.shape
    assert bool(jnp.all(jnp.isfinite(out)))
    print("KERNEL_OK")
</pallas_src>

<mosaic_0001>
module attributes {stable_mosaic.version = 11 : i64} {
  func.func @_conv_bias_kernel(%arg0: i32, %arg1: i32, %arg2: memref<256x256xbf16, #tpu.memory_space<vmem>>, %arg3: memref<256x128xbf16, #tpu.memory_space<vmem>>, %arg4: memref<1x128xf32, #tpu.memory_space<vmem>>, %arg5: memref<256x128xbf16, #tpu.memory_space<vmem>>, %arg6: memref<256x128xf32, #tpu.memory_space<vmem>>) attributes {dimension_semantics = [#tpu.dimension_semantics<parallel>, #tpu.dimension_semantics<arbitrary>], iteration_bounds = array<i64: 1, 1>, scalar_prefetch = 0 : i64, scratch_operands = 1 : i64, tpu.core_type = #tpu.core_type<tc>, window_params = [{transform_indices = @transform_0, window_bounds = array<i64: 256, 256>}, {transform_indices = @transform_1, window_bounds = array<i64: 256, 128>}, {pipeline_mode = #tpu.pipeline_mode<synchronous>, transform_indices = @transform_2, window_bounds = array<i64: 1, 128>}, {transform_indices = @transform_3, window_bounds = array<i64: 256, 128>}]} {
    %c0_i32 = arith.constant 0 : i32
    %0 = arith.cmpi eq, %arg1, %c0_i32 : i32
    %1 = arith.extui %0 : i1 to i32
    %c0_i32_0 = arith.constant 0 : i32
    %2 = arith.cmpi ne, %1, %c0_i32_0 : i32
    scf.if %2 {
      %cst_10 = arith.constant 0.000000e+00 : f32
      %12 = vector.broadcast %cst_10 : f32 to vector<256x128xf32>
      %c0_11 = arith.constant 0 : index
      %c0_12 = arith.constant 0 : index
      %13 = vector.load %arg6[%c0_11, %c0_12] : memref<256x128xf32, #tpu.memory_space<vmem>>, vector<256x128xf32>
      tpu.vector_store %arg6[%c0_11, %c0_12], %12 {strides = array<i32>} : memref<256x128xf32, #tpu.memory_space<vmem>>, vector<256x128xf32>,
    } else {
    }
    %c0 = arith.constant 0 : index
    %c0_1 = arith.constant 0 : index
    %3 = vector.load %arg6[%c0, %c0_1] : memref<256x128xf32, #tpu.memory_space<vmem>>, vector<256x128xf32>
    %c0_2 = arith.constant 0 : index
    %c0_3 = arith.constant 0 : index
    %4 = vector.load %arg2[%c0_2, %c0_3] : memref<256x256xbf16, #tpu.memory_space<vmem>>, vector<256x256xbf16>
    %c0_4 = arith.constant 0 : index
    %c0_5 = arith.constant 0 : index
    %5 = vector.load %arg3[%c0_4, %c0_5] : memref<256x128xbf16, #tpu.memory_space<vmem>>, vector<256x128xbf16>
    %cst = arith.constant dense<0.000000e+00> : vector<256x128xf32>
    %6 = tpu.matmul %4, %5, %cst {dimension_numbers = #tpu.dot_dimension_numbers<[1], [0], [0], [1], [0, 0, 1, 1], [], []>} : vector<256x256xbf16>, vector<256x128xbf16>, vector<256x128xf32> -> vector<256x128xf32>
    %7 = arith.addf %3, %6 : vector<256x128xf32>
    %c0_6 = arith.constant 0 : index
    %c0_7 = arith.constant 0 : index
    %8 = vector.load %arg6[%c0_6, %c0_7] : memref<256x128xf32, #tpu.memory_space<vmem>>, vector<256x128xf32>
    tpu.vector_store %arg6[%c0_6, %c0_7], %7 {strides = array<i32>} : memref<256x128xf32, #tpu.memory_space<vmem>>, vector<256x128xf32>,
    %c0_i32_8 = arith.constant 0 : i32
    %9 = arith.cmpi eq, %arg1, %c0_i32_8 : i32
    %10 = arith.extui %9 : i1 to i32
    %c0_i32_9 = arith.constant 0 : i32
    %11 = arith.cmpi ne, %10, %c0_i32_9 : i32
    scf.if %11 {
      %c0_10 = arith.constant 0 : index
      %c0_11 = arith.constant 0 : index
      %12 = vector.load %arg6[%c0_10, %c0_11] : memref<256x128xf32, #tpu.memory_space<vmem>>, vector<256x128xf32>
      %c0_12 = arith.constant 0 : index
      %c0_13 = arith.constant 0 : index
      %13 = vector.load %arg4[%c0_12, %c0_13] : memref<1x128xf32, #tpu.memory_space<vmem>>, vector<1x128xf32>
      %14 = vector.broadcast %13 : vector<1x128xf32> to vector<256x128xf32>
      %15 = arith.addf %12, %14 : vector<256x128xf32>
      %cst_14 = arith.constant 0.000000e+00 : f32
      %16 = vector.broadcast %cst_14 : f32 to vector<256x128xf32>
      %17 = arith.cmpf oge, %15, %16 : vector<256x128xf32>
      %cst_15 = arith.constant 2.000000e-01 : f32
      %18 = vector.broadcast %cst_15 : f32 to vector<256x128xf32>
      %19 = arith.mulf %18, %15 : vector<256x128xf32>
      %20 = arith.select %17, %15, %19 : vector<256x128xi1>, vector<256x128xf32>
      %21 = arith.truncf %20 : vector<256x128xf32> to vector<256x128xbf16>
      %c0_16 = arith.constant 0 : index
      %c0_17 = arith.constant 0 : index
      %22 = vector.load %arg5[%c0_16, %c0_17] : memref<256x128xbf16, #tpu.memory_space<vmem>>, vector<256x128xbf16>
      tpu.vector_store %arg5[%c0_16, %c0_17], %21 {strides = array<i32>} : memref<256x128xbf16, #tpu.memory_space<vmem>>, vector<256x128xbf16>,
    } else {
    }
    return
  }
  func.func @transform_0(%arg0: i32, %arg1: i32) -> (i32, i32) {
    %c0_i32 = arith.constant 0 : i32
    return %arg0, %arg1 : i32, i32
  }
  func.func @transform_1(%arg0: i32, %arg1: i32) -> (i32, i32) {
    %c0_i32 = arith.constant 0 : i32
    %c0_i32_0 = arith.constant 0 : i32
    return %arg1, %c0_i32 : i32, i32
  }
  func.func @transform_2(%arg0: i32, %arg1: i32) -> (i32, i32) {
    %c0_i32 = arith.constant 0 : i32
    %c0_i32_0 = arith.constant 0 : i32
    %c0_i32_1 = arith.constant 0 : i32
    return %c0_i32, %c0_i32_0 : i32, i32
  }
  func.func @transform_3(%arg0: i32, %arg1: i32) -> (i32, i32) {
    %c0_i32 = arith.constant 0 : i32
    %c0_i32_0 = arith.constant 0 : i32
    return %arg0, %c0_i32 : i32, i32
  }
}

module attributes {stable_mosaic.version = 11 : i64} {
  func.func @_bn_lrelu_kernel(%arg0: i32, %arg1: memref<56x128xf32, #tpu.memory_space<vmem>>, %arg2: memref<1x128xf32, #tpu.memory_space<vmem>>, %arg3: memref<1x128xf32, #tpu.memory_space<vmem>>, %arg4: memref<56x128xbf16, #tpu.memory_space<vmem>>) attributes {dimension_semantics = [#tpu.dimension_semantics<parallel>], iteration_bounds = array<i64: 1>, scalar_prefetch = 0 : i64, scratch_operands = 0 : i64, tpu.core_type = #tpu.core_type<tc>, window_params = [{transform_indices = @transform_0, window_bounds = array<i64: 56, 128>}, {pipeline_mode = #tpu.pipeline_mode<synchronous>, transform_indices = @transform_1, window_bounds = array<i64: 1, 128>}, {pipeline_mode = #tpu.pipeline_mode<synchronous>, transform_indices = @transform_2, window_bounds = array<i64: 1, 128>}, {transform_indices = @transform_3, window_bounds = array<i64: 56, 128>}]} {
    %c0 = arith.constant 0 : index
    %c0_0 = arith.constant 0 : index
    %0 = vector.load %arg1[%c0, %c0_0] : memref<56x128xf32, #tpu.memory_space<vmem>>, vector<56x128xf32>
    %c0_1 = arith.constant 0 : index
    %c0_2 = arith.constant 0 : index
    %1 = vector.load %arg2[%c0_1, %c0_2] : memref<1x128xf32, #tpu.memory_space<vmem>>, vector<1x128xf32>
    %2 = vector.broadcast %1 : vector<1x128xf32> to vector<56x128xf32>
    %3 = arith.mulf %0, %2 : vector<56x128xf32>
    %c0_3 = arith.constant 0 : index
    %c0_4 = arith.constant 0 : index
    %4 = vector.load %arg3[%c0_3, %c0_4] : memref<1x128xf32, #tpu.memory_space<vmem>>, vector<1x128xf32>
    %5 = vector.broadcast %4 : vector<1x128xf32> to vector<56x128xf32>
    %6 = arith.addf %3, %5 : vector<56x128xf32>
    %cst = arith.constant 0.000000e+00 : f32
    %7 = vector.broadcast %cst : f32 to vector<56x128xf32>
    %8 = arith.cmpf oge, %6, %7 : vector<56x128xf32>
    %cst_5 = arith.constant 2.000000e-01 : f32
    %9 = vector.broadcast %cst_5 : f32 to vector<56x128xf32>
    %10 = arith.mulf %9, %6 : vector<56x128xf32>
    %11 = arith.select %8, %6, %10 : vector<56x128xi1>, vector<56x128xf32>
    %12 = arith.truncf %11 : vector<56x128xf32> to vector<56x128xbf16>
    %c0_6 = arith.constant 0 : index
    %c0_7 = arith.constant 0 : index
    %13 = vector.load %arg4[%c0_6, %c0_7] : memref<56x128xbf16, #tpu.memory_space<vmem>>, vector<56x128xbf16>
    tpu.vector_store %arg4[%c0_6, %c0_7], %12 {strides = array<i32>} : memref<56x128xbf16, #tpu.memory_space<vmem>>, vector<56x128xbf16>,
    return
  }
  func.func @transform_0(%arg0: i32) -> (i32, i32) {
    %c0_i32 = arith.constant 0 : i32
    %c0_i32_0 = arith.constant 0 : i32
    return %arg0, %c0_i32 : i32, i32
  }
  func.func @transform_1(%arg0: i32) -> (i32, i32) {
    %c0_i32 = arith.constant 0 : i32
    %c0_i32_0 = arith.constant 0 : i32
    %c0_i32_1 = arith.constant 0 : i32
    return %c0_i32, %c0_i32_0 : i32, i32
  }
  func.func @transform_2(%arg0: i32) -> (i32, i32) {
    %c0_i32 = arith.constant 0 : i32
    %c0_i32_0 = arith.constant 0 : i32
    %c0_i32_1 = arith.constant 0 : i32
    return %c0_i32, %c0_i32_0 : i32, i32
  }
  func.func @transform_3(%arg0: i32) -> (i32, i32) {
    %c0_i32 = arith.constant 0 : i32
    %c0_i32_0 = arith.constant 0 : i32
    return %arg0, %c0_i32 : i32, i32
  }
}

module attributes {stable_mosaic.version = 11 : i64} {
  func.func @_conv_bias_kernel(%arg0: i32, %arg1: i32, %arg2: memref<56x2048xbf16, #tpu.memory_space<vmem>>, %arg3: memref<2048x128xbf16, #tpu.memory_space<vmem>>, %arg4: memref<1x128xf32, #tpu.memory_space<vmem>>, %arg5: memref<56x128xf32, #tpu.memory_space<vmem>>, %arg6: memref<1x8x128xf32, #tpu.memory_space<vmem>>, %arg7: memref<56x128xf32, #tpu.memory_space<vmem>>) attributes {dimension_semantics = [#tpu.dimension_semantics<parallel>, #tpu.dimension_semantics<arbitrary>], iteration_bounds = array<i64: 1, 4>, scalar_prefetch = 0 : i64, scratch_operands = 1 : i64, tpu.core_type = #tpu.core_type<tc>, window_params = [{transform_indices = @transform_0, window_bounds = array<i64: 56, 2048>}, {transform_indices = @transform_1, window_bounds = array<i64: 2048, 128>}, {pipeline_mode = #tpu.pipeline_mode<synchronous>, transform_indices = @transform_2, window_bounds = array<i64: 1, 128>}, {transform_indices = @transform_3, window_bounds = array<i64: 56, 128>}, {transform_indices = @transform_4, window_bounds = array<i64: 1, 8, 128>}]} {
    %c56_i32 = arith.constant 56 : i32
    %0 = arith.muli %arg0, %c56_i32 : i32
    %c0_i32 = arith.constant 0 : i32
    %1 = arith.cmpi eq, %arg1, %c0_i32 : i32
    %2 = arith.extui %1 : i1 to i32
    %c0_i32_0 = arith.constant 0 : i32
    %3 = arith.cmpi ne, %2, %c0_i32_0 : i32
    scf.if %3 {
      %cst_9 = arith.constant 0.000000e+00 : f32
      %13 = vector.broadcast %cst_9 : f32 to vector<56x128xf32>
      %c0_10 = arith.constant 0 : index
      %c0_11 = arith.constant 0 : index
      %14 = vector.load %arg7[%c0_10, %c0_11] : memref<56x128xf32, #tpu.memory_space<vmem>>, vector<56x128xf32>
      tpu.vector_store %arg7[%c0_10, %c0_11], %13 {strides = array<i32>} : memref<56x128xf32, #tpu.memory_space<vmem>>, vector<56x128xf32>,
    } else {
    }
    %c0 = arith.constant 0 : index
    %c0_1 = arith.constant 0 : index
    %4 = vector.load %arg7[%c0, %c0_1] : memref<56x128xf32, #tpu.memory_space<vmem>>, vector<56x128xf32>
    %c0_2 = arith.constant 0 : index
    %c0_3 = arith.constant 0 : index
    %5 = vector.load %arg2[%c0_2, %c0_3] : memref<56x2048xbf16, #tpu.memory_space<vmem>>, vector<56x2048xbf16>
    %c0_4 = arith.constant 0 : index
    %c0_5 = arith.constant 0 : index
    %6 = vector.load %arg3[%c0_4, %c0_5] : memref<2048x128xbf16, #tpu.memory_space<vmem>>, vector<2048x128xbf16>
    %cst = arith.constant dense<0.000000e+00> : vector<56x128xf32>
    %7 = tpu.matmul %5, %6, %cst {dimension_numbers = #tpu.dot_dimension_numbers<[1], [0], [0], [1], [0, 0, 1, 1], [], []>} : vector<56x2048xbf16>, vector<2048x128xbf16>, vector<56x128xf32> -> vector<56x128xf32>
    %8 = arith.addf %4, %7 : vector<56x128xf32>
    %c0_6 = arith.constant 0 : index
    %c0_7 = arith.constant 0 : index
    %9 = vector.load %arg7[%c0_6, %c0_7] : memref<56x128xf32, #tpu.memory_space<vmem>>, vector<56x128xf32>
    tpu.vector_store %arg7[%c0_6, %c0_7], %8 {strides = array<i32>} : memref<56x128xf32, #tpu.memory_space<vmem>>, vector<56x128xf32>,
    %c3_i32 = arith.constant 3 : i32
    %10 = arith.cmpi eq, %arg1, %c3_i32 : i32
    %11 = arith.extui %10 : i1 to i32
    %c0_i32_8 = arith.constant 0 : i32
    %12 = arith.cmpi ne, %11, %c0_i32_8 : i32
    scf.if %12 {
      %c0_9 = arith.constant 0 : index
      %c0_10 = arith.constant 0 : index
      %13 = vector.load %arg7[%c0_9, %c0_10] : memref<56x128xf32, #tpu.memory_space<vmem>>, vector<56x128xf32>
      %c0_11 = arith.constant 0 : index
      %c0_12 = arith.constant 0 : index
      %14 = vector.load %arg4[%c0_11, %c0_12] : memref<1x128xf32, #tpu.memory_space<vmem>>, vector<1x128xf32>
      %15 = vector.broadcast %14 : vector<1x128xf32> to vector<56x128xf32>
      %16 = arith.addf %13, %15 : vector<56x128xf32>
      %c0_13 = arith.constant 0 : index
      %c0_14 = arith.constant 0 : index
      %17 = vector.load %arg5[%c0_13, %c0_14] : memref<56x128xf32, #tpu.memory_space<vmem>>, vector<56x128xf32>
      tpu.vector_store %arg5[%c0_13, %c0_14], %16 {strides = array<i32>} : memref<56x128xf32, #tpu.memory_space<vmem>>, vector<56x128xf32>,
      %18 = tpu.iota {dimensions = array<i32: 0>} : vector<56x1xi32>
      %19 = vector.broadcast %0 : i32 to vector<56x1xi32>
      %20 = arith.addi %19, %18 : vector<56x1xi32>
      %c54_i32 = arith.constant 54 : i32
      %21 = vector.broadcast %c54_i32 : i32 to vector<56x1xi32>
      %22 = arith.cmpi slt, %20, %21 : vector<56x1xi32>
      %cst_15 = arith.constant 0.000000e+00 : f32
      %23 = vector.shape_cast %22 : vector<56x1xi1> to vector<56x1xi1>
      %24 = vector.broadcast %23 : vector<56x1xi1> to vector<56x128xi1>
      %25 = vector.broadcast %cst_15 : f32 to vector<56x128xf32>
      %26 = arith.select %24, %16, %25 : vector<56x128xi1>, vector<56x128xf32>
      %cst_16 = arith.constant dense<0.000000e+00> : vector<128xf32>
      %27 = vector.multi_reduction <add>, %26, %cst_16 [0] : vector<56x128xf32> to vector<128xf32>
      %28 = vector.shape_cast %27 : vector<128xf32> to vector<1x128xf32>
      %29 = arith.mulf %26, %26 : vector<56x128xf32>
      %cst_17 = arith.constant dense<0.000000e+00> : vector<128xf32>
      %30 = vector.multi_reduction <add>, %29, %cst_17 [0] : vector<56x128xf32> to vector<128xf32>
      %31 = vector.shape_cast %30 : vector<128xf32> to vector<1x128xf32>
      %cst_18 = arith.constant 0.000000e+00 : f32
      %32 = vector.broadcast %cst_18 : f32 to vector<6x128xf32>
      %33 = tpu.concatenate %28, %31, %32 in 0 : vector<1x128xf32>, vector<1x128xf32>, vector<6x128xf32> -> vector<8x128xf32>
      %c0_19 = arith.constant 0 : index
      %c0_20 = arith.constant 0 : index
      %c0_21 = arith.constant 0 : index
      %34 = vector.load %arg6[%c0_19, %c0_20, %c0_21] : memref<1x8x128xf32, #tpu.memory_space<vmem>>, vector<1x8x128xf32>
      %35 = vector.shape_cast %34 : vector<1x8x128xf32> to vector<8x128xf32>
      %36 = vector.shape_cast %33 : vector<8x128xf32> to vector<1x8x128xf32>
      tpu.vector_store %arg6[%c0_19, %c0_20, %c0_21], %36 {strides = array<i32>} : memref<1x8x128xf32, #tpu.memory_space<vmem>>, vector<1x8x128xf32>,
    } else {
    }
    return
  }
  func.func @transform_0(%arg0: i32, %arg1: i32) -> (i32, i32) {
    %c0_i32 = arith.constant 0 : i32
    return %arg0, %arg1 : i32, i32
  }
  func.func @transform_1(%arg0: i32, %arg1: i32) -> (i32, i32) {
    %c0_i32 = arith.constant 0 : i32
    %c0_i32_0 = arith.constant 0 : i32
    return %arg1, %c0_i32 : i32, i32
  }
  func.func @transform_2(%arg0: i32, %arg1: i32) -> (i32, i32) {
    %c0_i32 = arith.constant 0 : i32
    %c0_i32_0 = arith.constant 0 : i32
    %c0_i32_1 = arith.constant 0 : i32
    return %c0_i32, %c0_i32_0 : i32, i32
  }
  func.func @transform_3(%arg0: i32, %arg1: i32) -> (i32, i32) {
    %c0_i32 = arith.constant 0 : i32
    %c0_i32_0 = arith.constant 0 : i32
    return %arg0, %c0_i32 : i32, i32
  }
  func.func @transform_4(%arg0: i32, %arg1: i32) -> (i32, i32, i32) {
    %c0_i32 = arith.constant 0 : i32
    %c0_i32_0 = arith.constant 0 : i32
    %c0_i32_1 = arith.constant 0 : i32
    return %arg0, %c0_i32, %c0_i32_0 : i32, i32, i32
  }
}

module attributes {stable_mosaic.version = 11 : i64} {
  func.func @_conv_bias_kernel(%arg0: i32, %arg1: i32, %arg2: memref<16x2048xbf16, #tpu.memory_space<vmem>>, %arg3: memref<2048x128xbf16, #tpu.memory_space<vmem>>, %arg4: memref<1x128xf32, #tpu.memory_space<vmem>>, %arg5: memref<16x128xf32, #tpu.memory_space<vmem>>, %arg6: memref<1x8x128xf32, #tpu.memory_space<vmem>>, %arg7: memref<16x128xf32, #tpu.memory_space<vmem>>) attributes {dimension_semantics = [#tpu.dimension_semantics<parallel>, #tpu.dimension_semantics<arbitrary>], iteration_bounds = array<i64: 1, 4>, scalar_prefetch = 0 : i64, scratch_operands = 1 : i64, tpu.core_type = #tpu.core_type<tc>, window_params = [{transform_indices = @transform_0, window_bounds = array<i64: 16, 2048>}, {transform_indices = @transform_1, window_bounds = array<i64: 2048, 128>}, {pipeline_mode = #tpu.pipeline_mode<synchronous>, transform_indices = @transform_2, window_bounds = array<i64: 1, 128>}, {transform_indices = @transform_3, window_bounds = array<i64: 16, 128>}, {transform_indices = @transform_4, window_bounds = array<i64: 1, 8, 128>}]} {
    %c16_i32 = arith.constant 16 : i32
    %0 = arith.muli %arg0, %c16_i32 : i32
    %c0_i32 = arith.constant 0 : i32
    %1 = arith.cmpi eq, %arg1, %c0_i32 : i32
    %2 = arith.extui %1 : i1 to i32
    %c0_i32_0 = arith.constant 0 : i32
    %3 = arith.cmpi ne, %2, %c0_i32_0 : i32
    scf.if %3 {
      %cst_9 = arith.constant 0.000000e+00 : f32
      %13 = vector.broadcast %cst_9 : f32 to vector<16x128xf32>
      %c0_10 = arith.constant 0 : index
      %c0_11 = arith.constant 0 : index
      %14 = vector.load %arg7[%c0_10, %c0_11] : memref<16x128xf32, #tpu.memory_space<vmem>>, vector<16x128xf32>
      tpu.vector_store %arg7[%c0_10, %c0_11], %13 {strides = array<i32>} : memref<16x128xf32, #tpu.memory_space<vmem>>, vector<16x128xf32>,
    } else {
    }
    %c0 = arith.constant 0 : index
    %c0_1 = arith.constant 0 : index
    %4 = vector.load %arg7[%c0, %c0_1] : memref<16x128xf32, #tpu.memory_space<vmem>>, vector<16x128xf32>
    %c0_2 = arith.constant 0 : index
    %c0_3 = arith.constant 0 : index
    %5 = vector.load %arg2[%c0_2, %c0_3] : memref<16x2048xbf16, #tpu.memory_space<vmem>>, vector<16x2048xbf16>
    %c0_4 = arith.constant 0 : index
    %c0_5 = arith.constant 0 : index
    %6 = vector.load %arg3[%c0_4, %c0_5] : memref<2048x128xbf16, #tpu.memory_space<vmem>>, vector<2048x128xbf16>
    %cst = arith.constant dense<0.000000e+00> : vector<16x128xf32>
    %7 = tpu.matmul %5, %6, %cst {dimension_numbers = #tpu.dot_dimension_numbers<[1], [0], [0], [1], [0, 0, 1, 1], [], []>} : vector<16x2048xbf16>, vector<2048x128xbf16>, vector<16x128xf32> -> vector<16x128xf32>
    %8 = arith.addf %4, %7 : vector<16x128xf32>
    %c0_6 = arith.constant 0 : index
    %c0_7 = arith.constant 0 : index
    %9 = vector.load %arg7[%c0_6, %c0_7] : memref<16x128xf32, #tpu.memory_space<vmem>>, vector<16x128xf32>
    tpu.vector_store %arg7[%c0_6, %c0_7], %8 {strides = array<i32>} : memref<16x128xf32, #tpu.memory_space<vmem>>, vector<16x128xf32>,
    %c3_i32 = arith.constant 3 : i32
    %10 = arith.cmpi eq, %arg1, %c3_i32 : i32
    %11 = arith.extui %10 : i1 to i32
    %c0_i32_8 = arith.constant 0 : i32
    %12 = arith.cmpi ne, %11, %c0_i32_8 : i32
    scf.if %12 {
      %c0_9 = arith.constant 0 : index
      %c0_10 = arith.constant 0 : index
      %13 = vector.load %arg7[%c0_9, %c0_10] : memref<16x128xf32, #tpu.memory_space<vmem>>, vector<16x128xf32>
      %c0_11 = arith.constant 0 : index
      %c0_12 = arith.constant 0 : index
      %14 = vector.load %arg4[%c0_11, %c0_12] : memref<1x128xf32, #tpu.memory_space<vmem>>, vector<1x128xf32>
      %15 = vector.broadcast %14 : vector<1x128xf32> to vector<16x128xf32>
      %16 = arith.addf %13, %15 : vector<16x128xf32>
      %c0_13 = arith.constant 0 : index
      %c0_14 = arith.constant 0 : index
      %17 = vector.load %arg5[%c0_13, %c0_14] : memref<16x128xf32, #tpu.memory_space<vmem>>, vector<16x128xf32>
      tpu.vector_store %arg5[%c0_13, %c0_14], %16 {strides = array<i32>} : memref<16x128xf32, #tpu.memory_space<vmem>>, vector<16x128xf32>,
      %18 = tpu.iota {dimensions = array<i32: 0>} : vector<16x1xi32>
      %19 = vector.broadcast %0 : i32 to vector<16x1xi32>
      %20 = arith.addi %19, %18 : vector<16x1xi32>
      %c16_i32_15 = arith.constant 16 : i32
      %21 = vector.broadcast %c16_i32_15 : i32 to vector<16x1xi32>
      %22 = arith.cmpi slt, %20, %21 : vector<16x1xi32>
      %cst_16 = arith.constant 0.000000e+00 : f32
      %23 = vector.shape_cast %22 : vector<16x1xi1> to vector<16x1xi1>
      %24 = vector.broadcast %23 : vector<16x1xi1> to vector<16x128xi1>
      %25 = vector.broadcast %cst_16 : f32 to vector<16x128xf32>
      %26 = arith.select %24, %16, %25 : vector<16x128xi1>, vector<16x128xf32>
      %cst_17 = arith.constant dense<0.000000e+00> : vector<128xf32>
      %27 = vector.multi_reduction <add>, %26, %cst_17 [0] : vector<16x128xf32> to vector<128xf32>
      %28 = vector.shape_cast %27 : vector<128xf32> to vector<1x128xf32>
      %29 = arith.mulf %26, %26 : vector<16x128xf32>
      %cst_18 = arith.constant dense<0.000000e+00> : vector<128xf32>
      %30 = vector.multi_reduction <add>, %29, %cst_18 [0] : vector<16x128xf32> to vector<128xf32>
      %31 = vector.shape_cast %30 : vector<128xf32> to vector<1x128xf32>
      %cst_19 = arith.constant 0.000000e+00 : f32
      %32 = vector.broadcast %cst_19 : f32 to vector<6x128xf32>
      %33 = tpu.concatenate %28, %31, %32 in 0 : vector<1x128xf32>, vector<1x128xf32>, vector<6x128xf32> -> vector<8x128xf32>
      %c0_20 = arith.constant 0 : index
      %c0_21 = arith.constant 0 : index
      %c0_22 = arith.constant 0 : index
      %34 = vector.load %arg6[%c0_20, %c0_21, %c0_22] : memref<1x8x128xf32, #tpu.memory_space<vmem>>, vector<1x8x128xf32>
      %35 = vector.shape_cast %34 : vector<1x8x128xf32> to vector<8x128xf32>
      %36 = vector.shape_cast %33 : vector<8x128xf32> to vector<1x8x128xf32>
      tpu.vector_store %arg6[%c0_20, %c0_21, %c0_22], %36 {strides = array<i32>} : memref<1x8x128xf32, #tpu.memory_space<vmem>>, vector<1x8x128xf32>,
    } else {
    }
    return
  }
  func.func @transform_0(%arg0: i32, %arg1: i32) -> (i32, i32) {
    %c0_i32 = arith.constant 0 : i32
    return %arg0, %arg1 : i32, i32
  }
  func.func @transform_1(%arg0: i32, %arg1: i32) -> (i32, i32) {
    %c0_i32 = arith.constant 0 : i32
    %c0_i32_0 = arith.constant 0 : i32
    return %arg1, %c0_i32 : i32, i32
  }
  func.func @transform_2(%arg0: i32, %arg1: i32) -> (i32, i32) {
    %c0_i32 = arith.constant 0 : i32
    %c0_i32_0 = arith.constant 0 : i32
    %c0_i32_1 = arith.constant 0 : i32
    return %c0_i32, %c0_i32_0 : i32, i32
  }
  func.func @transform_3(%arg0: i32, %arg1: i32) -> (i32, i32) {
    %c0_i32 = arith.constant 0 : i32
    %c0_i32_0 = arith.constant 0 : i32
    return %arg0, %c0_i32 : i32, i32
  }
  func.func @transform_4(%arg0: i32, %arg1: i32) -> (i32, i32, i32) {
    %c0_i32 = arith.constant 0 : i32
    %c0_i32_0 = arith.constant 0 : i32
    %c0_i32_1 = arith.constant 0 : i32
    return %arg0, %c0_i32, %c0_i32_0 : i32, i32, i32
  }
}

module attributes {stable_mosaic.version = 11 : i64} {
  func.func @_bn_lrelu_kernel(%arg0: i32, %arg1: memref<16x128xf32, #tpu.memory_space<vmem>>, %arg2: memref<1x128xf32, #tpu.memory_space<vmem>>, %arg3: memref<1x128xf32, #tpu.memory_space<vmem>>, %arg4: memref<16x128xbf16, #tpu.memory_space<vmem>>) attributes {dimension_semantics = [#tpu.dimension_semantics<parallel>], iteration_bounds = array<i64: 1>, scalar_prefetch = 0 : i64, scratch_operands = 0 : i64, tpu.core_type = #tpu.core_type<tc>, window_params = [{transform_indices = @transform_0, window_bounds = array<i64: 16, 128>}, {pipeline_mode = #tpu.pipeline_mode<synchronous>, transform_indices = @transform_1, window_bounds = array<i64: 1, 128>}, {pipeline_mode = #tpu.pipeline_mode<synchronous>, transform_indices = @transform_2, window_bounds = array<i64: 1, 128>}, {transform_indices = @transform_3, window_bounds = array<i64: 16, 128>}]} {
    %c0 = arith.constant 0 : index
    %c0_0 = arith.constant 0 : index
    %0 = vector.load %arg1[%c0, %c0_0] : memref<16x128xf32, #tpu.memory_space<vmem>>, vector<16x128xf32>
    %c0_1 = arith.constant 0 : index
    %c0_2 = arith.constant 0 : index
    %1 = vector.load %arg2[%c0_1, %c0_2] : memref<1x128xf32, #tpu.memory_space<vmem>>, vector<1x128xf32>
    %2 = vector.broadcast %1 : vector<1x128xf32> to vector<16x128xf32>
    %3 = arith.mulf %0, %2 : vector<16x128xf32>
    %c0_3 = arith.constant 0 : index
    %c0_4 = arith.constant 0 : index
    %4 = vector.load %arg3[%c0_3, %c0_4] : memref<1x128xf32, #tpu.memory_space<vmem>>, vector<1x128xf32>
    %5 = vector.broadcast %4 : vector<1x128xf32> to vector<16x128xf32>
    %6 = arith.addf %3, %5 : vector<16x128xf32>
    %cst = arith.constant 0.000000e+00 : f32
    %7 = vector.broadcast %cst : f32 to vector<16x128xf32>
    %8 = arith.cmpf oge, %6, %7 : vector<16x128xf32>
    %cst_5 = arith.constant 2.000000e-01 : f32
    %9 = vector.broadcast %cst_5 : f32 to vector<16x128xf32>
    %10 = arith.mulf %9, %6 : vector<16x128xf32>
    %11 = arith.select %8, %6, %10 : vector<16x128xi1>, vector<16x128xf32>
    %12 = arith.truncf %11 : vector<16x128xf32> to vector<16x128xbf16>
    %c0_6 = arith.constant 0 : index
    %c0_7 = arith.constant 0 : index
    %13 = vector.load %arg4[%c0_6, %c0_7] : memref<16x128xbf16, #tpu.memory_space<vmem>>, vector<16x128xbf16>
    tpu.vector_store %arg4[%c0_6, %c0_7], %12 {strides = array<i32>} : memref<16x128xbf16, #tpu.memory_space<vmem>>, vector<16x128xbf16>,
    return
  }
  func.func @transform_0(%arg0: i32) -> (i32, i32) {
    %c0_i32 = arith.constant 0 : i32
    %c0_i32_0 = arith.constant 0 : i32
    return %arg0, %c0_i32 : i32, i32
  }
  func.func @transform_1(%arg0: i32) -> (i32, i32) {
    %c0_i32 = arith.constant 0 : i32
    %c0_i32_0 = arith.constant 0 : i32
    %c0_i32_1 = arith.constant 0 : i32
    return %c0_i32, %c0_i32_0 : i32, i32
  }
  func.func @transform_2(%arg0: i32) -> (i32, i32) {
    %c0_i32 = arith.constant 0 : i32
    %c0_i32_0 = arith.constant 0 : i32
    %c0_i32_1 = arith.constant 0 : i32
    return %c0_i32, %c0_i32_0 : i32, i32
  }
  func.func @transform_3(%arg0: i32) -> (i32, i32) {
    %c0_i32 = arith.constant 0 : i32
    %c0_i32_0 = arith.constant 0 : i32
    return %arg0, %c0_i32 : i32, i32
  }
}

module attributes {stable_mosaic.version = 11 : i64} {
  func.func @_conv_bias_kernel(%arg0: i32, %arg1: i32, %arg2: memref<128x2048xbf16, #tpu.memory_space<vmem>>, %arg3: memref<2048x128xbf16, #tpu.memory_space<vmem>>, %arg4: memref<1x128xf32, #tpu.memory_space<vmem>>, %arg5: memref<128x128xf32, #tpu.memory_space<vmem>>, %arg6: memref<128x128xf32, #tpu.memory_space<vmem>>) attributes {dimension_semantics = [#tpu.dimension_semantics<parallel>, #tpu.dimension_semantics<arbitrary>], iteration_bounds = array<i64: 1, 4>, scalar_prefetch = 0 : i64, scratch_operands = 1 : i64, tpu.core_type = #tpu.core_type<tc>, window_params = [{transform_indices = @transform_0, window_bounds = array<i64: 128, 2048>}, {transform_indices = @transform_1, window_bounds = array<i64: 2048, 128>}, {pipeline_mode = #tpu.pipeline_mode<synchronous>, transform_indices = @transform_2, window_bounds = array<i64: 1, 128>}, {transform_indices = @transform_3, window_bounds = array<i64: 128, 128>}]} {
    %c0_i32 = arith.constant 0 : i32
    %0 = arith.cmpi eq, %arg1, %c0_i32 : i32
    %1 = arith.extui %0 : i1 to i32
    %c0_i32_0 = arith.constant 0 : i32
    %2 = arith.cmpi ne, %1, %c0_i32_0 : i32
    scf.if %2 {
      %cst_9 = arith.constant 0.000000e+00 : f32
      %12 = vector.broadcast %cst_9 : f32 to vector<128x128xf32>
      %c0_10 = arith.constant 0 : index
      %c0_11 = arith.constant 0 : index
      %13 = vector.load %arg6[%c0_10, %c0_11] : memref<128x128xf32, #tpu.memory_space<vmem>>, vector<128x128xf32>
      tpu.vector_store %arg6[%c0_10, %c0_11], %12 {strides = array<i32>} : memref<128x128xf32, #tpu.memory_space<vmem>>, vector<128x128xf32>,
    } else {
    }
    %c0 = arith.constant 0 : index
    %c0_1 = arith.constant 0 : index
    %3 = vector.load %arg6[%c0, %c0_1] : memref<128x128xf32, #tpu.memory_space<vmem>>, vector<128x128xf32>
    %c0_2 = arith.constant 0 : index
    %c0_3 = arith.constant 0 : index
    %4 = vector.load %arg2[%c0_2, %c0_3] : memref<128x2048xbf16, #tpu.memory_space<vmem>>, vector<128x2048xbf16>
    %c0_4 = arith.constant 0 : index
    %c0_5 = arith.constant 0 : index
    %5 = vector.load %arg3[%c0_4, %c0_5] : memref<2048x128xbf16, #tpu.memory_space<vmem>>, vector<2048x128xbf16>
    %cst = arith.constant dense<0.000000e+00> : vector<128x128xf32>
    %6 = tpu.matmul %4, %5, %cst {dimension_numbers = #tpu.dot_dimension_numbers<[1], [0], [0], [1], [0, 0, 1, 1], [], []>} : vector<128x2048xbf16>, vector<2048x128xbf16>, vector<128x128xf32> -> vector<128x128xf32>
    %7 = arith.addf %3, %6 : vector<128x128xf32>
    %c0_6 = arith.constant 0 : index
    %c0_7 = arith.constant 0 : index
    %8 = vector.load %arg6[%c0_6, %c0_7] : memref<128x128xf32, #tpu.memory_space<vmem>>, vector<128x128xf32>
    tpu.vector_store %arg6[%c0_6, %c0_7], %7 {strides = array<i32>} : memref<128x128xf32, #tpu.memory_space<vmem>>, vector<128x128xf32>,
    %c3_i32 = arith.constant 3 : i32
    %9 = arith.cmpi eq, %arg1, %c3_i32 : i32
    %10 = arith.extui %9 : i1 to i32
    %c0_i32_8 = arith.constant 0 : i32
    %11 = arith.cmpi ne, %10, %c0_i32_8 : i32
    scf.if %11 {
      %c0_9 = arith.constant 0 : index
      %c0_10 = arith.constant 0 : index
      %12 = vector.load %arg6[%c0_9, %c0_10] : memref<128x128xf32, #tpu.memory_space<vmem>>, vector<128x128xf32>
      %c0_11 = arith.constant 0 : index
      %c0_12 = arith.constant 0 : index
      %13 = vector.load %arg4[%c0_11, %c0_12] : memref<1x128xf32, #tpu.memory_space<vmem>>, vector<1x128xf32>
      %14 = vector.broadcast %13 : vector<1x128xf32> to vector<128x128xf32>
      %15 = arith.addf %12, %14 : vector<128x128xf32>
      %c0_13 = arith.constant 0 : index
      %c0_14 = arith.constant 0 : index
      %16 = vector.load %arg5[%c0_13, %c0_14] : memref<128x128xf32, #tpu.memory_space<vmem>>, vector<128x128xf32>
      tpu.vector_store %arg5[%c0_13, %c0_14], %15 {strides = array<i32>} : memref<128x128xf32, #tpu.memory_space<vmem>>, vector<128x128xf32>,
    } else {
    }
    return
  }
  func.func @transform_0(%arg0: i32, %arg1: i32) -> (i32, i32) {
    %c0_i32 = arith.constant 0 : i32
    return %arg0, %arg1 : i32, i32
  }
  func.func @transform_1(%arg0: i32, %arg1: i32) -> (i32, i32) {
    %c0_i32 = arith.constant 0 : i32
    %c0_i32_0 = arith.constant 0 : i32
    return %arg1, %c0_i32 : i32, i32
  }
  func.func @transform_2(%arg0: i32, %arg1: i32) -> (i32, i32) {
    %c0_i32 = arith.constant 0 : i32
    %c0_i32_0 = arith.constant 0 : i32
    %c0_i32_1 = arith.constant 0 : i32
    return %c0_i32, %c0_i32_0 : i32, i32
  }
  func.func @transform_3(%arg0: i32, %arg1: i32) -> (i32, i32) {
    %c0_i32 = arith.constant 0 : i32
    %c0_i32_0 = arith.constant 0 : i32
    return %arg0, %c0_i32 : i32, i32
  }
}

</mosaic_0001>

<llo_original>
// kernel: _lambda_.8
$region0: #{_lambda_.8}
  #allocation0 [shape = 'u32[]', space=smem, size = 0x4, offset = 0x4, fixed_abs, tag = 'smem constant byte address 0x4 - core index']
  #allocation1 [shape = 'u32[144,128]{1,0:T(1,128)}', space=vmem, size = 0x12000, scoped, tag = 'internal scratch']
  #allocation2 [shape = 'f32[256,128]{1,0:T(8,128)}', space=vmem, size = 0x20000, scoped, tag = 'scratch operand']
  %s0 = inlined_call_operand.vmem [shape: bf16[256,256], index: 0, kind: input, shape index: {}]
  %s1 = inlined_call_operand.vmem [shape: bf16[256,128], index: 1, kind: input, shape index: {}]
  %s2 = inlined_call_operand.vmem [shape: f32[1,128], index: 2, kind: input, shape index: {}]
  %s3 = inlined_call_operand.vmem [shape: bf16[256,128], index: 3, kind: output, shape index: {}]
  %s4 = sld [smem:[#allocation0]]
  $region30: #{_lambda_.8} parent=0
    _
  %s6 = ssub.s32 1, %s4
  %s7 = scalar_select 0, %s6, %s4
  // Predicated region
  $region2: #{_lambda_.8} parent=0 // pred_check
    _
  $region3: #{_lambda_.8} parent=0 // pred_check_branch
    %9 = sbr.rel (0) target = $region5
  $region4: #{_lambda_.8} parent=0 // pred_region
    _
  $region5: #{_lambda_.8} parent=0 // pred_fallthru
    _
  // Predicated region
  $region6: #{_lambda_.8} parent=0 // pred_check
    _
  $region7: #{_lambda_.8} parent=0 // pred_check_branch
    %11 = sbr.rel (0) target = $region9
  $region8: #{_lambda_.8} parent=0 // pred_region
    _
  $region9: #{_lambda_.8} parent=0 // pred_fallthru
    _
  // Predicated region
  $region10: #{_lambda_.8} parent=0 // pred_check
    _
  $region11: #{_lambda_.8} parent=0 // pred_check_branch
    %13 = sbr.rel (0) target = $region13
  $region12: #{_lambda_.8} parent=0 // pred_region
    _
  $region13: #{_lambda_.8} parent=0 // pred_fallthru
    _
  %p15 = scmp.eq.s32.totalorder 0, 0
  // Predicated region
  $region14: #{_lambda_.8} parent=0 // pred_check
    %p16 = pneg %p15
  $region15: #{_lambda_.8} parent=0 // pred_check_branch
    %18 = sbr.rel (%p16) target = $region17
  $region16: #{_lambda_.8} parent=0 // pred_region
    %19 = vst [vmem:[#allocation2] sm:$0xff] 0.0
    %20 = vst [vmem:[#allocation2 + $0x8] sm:$0xff] 0.0
    %21 = vst [vmem:[#allocation2 + $0x10] sm:$0xff] 0.0
    %22 = vst [vmem:[#allocation2 + $0x18] sm:$0xff] 0.0
    %23 = vst [vmem:[#allocation2 + $0x20] sm:$0xff] 0.0
    %24 = vst [vmem:[#allocation2 + $0x28] sm:$0xff] 0.0
    %25 = vst [vmem:[#allocation2 + $0x30] sm:$0xff] 0.0
    %26 = vst [vmem:[#allocation2 + $0x38] sm:$0xff] 0.0
    %27 = vst [vmem:[#allocation2 + $0x40] sm:$0xff] 0.0
    %28 = vst [vmem:[#allocation2 + $0x48] sm:$0xff] 0.0
    %29 = vst [vmem:[#allocation2 + $0x50] sm:$0xff] 0.0
    %30 = vst [vmem:[#allocation2 + $0x58] sm:$0xff] 0.0
    %31 = vst [vmem:[#allocation2 + $0x60] sm:$0xff] 0.0
    %32 = vst [vmem:[#allocation2 + $0x68] sm:$0xff] 0.0
    %33 = vst [vmem:[#allocation2 + $0x70] sm:$0xff] 0.0
    %34 = vst [vmem:[#allocation2 + $0x78] sm:$0xff] 0.0
    %35 = vst [vmem:[#allocation2 + $0x80] sm:$0xff] 0.0
    %36 = vst [vmem:[#allocation2 + $0x88] sm:$0xff] 0.0
    %37 = vst [vmem:[#allocation2 + $0x90] sm:$0xff] 0.0
    %38 = vst [vmem:[#allocation2 + $0x98] sm:$0xff] 0.0
    %39 = vst [vmem:[#allocation2 + $0xa0] sm:$0xff] 0.0
    %40 = vst [vmem:[#allocation2 + $0xa8] sm:$0xff] 0.0
    %41 = vst [vmem:[#allocation2 + $0xb0] sm:$0xff] 0.0
    %42 = vst [vmem:[#allocation2 + $0xb8] sm:$0xff] 0.0
    %43 = vst [vmem:[#allocation2 + $0xc0] sm:$0xff] 0.0
    %44 = vst [vmem:[#allocation2 + $0xc8] sm:$0xff] 0.0
    %45 = vst [vmem:[#allocation2 + $0xd0] sm:$0xff] 0.0
    %46 = vst [vmem:[#allocation2 + $0xd8] sm:$0xff] 0.0
    %47 = vst [vmem:[#allocation2 + $0xe0] sm:$0xff] 0.0
    %48 = vst [vmem:[#allocation2 + $0xe8] sm:$0xff] 0.0
    %49 = vst [vmem:[#allocation2 + $0xf0] sm:$0xff] 0.0
    %50 = vst [vmem:[#allocation2 + $0xf8] sm:$0xff] 0.0
  $region17: #{_lambda_.8} parent=0 // pred_fallthru
    _
  %v51 = vld [vmem:[#allocation2] sm:$0xff]
  %v52 = vld [vmem:[#allocation2 + $0x8] sm:$0xff]
  %v53 = vld [vmem:[#allocation2 + $0x10] sm:$0xff]
  %v54 = vld [vmem:[#allocation2 + $0x18] sm:$0xff]
  %v55 = vld [vmem:[#allocation2 + $0x20] sm:$0xff]
  %v56 = vld [vmem:[#allocation2 + $0x28] sm:$0xff]
  %v57 = vld [vmem:[#allocation2 + $0x30] sm:$0xff]
  %v58 = vld [vmem:[#allocation2 + $0x38] sm:$0xff]
  %v59 = vld [vmem:[#allocation2 + $0x40] sm:$0xff]
  %v60 = vld [vmem:[#allocation2 + $0x48] sm:$0xff]
  %v61 = vld [vmem:[#allocation2 + $0x50] sm:$0xff]
  %v62 = vld [vmem:[#allocation2 + $0x58] sm:$0xff]
  %v63 = vld [vmem:[#allocation2 + $0x60] sm:$0xff]
  %v64 = vld [vmem:[#allocation2 + $0x68] sm:$0xff]
  %v65 = vld [vmem:[#allocation2 + $0x70] sm:$0xff]
  %v66 = vld [vmem:[#allocation2 + $0x78] sm:$0xff]
  %v67 = vld [vmem:[#allocation2 + $0x80] sm:$0xff]
  %v68 = vld [vmem:[#allocation2 + $0x88] sm:$0xff]
  %v69 = vld [vmem:[#allocation2 + $0x90] sm:$0xff]
  %v70 = vld [vmem:[#allocation2 + $0x98] sm:$0xff]
  %v71 = vld [vmem:[#allocation2 + $0xa0] sm:$0xff]
  %v72 = vld [vmem:[#allocation2 + $0xa8] sm:$0xff]
  %v73 = vld [vmem:[#allocation2 + $0xb0] sm:$0xff]
  %v74 = vld [vmem:[#allocation2 + $0xb8] sm:$0xff]
  %v75 = vld [vmem:[#allocation2 + $0xc0] sm:$0xff]
  %v76 = vld [vmem:[#allocation2 + $0xc8] sm:$0xff]
  %v77 = vld [vmem:[#allocation2 + $0xd0] sm:$0xff]
  %v78 = vld [vmem:[#allocation2 + $0xd8] sm:$0xff]
  %v79 = vld [vmem:[#allocation2 + $0xe0] sm:$0xff]
  %v80 = vld [vmem:[#allocation2 + $0xe8] sm:$0xff]
  %v81 = vld [vmem:[#allocation2 + $0xf0] sm:$0xff]
  %v82 = vld [vmem:[#allocation2 + $0xf8] sm:$0xff]
  %v83 = vld [vmem:[%s0] sm:$0xff]
  %v84 = vld [vmem:[%s0 + $0x8] sm:$0xff]
  %v85 = vld [vmem:[%s0 + $0x10] sm:$0xff]
  %v86 = vld [vmem:[%s0 + $0x18] sm:$0xff]
  %v87 = vld [vmem:[%s0 + $0x20] sm:$0xff]
  %v88 = vld [vmem:[%s0 + $0x28] sm:$0xff]
  %v89 = vld [vmem:[%s0 + $0x30] sm:$0xff]
  %v90 = vld [vmem:[%s0 + $0x38] sm:$0xff]
  %v91 = vld [vmem:[%s0 + $0x40] sm:$0xff]
  %v92 = vld [vmem:[%s0 + $0x48] sm:$0xff]
  %v93 = vld [vmem:[%s0 + $0x50] sm:$0xff]
  %v94 = vld [vmem:[%s0 + $0x58] sm:$0xff]
  %v95 = vld [vmem:[%s0 + $0x60] sm:$0xff]
  %v96 = vld [vmem:[%s0 + $0x68] sm:$0xff]
  %v97 = vld [vmem:[%s0 + $0x70] sm:$0xff]
  %v98 = vld [vmem:[%s0 + $0x78] sm:$0xff]
  %v99 = vld [vmem:[%s0 + $0x80] sm:$0xff]
  %v100 = vld [vmem:[%s0 + $0x88] sm:$0xff]
  %v101 = vld [vmem:[%s0 + $0x90] sm:$0xff]
  %v102 = vld [vmem:[%s0 + $0x98] sm:$0xff]
  %v103 = vld [vmem:[%s0 + $0xa0] sm:$0xff]
  %v104 = vld [vmem:[%s0 + $0xa8] sm:$0xff]
  %v105 = vld [vmem:[%s0 + $0xb0] sm:$0xff]
  %v106 = vld [vmem:[%s0 + $0xb8] sm:$0xff]
  %v107 = vld [vmem:[%s0 + $0xc0] sm:$0xff]
  %v108 = vld [vmem:[%s0 + $0xc8] sm:$0xff]
  %v109 = vld [vmem:[%s0 + $0xd0] sm:$0xff]
  %v110 = vld [vmem:[%s0 + $0xd8] sm:$0xff]
  %v111 = vld [vmem:[%s0 + $0xe0] sm:$0xff]
  %v112 = vld [vmem:[%s0 + $0xe8] sm:$0xff]
  %v113 = vld [vmem:[%s0 + $0xf0] sm:$0xff]
  %v114 = vld [vmem:[%s0 + $0xf8] sm:$0xff]
  %v115 = vld [vmem:[%s1] sm:$0xf]
  %v116 = vld [vmem:[%s1 + $0x4] sm:$0xf]
  %v117 = vld [vmem:[%s1 + $0x8] sm:$0xf]
  %v118 = vld [vmem:[%s1 + $0xc] sm:$0xf]
  %v119 = vld [vmem:[%s1 + $0x10] sm:$0xf]
  %v120 = vld [vmem:[%s1 + $0x14] sm:$0xf]
  %v121 = vld [vmem:[%s1 + $0x18] sm:$0xf]
  %v122 = vld [vmem:[%s1 + $0x1c] sm:$0xf]
  %v123 = vld [vmem:[%s1 + $0x20] sm:$0xf]
  %v124 = vld [vmem:[%s1 + $0x24] sm:$0xf]
  %v125 = vld [vmem:[%s1 + $0x28] sm:$0xf]
  %v126 = vld [vmem:[%s1 + $0x2c] sm:$0xf]
  %v127 = vld [vmem:[%s1 + $0x30] sm:$0xf]
  %v128 = vld [vmem:[%s1 + $0x34] sm:$0xf]
  %v129 = vld [vmem:[%s1 + $0x38] sm:$0xf]
  %v130 = vld [vmem:[%s1 + $0x3c] sm:$0xf]
  %v131 = vld [vmem:[%s1 + $0x40] sm:$0xf]
  %v132 = vld [vmem:[%s1 + $0x44] sm:$0xf]
  %v133 = vld [vmem:[%s1 + $0x48] sm:$0xf]
  %v134 = vld [vmem:[%s1 + $0x4c] sm:$0xf]
  %v135 = vld [vmem:[%s1 + $0x50] sm:$0xf]
  %v136 = vld [vmem:[%s1 + $0x54] sm:$0xf]
  %v137 = vld [vmem:[%s1 + $0x58] sm:$0xf]
  %v138 = vld [vmem:[%s1 + $0x5c] sm:$0xf]
  %v139 = vld [vmem:[%s1 + $0x60] sm:$0xf]
  %v140 = vld [vmem:[%s1 + $0x64] sm:$0xf]
  %v141 = vld [vmem:[%s1 + $0x68] sm:$0xf]
  %v142 = vld [vmem:[%s1 + $0x6c] sm:$0xf]
  %v143 = vld [vmem:[%s1 + $0x70] sm:$0xf]
  %v144 = vld [vmem:[%s1 + $0x74] sm:$0xf]
  %v145 = vld [vmem:[%s1 + $0x78] sm:$0xf]
  %v146 = vld [vmem:[%s1 + $0x7c] sm:$0xf]
  %v179 = vunpack.c.l.b16 %v83
  %v180 = vunpack.c.h.b16 %v83
  %v181 = vunpack.c.l.b16 %v84
  %v182 = vunpack.c.h.b16 %v84
  %v183 = vunpack.c.l.b16 %v85
  %v184 = vunpack.c.h.b16 %v85
  %v185 = vunpack.c.l.b16 %v86
  %v186 = vunpack.c.h.b16 %v86
  %v187 = vunpack.c.l.b16 %v87
  %v188 = vunpack.c.h.b16 %v87
  %v189 = vunpack.c.l.b16 %v88
  %v190 = vunpack.c.h.b16 %v88
  %v191 = vunpack.c.l.b16 %v89
  %v192 = vunpack.c.h.b16 %v89
  %v193 = vunpack.c.l.b16 %v90
  %v194 = vunpack.c.h.b16 %v90
  %v195 = vunpack.c.l.b16 %v91
  %v196 = vunpack.c.h.b16 %v91
  %v197 = vunpack.c.l.b16 %v92
  %v198 = vunpack.c.h.b16 %v92
  %v199 = vunpack.c.l.b16 %v93
  %v200 = vunpack.c.h.b16 %v93
  %v201 = vunpack.c.l.b16 %v94
  %v202 = vunpack.c.h.b16 %v94
  %v203 = vunpack.c.l.b16 %v95
  %v204 = vunpack.c.h.b16 %v95
  %v205 = vunpack.c.l.b16 %v96
  %v206 = vunpack.c.h.b16 %v96
  %v207 = vunpack.c.l.b16 %v97
  %v208 = vunpack.c.h.b16 %v97
  %v209 = vunpack.c.l.b16 %v98
  %v210 = vunpack.c.h.b16 %v98
  %v211 = vunpack.c.l.b16 %v99
  %v212 = vunpack.c.h.b16 %v99
  %v213 = vunpack.c.l.b16 %v100
  %v214 = vunpack.c.h.b16 %v100
  %v215 = vunpack.c.l.b16 %v101
  %v216 = vunpack.c.h.b16 %v101
  %v217 = vunpack.c.l.b16 %v102
  %v218 = vunpack.c.h.b16 %v102
  %v219 = vunpack.c.l.b16 %v103
  %v220 = vunpack.c.h.b16 %v103
  %v221 = vunpack.c.l.b16 %v104
  %v222 = vunpack.c.h.b16 %v104
  %v223 = vunpack.c.l.b16 %v105
  %v224 = vunpack.c.h.b16 %v105
  %v225 = vunpack.c.l.b16 %v106
  %v226 = vunpack.c.h.b16 %v106
  %v227 = vunpack.c.l.b16 %v107
  %v228 = vunpack.c.h.b16 %v107
  %v229 = vunpack.c.l.b16 %v108
  %v230 = vunpack.c.h.b16 %v108
  %v231 = vunpack.c.l.b16 %v109
  %v232 = vunpack.c.h.b16 %v109
  %v233 = vunpack.c.l.b16 %v110
  %v234 = vunpack.c.h.b16 %v110
  %v235 = vunpack.c.l.b16 %v111
  %v236 = vunpack.c.h.b16 %v111
  %v237 = vunpack.c.l.b16 %v112
  %v238 = vunpack.c.h.b16 %v112
  %v239 = vunpack.c.l.b16 %v113
  %v240 = vunpack.c.h.b16 %v113
  %v241 = vunpack.c.l.b16 %v114
  %v242 = vunpack.c.h.b16 %v114
  %v243 = vpack.c.b16 %v181, %v179
  %v244 = vpack.c.b16 %v182, %v180
  %v245 = vpack.c.b16 %v185, %v183
  %v246 = vpack.c.b16 %v186, %v184
  %v247 = vpack.c.b16 %v189, %v187
  %v248 = vpack.c.b16 %v190, %v188
  %v249 = vpack.c.b16 %v193, %v191
  %v250 = vpack.c.b16 %v194, %v192
  %v251 = vpack.c.b16 %v197, %v195
  %v252 = vpack.c.b16 %v198, %v196
  %v253 = vpack.c.b16 %v201, %v199
  %v254 = vpack.c.b16 %v202, %v200
  %v255 = vpack.c.b16 %v205, %v203
  %v256 = vpack.c.b16 %v206, %v204
  %v257 = vpack.c.b16 %v209, %v207
  %v258 = vpack.c.b16 %v210, %v208
  %v259 = vpack.c.b16 %v213, %v211
  %v260 = vpack.c.b16 %v214, %v212
  %v261 = vpack.c.b16 %v217, %v215
  %v262 = vpack.c.b16 %v218, %v216
  %v263 = vpack.c.b16 %v221, %v219
  %v264 = vpack.c.b16 %v222, %v220
  %v265 = vpack.c.b16 %v225, %v223
  %v266 = vpack.c.b16 %v226, %v224
  %v267 = vpack.c.b16 %v229, %v227
  %v268 = vpack.c.b16 %v230, %v228
  %v269 = vpack.c.b16 %v233, %v231
  %v270 = vpack.c.b16 %v234, %v232
  %v271 = vpack.c.b16 %v237, %v235
  %v272 = vpack.c.b16 %v238, %v236
  %v273 = vpack.c.b16 %v241, %v239
  %v274 = vpack.c.b16 %v242, %v240
  %v339 = vunpack.c.l.b16 %v115
  %v340 = vunpack.c.l.b16 %v116
  %v341 = vunpack.c.l.b16 %v117
  %v342 = vunpack.c.l.b16 %v118
  %v343 = vunpack.c.l.b16 %v119
  %v344 = vunpack.c.l.b16 %v120
  %v345 = vunpack.c.l.b16 %v121
  %v346 = vunpack.c.l.b16 %v122
  %v347 = vunpack.c.l.b16 %v123
  %v348 = vunpack.c.l.b16 %v124
  %v349 = vunpack.c.l.b16 %v125
  %v350 = vunpack.c.l.b16 %v126
  %v351 = vunpack.c.l.b16 %v127
  %v352 = vunpack.c.l.b16 %v128
  %v353 = vunpack.c.l.b16 %v129
  %v354 = vunpack.c.l.b16 %v130
  %v355 = vunpack.c.l.b16 %v131
  %v356 = vunpack.c.l.b16 %v132
  %v357 = vunpack.c.l.b16 %v133
  %v358 = vunpack.c.l.b16 %v134
  %v359 = vunpack.c.l.b16 %v135
  %v360 = vunpack.c.l.b16 %v136
  %v361 = vunpack.c.l.b16 %v137
  %v362 = vunpack.c.l.b16 %v138
  %v363 = vunpack.c.l.b16 %v139
  %v364 = vunpack.c.l.b16 %v140
  %v365 = vunpack.c.l.b16 %v141
  %v366 = vunpack.c.l.b16 %v142
  %v367 = vunpack.c.l.b16 %v143
  %v368 = vunpack.c.l.b16 %v144
  %v369 = vunpack.c.l.b16 %v145
  %v370 = vunpack.c.l.b16 %v146
  %v371 = vpack.c.b16 %v340, %v339
  %v372 = vpack.c.b16 %v342, %v341
  %v373 = vpack.c.b16 %v344, %v343
  %v374 = vpack.c.b16 %v346, %v345
  %v375 = vpack.c.b16 %v348, %v347
  %v376 = vpack.c.b16 %v350, %v349
  %v377 = vpack.c.b16 %v352, %v351
  %v378 = vpack.c.b16 %v354, %v353
  %v379 = vpack.c.b16 %v356, %v355
  %v380 = vpack.c.b16 %v358, %v357
  %v381 = vpack.c.b16 %v360, %v359
  %v382 = vpack.c.b16 %v362, %v361
  %v383 = vpack.c.b16 %v364, %v363
  %v384 = vpack.c.b16 %v366, %v365
  %v385 = vpack.c.b16 %v368, %v367
  %v386 = vpack.c.b16 %v370, %v369
  %403 = vmatprep.subr.bf16.mxu0 0
  %404 = vmatpush1.bf16.msra.mxu0 %v371
  %405 = vmatprep.subr.bf16.mxu0 0
  %406 = vmatpush1.bf16.msra.mxu0 %v372
  %407 = vmatprep.subr.bf16.mxu0 0
  %408 = vmatpush1.bf16.msra.mxu0 %v373
  %409 = vmatprep.subr.bf16.mxu0 0
  %410 = vmatpush1.bf16.msra.mxu0 %v374
  %411 = vmatprep.subr.bf16.mxu0 0
  %412 = vmatpush1.bf16.msra.mxu0 %v375
  %413 = vmatprep.subr.bf16.mxu0 0
  %414 = vmatpush1.bf16.msra.mxu0 %v376
  %415 = vmatprep.subr.bf16.mxu0 0
  %416 = vmatpush1.bf16.msra.mxu0 %v377
  %417 = vmatprep.subr.bf16.mxu0 0
  %418 = vmatpush1.bf16.msra.mxu0 %v378
  %419 = vmatprep.subr.bf16.mxu0 0
  %420 = vmatpush1.bf16.msra.mxu0 %v379
  %421 = vmatprep.subr.bf16.mxu0 0
  %422 = vmatpush1.bf16.msra.mxu0 %v380
  %423 = vmatprep.subr.bf16.mxu0 0
  %424 = vmatpush1.bf16.msra.mxu0 %v381
  %425 = vmatprep.subr.bf16.mxu0 0
  %426 = vmatpush1.bf16.msra.mxu0 %v382
  %427 = vmatprep.subr.bf16.mxu0 0
  %428 = vmatpush1.bf16.msra.mxu0 %v383
  %429 = vmatprep.subr.bf16.mxu0 0
  %430 = vmatpush1.bf16.msra.mxu0 %v384
  %431 = vmatprep.subr.bf16.mxu0 0
  %432 = vmatpush1.bf16.msra.mxu0 %v385
  %433 = vmatprep.subr.bf16.mxu0 0
  %434 = vmatpush1.bf16.msra.mxu0 %v386
  %435 = vmatprep.mubr.bf16.mxu0 %v244
  %436 = vmatmul.mubr.bf16.gmra.mrb[0].mxu0 %v243
  %v437 = vpop.f32.mrb[0].mxu0
  %v438 = vadd.f32 0.0, %v437
  %v439 = vpop.f32.mrb[0].mxu0
  %v440 = vpop.f32.mrb[0].mxu0
  %v441 = vadd.f32 0.0, %v440
  %v442 = vpop.f32.mrb[0].mxu0
  %443 = vmatprep.mubr.bf16.mxu0 %v246
  %444 = vmatmul.mubr.bf16.gmra.mrb[0].mxu0 %v245
  %v445 = vpop.f32.mrb[0].mxu0
  %v446 = vadd.f32 0.0, %v445
  %v447 = vpop.f32.mrb[0].mxu0
  %v448 = vpop.f32.mrb[0].mxu0
  %v449 = vadd.f32 0.0, %v448
  %v450 = vpop.f32.mrb[0].mxu0
  %451 = vmatprep.mubr.bf16.mxu0 %v248
  %452 = vmatmul.mubr.bf16.gmra.mrb[0].mxu0 %v247
  %v453 = vpop.f32.mrb[0].mxu0
  %v454 = vadd.f32 0.0, %v453
  %v455 = vpop.f32.mrb[0].mxu0
  %v456 = vpop.f32.mrb[0].mxu0
  %v457 = vadd.f32 0.0, %v456
  %v458 = vpop.f32.mrb[0].mxu0
  %459 = vmatprep.mubr.bf16.mxu0 %v250
  %460 = vmatmul.mubr.bf16.gmra.mrb[0].mxu0 %v249
  %v461 = vpop.f32.mrb[0].mxu0
  %v462 = vadd.f32 0.0, %v461
  %v463 = vpop.f32.mrb[0].mxu0
  %v464 = vpop.f32.mrb[0].mxu0
  %v465 = vadd.f32 0.0, %v464
  %v466 = vpop.f32.mrb[0].mxu0
  %467 = vmatprep.mubr.bf16.mxu0 %v252
  %468 = vmatmul.mubr.bf16.gmra.mrb[0].mxu0 %v251
  %v469 = vpop.f32.mrb[0].mxu0
  %v470 = vadd.f32 0.0, %v469
  %v471 = vpop.f32.mrb[0].mxu0
  %v472 = vpop.f32.mrb[0].mxu0
  %v473 = vadd.f32 0.0, %v472
  %v474 = vpop.f32.mrb[0].mxu0
  %475 = vmatprep.mubr.bf16.mxu0 %v254
  %476 = vmatmul.mubr.bf16.gmra.mrb[0].mxu0 %v253
  %v477 = vpop.f32.mrb[0].mxu0
  %v478 = vadd.f32 0.0, %v477
  %v479 = vpop.f32.mrb[0].mxu0
  %v480 = vpop.f32.mrb[0].mxu0
  %v481 = vadd.f32 0.0, %v480
  %v482 = vpop.f32.mrb[0].mxu0
  %483 = vmatprep.mubr.bf16.mxu0 %v256
  %484 = vmatmul.mubr.bf16.gmra.mrb[0].mxu0 %v255
  %v485 = vpop.f32.mrb[0].mxu0
  %v486 = vadd.f32 0.0, %v485
  %v487 = vpop.f32.mrb[0].mxu0
  %v488 = vpop.f32.mrb[0].mxu0
  %v489 = vadd.f32 0.0, %v488
  %v490 = vpop.f32.mrb[0].mxu0
  %491 = vmatprep.mubr.bf16.mxu0 %v258
  %492 = vmatmul.mubr.bf16.gmra.mrb[0].mxu0 %v257
  %v493 = vpop.f32.mrb[0].mxu0
  %v494 = vadd.f32 0.0, %v493
  %v495 = vpop.f32.mrb[0].mxu0
  %v496 = vpop.f32.mrb[0].mxu0
  %v497 = vadd.f32 0.0, %v496
  %v498 = vpop.f32.mrb[0].mxu0
  %499 = vmatprep.mubr.bf16.mxu0 %v260
  %500 = vmatmul.mubr.bf16.gmra.mrb[0].mxu0 %v259
  %v501 = vpop.f32.mrb[0].mxu0
  %v502 = vadd.f32 0.0, %v501
  %v503 = vpop.f32.mrb[0].mxu0
  %v504 = vpop.f32.mrb[0].mxu0
  %v505 = vadd.f32 0.0, %v504
  %v506 = vpop.f32.mrb[0].mxu0
  %507 = vmatprep.mubr.bf16.mxu0 %v262
  %508 = vmatmul.mubr.bf16.gmra.mrb[0].mxu0 %v261
  %v509 = vpop.f32.mrb[0].mxu0
  %v510 = vadd.f32 0.0, %v509
  %v511 = vpop.f32.mrb[0].mxu0
  %v512 = vpop.f32.mrb[0].mxu0
  %v513 = vadd.f32 0.0, %v512
  %v514 = vpop.f32.mrb[0].mxu0
  %515 = vmatprep.mubr.bf16.mxu0 %v264
  %516 = vmatmul.mubr.bf16.gmra.mrb[0].mxu0 %v263
  %v517 = vpop.f32.mrb[0].mxu0
  %v518 = vadd.f32 0.0, %v517
  %v519 = vpop.f32.mrb[0].mxu0
  %v520 = vpop.f32.mrb[0].mxu0
  %v521 = vadd.f32 0.0, %v520
  %v522 = vpop.f32.mrb[0].mxu0
  %523 = vmatprep.mubr.bf16.mxu0 %v266
  %524 = vmatmul.mubr.bf16.gmra.mrb[0].mxu0 %v265
  %v525 = vpop.f32.mrb[0].mxu0
  %v526 = vadd.f32 0.0, %v525
  %v527 = vpop.f32.mrb[0].mxu0
  %v528 = vpop.f32.mrb[0].mxu0
  %v529 = vadd.f32 0.0, %v528
  %v530 = vpop.f32.mrb[0].mxu0
  %531 = vmatprep.mubr.bf16.mxu0 %v268
  %532 = vmatmul.mubr.bf16.gmra.mrb[0].mxu0 %v267
  %v533 = vpop.f32.mrb[0].mxu0
  %v534 = vadd.f32 0.0, %v533
  %v535 = vpop.f32.mrb[0].mxu0
  %v536 = vpop.f32.mrb[0].mxu0
  %v537 = vadd.f32 0.0, %v536
  %v538 = vpop.f32.mrb[0].mxu0
  %539 = vmatprep.mubr.bf16.mxu0 %v270
  %540 = vmatmul.mubr.bf16.gmra.mrb[0].mxu0 %v269
  %v541 = vpop.f32.mrb[0].mxu0
  %v542 = vadd.f32 0.0, %v541
  %v543 = vpop.f32.mrb[0].mxu0
  %v544 = vpop.f32.mrb[0].mxu0
  %v545 = vadd.f32 0.0, %v544
  %v546 = vpop.f32.mrb[0].mxu0
  %547 = vmatprep.mubr.bf16.mxu0 %v272
  %548 = vmatmul.mubr.bf16.gmra.mrb[0].mxu0 %v271
  %v549 = vpop.f32.mrb[0].mxu0
  %v550 = vadd.f32 0.0, %v549
  %v551 = vpop.f32.mrb[0].mxu0
  %v552 = vpop.f32.mrb[0].mxu0
  %v553 = vadd.f32 0.0, %v552
  %v554 = vpop.f32.mrb[0].mxu0
  %555 = vmatprep.mubr.bf16.mxu0 %v274
  %556 = vmatmul.mubr.bf16.gmra.mrb[0].mxu0 %v273
  %v557 = vpop.f32.mrb[0].mxu0
  %v558 = vadd.f32 0.0, %v557
  %v559 = vpop.f32.mrb[0].mxu0
  %v560 = vpop.f32.mrb[0].mxu0
  %v561 = vadd.f32 0.0, %v560
  %v562 = vpop.f32.mrb[0].mxu0
  %563 = vdwg.mxu0
  %v564 = vadd.f32 %v51, %v438
  %v565 = vadd.f32 %v52, %v441
  %v566 = vadd.f32 %v53, %v446
  %v567 = vadd.f32 %v54, %v449
  %v568 = vadd.f32 %v55, %v454
  %v569 = vadd.f32 %v56, %v457
  %v570 = vadd.f32 %v57, %v462
  %v571 = vadd.f32 %v58, %v465
  %v572 = vadd.f32 %v59, %v470
  %v573 = vadd.f32 %v60, %v473
  %v574 = vadd.f32 %v61, %v478
  %v575 = vadd.f32 %v62, %v481
  %v576 = vadd.f32 %v63, %v486
  %v577 = vadd.f32 %v64, %v489
  %v578 = vadd.f32 %v65, %v494
  %v579 = vadd.f32 %v66, %v497
  %v580 = vadd.f32 %v67, %v502
  %v581 = vadd.f32 %v68, %v505
  %v582 = vadd.f32 %v69, %v510
  %v583 = vadd.f32 %v70, %v513
  %v584 = vadd.f32 %v71, %v518
  %v585 = vadd.f32 %v72, %v521
  %v586 = vadd.f32 %v73, %v526
  %v587 = vadd.f32 %v74, %v529
  %v588 = vadd.f32 %v75, %v534
  %v589 = vadd.f32 %v76, %v537
  %v590 = vadd.f32 %v77, %v542
  %v591 = vadd.f32 %v78, %v545
  %v592 = vadd.f32 %v79, %v550
  %v593 = vadd.f32 %v80, %v553
  %v594 = vadd.f32 %v81, %v558
  %v595 = vadd.f32 %v82, %v561
  %596 = vst [vmem:[#allocation2] sm:$0xff] %v564
  %597 = vst [vmem:[#allocation2 + $0x8] sm:$0xff] %v565
  %598 = vst [vmem:[#allocation2 + $0x10] sm:$0xff] %v566
  %599 = vst [vmem:[#allocation2 + $0x18] sm:$0xff] %v567
  %600 = vst [vmem:[#allocation2 + $0x20] sm:$0xff] %v568
  %601 = vst [vmem:[#allocation2 + $0x28] sm:$0xff] %v569
  %602 = vst [vmem:[#allocation2 + $0x30] sm:$0xff] %v570
  %603 = vst [vmem:[#allocation2 + $0x38] sm:$0xff] %v571
  %604 = vst [vmem:[#allocation2 + $0x40] sm:$0xff] %v572
  %605 = vst [vmem:[#allocation2 + $0x48] sm:$0xff] %v573
  %606 = vst [vmem:[#allocation2 + $0x50] sm:$0xff] %v574
  %607 = vst [vmem:[#allocation2 + $0x58] sm:$0xff] %v575
  %608 = vst [vmem:[#allocation2 + $0x60] sm:$0xff] %v576
  %609 = vst [vmem:[#allocation2 + $0x68] sm:$0xff] %v577
  %610 = vst [vmem:[#allocation2 + $0x70] sm:$0xff] %v578
  %611 = vst [vmem:[#allocation2 + $0x78] sm:$0xff] %v579
  %612 = vst [vmem:[#allocation2 + $0x80] sm:$0xff] %v580
  %613 = vst [vmem:[#allocation2 + $0x88] sm:$0xff] %v581
  %614 = vst [vmem:[#allocation2 + $0x90] sm:$0xff] %v582
  %615 = vst [vmem:[#allocation2 + $0x98] sm:$0xff] %v583
  %616 = vst [vmem:[#allocation2 + $0xa0] sm:$0xff] %v584
  %617 = vst [vmem:[#allocation2 + $0xa8] sm:$0xff] %v585
  %618 = vst [vmem:[#allocation2 + $0xb0] sm:$0xff] %v586
  %619 = vst [vmem:[#allocation2 + $0xb8] sm:$0xff] %v587
  %620 = vst [vmem:[#allocation2 + $0xc0] sm:$0xff] %v588
  %621 = vst [vmem:[#allocation2 + $0xc8] sm:$0xff] %v589
  %622 = vst [vmem:[#allocation2 + $0xd0] sm:$0xff] %v590
  %623 = vst [vmem:[#allocation2 + $0xd8] sm:$0xff] %v591
  %624 = vst [vmem:[#allocation2 + $0xe0] sm:$0xff] %v592
  %625 = vst [vmem:[#allocation2 + $0xe8] sm:$0xff] %v593
  %626 = vst [vmem:[#allocation2 + $0xf0] sm:$0xff] %v594
  %627 = vst [vmem:[#allocation2 + $0xf8] sm:$0xff] %v595
  // Predicated region
  $region18: #{_lambda_.8} parent=0 // pred_check
    %p628 = pneg %p15
  $region19: #{_lambda_.8} parent=0 // pred_check_branch
    %630 = sbr.rel (%p628) target = $region21
  $region20: #{_lambda_.8} parent=0 // pred_region
    %v631 = vld [vmem:[#allocation2] sm:$0xff]
    %v632 = vld [vmem:[#allocation2 + $0x8] sm:$0xff]
    %v633 = vld [vmem:[#allocation2 + $0x10] sm:$0xff]
    %v634 = vld [vmem:[#allocation2 + $0x18] sm:$0xff]
    %v635 = vld [vmem:[#allocation2 + $0x20] sm:$0xff]
    %v636 = vld [vmem:[#allocation2 + $0x28] sm:$0xff]
    %v637 = vld [vmem:[#allocation2 + $0x30] sm:$0xff]
    %v638 = vld [vmem:[#allocation2 + $0x38] sm:$0xff]
    %v639 = vld [vmem:[#allocation2 + $0x40] sm:$0xff]
    %v640 = vld [vmem:[#allocation2 + $0x48] sm:$0xff]
    %v641 = vld [vmem:[#allocation2 + $0x50] sm:$0xff]
    %v642 = vld [vmem:[#allocation2 + $0x58] sm:$0xff]
    %v643 = vld [vmem:[#allocation2 + $0x60] sm:$0xff]
    %v644 = vld [vmem:[#allocation2 + $0x68] sm:$0xff]
    %v645 = vld [vmem:[#allocation2 + $0x70] sm:$0xff]
    %v646 = vld [vmem:[#allocation2 + $0x78] sm:$0xff]
    %v647 = vld [vmem:[#allocation2 + $0x80] sm:$0xff]
    %v648 = vld [vmem:[#allocation2 + $0x88] sm:$0xff]
    %v649 = vld [vmem:[#allocation2 + $0x90] sm:$0xff]
    %v650 = vld [vmem:[#allocation2 + $0x98] sm:$0xff]
    %v651 = vld [vmem:[#allocation2 + $0xa0] sm:$0xff]
    %v652 = vld [vmem:[#allocation2 + $0xa8] sm:$0xff]
    %v653 = vld [vmem:[#allocation2 + $0xb0] sm:$0xff]
    %v654 = vld [vmem:[#allocation2 + $0xb8] sm:$0xff]
    %v655 = vld [vmem:[#allocation2 + $0xc0] sm:$0xff]
    %v656 = vld [vmem:[#allocation2 + $0xc8] sm:$0xff]
    %v657 = vld [vmem:[#allocation2 + $0xd0] sm:$0xff]
    %v658 = vld [vmem:[#allocation2 + $0xd8] sm:$0xff]
    %v659 = vld [vmem:[#allocation2 + $0xe0] sm:$0xff]
    %v660 = vld [vmem:[#allocation2 + $0xe8] sm:$0xff]
    %v661 = vld [vmem:[#allocation2 + $0xf0] sm:$0xff]
    %v662 = vld [vmem:[#allocation2 + $0xf8] sm:$0xff]
    %v663 = vld [vmem:[%s2] sm:$0x1]
    %v665 = vlaneseq
    %v666 = vshrl.u32 %v665, 7
    %v667 = vsub.s32 0, %v666
    %v668 = vrot.slane %v663, %v667
    %v670 = vadd.f32 %v631, %v668
    %v671 = vadd.f32 %v632, %v668
    %v672 = vadd.f32 %v633, %v668
    %v673 = vadd.f32 %v634, %v668
    %v674 = vadd.f32 %v635, %v668
    %v675 = vadd.f32 %v636, %v668
    %v676 = vadd.f32 %v637, %v668
    %v677 = vadd.f32 %v638, %v668
    %v678 = vadd.f32 %v639, %v668
    %v679 = vadd.f32 %v640, %v668
    %v680 = vadd.f32 %v641, %v668
    %v681 = vadd.f32 %v642, %v668
    %v682 = vadd.f32 %v643, %v668
    %v683 = vadd.f32 %v644, %v668
    %v684 = vadd.f32 %v645, %v668
    %v685 = vadd.f32 %v646, %v668
    %v686 = vadd.f32 %v647, %v668
    %v687 = vadd.f32 %v648, %v668
    %v688 = vadd.f32 %v649, %v668
    %v689 = vadd.f32 %v650, %v668
    %v690 = vadd.f32 %v651, %v668
    %v691 = vadd.f32 %v652, %v668
    %v692 = vadd.f32 %v653, %v668
    %v693 = vadd.f32 %v654, %v668
    %v694 = vadd.f32 %v655, %v668
    %v695 = vadd.f32 %v656, %v668
    %v696 = vadd.f32 %v657, %v668
    %v697 = vadd.f32 %v658, %v668
    %v698 = vadd.f32 %v659, %v668
    %v699 = vadd.f32 %v660, %v668
    %v700 = vadd.f32 %v661, %v668
    %v701 = vadd.f32 %v662, %v668
    %vm702 = vcmp.ge.f32.partialorder %v670, 0.0
    %vm703 = vcmp.ge.f32.partialorder %v671, 0.0
    %vm704 = vcmp.ge.f32.partialorder %v672, 0.0
    %vm705 = vcmp.ge.f32.partialorder %v673, 0.0
    %vm706 = vcmp.ge.f32.partialorder %v674, 0.0
    %vm707 = vcmp.ge.f32.partialorder %v675, 0.0
    %vm708 = vcmp.ge.f32.partialorder %v676, 0.0
    %vm709 = vcmp.ge.f32.partialorder %v677, 0.0
    %vm710 = vcmp.ge.f32.partialorder %v678, 0.0
    %vm711 = vcmp.ge.f32.partialorder %v679, 0.0
    %vm712 = vcmp.ge.f32.partialorder %v680, 0.0
    %vm713 = vcmp.ge.f32.partialorder %v681, 0.0
    %vm714 = vcmp.ge.f32.partialorder %v682, 0.0
    %vm715 = vcmp.ge.f32.partialorder %v683, 0.0
    %vm716 = vcmp.ge.f32.partialorder %v684, 0.0
    %vm717 = vcmp.ge.f32.partialorder %v685, 0.0
    %vm718 = vcmp.ge.f32.partialorder %v686, 0.0
    %vm719 = vcmp.ge.f32.partialorder %v687, 0.0
    %vm720 = vcmp.ge.f32.partialorder %v688, 0.0
    %vm721 = vcmp.ge.f32.partialorder %v689, 0.0
    %vm722 = vcmp.ge.f32.partialorder %v690, 0.0
    %vm723 = vcmp.ge.f32.partialorder %v691, 0.0
    %vm724 = vcmp.ge.f32.partialorder %v692, 0.0
    %vm725 = vcmp.ge.f32.partialorder %v693, 0.0
    %vm726 = vcmp.ge.f32.partialorder %v694, 0.0
    %vm727 = vcmp.ge.f32.partialorder %v695, 0.0
    %vm728 = vcmp.ge.f32.partialorder %v696, 0.0
    %vm729 = vcmp.ge.f32.partialorder %v697, 0.0
    %vm730 = vcmp.ge.f32.partialorder %v698, 0.0
    %vm731 = vcmp.ge.f32.partialorder %v699, 0.0
    %vm732 = vcmp.ge.f32.partialorder %v700, 0.0
    %vm733 = vcmp.ge.f32.partialorder %v701, 0.0
    %v734 = vmul.f32 %v670, 0.2
    %v735 = vmul.f32 %v671, 0.2
    %v736 = vmul.f32 %v672, 0.2
    %v737 = vmul.f32 %v673, 0.2
    %v738 = vmul.f32 %v674, 0.2
    %v739 = vmul.f32 %v675, 0.2
    %v740 = vmul.f32 %v676, 0.2
    %v741 = vmul.f32 %v677, 0.2
    %v742 = vmul.f32 %v678, 0.2
    %v743 = vmul.f32 %v679, 0.2
    %v744 = vmul.f32 %v680, 0.2
    %v745 = vmul.f32 %v681, 0.2
    %v746 = vmul.f32 %v682, 0.2
    %v747 = vmul.f32 %v683, 0.2
    %v748 = vmul.f32 %v684, 0.2
    %v749 = vmul.f32 %v685, 0.2
    %v750 = vmul.f32 %v686, 0.2
    %v751 = vmul.f32 %v687, 0.2
    %v752 = vmul.f32 %v688, 0.2
    %v753 = vmul.f32 %v689, 0.2
    %v754 = vmul.f32 %v690, 0.2
    %v755 = vmul.f32 %v691, 0.2
    %v756 = vmul.f32 %v692, 0.2
    %v757 = vmul.f32 %v693, 0.2
    %v758 = vmul.f32 %v694, 0.2
    %v759 = vmul.f32 %v695, 0.2
    %v760 = vmul.f32 %v696, 0.2
    %v761 = vmul.f32 %v697, 0.2
    %v762 = vmul.f32 %v698, 0.2
    %v763 = vmul.f32 %v699, 0.2
    %v764 = vmul.f32 %v700, 0.2
    %v765 = vmul.f32 %v701, 0.2
    %v766 = vsel %vm702, %v670, %v734
    %v767 = vsel %vm703, %v671, %v735
    %v768 = vsel %vm704, %v672, %v736
    %v769 = vsel %vm705, %v673, %v737
    %v770 = vsel %vm706, %v674, %v738
    %v771 = vsel %vm707, %v675, %v739
    %v772 = vsel %vm708, %v676, %v740
    %v773 = vsel %vm709, %v677, %v741
    %v774 = vsel %vm710, %v678, %v742
    %v775 = vsel %vm711, %v679, %v743
    %v776 = vsel %vm712, %v680, %v744
    %v777 = vsel %vm713, %v681, %v745
    %v778 = vsel %vm714, %v682, %v746
    %v779 = vsel %vm715, %v683, %v747
    %v780 = vsel %vm716, %v684, %v748
    %v781 = vsel %vm717, %v685, %v749
    %v782 = vsel %vm718, %v686, %v750
    %v783 = vsel %vm719, %v687, %v751
    %v784 = vsel %vm720, %v688, %v752
    %v785 = vsel %vm721, %v689, %v753
    %v786 = vsel %vm722, %v690, %v754
    %v787 = vsel %vm723, %v691, %v755
    %v788 = vsel %vm724, %v692, %v756
    %v789 = vsel %vm725, %v693, %v757
    %v790 = vsel %vm726, %v694, %v758
    %v791 = vsel %vm727, %v695, %v759
    %v792 = vsel %vm728, %v696, %v760
    %v793 = vsel %vm729, %v697, %v761
    %v794 = vsel %vm730, %v698, %v762
    %v795 = vsel %vm731, %v699, %v763
    %v796 = vsel %vm732, %v700, %v764
    %v797 = vsel %vm733, %v701, %v765
    %v798 = vpack.c.bf16 %v767, %v766
    %v799 = vpack.c.bf16 %v769, %v768
    %v800 = vpack.c.bf16 %v771, %v770
    %v801 = vpack.c.bf16 %v773, %v772
    %v802 = vpack.c.bf16 %v775, %v774
    %v803 = vpack.c.bf16 %v777, %v776
    %v804 = vpack.c.bf16 %v779, %v778
    %v805 = vpack.c.bf16 %v781, %v780
    %v806 = vpack.c.bf16 %v783, %v782
    %v807 = vpack.c.bf16 %v785, %v784
    %v808 = vpack.c.bf16 %v787, %v786
    %v809 = vpack.c.bf16 %v789, %v788
    %v810 = vpack.c.bf16 %v791, %v790
    %v811 = vpack.c.bf16 %v793, %v792
    %v812 = vpack.c.bf16 %v795, %v794
    %v813 = vpack.c.bf16 %v797, %v796
    %v830 = vunpack.c.l.b16 %v798
    %v831 = vunpack.c.h.b16 %v798
    %v832 = vunpack.c.l.b16 %v799
    %v833 = vunpack.c.h.b16 %v799
    %v834 = vunpack.c.l.b16 %v800
    %v835 = vunpack.c.h.b16 %v800
    %v836 = vunpack.c.l.b16 %v801
    %v837 = vunpack.c.h.b16 %v801
    %v838 = vunpack.c.l.b16 %v802
    %v839 = vunpack.c.h.b16 %v802
    %v840 = vunpack.c.l.b16 %v803
    %v841 = vunpack.c.h.b16 %v803
    %v842 = vunpack.c.l.b16 %v804
    %v843 = vunpack.c.h.b16 %v804
    %v844 = vunpack.c.l.b16 %v805
    %v845 = vunpack.c.h.b16 %v805
    %v846 = vunpack.c.l.b16 %v806
    %v847 = vunpack.c.h.b16 %v806
    %v848 = vunpack.c.l.b16 %v807
    %v849 = vunpack.c.h.b16 %v807
    %v850 = vunpack.c.l.b16 %v808
    %v851 = vunpack.c.h.b16 %v808
    %v852 = vunpack.c.l.b16 %v809
    %v853 = vunpack.c.h.b16 %v809
    %v854 = vunpack.c.l.b16 %v810
    %v855 = vunpack.c.h.b16 %v810
    %v856 = vunpack.c.l.b16 %v811
    %v857 = vunpack.c.h.b16 %v811
    %v858 = vunpack.c.l.b16 %v812
    %v859 = vunpack.c.h.b16 %v812
    %v860 = vunpack.c.l.b16 %v813
    %v861 = vunpack.c.h.b16 %v813
    %v862 = vpack.c.b16 %v830, %v830
    %v863 = vpack.c.b16 %v831, %v831
    %v864 = vpack.c.b16 %v832, %v832
    %v865 = vpack.c.b16 %v833, %v833
    %v866 = vpack.c.b16 %v834, %v834
    %v867 = vpack.c.b16 %v835, %v835
    %v868 = vpack.c.b16 %v836, %v836
    %v869 = vpack.c.b16 %v837, %v837
    %v870 = vpack.c.b16 %v838, %v838
    %v871 = vpack.c.b16 %v839, %v839
    %v872 = vpack.c.b16 %v840, %v840
    %v873 = vpack.c.b16 %v841, %v841
    %v874 = vpack.c.b16 %v842, %v842
    %v875 = vpack.c.b16 %v843, %v843
    %v876 = vpack.c.b16 %v844, %v844
    %v877 = vpack.c.b16 %v845, %v845
    %v878 = vpack.c.b16 %v846, %v846
    %v879 = vpack.c.b16 %v847, %v847
    %v880 = vpack.c.b16 %v848, %v848
    %v881 = vpack.c.b16 %v849, %v849
    %v882 = vpack.c.b16 %v850, %v850
    %v883 = vpack.c.b16 %v851, %v851
    %v884 = vpack.c.b16 %v852, %v852
    %v885 = vpack.c.b16 %v853, %v853
    %v886 = vpack.c.b16 %v854, %v854
    %v887 = vpack.c.b16 %v855, %v855
    %v888 = vpack.c.b16 %v856, %v856
    %v889 = vpack.c.b16 %v857, %v857
    %v890 = vpack.c.b16 %v858, %v858
    %v891 = vpack.c.b16 %v859, %v859
    %v892 = vpack.c.b16 %v860, %v860
    %v893 = vpack.c.b16 %v861, %v861
    %926 = vst [vmem:[%s3] sm:$0xf] %v862
    %927 = vst [vmem:[%s3 + $0x4] sm:$0xf] %v863
    %928 = vst [vmem:[%s3 + $0x8] sm:$0xf] %v864
    %929 = vst [vmem:[%s3 + $0xc] sm:$0xf] %v865
    %930 = vst [vmem:[%s3 + $0x10] sm:$0xf] %v866
    %931 = vst [vmem:[%s3 + $0x14] sm:$0xf] %v867
    %932 = vst [vmem:[%s3 + $0x18] sm:$0xf] %v868
    %933 = vst [vmem:[%s3 + $0x1c] sm:$0xf] %v869
    %934 = vst [vmem:[%s3 + $0x20] sm:$0xf] %v870
    %935 = vst [vmem:[%s3 + $0x24] sm:$0xf] %v871
    %936 = vst [vmem:[%s3 + $0x28] sm:$0xf] %v872
    %937 = vst [vmem:[%s3 + $0x2c] sm:$0xf] %v873
    %938 = vst [vmem:[%s3 + $0x30] sm:$0xf] %v874
    %939 = vst [vmem:[%s3 + $0x34] sm:$0xf] %v875
    %940 = vst [vmem:[%s3 + $0x38] sm:$0xf] %v876
    %941 = vst [vmem:[%s3 + $0x3c] sm:$0xf] %v877
    %942 = vst [vmem:[%s3 + $0x40] sm:$0xf] %v878
    %943 = vst [vmem:[%s3 + $0x44] sm:$0xf] %v879
    %944 = vst [vmem:[%s3 + $0x48] sm:$0xf] %v880
    %945 = vst [vmem:[%s3 + $0x4c] sm:$0xf] %v881
    %946 = vst [vmem:[%s3 + $0x50] sm:$0xf] %v882
    %947 = vst [vmem:[%s3 + $0x54] sm:$0xf] %v883
    %948 = vst [vmem:[%s3 + $0x58] sm:$0xf] %v884
    %949 = vst [vmem:[%s3 + $0x5c] sm:$0xf] %v885
    %950 = vst [vmem:[%s3 + $0x60] sm:$0xf] %v886
    %951 = vst [vmem:[%s3 + $0x64] sm:$0xf] %v887
    %952 = vst [vmem:[%s3 + $0x68] sm:$0xf] %v888
    %953 = vst [vmem:[%s3 + $0x6c] sm:$0xf] %v889
    %954 = vst [vmem:[%s3 + $0x70] sm:$0xf] %v890
    %955 = vst [vmem:[%s3 + $0x74] sm:$0xf] %v891
    %956 = vst [vmem:[%s3 + $0x78] sm:$0xf] %v892
    %957 = vst [vmem:[%s3 + $0x7c] sm:$0xf] %v893
  $region21: #{_lambda_.8} parent=0 // pred_fallthru
    _
  // Predicated region
  $region22: #{_lambda_.8} parent=0 // pred_check
    _
  $region23: #{_lambda_.8} parent=0 // pred_check_branch
    %959 = sbr.rel (0) target = $region25
  $region24: #{_lambda_.8} parent=0 // pred_region
    _
  $region25: #{_lambda_.8} parent=0 // pred_fallthru
    _
  // Predicated region
  $region26: #{_lambda_.8} parent=0 // pred_check
    _
  $region27: #{_lambda_.8} parent=0 // pred_check_branch
    %961 = sbr.rel (0) target = $region29
  $region28: #{_lambda_.8} parent=0 // pred_region
    _
  $region29: #{_lambda_.8} parent=0 // pred_fallthru
    _

// kernel: _lambda_.10
$region0: #{_lambda_.10}
  #allocation0 [shape = 'u32[]', space=smem, size = 0x4, offset = 0x4, fixed_abs, tag = 'smem constant byte address 0x4 - core index']
  #allocation1 [shape = 'u32[144,128]{1,0:T(1,128)}', space=vmem, size = 0x12000, scoped, tag = 'internal scratch']
  %s0 = inlined_call_operand.vmem [shape: f32[56,128], index: 0, kind: input, shape index: {}]
  %s1 = inlined_call_operand.vmem [shape: f32[1,128], index: 1, kind: input, shape index: {}]
  %s2 = inlined_call_operand.vmem [shape: f32[1,128], index: 2, kind: input, shape index: {}]
  %s3 = inlined_call_operand.vmem [shape: bf16[56,128], index: 3, kind: output, shape index: {}]
  %s4 = sld [smem:[#allocation0]]
  $region22: #{_lambda_.10} parent=0
    _
  %s6 = ssub.s32 1, %s4
  %s7 = scalar_select 0, %s6, %s4
  // Predicated region
  $region2: #{_lambda_.10} parent=0 // pred_check
    _
  $region3: #{_lambda_.10} parent=0 // pred_check_branch
    %9 = sbr.rel (0) target = $region5
  $region4: #{_lambda_.10} parent=0 // pred_region
    _
  $region5: #{_lambda_.10} parent=0 // pred_fallthru
    _
  // Predicated region
  $region6: #{_lambda_.10} parent=0 // pred_check
    _
  $region7: #{_lambda_.10} parent=0 // pred_check_branch
    %11 = sbr.rel (0) target = $region9
  $region8: #{_lambda_.10} parent=0 // pred_region
    _
  $region9: #{_lambda_.10} parent=0 // pred_fallthru
    _
  // Predicated region
  $region10: #{_lambda_.10} parent=0 // pred_check
    _
  $region11: #{_lambda_.10} parent=0 // pred_check_branch
    %13 = sbr.rel (0) target = $region13
  $region12: #{_lambda_.10} parent=0 // pred_region
    _
  $region13: #{_lambda_.10} parent=0 // pred_fallthru
    _
  %v14 = vld [vmem:[%s0] sm:$0xff]
  %v15 = vld [vmem:[%s0 + $0x8] sm:$0xff]
  %v16 = vld [vmem:[%s0 + $0x10] sm:$0xff]
  %v17 = vld [vmem:[%s0 + $0x18] sm:$0xff]
  %v18 = vld [vmem:[%s0 + $0x20] sm:$0xff]
  %v19 = vld [vmem:[%s0 + $0x28] sm:$0xff]
  %v20 = vld [vmem:[%s0 + $0x30] sm:$0xff]
  %v21 = vld [vmem:[%s1] sm:$0x1]
  %v23 = vlaneseq
  %v24 = vshrl.u32 %v23, 7
  %v25 = vsub.s32 0, %v24
  %v26 = vrot.slane %v21, %v25
  %v28 = vmul.f32 %v14, %v26
  %v29 = vmul.f32 %v15, %v26
  %v30 = vmul.f32 %v16, %v26
  %v31 = vmul.f32 %v17, %v26
  %v32 = vmul.f32 %v18, %v26
  %v33 = vmul.f32 %v19, %v26
  %v34 = vmul.f32 %v20, %v26
  %v35 = vld [vmem:[%s2] sm:$0x1]
  %v37 = vlaneseq
  %v38 = vshrl.u32 %v37, 7
  %v39 = vsub.s32 0, %v38
  %v40 = vrot.slane %v35, %v39
  %v42 = vadd.f32 %v28, %v40
  %v43 = vadd.f32 %v29, %v40
  %v44 = vadd.f32 %v30, %v40
  %v45 = vadd.f32 %v31, %v40
  %v46 = vadd.f32 %v32, %v40
  %v47 = vadd.f32 %v33, %v40
  %v48 = vadd.f32 %v34, %v40
  %vm49 = vcmp.ge.f32.partialorder %v42, 0.0
  %vm50 = vcmp.ge.f32.partialorder %v43, 0.0
  %vm51 = vcmp.ge.f32.partialorder %v44, 0.0
  %vm52 = vcmp.ge.f32.partialorder %v45, 0.0
  %vm53 = vcmp.ge.f32.partialorder %v46, 0.0
  %vm54 = vcmp.ge.f32.partialorder %v47, 0.0
  %vm55 = vcmp.ge.f32.partialorder %v48, 0.0
  %v56 = vmul.f32 %v42, 0.2
  %v57 = vmul.f32 %v43, 0.2
  %v58 = vmul.f32 %v44, 0.2
  %v59 = vmul.f32 %v45, 0.2
  %v60 = vmul.f32 %v46, 0.2
  %v61 = vmul.f32 %v47, 0.2
  %v62 = vmul.f32 %v48, 0.2
  %v63 = vsel %vm49, %v42, %v56
  %v64 = vsel %vm50, %v43, %v57
  %v65 = vsel %vm51, %v44, %v58
  %v66 = vsel %vm52, %v45, %v59
  %v67 = vsel %vm53, %v46, %v60
  %v68 = vsel %vm54, %v47, %v61
  %v69 = vsel %vm55, %v48, %v62
  %v70 = vpack.c.bf16 %v64, %v63
  %v71 = vpack.c.bf16 %v66, %v65
  %v72 = vpack.c.bf16 %v68, %v67
  %v73 = vpack.c.bf16 %v69, %v69
  %v78 = vunpack.c.l.b16 %v70
  %v79 = vunpack.c.h.b16 %v70
  %v80 = vunpack.c.l.b16 %v71
  %v81 = vunpack.c.h.b16 %v71
  %v82 = vunpack.c.l.b16 %v72
  %v83 = vunpack.c.h.b16 %v72
  %v84 = vunpack.c.l.b16 %v73
  %v85 = vpack.c.b16 %v78, %v78
  %v86 = vpack.c.b16 %v79, %v79
  %v87 = vpack.c.b16 %v80, %v80
  %v88 = vpack.c.b16 %v81, %v81
  %v89 = vpack.c.b16 %v82, %v82
  %v90 = vpack.c.b16 %v83, %v83
  %v91 = vpack.c.b16 %v84, %v84
  %99 = vst [vmem:[%s3] sm:$0xf] %v85
  %100 = vst [vmem:[%s3 + $0x4] sm:$0xf] %v86
  %101 = vst [vmem:[%s3 + $0x8] sm:$0xf] %v87
  %102 = vst [vmem:[%s3 + $0xc] sm:$0xf] %v88
  %103 = vst [vmem:[%s3 + $0x10] sm:$0xf] %v89
  %104 = vst [vmem:[%s3 + $0x14] sm:$0xf] %v90
  %105 = vst [vmem:[%s3 + $0x18] sm:$0xf] %v91
  // Predicated region
  $region14: #{_lambda_.10} parent=0 // pred_check
    _
  $region15: #{_lambda_.10} parent=0 // pred_check_branch
    %107 = sbr.rel (0) target = $region17
  $region16: #{_lambda_.10} parent=0 // pred_region
    _
  $region17: #{_lambda_.10} parent=0 // pred_fallthru
    _
  // Predicated region
  $region18: #{_lambda_.10} parent=0 // pred_check
    _
  $region19: #{_lambda_.10} parent=0 // pred_check_branch
    %109 = sbr.rel (0) target = $region21
  $region20: #{_lambda_.10} parent=0 // pred_region
    _
  $region21: #{_lambda_.10} parent=0 // pred_fallthru
    _

// kernel: _lambda_.9
$region0: #{_lambda_.9}
  #allocation0 [shape = 'u32[]', space=smem, size = 0x4, offset = 0x4, fixed_abs, tag = 'smem constant byte address 0x4 - core index']
  #allocation1 [shape = 'u32[144,128]{1,0:T(1,128)}', space=vmem, size = 0x12000, scoped, tag = 'internal scratch']
  #allocation2 [shape = 'f32[56,128]{1,0:T(8,128)}', space=vmem, size = 0x7000, scoped, tag = 'scratch operand']
  %s0 = inlined_call_operand.vmem [shape: bf16[56,8192], index: 0, kind: input, shape index: {}]
  %s1 = inlined_call_operand.vmem [shape: bf16[8192,128], index: 1, kind: input, shape index: {}]
  %s2 = inlined_call_operand.vmem [shape: f32[1,128], index: 2, kind: input, shape index: {}]
  %s3 = inlined_call_operand.vmem [shape: f32[56,128], index: 3, kind: output, shape index: {0}]
  %s4 = inlined_call_operand.vmem [shape: f32[1,8,128], index: 4, kind: output, shape index: {1}]
  %5 = xla_tuple %s3, %s4
  %s6 = sld [smem:[#allocation0]]
  $region84: #{_lambda_.9} parent=0
    _
  %s8 = ssub.s32 1, %s6
  %s9 = scalar_select 0, %s8, %s6
  $region1: #{_lambda_.9} parent=0
    #allocation3 [shape = 'u8[458752]{0}', space=vmem, size = 0x70000, scoped, tag = 'input window, operand 0']
    loop: start=0, step=1, limit=6
    $region2: #{_lambda_.9} parent=1 // loop_pre_header
      _
    $region3: #{_lambda_.9} parent=1 // loop_header
      %s11 = sphi 0, %s15
      %p12 = scmp.ge.s32.totalorder %s11, 6
      %s18 = sphi 0, %s30
      %s19 = sphi 0, %s26
      %s20 = sphi 0, %s18
      %s21 = sphi 0, %s19
      %s22 = sphi 0, %s20
      %s23 = sphi 0, %s21
      %s35 = sphi 0, %s37
      %s38 = sphi 0, %s35
      %s39 = sphi 0, %s38
      %s55 = sphi 0, %s39
      %s61 = sphi 0, %s63
      %s64 = sphi 0, %s61
      %s65 = sphi 0, %s64
      %s81 = sphi 0, %s65
      %s85 = sphi 0, %s85
      %s87 = sphi 0, %s85
      %s88 = sphi 0, %s87
      %s102 = sphi 0, %s88
      %s108 = sphi 0, %s110
      %s111 = sphi 0, %s108
      %s112 = sphi 0, %s111
      %s128 = sphi 0, %s112
      %s134 = sphi 0, %s136
      %s137 = sphi 0, %s134
      %s138 = sphi 0, %s137
      %s154 = sphi 0, %s138
    $region4: #{_lambda_.9} parent=1 // loop_header_branch
      %14 = sbr.rel (%p12) target = $region8
    $region5: #{_lambda_.9} parent=1 // loop_body
      %s16 = ssub.s32 %s11, 1
      %s17 = ssub.s32 %s11, 2
      %s24 = sadd.s32 1, %s19
      %p25 = scmp.ge.s32.totalorder %s24, 4
      %s26 = scalar_select %p25, 0, %s24
      %s27 = sadd.s32 1, %s18
      %s28 = scalar_select %p25, %s27, %s18
      %p29 = scmp.ge.s32.totalorder %s28, 1
      %s30 = scalar_select %p29, 0, %s28
      %s31 = ssub.s32 %s18, %s30
      %s32 = ssub.s32 %s19, %s26
      %s33 = sor.u32 %s31, %s32
      %p34 = scmp.eq.s32.totalorder %s33, 0
      %s36 = sadd.s32 %s35, 1
      %s37 = scalar_select %p34, %s35, %s36
      %p40 = pneg %p34
      %p41 = scmp.eq.s32.totalorder %s11, 3
      %p42 = por %p40, %p41
      %p43 = scmp.ne.s32.totalorder %s35, %s38
      %p44 = scmp.eq.s32.totalorder %s11, 0
      %p45 = por %p43, %p44
      %p46 = scmp.ne.s32.totalorder %s35, %s38
      %p47 = scmp.eq.s32.totalorder %s16, 3
      %p48 = por %p46, %p47
      %p49 = scmp.ne.s32.totalorder %s38, %s39
      %p50 = scmp.eq.s32.totalorder %s16, 0
      %p51 = por %p49, %p50
      %p52 = scmp.ne.s32.totalorder %s38, %s39
      %p53 = scmp.eq.s32.totalorder %s17, 3
      %p54 = por %p52, %p53
      %p56 = scmp.ne.s32.totalorder %s39, %s55
      %p57 = scmp.eq.s32.totalorder %s17, 0
      %p58 = por %p56, %p57
      %s59 = ssub.s32 %s19, %s26
      %p60 = scmp.eq.s32.totalorder %s59, 0
      %s62 = sadd.s32 %s61, 1
      %s63 = scalar_select %p60, %s61, %s62
      %p66 = pneg %p60
      %p67 = scmp.eq.s32.totalorder %s11, 3
      %p68 = por %p66, %p67
      %p69 = scmp.ne.s32.totalorder %s61, %s64
      %p70 = scmp.eq.s32.totalorder %s11, 0
      %p71 = por %p69, %p70
      %p72 = scmp.ne.s32.totalorder %s61, %s64
      %p73 = scmp.eq.s32.totalorder %s16, 3
      %p74 = por %p72, %p73
      %p75 = scmp.ne.s32.totalorder %s64, %s65
      %p76 = scmp.eq.s32.totalorder %s16, 0
      %p77 = por %p75, %p76
      %p78 = scmp.ne.s32.totalorder %s64, %s65
      %p79 = scmp.eq.s32.totalorder %s17, 3
      %p80 = por %p78, %p79
      %p82 = scmp.ne.s32.totalorder %s65, %s81
      %p83 = scmp.eq.s32.totalorder %s17, 0
      %p84 = por %p82, %p83
      %s86 = sadd.s32 %s85, 1
      %p89 = scmp.eq.s32.totalorder %s11, 3
      %p90 = scmp.ne.s32.totalorder %s85, %s87
      %p91 = scmp.eq.s32.totalorder %s11, 0
      %p92 = por %p90, %p91
      %p93 = scmp.ne.s32.totalorder %s85, %s87
      %p94 = scmp.eq.s32.totalorder %s16, 3
      %p95 = por %p93, %p94
      %p96 = scmp.ne.s32.totalorder %s87, %s88
      %p97 = scmp.eq.s32.totalorder %s16, 0
      %p98 = por %p96, %p97
      %p99 = scmp.ne.s32.totalorder %s87, %s88
      %p100 = scmp.eq.s32.totalorder %s17, 3
      %p101 = por %p99, %p100
      %p103 = scmp.ne.s32.totalorder %s88, %s102
      %p104 = scmp.eq.s32.totalorder %s17, 0
      %p105 = por %p103, %p104
      %s106 = ssub.s32 %s18, %s30
      %p107 = scmp.eq.s32.totalorder %s106, 0
      %s109 = sadd.s32 %s108, 1
      %s110 = scalar_select %p107, %s108, %s109
      %p113 = pneg %p107
      %p114 = scmp.eq.s32.totalorder %s11, 3
      %p115 = por %p113, %p114
      %p116 = scmp.ne.s32.totalorder %s108, %s111
      %p117 = scmp.eq.s32.totalorder %s11, 0
      %p118 = por %p116, %p117
      %p119 = scmp.ne.s32.totalorder %s108, %s111
      %p120 = scmp.eq.s32.totalorder %s16, 3
      %p121 = por %p119, %p120
      %p122 = scmp.ne.s32.totalorder %s111, %s112
      %p123 = scmp.eq.s32.totalorder %s16, 0
      %p124 = por %p122, %p123
      %p125 = scmp.ne.s32.totalorder %s111, %s112
      %p126 = scmp.eq.s32.totalorder %s17, 3
      %p127 = por %p125, %p126
      %p129 = scmp.ne.s32.totalorder %s112, %s128
      %p130 = scmp.eq.s32.totalorder %s17, 0
      %p131 = por %p129, %p130
      %s132 = ssub.s32 %s18, %s30
      %p133 = scmp.eq.s32.totalorder %s132, 0
      %s135 = sadd.s32 %s134, 1
      %s136 = scalar_select %p133, %s134, %s135
      %p139 = pneg %p133
      %p140 = scmp.eq.s32.totalorder %s11, 3
      %p141 = por %p139, %p140
      %p142 = scmp.ne.s32.totalorder %s134, %s137
      %p143 = scmp.eq.s32.totalorder %s11, 0
      %p144 = por %p142, %p143
      %p145 = scmp.ne.s32.totalorder %s134, %s137
      %p146 = scmp.eq.s32.totalorder %s16, 3
      %p147 = por %p145, %p146
      %p148 = scmp.ne.s32.totalorder %s137, %s138
      %p149 = scmp.eq.s32.totalorder %s16, 0
      %p150 = por %p148, %p149
      %p151 = scmp.ne.s32.totalorder %s137, %s138
      %p152 = scmp.eq.s32.totalorder %s17, 3
      %p153 = por %p151, %p152
      %p155 = scmp.ne.s32.totalorder %s138, %s154
      %p156 = scmp.eq.s32.totalorder %s17, 0
      %p157 = por %p155, %p156
      %p158 = scmp.le.s32.totalorder 1, %s11
      %p159 = scmp.lt.s32.totalorder %s11, 5
      %p160 = pnand %p158, %p159
      %p161 = pneg %p160
      // Predicated region
      $region9: #{_lambda_.9} parent=5 // pred_check
        _
      $region10: #{_lambda_.9} parent=5 // pred_check_branch
        %163 = sbr.rel (%p160) target = $region12
      $region11: #{_lambda_.9} parent=5 // pred_region
        %s164 = ssub.s32 %s11, 1
        // Predicated region
        $region13: #{_lambda_.9} parent=11 // pred_check
          %p165 = pneg %p98
        $region14: #{_lambda_.9} parent=11 // pred_check_branch
          %167 = sbr.rel (%p165) target = $region16
        $region15: #{_lambda_.9} parent=11 // pred_region
          _
        $region16: #{_lambda_.9} parent=11 // pred_fallthru
          _
      $region12: #{_lambda_.9} parent=5 // pred_fallthru
        _
      %p168 = scmp.lt.s32.totalorder %s11, 4
      // Predicated region
      $region17: #{_lambda_.9} parent=5 // pred_check
        %p169 = pneg %p168
      $region18: #{_lambda_.9} parent=5 // pred_check_branch
        %171 = sbr.rel (%p169) target = $region20
      $region19: #{_lambda_.9} parent=5 // pred_region
        // Predicated region
        $region21: #{_lambda_.9} parent=19 // pred_check
          %p172 = pneg %p45
        $region22: #{_lambda_.9} parent=19 // pred_check_branch
          %174 = sbr.rel (%p172) target = $region24
        $region23: #{_lambda_.9} parent=19 // pred_region
          %s175 = sand.u32 %s35, 1
          %s176 = sand.u32 %s35, 1
          %s177 = smul.addr %s176, 448
          %s178 = scalar_lea.vmem [#allocation3], %s177
          %s179 = smul.u32 7, %s18
          %s180 = smul.u32 16, %s19
          %s181 = smul.addr %s179, 64
          %s182 = sadd.s32 %s180, %s181
          %s183 = smul.addr %s182, 4
          %s184 = scalar_lea.vmem %s0, %s183
          // Predicated region
          $region25: #{_lambda_.9} parent=23 // pred_check
            _
          $region26: #{_lambda_.9} parent=23 // pred_check_branch
            %186 = sbr.rel (0) target = $region28
          $region27: #{_lambda_.9} parent=23 // pred_region
            // Predicated region
            $region29: #{_lambda_.9} parent=27 // pred_check
              _
            $region30: #{_lambda_.9} parent=27 // pred_check_branch
              %188 = sbr.rel (0) target = $region32
            $region31: #{_lambda_.9} parent=27 // pred_region
              loop: start=0, step=1, limit=1
              $region33: #{_lambda_.9} parent=31 // loop_pre_header
                _
              $region34: #{_lambda_.9} parent=31 // loop_header
                %s190 = sphi 0, %s194
                %p191 = scmp.ge.s32.totalorder %s190, 1
                %s195 = sphi %s184, %s184
                %s196 = sphi %s178, %s178
              $region35: #{_lambda_.9} parent=31 // loop_header_branch
                %193 = sbr.rel (%p191) target = $region39
              $region36: #{_lambda_.9} parent=31 // loop_body
                %v197 = vld [vmem:[%s195] sm:$0xff]
                %198 = vst [vmem:[%s196] sm:$0xff] %v197
                %v199 = vld [vmem:[%s195 + $0x8] sm:$0xff]
                %200 = vst [vmem:[%s196 + $0x8] sm:$0xff] %v199
                %v201 = vld [vmem:[%s195 + $0x10] sm:$0xff]
                %202 = vst [vmem:[%s196 + $0x10] sm:$0xff] %v201
                %v203 = vld [vmem:[%s195 + $0x18] sm:$0xff]
                %204 = vst [vmem:[%s196 + $0x18] sm:$0xff] %v203
                %v205 = vld [vmem:[%s195 + $0x20] sm:$0xff]
                %206 = vst [vmem:[%s196 + $0x20] sm:$0xff] %v205
                %v207 = vld [vmem:[%s195 + $0x28] sm:$0xff]
                %208 = vst [vmem:[%s196 + $0x28] sm:$0xff] %v207
                %v209 = vld [vmem:[%s195 + $0x30] sm:$0xff]
                %210 = vst [vmem:[%s196 + $0x30] sm:$0xff] %v209
                %v211 = vld [vmem:[%s195 + $0x38] sm:$0xff]
                %212 = vst [vmem:[%s196 + $0x38] sm:$0xff] %v211
                %v213 = vld [vmem:[%s195 + $0x100] sm:$0xff]
                %214 = vst [vmem:[%s196 + $0x40] sm:$0xff] %v213
                %v215 = vld [vmem:[%s195 + $0x108] sm:$0xff]
                %216 = vst [vmem:[%s196 + $0x48] sm:$0xff] %v215
                %v217 = vld [vmem:[%s195 + $0x110] sm:$0xff]
                %218 = vst [vmem:[%s196 + $0x50] sm:$0xff] %v217
                %v219 = vld [vmem:[%s195 + $0x118] sm:$0xff]
                %220 = vst [vmem:[%s196 + $0x58] sm:$0xff] %v219
                %v221 = vld [vmem:[%s195 + $0x120] sm:$0xff]
                %222 = vst [vmem:[%s196 + $0x60] sm:$0xff] %v221
                %v223 = vld [vmem:[%s195 + $0x128] sm:$0xff]
                %224 = vst [vmem:[%s196 + $0x68] sm:$0xff] %v223
                %v225 = vld [vmem:[%s195 + $0x130] sm:$0xff]
                %226 = vst [vmem:[%s196 + $0x70] sm:$0xff] %v225
                %v227 = vld [vmem:[%s195 + $0x138] sm:$0xff]
                %228 = vst [vmem:[%s196 + $0x78] sm:$0xff] %v227
                %v229 = vld [vmem:[%s195 + $0x200] sm:$0xff]
                %230 = vst [vmem:[%s196 + $0x80] sm:$0xff] %v229
                %v231 = vld [vmem:[%s195 + $0x208] sm:$0xff]
                %232 = vst [vmem:[%s196 + $0x88] sm:$0xff] %v231
                %v233 = vld [vmem:[%s195 + $0x210] sm:$0xff]
                %234 = vst [vmem:[%s196 + $0x90] sm:$0xff] %v233
                %v235 = vld [vmem:[%s195 + $0x218] sm:$0xff]
                %236 = vst [vmem:[%s196 + $0x98] sm:$0xff] %v235
                %v237 = vld [vmem:[%s195 + $0x220] sm:$0xff]
                %238 = vst [vmem:[%s196 + $0xa0] sm:$0xff] %v237
                %v239 = vld [vmem:[%s195 + $0x228] sm:$0xff]
                %240 = vst [vmem:[%s196 + $0xa8] sm:$0xff] %v239
                %v241 = vld [vmem:[%s195 + $0x230] sm:$0xff]
                %242 = vst [vmem:[%s196 + $0xb0] sm:$0xff] %v241
                %v243 = vld [vmem:[%s195 + $0x238] sm:$0xff]
                %244 = vst [vmem:[%s196 + $0xb8] sm:$0xff] %v243
                %v245 = vld [vmem:[%s195 + $0x300] sm:$0xff]
                %246 = vst [vmem:[%s196 + $0xc0] sm:$0xff] %v245
                %v247 = vld [vmem:[%s195 + $0x308] sm:$0xff]
                %248 = vst [vmem:[%s196 + $0xc8] sm:$0xff] %v247
                %v249 = vld [vmem:[%s195 + $0x310] sm:$0xff]
                %250 = vst [vmem:[%s196 + $0xd0] sm:$0xff] %v249
                %v251 = vld [vmem:[%s195 + $0x318] sm:$0xff]
                %252 = vst [vmem:[%s196 + $0xd8] sm:$0xff] %v251
                %v253 = vld [vmem:[%s195 + $0x320] sm:$0xff]
                %254 = vst [vmem:[%s196 + $0xe0] sm:$0xff] %v253
                %v255 = vld [vmem:[%s195 + $0x328] sm:$0xff]
                %256 = vst [vmem:[%s196 + $0xe8] sm:$0xff] %v255
                %v257 = vld [vmem:[%s195 + $0x330] sm:$0xff]
                %258 = vst [vmem:[%s196 + $0xf0] sm:$0xff] %v257
                %v259 = vld [vmem:[%s195 + $0x338] sm:$0xff]
                %260 = vst [vmem:[%s196 + $0xf8] sm:$0xff] %v259
                %v261 = vld [vmem:[%s195 + $0x400] sm:$0xff]
                %262 = vst [vmem:[%s196 + $0x100] sm:$0xff] %v261
                %v263 = vld [vmem:[%s195 + $0x408] sm:$0xff]
                %264 = vst [vmem:[%s196 + $0x108] sm:$0xff] %v263
                %v265 = vld [vmem:[%s195 + $0x410] sm:$0xff]
                %266 = vst [vmem:[%s196 + $0x110] sm:$0xff] %v265
                %v267 = vld [vmem:[%s195 + $0x418] sm:$0xff]
                %268 = vst [vmem:[%s196 + $0x118] sm:$0xff] %v267
                %v269 = vld [vmem:[%s195 + $0x420] sm:$0xff]
                %270 = vst [vmem:[%s196 + $0x120] sm:$0xff] %v269
                %v271 = vld [vmem:[%s195 + $0x428] sm:$0xff]
                %272 = vst [vmem:[%s196 + $0x128] sm:$0xff] %v271
                %v273 = vld [vmem:[%s195 + $0x430] sm:$0xff]
                %274 = vst [vmem:[%s196 + $0x130] sm:$0xff] %v273
                %v275 = vld [vmem:[%s195 + $0x438] sm:$0xff]
                %276 = vst [vmem:[%s196 + $0x138] sm:$0xff] %v275
                %v277 = vld [vmem:[%s195 + $0x500] sm:$0xff]
                %278 = vst [vmem:[%s196 + $0x140] sm:$0xff] %v277
                %v279 = vld [vmem:[%s195 + $0x508] sm:$0xff]
                %280 = vst [vmem:[%s196 + $0x148] sm:$0xff] %v279
                %v281 = vld [vmem:[%s195 + $0x510] sm:$0xff]
                %282 = vst [vmem:[%s196 + $0x150] sm:$0xff] %v281
                %v283 = vld [vmem:[%s195 + $0x518] sm:$0xff]
                %284 = vst [vmem:[%s196 + $0x158] sm:$0xff] %v283
                %v285 = vld [vmem:[%s195 + $0x520] sm:$0xff]
                %286 = vst [vmem:[%s196 + $0x160] sm:$0xff] %v285
                %v287 = vld [vmem:[%s195 + $0x528] sm:$0xff]
                %288 = vst [vmem:[%s196 + $0x168] sm:$0xff] %v287
                %v289 = vld [vmem:[%s195 + $0x530] sm:$0xff]
                %290 = vst [vmem:[%s196 + $0x170] sm:$0xff] %v289
                %v291 = vld [vmem:[%s195 + $0x538] sm:$0xff]
                %292 = vst [vmem:[%s196 + $0x178] sm:$0xff] %v291
                %v293 = vld [vmem:[%s195 + $0x600] sm:$0xff]
                %294 = vst [vmem:[%s196 + $0x180] sm:$0xff] %v293
                %v295 = vld [vmem:[%s195 + $0x608] sm:$0xff]
                %296 = vst [vmem:[%s196 + $0x188] sm:$0xff] %v295
                %v297 = vld [vmem:[%s195 + $0x610] sm:$0xff]
                %298 = vst [vmem:[%s196 + $0x190] sm:$0xff] %v297
                %v299 = vld [vmem:[%s195 + $0x618] sm:$0xff]
                %300 = vst [vmem:[%s196 + $0x198] sm:$0xff] %v299
                %v301 = vld [vmem:[%s195 + $0x620] sm:$0xff]
                %302 = vst [vmem:[%s196 + $0x1a0] sm:$0xff] %v301
                %v303 = vld [vmem:[%s195 + $0x628] sm:$0xff]
                %304 = vst [vmem:[%s196 + $0x1a8] sm:$0xff] %v303
                %v305 = vld [vmem:[%s195 + $0x630] sm:$0xff]
                %306 = vst [vmem:[%s196 + $0x1b0] sm:$0xff] %v305
                %v307 = vld [vmem:[%s195 + $0x638] sm:$0xff]
                %308 = vst [vmem:[%s196 + $0x1b8] sm:$0xff] %v307
              $region37: #{_lambda_.9} parent=31 // loop_footer
                %s194 = sadd.s32 1, %s190
              $region38: #{_lambda_.9} parent=31 // loop_footer_branch
                %189 = sbr.rel target = $region34
              $region39: #{_lambda_.9} parent=31 // loop_exit
                _
            $region32: #{_lambda_.9} parent=27 // pred_fallthru
              _
            // Predicated region
            $region40: #{_lambda_.9} parent=27 // pred_check
              _
            $region41: #{_lambda_.9} parent=27 // pred_check_branch
              %310 = sbr.rel target = $region43
            $region42: #{_lambda_.9} parent=27 // pred_region
              _
            $region43: #{_lambda_.9} parent=27 // pred_fallthru
              _
          $region28: #{_lambda_.9} parent=23 // pred_fallthru
            _
          %311 = vnop
        $region24: #{_lambda_.9} parent=19 // pred_fallthru
          _
        // Predicated region
        $region44: #{_lambda_.9} parent=19 // pred_check
          %p312 = pneg %p71
        $region45: #{_lambda_.9} parent=19 // pred_check_branch
          %314 = sbr.rel (%p312) target = $region47
        $region46: #{_lambda_.9} parent=19 // pred_region
          %s315 = smul.u32 256, %s19
          %p316 = scmp.lt.s32.totalorder %s315, 1023
          %s317 = scalar_select %p316, %s315, 1023
          %s318 = smul.addr %s317, 4
          %s319 = scalar_lea.vmem %s1, %s318
          %s320 = smul.u32 256, %s19
        $region47: #{_lambda_.9} parent=19 // pred_fallthru
          _
      $region20: #{_lambda_.9} parent=5 // pred_fallthru
        _
      %p321 = scmp.le.s32.totalorder 1, %s11
      %p322 = scmp.lt.s32.totalorder %s11, 5
      %p323 = pnand %p321, %p322
      %p324 = pneg %p323
      // Predicated region
      $region48: #{_lambda_.9} parent=5 // pred_check
        _
      $region49: #{_lambda_.9} parent=5 // pred_check_branch
        %326 = sbr.rel (%p323) target = $region51
      $region50: #{_lambda_.9} parent=5 // pred_region
        %s327 = ssub.s32 %s11, 1
        %s328 = sand.u32 %s38, 1
        %s329 = sand.u32 %s38, 1
        %s330 = smul.addr %s329, 448
        %s331 = scalar_lea.vmem [#allocation3], %s330
        // Predicated region
        $region52: #{_lambda_.9} parent=50 // pred_check
          %p332 = pneg %p51
        $region53: #{_lambda_.9} parent=50 // pred_check_branch
          %334 = sbr.rel (%p332) target = $region55
        $region54: #{_lambda_.9} parent=50 // pred_region
          _
        $region55: #{_lambda_.9} parent=50 // pred_fallthru
          _
        %s335 = sand.u32 %s38, 1
        %s336 = sand.u32 %s38, 1
        %s337 = smul.addr %s336, 448
        %s338 = scalar_lea.vmem [#allocation3], %s337
        %p339 = pneg %p51
        %p340 = pneg %p48
        %s341 = smul.u32 256, %s21
        %p342 = scmp.lt.s32.totalorder %s341, 1023
        %s343 = scalar_select %p342, %s341, 1023
        %s344 = smul.addr %s343, 4
        %s345 = scalar_lea.vmem %s1, %s344
        %p346 = pneg %p77
        %p347 = pneg %p74
        %p348 = pneg %p98
        %p349 = pneg %p95
        %p350 = pneg %p124
        %p351 = pneg %p121
        %s352 = smul.u32 7, %s20
        %p353 = scmp.lt.s32.totalorder %s352, 6
        %s354 = scalar_select %p353, %s352, 6
        %s355 = smul.addr %s354, 8
        %s356 = scalar_lea.vmem %s3, %s355
        %p357 = pneg %p150
        %p358 = pneg %p147
        %p359 = scmp.lt.s32.totalorder %s20, 0
        %s360 = scalar_select %p359, %s20, 0
        %s361 = smul.addr %s360, 8
        %s362 = scalar_lea.vmem %s4, %s361
        %s363 = smul.u32 7, %s20
        %s364 = smul.u32 16, %s21
        %s365 = smul.u32 256, %s21
        %p366 = scmp.lt.s32.totalorder %s365, 1023
        %s367 = scalar_select %p366, %s365, 1023
        %s368 = smul.addr %s367, 4
        %s369 = scalar_lea.vmem %s1, %s368
        %s370 = smul.u32 256, %s21
        %s371 = smul.u32 7, %s20
        %p372 = scmp.lt.s32.totalorder %s371, 6
        %s373 = scalar_select %p372, %s371, 6
        %s374 = smul.addr %s373, 8
        %s375 = scalar_lea.vmem %s3, %s374
        %s376 = smul.u32 7, %s20
        %p377 = scmp.lt.s32.totalorder %s20, 0
        %s378 = scalar_select %p377, %s20, 0
        %s379 = smul.addr %s378, 8
        %s380 = scalar_lea.vmem %s4, %s379
        %s382 = smul.u32 %s20, 56
        %p383 = scmp.eq.s32.totalorder %s21, 0
        // Predicated region
        $region56: #{_lambda_.9} parent=50 // pred_check
          %p384 = pneg %p383
        $region57: #{_lambda_.9} parent=50 // pred_check_branch
          %386 = sbr.rel (%p384) target = $region59
        $region58: #{_lambda_.9} parent=50 // pred_region
          %387 = vst [vmem:[#allocation2] sm:$0xff] 0.0
          %388 = vst [vmem:[#allocation2 + $0x8] sm:$0xff] 0.0
          %389 = vst [vmem:[#allocation2 + $0x10] sm:$0xff] 0.0
          %390 = vst [vmem:[#allocation2 + $0x18] sm:$0xff] 0.0
          %391 = vst [vmem:[#allocation2 + $0x20] sm:$0xff] 0.0
          %392 = vst [vmem:[#allocation2 + $0x28] sm:$0xff] 0.0
          %393 = vst [vmem:[#allocation2 + $0x30] sm:$0xff] 0.0
        $region59: #{_lambda_.9} parent=50 // pred_fallthru
          _
        %v394 = vld [vmem:[#allocation2] sm:$0xff]
        %v395 = vld [vmem:[#allocation2 + $0x8] sm:$0xff]
        %v396 = vld [vmem:[#allocation2 + $0x10] sm:$0xff]
        %v397 = vld [vmem:[#allocation2 + $0x18] sm:$0xff]
        %v398 = vld [vmem:[#allocation2 + $0x20] sm:$0xff]
        %v399 = vld [vmem:[#allocation2 + $0x28] sm:$0xff]
        %v400 = vld [vmem:[#allocation2 + $0x30] sm:$0xff]
        %v401 = vld [vmem:[%s331] sm:$0xff]
        %v402 = vld [vmem:[%s331 + $0x8] sm:$0xff]
        %v403 = vld [vmem:[%s331 + $0x10] sm:$0xff]
        %v404 = vld [vmem:[%s331 + $0x18] sm:$0xff]
        %v405 = vld [vmem:[%s331 + $0x20] sm:$0xff]
        %v406 = vld [vmem:[%s331 + $0x28] sm:$0xff]
        %v407 = vld [vmem:[%s331 + $0x30] sm:$0xff]
        %v408 = vld [vmem:[%s331 + $0x38] sm:$0xff]
        %v409 = vld [vmem:[%s331 + $0x40] sm:$0xff]
        %v410 = vld [vmem:[%s331 + $0x48] sm:$0xff]
        %v411 = vld [vmem:[%s331 + $0x50] sm:$0xff]
        %v412 = vld [vmem:[%s331 + $0x58] sm:$0xff]
        %v413 = vld [vmem:[%s331 + $0x60] sm:$0xff]
        %v414 = vld [vmem:[%s331 + $0x68] sm:$0xff]
        %v415 = vld [vmem:[%s331 + $0x70] sm:$0xff]
        %v416 = vld [vmem:[%s331 + $0x78] sm:$0xff]
        %v417 = vld [vmem:[%s331 + $0x80] sm:$0xff]
        %v418 = vld [vmem:[%s331 + $0x88] sm:$0xff]
        %v419 = vld [vmem:[%s331 + $0x90] sm:$0xff]
        %v420 = vld [vmem:[%s331 + $0x98] sm:$0xff]
        %v421 = vld [vmem:[%s331 + $0xa0] sm:$0xff]
        %v422 = vld [vmem:[%s331 + $0xa8] sm:$0xff]
        %v423 = vld [vmem:[%s331 + $0xb0] sm:$0xff]
        %v424 = vld [vmem:[%s331 + $0xb8] sm:$0xff]
        %v425 = vld [vmem:[%s331 + $0xc0] sm:$0xff]
        %v426 = vld [vmem:[%s331 + $0xc8] sm:$0xff]
        %v427 = vld [vmem:[%s331 + $0xd0] sm:$0xff]
        %v428 = vld [vmem:[%s331 + $0xd8] sm:$0xff]
        %v429 = vld [vmem:[%s331 + $0xe0] sm:$0xff]
        %v430 = vld [vmem:[%s331 + $0xe8] sm:$0xff]
        %v431 = vld [vmem:[%s331 + $0xf0] sm:$0xff]
        %v432 = vld [vmem:[%s331 + $0xf8] sm:$0xff]
        %v433 = vld [vmem:[%s331 + $0x100] sm:$0xff]
        %v434 = vld [vmem:[%s331 + $0x108] sm:$0xff]
        %v435 = vld [vmem:[%s331 + $0x110] sm:$0xff]
        %v436 = vld [vmem:[%s331 + $0x118] sm:$0xff]
        %v437 = vld [vmem:[%s331 + $0x120] sm:$0xff]
        %v438 = vld [vmem:[%s331 + $0x128] sm:$0xff]
        %v439 = vld [vmem:[%s331 + $0x130] sm:$0xff]
        %v440 = vld [vmem:[%s331 + $0x138] sm:$0xff]
        %v441 = vld [vmem:[%s331 + $0x140] sm:$0xff]
        %v442 = vld [vmem:[%s331 + $0x148] sm:$0xff]
        %v443 = vld [vmem:[%s331 + $0x150] sm:$0xff]
        %v444 = vld [vmem:[%s331 + $0x158] sm:$0xff]
        %v445 = vld [vmem:[%s331 + $0x160] sm:$0xff]
        %v446 = vld [vmem:[%s331 + $0x168] sm:$0xff]
        %v447 = vld [vmem:[%s331 + $0x170] sm:$0xff]
        %v448 = vld [vmem:[%s331 + $0x178] sm:$0xff]
        %v449 = vld [vmem:[%s331 + $0x180] sm:$0xff]
        %v450 = vld [vmem:[%s331 + $0x188] sm:$0xff]
        %v451 = vld [vmem:[%s331 + $0x190] sm:$0xff]
        %v452 = vld [vmem:[%s331 + $0x198] sm:$0xff]
        %v453 = vld [vmem:[%s331 + $0x1a0] sm:$0xff]
        %v454 = vld [vmem:[%s331 + $0x1a8] sm:$0xff]
        %v455 = vld [vmem:[%s331 + $0x1b0] sm:$0xff]
        %v456 = vld [vmem:[%s331 + $0x1b8] sm:$0xff]
        %v457 = vld [vmem:[%s369] sm:$0xf]
        %v458 = vld [vmem:[%s369 + $0x4] sm:$0xf]
        %v459 = vld [vmem:[%s369 + $0x8] sm:$0xf]
        %v460 = vld [vmem:[%s369 + $0xc] sm:$0xf]
        %v461 = vld [vmem:[%s369 + $0x10] sm:$0xf]
        %v462 = vld [vmem:[%s369 + $0x14] sm:$0xf]
        %v463 = vld [vmem:[%s369 + $0x18] sm:$0xf]
        %v464 = vld [vmem:[%s369 + $0x1c] sm:$0xf]
        %v465 = vld [vmem:[%s369 + $0x20] sm:$0xf]
        %v466 = vld [vmem:[%s369 + $0x24] sm:$0xf]
        %v467 = vld [vmem:[%s369 + $0x28] sm:$0xf]
        %v468 = vld [vmem:[%s369 + $0x2c] sm:$0xf]
        %v469 = vld [vmem:[%s369 + $0x30] sm:$0xf]
        %v470 = vld [vmem:[%s369 + $0x34] sm:$0xf]
        %v471 = vld [vmem:[%s369 + $0x38] sm:$0xf]
        %v472 = vld [vmem:[%s369 + $0x3c] sm:$0xf]
        %v473 = vld [vmem:[%s369 + $0x40] sm:$0xf]
        %v474 = vld [vmem:[%s369 + $0x44] sm:$0xf]
        %v475 = vld [vmem:[%s369 + $0x48] sm:$0xf]
        %v476 = vld [vmem:[%s369 + $0x4c] sm:$0xf]
        %v477 = vld [vmem:[%s369 + $0x50] sm:$0xf]
        %v478 = vld [vmem:[%s369 + $0x54] sm:$0xf]
        %v479 = vld [vmem:[%s369 + $0x58] sm:$0xf]
        %v480 = vld [vmem:[%s369 + $0x5c] sm:$0xf]
        %v481 = vld [vmem:[%s369 + $0x60] sm:$0xf]
        %v482 = vld [vmem:[%s369 + $0x64] sm:$0xf]
        %v483 = vld [vmem:[%s369 + $0x68] sm:$0xf]
        %v484 = vld [vmem:[%s369 + $0x6c] sm:$0xf]
        %v485 = vld [vmem:[%s369 + $0x70] sm:$0xf]
        %v486 = vld [vmem:[%s369 + $0x74] sm:$0xf]
        %v487 = vld [vmem:[%s369 + $0x78] sm:$0xf]
        %v488 = vld [vmem:[%s369 + $0x7c] sm:$0xf]
        %v489 = vld [vmem:[%s369 + $0x80] sm:$0xf]
        %v490 = vld [vmem:[%s369 + $0x84] sm:$0xf]
        %v491 = vld [vmem:[%s369 + $0x88] sm:$0xf]
        %v492 = vld [vmem:[%s369 + $0x8c] sm:$0xf]
        %v493 = vld [vmem:[%s369 + $0x90] sm:$0xf]
        %v494 = vld [vmem:[%s369 + $0x94] sm:$0xf]
        %v495 = vld [vmem:[%s369 + $0x98] sm:$0xf]
        %v496 = vld [vmem:[%s369 + $0x9c] sm:$0xf]
        %v497 = vld [vmem:[%s369 + $0xa0] sm:$0xf]
        %v498 = vld [vmem:[%s369 + $0xa4] sm:$0xf]
        %v499 = vld [vmem:[%s369 + $0xa8] sm:$0xf]
        %v500 = vld [vmem:[%s369 + $0xac] sm:$0xf]
        %v501 = vld [vmem:[%s369 + $0xb0] sm:$0xf]
        %v502 = vld [vmem:[%s369 + $0xb4] sm:$0xf]
        %v503 = vld [vmem:[%s369 + $0xb8] sm:$0xf]
        %v504 = vld [vmem:[%s369 + $0xbc] sm:$0xf]
        %v505 = vld [vmem:[%s369 + $0xc0] sm:$0xf]
        %v506 = vld [vmem:[%s369 + $0xc4] sm:$0xf]
        %v507 = vld [vmem:[%s369 + $0xc8] sm:$0xf]
        %v508 = vld [vmem:[%s369 + $0xcc] sm:$0xf]
        %v509 = vld [vmem:[%s369 + $0xd0] sm:$0xf]
        %v510 = vld [vmem:[%s369 + $0xd4] sm:$0xf]
        %v511 = vld [vmem:[%s369 + $0xd8] sm:$0xf]
        %v512 = vld [vmem:[%s369 + $0xdc] sm:$0xf]
        %v513 = vld [vmem:[%s369 + $0xe0] sm:$0xf]
        %v514 = vld [vmem:[%s369 + $0xe4] sm:$0xf]
        %v515 = vld [vmem:[%s369 + $0xe8] sm:$0xf]
        %v516 = vld [vmem:[%s369 + $0xec] sm:$0xf]
        %v517 = vld [vmem:[%s369 + $0xf0] sm:$0xf]
        %v518 = vld [vmem:[%s369 + $0xf4] sm:$0xf]
        %v519 = vld [vmem:[%s369 + $0xf8] sm:$0xf]
        %v520 = vld [vmem:[%s369 + $0xfc] sm:$0xf]
        %v521 = vld [vmem:[%s369 + $0x100] sm:$0xf]
        %v522 = vld [vmem:[%s369 + $0x104] sm:$0xf]
        %v523 = vld [vmem:[%s369 + $0x108] sm:$0xf]
        %v524 = vld [vmem:[%s369 + $0x10c] sm:$0xf]
        %v525 = vld [vmem:[%s369 + $0x110] sm:$0xf]
        %v526 = vld [vmem:[%s369 + $0x114] sm:$0xf]
        %v527 = vld [vmem:[%s369 + $0x118] sm:$0xf]
        %v528 = vld [vmem:[%s369 + $0x11c] sm:$0xf]
        %v529 = vld [vmem:[%s369 + $0x120] sm:$0xf]
        %v530 = vld [vmem:[%s369 + $0x124] sm:$0xf]
        %v531 = vld [vmem:[%s369 + $0x128] sm:$0xf]
        %v532 = vld [vmem:[%s369 + $0x12c] sm:$0xf]
        %v533 = vld [vmem:[%s369 + $0x130] sm:$0xf]
        %v534 = vld [vmem:[%s369 + $0x134] sm:$0xf]
        %v535 = vld [vmem:[%s369 + $0x138] sm:$0xf]
        %v536 = vld [vmem:[%s369 + $0x13c] sm:$0xf]
        %v537 = vld [vmem:[%s369 + $0x140] sm:$0xf]
        %v538 = vld [vmem:[%s369 + $0x144] sm:$0xf]
        %v539 = vld [vmem:[%s369 + $0x148] sm:$0xf]
        %v540 = vld [vmem:[%s369 + $0x14c] sm:$0xf]
        %v541 = vld [vmem:[%s369 + $0x150] sm:$0xf]
        %v542 = vld [vmem:[%s369 + $0x154] sm:$0xf]
        %v543 = vld [vmem:[%s369 + $0x158] sm:$0xf]
        %v544 = vld [vmem:[%s369 + $0x15c] sm:$0xf]
        %v545 = vld [vmem:[%s369 + $0x160] sm:$0xf]
        %v546 = vld [vmem:[%s369 + $0x164] sm:$0xf]
        %v547 = vld [vmem:[%s369 + $0x168] sm:$0xf]
        %v548 = vld [vmem:[%s369 + $0x16c] sm:$0xf]
        %v549 = vld [vmem:[%s369 + $0x170] sm:$0xf]
        %v550 = vld [vmem:[%s369 + $0x174] sm:$0xf]
        %v551 = vld [vmem:[%s369 + $0x178] sm:$0xf]
        %v552 = vld [vmem:[%s369 + $0x17c] sm:$0xf]
        %v553 = vld [vmem:[%s369 + $0x180] sm:$0xf]
        %v554 = vld [vmem:[%s369 + $0x184] sm:$0xf]
        %v555 = vld [vmem:[%s369 + $0x188] sm:$0xf]
        %v556 = vld [vmem:[%s369 + $0x18c] sm:$0xf]
        %v557 = vld [vmem:[%s369 + $0x190] sm:$0xf]
        %v558 = vld [vmem:[%s369 + $0x194] sm:$0xf]
        %v559 = vld [vmem:[%s369 + $0x198] sm:$0xf]
        %v560 = vld [vmem:[%s369 + $0x19c] sm:$0xf]
        %v561 = vld [vmem:[%s369 + $0x1a0] sm:$0xf]
        %v562 = vld [vmem:[%s369 + $0x1a4] sm:$0xf]
        %v563 = vld [vmem:[%s369 + $0x1a8] sm:$0xf]
        %v564 = vld [vmem:[%s369 + $0x1ac] sm:$0xf]
        %v565 = vld [vmem:[%s369 + $0x1b0] sm:$0xf]
        %v566 = vld [vmem:[%s369 + $0x1b4] sm:$0xf]
        %v567 = vld [vmem:[%s369 + $0x1b8] sm:$0xf]
        %v568 = vld [vmem:[%s369 + $0x1bc] sm:$0xf]
        %v569 = vld [vmem:[%s369 + $0x1c0] sm:$0xf]
        %v570 = vld [vmem:[%s369 + $0x1c4] sm:$0xf]
        %v571 = vld [vmem:[%s369 + $0x1c8] sm:$0xf]
        %v572 = vld [vmem:[%s369 + $0x1cc] sm:$0xf]
        %v573 = vld [vmem:[%s369 + $0x1d0] sm:$0xf]
        %v574 = vld [vmem:[%s369 + $0x1d4] sm:$0xf]
        %v575 = vld [vmem:[%s369 + $0x1d8] sm:$0xf]
        %v576 = vld [vmem:[%s369 + $0x1dc] sm:$0xf]
        %v577 = vld [vmem:[%s369 + $0x1e0] sm:$0xf]
        %v578 = vld [vmem:[%s369 + $0x1e4] sm:$0xf]
        %v579 = vld [vmem:[%s369 + $0x1e8] sm:$0xf]
        %v580 = vld [vmem:[%s369 + $0x1ec] sm:$0xf]
        %v581 = vld [vmem:[%s369 + $0x1f0] sm:$0xf]
        %v582 = vld [vmem:[%s369 + $0x1f4] sm:$0xf]
        %v583 = vld [vmem:[%s369 + $0x1f8] sm:$0xf]
        %v584 = vld [vmem:[%s369 + $0x1fc] sm:$0xf]
        %v585 = vld [vmem:[%s369 + $0x200] sm:$0xf]
        %v586 = vld [vmem:[%s369 + $0x204] sm:$0xf]
        %v587 = vld [vmem:[%s369 + $0x208] sm:$0xf]
        %v588 = vld [vmem:[%s369 + $0x20c] sm:$0xf]
        %v589 = vld [vmem:[%s369 + $0x210] sm:$0xf]
        %v590 = vld [vmem:[%s369 + $0x214] sm:$0xf]
        %v591 = vld [vmem:[%s369 + $0x218] sm:$0xf]
        %v592 = vld [vmem:[%s369 + $0x21c] sm:$0xf]
        %v593 = vld [vmem:[%s369 + $0x220] sm:$0xf]
        %v594 = vld [vmem:[%s369 + $0x224] sm:$0xf]
        %v595 = vld [vmem:[%s369 + $0x228] sm:$0xf]
        %v596 = vld [vmem:[%s369 + $0x22c] sm:$0xf]
        %v597 = vld [vmem:[%s369 + $0x230] sm:$0xf]
        %v598 = vld [vmem:[%s369 + $0x234] sm:$0xf]
        %v599 = vld [vmem:[%s369 + $0x238] sm:$0xf]
        %v600 = vld [vmem:[%s369 + $0x23c] sm:$0xf]
        %v601 = vld [vmem:[%s369 + $0x240] sm:$0xf]
        %v602 = vld [vmem:[%s369 + $0x244] sm:$0xf]
        %v603 = vld [vmem:[%s369 + $0x248] sm:$0xf]
        %v604 = vld [vmem:[%s369 + $0x24c] sm:$0xf]
        %v605 = vld [vmem:[%s369 + $0x250] sm:$0xf]
        %v606 = vld [vmem:[%s369 + $0x254] sm:$0xf]
        %v607 = vld [vmem:[%s369 + $0x258] sm:$0xf]
        %v608 = vld [vmem:[%s369 + $0x25c] sm:$0xf]
        %v609 = vld [vmem:[%s369 + $0x260] sm:$0xf]
        %v610 = vld [vmem:[%s369 + $0x264] sm:$0xf]
        %v611 = vld [vmem:[%s369 + $0x268] sm:$0xf]
        %v612 = vld [vmem:[%s369 + $0x26c] sm:$0xf]
        %v613 = vld [vmem:[%s369 + $0x270] sm:$0xf]
        %v614 = vld [vmem:[%s369 + $0x274] sm:$0xf]
        %v615 = vld [vmem:[%s369 + $0x278] sm:$0xf]
        %v616 = vld [vmem:[%s369 + $0x27c] sm:$0xf]
        %v617 = vld [vmem:[%s369 + $0x280] sm:$0xf]
        %v618 = vld [vmem:[%s369 + $0x284] sm:$0xf]
        %v619 = vld [vmem:[%s369 + $0x288] sm:$0xf]
        %v620 = vld [vmem:[%s369 + $0x28c] sm:$0xf]
        %v621 = vld [vmem:[%s369 + $0x290] sm:$0xf]
        %v622 = vld [vmem:[%s369 + $0x294] sm:$0xf]
        %v623 = vld [vmem:[%s369 + $0x298] sm:$0xf]
        %v624 = vld [vmem:[%s369 + $0x29c] sm:$0xf]
        %v625 = vld [vmem:[%s369 + $0x2a0] sm:$0xf]
        %v626 = vld [vmem:[%s369 + $0x2a4] sm:$0xf]
        %v627 = vld [vmem:[%s369 + $0x2a8] sm:$0xf]
        %v628 = vld [vmem:[%s369 + $0x2ac] sm:$0xf]
        %v629 = vld [vmem:[%s369 + $0x2b0] sm:$0xf]
        %v630 = vld [vmem:[%s369 + $0x2b4] sm:$0xf]
        %v631 = vld [vmem:[%s369 + $0x2b8] sm:$0xf]
        %v632 = vld [vmem:[%s369 + $0x2bc] sm:$0xf]
        %v633 = vld [vmem:[%s369 + $0x2c0] sm:$0xf]
        %v634 = vld [vmem:[%s369 + $0x2c4] sm:$0xf]
        %v635 = vld [vmem:[%s369 + $0x2c8] sm:$0xf]
        %v636 = vld [vmem:[%s369 + $0x2cc] sm:$0xf]
        %v637 = vld [vmem:[%s369 + $0x2d0] sm:$0xf]
        %v638 = vld [vmem:[%s369 + $0x2d4] sm:$0xf]
        %v639 = vld [vmem:[%s369 + $0x2d8] sm:$0xf]
        %v640 = vld [vmem:[%s369 + $0x2dc] sm:$0xf]
        %v641 = vld [vmem:[%s369 + $0x2e0] sm:$0xf]
        %v642 = vld [vmem:[%s369 + $0x2e4] sm:$0xf]
        %v643 = vld [vmem:[%s369 + $0x2e8] sm:$0xf]
        %v644 = vld [vmem:[%s369 + $0x2ec] sm:$0xf]
        %v645 = vld [vmem:[%s369 + $0x2f0] sm:$0xf]
        %v646 = vld [vmem:[%s369 + $0x2f4] sm:$0xf]
        %v647 = vld [vmem:[%s369 + $0x2f8] sm:$0xf]
        %v648 = vld [vmem:[%s369 + $0x2fc] sm:$0xf]
        %v649 = vld [vmem:[%s369 + $0x300] sm:$0xf]
        %v650 = vld [vmem:[%s369 + $0x304] sm:$0xf]
        %v651 = vld [vmem:[%s369 + $0x308] sm:$0xf]
        %v652 = vld [vmem:[%s369 + $0x30c] sm:$0xf]
        %v653 = vld [vmem:[%s369 + $0x310] sm:$0xf]
        %v654 = vld [vmem:[%s369 + $0x314] sm:$0xf]
        %v655 = vld [vmem:[%s369 + $0x318] sm:$0xf]
        %v656 = vld [vmem:[%s369 + $0x31c] sm:$0xf]
        %v657 = vld [vmem:[%s369 + $0x320] sm:$0xf]
        %v658 = vld [vmem:[%s369 + $0x324] sm:$0xf]
        %v659 = vld [vmem:[%s369 + $0x328] sm:$0xf]
        %v660 = vld [vmem:[%s369 + $0x32c] sm:$0xf]
        %v661 = vld [vmem:[%s369 + $0x330] sm:$0xf]
        %v662 = vld [vmem:[%s369 + $0x334] sm:$0xf]
        %v663 = vld [vmem:[%s369 + $0x338] sm:$0xf]
        %v664 = vld [vmem:[%s369 + $0x33c] sm:$0xf]
        %v665 = vld [vmem:[%s369 + $0x340] sm:$0xf]
        %v666 = vld [vmem:[%s369 + $0x344] sm:$0xf]
        %v667 = vld [vmem:[%s369 + $0x348] sm:$0xf]
        %v668 = vld [vmem:[%s369 + $0x34c] sm:$0xf]
        %v669 = vld [vmem:[%s369 + $0x350] sm:$0xf]
        %v670 = vld [vmem:[%s369 + $0x354] sm:$0xf]
        %v671 = vld [vmem:[%s369 + $0x358] sm:$0xf]
        %v672 = vld [vmem:[%s369 + $0x35c] sm:$0xf]
        %v673 = vld [vmem:[%s369 + $0x360] sm:$0xf]
        %v674 = vld [vmem:[%s369 + $0x364] sm:$0xf]
        %v675 = vld [vmem:[%s369 + $0x368] sm:$0xf]
        %v676 = vld [vmem:[%s369 + $0x36c] sm:$0xf]
        %v677 = vld [vmem:[%s369 + $0x370] sm:$0xf]
        %v678 = vld [vmem:[%s369 + $0x374] sm:$0xf]
        %v679 = vld [vmem:[%s369 + $0x378] sm:$0xf]
        %v680 = vld [vmem:[%s369 + $0x37c] sm:$0xf]
        %v681 = vld [vmem:[%s369 + $0x380] sm:$0xf]
        %v682 = vld [vmem:[%s369 + $0x384] sm:$0xf]
        %v683 = vld [vmem:[%s369 + $0x388] sm:$0xf]
        %v684 = vld [vmem:[%s369 + $0x38c] sm:$0xf]
        %v685 = vld [vmem:[%s369 + $0x390] sm:$0xf]
        %v686 = vld [vmem:[%s369 + $0x394] sm:$0xf]
        %v687 = vld [vmem:[%s369 + $0x398] sm:$0xf]
        %v688 = vld [vmem:[%s369 + $0x39c] sm:$0xf]
        %v689 = vld [vmem:[%s369 + $0x3a0] sm:$0xf]
        %v690 = vld [vmem:[%s369 + $0x3a4] sm:$0xf]
        %v691 = vld [vmem:[%s369 + $0x3a8] sm:$0xf]
        %v692 = vld [vmem:[%s369 + $0x3ac] sm:$0xf]
        %v693 = vld [vmem:[%s369 + $0x3b0] sm:$0xf]
        %v694 = vld [vmem:[%s369 + $0x3b4] sm:$0xf]
        %v695 = vld [vmem:[%s369 + $0x3b8] sm:$0xf]
        %v696 = vld [vmem:[%s369 + $0x3bc] sm:$0xf]
        %v697 = vld [vmem:[%s369 + $0x3c0] sm:$0xf]
        %v698 = vld [vmem:[%s369 + $0x3c4] sm:$0xf]
        %v699 = vld [vmem:[%s369 + $0x3c8] sm:$0xf]
        %v700 = vld [vmem:[%s369 + $0x3cc] sm:$0xf]
        %v701 = vld [vmem:[%s369 + $0x3d0] sm:$0xf]
        %v702 = vld [vmem:[%s369 + $0x3d4] sm:$0xf]
        %v703 = vld [vmem:[%s369 + $0x3d8] sm:$0xf]
        %v704 = vld [vmem:[%s369 + $0x3dc] sm:$0xf]
        %v705 = vld [vmem:[%s369 + $0x3e0] sm:$0xf]
        %v706 = vld [vmem:[%s369 + $0x3e4] sm:$0xf]
        %v707 = vld [vmem:[%s369 + $0x3e8] sm:$0xf]
        %v708 = vld [vmem:[%s369 + $0x3ec] sm:$0xf]
        %v709 = vld [vmem:[%s369 + $0x3f0] sm:$0xf]
        %v710 = vld [vmem:[%s369 + $0x3f4] sm:$0xf]
        %v711 = vld [vmem:[%s369 + $0x3f8] sm:$0xf]
        %v712 = vld [vmem:[%s369 + $0x3fc] sm:$0xf]
        %v769 = vunpack.c.l.b16 %v401
        %v770 = vunpack.c.h.b16 %v401
        %v771 = vunpack.c.l.b16 %v402
        %v772 = vunpack.c.h.b16 %v402
        %v773 = vunpack.c.l.b16 %v403
        %v774 = vunpack.c.h.b16 %v403
        %v775 = vunpack.c.l.b16 %v404
        %v776 = vunpack.c.h.b16 %v404
        %v777 = vunpack.c.l.b16 %v405
        %v778 = vunpack.c.h.b16 %v405
        %v779 = vunpack.c.l.b16 %v406
        %v780 = vunpack.c.h.b16 %v406
        %v781 = vunpack.c.l.b16 %v407
        %v782 = vunpack.c.h.b16 %v407
        %v783 = vunpack.c.l.b16 %v408
        %v784 = vunpack.c.h.b16 %v408
        %v785 = vunpack.c.l.b16 %v409
        %v786 = vunpack.c.h.b16 %v409
        %v787 = vunpack.c.l.b16 %v410
        %v788 = vunpack.c.h.b16 %v410
        %v789 = vunpack.c.l.b16 %v411
        %v790 = vunpack.c.h.b16 %v411
        %v791 = vunpack.c.l.b16 %v412
        %v792 = vunpack.c.h.b16 %v412
        %v793 = vunpack.c.l.b16 %v413
        %v794 = vunpack.c.h.b16 %v413
        %v795 = vunpack.c.l.b16 %v414
        %v796 = vunpack.c.h.b16 %v414
        %v797 = vunpack.c.l.b16 %v415
        %v798 = vunpack.c.h.b16 %v415
        %v799 = vunpack.c.l.b16 %v416
        %v800 = vunpack.c.h.b16 %v416
        %v801 = vunpack.c.l.b16 %v417
        %v802 = vunpack.c.h.b16 %v417
        %v803 = vunpack.c.l.b16 %v418
        %v804 = vunpack.c.h.b16 %v418
        %v805 = vunpack.c.l.b16 %v419
        %v806 = vunpack.c.h.b16 %v419
        %v807 = vunpack.c.l.b16 %v420
        %v808 = vunpack.c.h.b16 %v420
        %v809 = vunpack.c.l.b16 %v421
        %v810 = vunpack.c.h.b16 %v421
        %v811 = vunpack.c.l.b16 %v422
        %v812 = vunpack.c.h.b16 %v422
        %v813 = vunpack.c.l.b16 %v423
        %v814 = vunpack.c.h.b16 %v423
        %v815 = vunpack.c.l.b16 %v424
        %v816 = vunpack.c.h.b16 %v424
        %v817 = vunpack.c.l.b16 %v425
        %v818 = vunpack.c.h.b16 %v425
        %v819 = vunpack.c.l.b16 %v426
        %v820 = vunpack.c.h.b16 %v426
        %v821 = vunpack.c.l.b16 %v427
        %v822 = vunpack.c.h.b16 %v427
        %v823 = vunpack.c.l.b16 %v428
        %v824 = vunpack.c.h.b16 %v428
        %v825 = vunpack.c.l.b16 %v429
        %v826 = vunpack.c.h.b16 %v429
        %v827 = vunpack.c.l.b16 %v430
        %v828 = vunpack.c.h.b16 %v430
        %v829 = vunpack.c.l.b16 %v431
        %v830 = vunpack.c.h.b16 %v431
        %v831 = vunpack.c.l.b16 %v432
        %v832 = vunpack.c.h.b16 %v432
        %v833 = vunpack.c.l.b16 %v433
        %v834 = vunpack.c.h.b16 %v433
        %v835 = vunpack.c.l.b16 %v434
        %v836 = vunpack.c.h.b16 %v434
        %v837 = vunpack.c.l.b16 %v435
        %v838 = vunpack.c.h.b16 %v435
        %v839 = vunpack.c.l.b16 %v436
        %v840 = vunpack.c.h.b16 %v436
        %v841 = vunpack.c.l.b16 %v437
        %v842 = vunpack.c.h.b16 %v437
        %v843 = vunpack.c.l.b16 %v438
        %v844 = vunpack.c.h.b16 %v438
        %v845 = vunpack.c.l.b16 %v439
        %v846 = vunpack.c.h.b16 %v439
        %v847 = vunpack.c.l.b16 %v440
        %v848 = vunpack.c.h.b16 %v440
        %v849 = vunpack.c.l.b16 %v441
        %v850 = vunpack.c.h.b16 %v441
        %v851 = vunpack.c.l.b16 %v442
        %v852 = vunpack.c.h.b16 %v442
        %v853 = vunpack.c.l.b16 %v443
        %v854 = vunpack.c.h.b16 %v443
        %v855 = vunpack.c.l.b16 %v444
        %v856 = vunpack.c.h.b16 %v444
        %v857 = vunpack.c.l.b16 %v445
        %v858 = vunpack.c.h.b16 %v445
        %v859 = vunpack.c.l.b16 %v446
        %v860 = vunpack.c.h.b16 %v446
        %v861 = vunpack.c.l.b16 %v447
        %v862 = vunpack.c.h.b16 %v447
        %v863 = vunpack.c.l.b16 %v448
        %v864 = vunpack.c.h.b16 %v448
        %v865 = vunpack.c.l.b16 %v449
        %v866 = vunpack.c.h.b16 %v449
        %v867 = vunpack.c.l.b16 %v450
        %v868 = vunpack.c.h.b16 %v450
        %v869 = vunpack.c.l.b16 %v451
        %v870 = vunpack.c.h.b16 %v451
        %v871 = vunpack.c.l.b16 %v452
        %v872 = vunpack.c.h.b16 %v452
        %v873 = vunpack.c.l.b16 %v453
        %v874 = vunpack.c.h.b16 %v453
        %v875 = vunpack.c.l.b16 %v454
        %v876 = vunpack.c.h.b16 %v454
        %v877 = vunpack.c.l.b16 %v455
        %v878 = vunpack.c.h.b16 %v455
        %v879 = vunpack.c.l.b16 %v456
        %v880 = vunpack.c.h.b16 %v456
        %v881 = vpack.c.b16 %v785, %v769
        %v882 = vpack.c.b16 %v786, %v770
        %v883 = vpack.c.b16 %v787, %v771
        %v884 = vpack.c.b16 %v788, %v772
        %v885 = vpack.c.b16 %v789, %v773
        %v886 = vpack.c.b16 %v790, %v774
        %v887 = vpack.c.b16 %v791, %v775
        %v888 = vpack.c.b16 %v792, %v776
        %v889 = vpack.c.b16 %v793, %v777
        %v890 = vpack.c.b16 %v794, %v778
        %v891 = vpack.c.b16 %v795, %v779
        %v892 = vpack.c.b16 %v796, %v780
        %v893 = vpack.c.b16 %v797, %v781
        %v894 = vpack.c.b16 %v798, %v782
        %v895 = vpack.c.b16 %v799, %v783
        %v896 = vpack.c.b16 %v800, %v784
        %v897 = vpack.c.b16 %v817, %v801
        %v898 = vpack.c.b16 %v818, %v802
        %v899 = vpack.c.b16 %v819, %v803
        %v900 = vpack.c.b16 %v820, %v804
        %v901 = vpack.c.b16 %v821, %v805
        %v902 = vpack.c.b16 %v822, %v806
        %v903 = vpack.c.b16 %v823, %v807
        %v904 = vpack.c.b16 %v824, %v808
        %v905 = vpack.c.b16 %v825, %v809
        %v906 = vpack.c.b16 %v826, %v810
        %v907 = vpack.c.b16 %v827, %v811
        %v908 = vpack.c.b16 %v828, %v812
        %v909 = vpack.c.b16 %v829, %v813
        %v910 = vpack.c.b16 %v830, %v814
        %v911 = vpack.c.b16 %v831, %v815
        %v912 = vpack.c.b16 %v832, %v816
        %v913 = vpack.c.b16 %v849, %v833
        %v914 = vpack.c.b16 %v850, %v834
        %v915 = vpack.c.b16 %v851, %v835
        %v916 = vpack.c.b16 %v852, %v836
        %v917 = vpack.c.b16 %v853, %v837
        %v918 = vpack.c.b16 %v854, %v838
        %v919 = vpack.c.b16 %v855, %v839
        %v920 = vpack.c.b16 %v856, %v840
        %v921 = vpack.c.b16 %v857, %v841
        %v922 = vpack.c.b16 %v858, %v842
        %v923 = vpack.c.b16 %v859, %v843
        %v924 = vpack.c.b16 %v860, %v844
        %v925 = vpack.c.b16 %v861, %v845
        %v926 = vpack.c.b16 %v862, %v846
        %v927 = vpack.c.b16 %v863, %v847
        %v928 = vpack.c.b16 %v864, %v848
        %v929 = vpack.c.b16 %v865, %v865
        %v930 = vpack.c.b16 %v866, %v866
        %v931 = vpack.c.b16 %v867, %v867
        %v932 = vpack.c.b16 %v868, %v868
        %v933 = vpack.c.b16 %v869, %v869
        %v934 = vpack.c.b16 %v870, %v870
        %v935 = vpack.c.b16 %v871, %v871
        %v936 = vpack.c.b16 %v872, %v872
        %v937 = vpack.c.b16 %v873, %v873
        %v938 = vpack.c.b16 %v874, %v874
        %v939 = vpack.c.b16 %v875, %v875
        %v940 = vpack.c.b16 %v876, %v876
        %v941 = vpack.c.b16 %v877, %v877
        %v942 = vpack.c.b16 %v878, %v878
        %v943 = vpack.c.b16 %v879, %v879
        %v944 = vpack.c.b16 %v880, %v880
        %v1265 = vunpack.c.l.b16 %v457
        %v1266 = vunpack.c.l.b16 %v458
        %v1267 = vunpack.c.l.b16 %v459
        %v1268 = vunpack.c.l.b16 %v460
        %v1269 = vunpack.c.l.b16 %v461
        %v1270 = vunpack.c.l.b16 %v462
        %v1271 = vunpack.c.l.b16 %v463
        %v1272 = vunpack.c.l.b16 %v464
        %v1273 = vunpack.c.l.b16 %v465
        %v1274 = vunpack.c.l.b16 %v466
        %v1275 = vunpack.c.l.b16 %v467
        %v1276 = vunpack.c.l.b16 %v468
        %v1277 = vunpack.c.l.b16 %v469
        %v1278 = vunpack.c.l.b16 %v470
        %v1279 = vunpack.c.l.b16 %v471
        %v1280 = vunpack.c.l.b16 %v472
        %v1281 = vunpack.c.l.b16 %v473
        %v1282 = vunpack.c.l.b16 %v474
        %v1283 = vunpack.c.l.b16 %v475
        %v1284 = vunpack.c.l.b16 %v476
        %v1285 = vunpack.c.l.b16 %v477
        %v1286 = vunpack.c.l.b16 %v478
        %v1287 = vunpack.c.l.b16 %v479
        %v1288 = vunpack.c.l.b16 %v480
        %v1289 = vunpack.c.l.b16 %v481
        %v1290 = vunpack.c.l.b16 %v482
        %v1291 = vunpack.c.l.b16 %v483
        %v1292 = vunpack.c.l.b16 %v484
        %v1293 = vunpack.c.l.b16 %v485
        %v1294 = vunpack.c.l.b16 %v486
        %v1295 = vunpack.c.l.b16 %v487
        %v1296 = vunpack.c.l.b16 %v488
        %v1297 = vunpack.c.l.b16 %v489
        %v1298 = vunpack.c.l.b16 %v490
        %v1299 = vunpack.c.l.b16 %v491
        %v1300 = vunpack.c.l.b16 %v492
        %v1301 = vunpack.c.l.b16 %v493
        %v1302 = vunpack.c.l.b16 %v494
        %v1303 = vunpack.c.l.b16 %v495
        %v1304 = vunpack.c.l.b16 %v496
        %v1305 = vunpack.c.l.b16 %v497
        %v1306 = vunpack.c.l.b16 %v498
        %v1307 = vunpack.c.l.b16 %v499
        %v1308 = vunpack.c.l.b16 %v500
        %v1309 = vunpack.c.l.b16 %v501
        %v1310 = vunpack.c.l.b16 %v502
        %v1311 = vunpack.c.l.b16 %v503
        %v1312 = vunpack.c.l.b16 %v504
        %v1313 = vunpack.c.l.b16 %v505
        %v1314 = vunpack.c.l.b16 %v506
        %v1315 = vunpack.c.l.b16 %v507
        %v1316 = vunpack.c.l.b16 %v508
        %v1317 = vunpack.c.l.b16 %v509
        %v1318 = vunpack.c.l.b16 %v510
        %v1319 = vunpack.c.l.b16 %v511
        %v1320 = vunpack.c.l.b16 %v512
        %v1321 = vunpack.c.l.b16 %v513
        %v1322 = vunpack.c.l.b16 %v514
        %v1323 = vunpack.c.l.b16 %v515
        %v1324 = vunpack.c.l.b16 %v516
        %v1325 = vunpack.c.l.b16 %v517
        %v1326 = vunpack.c.l.b16 %v518
        %v1327 = vunpack.c.l.b16 %v519
        %v1328 = vunpack.c.l.b16 %v520
        %v1329 = vunpack.c.l.b16 %v521
        %v1330 = vunpack.c.l.b16 %v522
        %v1331 = vunpack.c.l.b16 %v523
        %v1332 = vunpack.c.l.b16 %v524
        %v1333 = vunpack.c.l.b16 %v525
        %v1334 = vunpack.c.l.b16 %v526
        %v1335 = vunpack.c.l.b16 %v527
        %v1336 = vunpack.c.l.b16 %v528
        %v1337 = vunpack.c.l.b16 %v529
        %v1338 = vunpack.c.l.b16 %v530
        %v1339 = vunpack.c.l.b16 %v531
        %v1340 = vunpack.c.l.b16 %v532
        %v1341 = vunpack.c.l.b16 %v533
        %v1342 = vunpack.c.l.b16 %v534
        %v1343 = vunpack.c.l.b16 %v535
        %v1344 = vunpack.c.l.b16 %v536
        %v1345 = vunpack.c.l.b16 %v537
        %v1346 = vunpack.c.l.b16 %v538
        %v1347 = vunpack.c.l.b16 %v539
        %v1348 = vunpack.c.l.b16 %v540
        %v1349 = vunpack.c.l.b16 %v541
        %v1350 = vunpack.c.l.b16 %v542
        %v1351 = vunpack.c.l.b16 %v543
        %v1352 = vunpack.c.l.b16 %v544
        %v1353 = vunpack.c.l.b16 %v545
        %v1354 = vunpack.c.l.b16 %v546
        %v1355 = vunpack.c.l.b16 %v547
        %v1356 = vunpack.c.l.b16 %v548
        %v1357 = vunpack.c.l.b16 %v549
        %v1358 = vunpack.c.l.b16 %v550
        %v1359 = vunpack.c.l.b16 %v551
        %v1360 = vunpack.c.l.b16 %v552
        %v1361 = vunpack.c.l.b16 %v553
        %v1362 = vunpack.c.l.b16 %v554
        %v1363 = vunpack.c.l.b16 %v555
        %v1364 = vunpack.c.l.b16 %v556
        %v1365 = vunpack.c.l.b16 %v557
        %v1366 = vunpack.c.l.b16 %v558
        %v1367 = vunpack.c.l.b16 %v559
        %v1368 = vunpack.c.l.b16 %v560
        %v1369 = vunpack.c.l.b16 %v561
        %v1370 = vunpack.c.l.b16 %v562
        %v1371 = vunpack.c.l.b16 %v563
        %v1372 = vunpack.c.l.b16 %v564
        %v1373 = vunpack.c.l.b16 %v565
        %v1374 = vunpack.c.l.b16 %v566
        %v1375 = vunpack.c.l.b16 %v567
        %v1376 = vunpack.c.l.b16 %v568
        %v1377 = vunpack.c.l.b16 %v569
        %v1378 = vunpack.c.l.b16 %v570
        %v1379 = vunpack.c.l.b16 %v571
        %v1380 = vunpack.c.l.b16 %v572
        %v1381 = vunpack.c.l.b16 %v573
        %v1382 = vunpack.c.l.b16 %v574
        %v1383 = vunpack.c.l.b16 %v575
        %v1384 = vunpack.c.l.b16 %v576
        %v1385 = vunpack.c.l.b16 %v577
        %v1386 = vunpack.c.l.b16 %v578
        %v1387 = vunpack.c.l.b16 %v579
        %v1388 = vunpack.c.l.b16 %v580
        %v1389 = vunpack.c.l.b16 %v581
        %v1390 = vunpack.c.l.b16 %v582
        %v1391 = vunpack.c.l.b16 %v583
        %v1392 = vunpack.c.l.b16 %v584
        %v1393 = vunpack.c.l.b16 %v585
        %v1394 = vunpack.c.l.b16 %v586
        %v1395 = vunpack.c.l.b16 %v587
        %v1396 = vunpack.c.l.b16 %v588
        %v1397 = vunpack.c.l.b16 %v589
        %v1398 = vunpack.c.l.b16 %v590
        %v1399 = vunpack.c.l.b16 %v591
        %v1400 = vunpack.c.l.b16 %v592
        %v1401 = vunpack.c.l.b16 %v593
        %v1402 = vunpack.c.l.b16 %v594
        %v1403 = vunpack.c.l.b16 %v595
        %v1404 = vunpack.c.l.b16 %v596
        %v1405 = vunpack.c.l.b16 %v597
        %v1406 = vunpack.c.l.b16 %v598
        %v1407 = vunpack.c.l.b16 %v599
        %v1408 = vunpack.c.l.b16 %v600
        %v1409 = vunpack.c.l.b16 %v601
        %v1410 = vunpack.c.l.b16 %v602
        %v1411 = vunpack.c.l.b16 %v603
        %v1412 = vunpack.c.l.b16 %v604
        %v1413 = vunpack.c.l.b16 %v605
        %v1414 = vunpack.c.l.b16 %v606
        %v1415 = vunpack.c.l.b16 %v607
        %v1416 = vunpack.c.l.b16 %v608
        %v1417 = vunpack.c.l.b16 %v609
        %v1418 = vunpack.c.l.b16 %v610
        %v1419 = vunpack.c.l.b16 %v611
        %v1420 = vunpack.c.l.b16 %v612
        %v1421 = vunpack.c.l.b16 %v613
        %v1422 = vunpack.c.l.b16 %v614
        %v1423 = vunpack.c.l.b16 %v615
        %v1424 = vunpack.c.l.b16 %v616
        %v1425 = vunpack.c.l.b16 %v617
        %v1426 = vunpack.c.l.b16 %v618
        %v1427 = vunpack.c.l.b16 %v619
        %v1428 = vunpack.c.l.b16 %v620
        %v1429 = vunpack.c.l.b16 %v621
        %v1430 = vunpack.c.l.b16 %v622
        %v1431 = vunpack.c.l.b16 %v623
        %v1432 = vunpack.c.l.b16 %v624
        %v1433 = vunpack.c.l.b16 %v625
        %v1434 = vunpack.c.l.b16 %v626
        %v1435 = vunpack.c.l.b16 %v627
        %v1436 = vunpack.c.l.b16 %v628
        %v1437 = vunpack.c.l.b16 %v629
        %v1438 = vunpack.c.l.b16 %v630
        %v1439 = vunpack.c.l.b16 %v631
        %v1440 = vunpack.c.l.b16 %v632
        %v1441 = vunpack.c.l.b16 %v633
        %v1442 = vunpack.c.l.b16 %v634
        %v1443 = vunpack.c.l.b16 %v635
        %v1444 = vunpack.c.l.b16 %v636
        %v1445 = vunpack.c.l.b16 %v637
        %v1446 = vunpack.c.l.b16 %v638
        %v1447 = vunpack.c.l.b16 %v639
        %v1448 = vunpack.c.l.b16 %v640
        %v1449 = vunpack.c.l.b16 %v641
        %v1450 = vunpack.c.l.b16 %v642
        %v1451 = vunpack.c.l.b16 %v643
        %v1452 = vunpack.c.l.b16 %v644
        %v1453 = vunpack.c.l.b16 %v645
        %v1454 = vunpack.c.l.b16 %v646
        %v1455 = vunpack.c.l.b16 %v647
        %v1456 = vunpack.c.l.b16 %v648
        %v1457 = vunpack.c.l.b16 %v649
        %v1458 = vunpack.c.l.b16 %v650
        %v1459 = vunpack.c.l.b16 %v651
        %v1460 = vunpack.c.l.b16 %v652
        %v1461 = vunpack.c.l.b16 %v653
        %v1462 = vunpack.c.l.b16 %v654
        %v1463 = vunpack.c.l.b16 %v655
        %v1464 = vunpack.c.l.b16 %v656
        %v1465 = vunpack.c.l.b16 %v657
        %v1466 = vunpack.c.l.b16 %v658
        %v1467 = vunpack.c.l.b16 %v659
        %v1468 = vunpack.c.l.b16 %v660
        %v1469 = vunpack.c.l.b16 %v661
        %v1470 = vunpack.c.l.b16 %v662
        %v1471 = vunpack.c.l.b16 %v663
        %v1472 = vunpack.c.l.b16 %v664
        %v1473 = vunpack.c.l.b16 %v665
        %v1474 = vunpack.c.l.b16 %v666
        %v1475 = vunpack.c.l.b16 %v667
        %v1476 = vunpack.c.l.b16 %v668
        %v1477 = vunpack.c.l.b16 %v669
        %v1478 = vunpack.c.l.b16 %v670
        %v1479 = vunpack.c.l.b16 %v671
        %v1480 = vunpack.c.l.b16 %v672
        %v1481 = vunpack.c.l.b16 %v673
        %v1482 = vunpack.c.l.b16 %v674
        %v1483 = vunpack.c.l.b16 %v675
        %v1484 = vunpack.c.l.b16 %v676
        %v1485 = vunpack.c.l.b16 %v677
        %v1486 = vunpack.c.l.b16 %v678
        %v1487 = vunpack.c.l.b16 %v679
        %v1488 = vunpack.c.l.b16 %v680
        %v1489 = vunpack.c.l.b16 %v681
        %v1490 = vunpack.c.l.b16 %v682
        %v1491 = vunpack.c.l.b16 %v683
        %v1492 = vunpack.c.l.b16 %v684
        %v1493 = vunpack.c.l.b16 %v685
        %v1494 = vunpack.c.l.b16 %v686
        %v1495 = vunpack.c.l.b16 %v687
        %v1496 = vunpack.c.l.b16 %v688
        %v1497 = vunpack.c.l.b16 %v689
        %v1498 = vunpack.c.l.b16 %v690
        %v1499 = vunpack.c.l.b16 %v691
        %v1500 = vunpack.c.l.b16 %v692
        %v1501 = vunpack.c.l.b16 %v693
        %v1502 = vunpack.c.l.b16 %v694
        %v1503 = vunpack.c.l.b16 %v695
        %v1504 = vunpack.c.l.b16 %v696
        %v1505 = vunpack.c.l.b16 %v697
        %v1506 = vunpack.c.l.b16 %v698
        %v1507 = vunpack.c.l.b16 %v699
        %v1508 = vunpack.c.l.b16 %v700
        %v1509 = vunpack.c.l.b16 %v701
        %v1510 = vunpack.c.l.b16 %v702
        %v1511 = vunpack.c.l.b16 %v703
        %v1512 = vunpack.c.l.b16 %v704
        %v1513 = vunpack.c.l.b16 %v705
        %v1514 = vunpack.c.l.b16 %v706
        %v1515 = vunpack.c.l.b16 %v707
        %v1516 = vunpack.c.l.b16 %v708
        %v1517 = vunpack.c.l.b16 %v709
        %v1518 = vunpack.c.l.b16 %v710
        %v1519 = vunpack.c.l.b16 %v711
        %v1520 = vunpack.c.l.b16 %v712
        %v1521 = vpack.c.b16 %v1266, %v1265
        %v1522 = vpack.c.b16 %v1268, %v1267
        %v1523 = vpack.c.b16 %v1270, %v1269
        %v1524 = vpack.c.b16 %v1272, %v1271
        %v1525 = vpack.c.b16 %v1274, %v1273
        %v1526 = vpack.c.b16 %v1276, %v1275
        %v1527 = vpack.c.b16 %v1278, %v1277
        %v1528 = vpack.c.b16 %v1280, %v1279
        %v1529 = vpack.c.b16 %v1282, %v1281
        %v1530 = vpack.c.b16 %v1284, %v1283
        %v1531 = vpack.c.b16 %v1286, %v1285
        %v1532 = vpack.c.b16 %v1288, %v1287
        %v1533 = vpack.c.b16 %v1290, %v1289
        %v1534 = vpack.c.b16 %v1292, %v1291
        %v1535 = vpack.c.b16 %v1294, %v1293
        %v1536 = vpack.c.b16 %v1296, %v1295
        %v1537 = vpack.c.b16 %v1298, %v1297
        %v1538 = vpack.c.b16 %v1300, %v1299
        %v1539 = vpack.c.b16 %v1302, %v1301
        %v1540 = vpack.c.b16 %v1304, %v1303
        %v1541 = vpack.c.b16 %v1306, %v1305
        %v1542 = vpack.c.b16 %v1308, %v1307
        %v1543 = vpack.c.b16 %v1310, %v1309
        %v1544 = vpack.c.b16 %v1312, %v1311
        %v1545 = vpack.c.b16 %v1314, %v1313
        %v1546 = vpack.c.b16 %v1316, %v1315
        %v1547 = vpack.c.b16 %v1318, %v1317
        %v1548 = vpack.c.b16 %v1320, %v1319
        %v1549 = vpack.c.b16 %v1322, %v1321
        %v1550 = vpack.c.b16 %v1324, %v1323
        %v1551 = vpack.c.b16 %v1326, %v1325
        %v1552 = vpack.c.b16 %v1328, %v1327
        %v1553 = vpack.c.b16 %v1330, %v1329
        %v1554 = vpack.c.b16 %v1332, %v1331
        %v1555 = vpack.c.b16 %v1334, %v1333
        %v1556 = vpack.c.b16 %v1336, %v1335
        %v1557 = vpack.c.b16 %v1338, %v1337
        %v1558 = vpack.c.b16 %v1340, %v1339
        %v1559 = vpack.c.b16 %v1342, %v1341
        %v1560 = vpack.c.b16 %v1344, %v1343
        %v1561 = vpack.c.b16 %v1346, %v1345
        %v1562 = vpack.c.b16 %v1348, %v1347
        %v1563 = vpack.c.b16 %v1350, %v1349
        %v1564 = vpack.c.b16 %v1352, %v1351
        %v1565 = vpack.c.b16 %v1354, %v1353
        %v1566 = vpack.c.b16 %v1356, %v1355
        %v1567 = vpack.c.b16 %v1358, %v1357
        %v1568 = vpack.c.b16 %v1360, %v1359
        %v1569 = vpack.c.b16 %v1362, %v1361
        %v1570 = vpack.c.b16 %v1364, %v1363
        %v1571 = vpack.c.b16 %v1366, %v1365
        %v1572 = vpack.c.b16 %v1368, %v1367
        %v1573 = vpack.c.b16 %v1370, %v1369
        %v1574 = vpack.c.b16 %v1372, %v1371
        %v1575 = vpack.c.b16 %v1374, %v1373
        %v1576 = vpack.c.b16 %v1376, %v1375
        %v1577 = vpack.c.b16 %v1378, %v1377
        %v1578 = vpack.c.b16 %v1380, %v1379
        %v1579 = vpack.c.b16 %v1382, %v1381
        %v1580 = vpack.c.b16 %v1384, %v1383
        %v1581 = vpack.c.b16 %v1386, %v1385
        %v1582 = vpack.c.b16 %v1388, %v1387
        %v1583 = vpack.c.b16 %v1390, %v1389
        %v1584 = vpack.c.b16 %v1392, %v1391
        %v1585 = vpack.c.b16 %v1394, %v1393
        %v1586 = vpack.c.b16 %v1396, %v1395
        %v1587 = vpack.c.b16 %v1398, %v1397
        %v1588 = vpack.c.b16 %v1400, %v1399
        %v1589 = vpack.c.b16 %v1402, %v1401
        %v1590 = vpack.c.b16 %v1404, %v1403
        %v1591 = vpack.c.b16 %v1406, %v1405
        %v1592 = vpack.c.b16 %v1408, %v1407
        %v1593 = vpack.c.b16 %v1410, %v1409
        %v1594 = vpack.c.b16 %v1412, %v1411
        %v1595 = vpack.c.b16 %v1414, %v1413
        %v1596 = vpack.c.b16 %v1416, %v1415
        %v1597 = vpack.c.b16 %v1418, %v1417
        %v1598 = vpack.c.b16 %v1420, %v1419
        %v1599 = vpack.c.b16 %v1422, %v1421
        %v1600 = vpack.c.b16 %v1424, %v1423
        %v1601 = vpack.c.b16 %v1426, %v1425
        %v1602 = vpack.c.b16 %v1428, %v1427
        %v1603 = vpack.c.b16 %v1430, %v1429
        %v1604 = vpack.c.b16 %v1432, %v1431
        %v1605 = vpack.c.b16 %v1434, %v1433
        %v1606 = vpack.c.b16 %v1436, %v1435
        %v1607 = vpack.c.b16 %v1438, %v1437
        %v1608 = vpack.c.b16 %v1440, %v1439
        %v1609 = vpack.c.b16 %v1442, %v1441
        %v1610 = vpack.c.b16 %v1444, %v1443
        %v1611 = vpack.c.b16 %v1446, %v1445
        %v1612 = vpack.c.b16 %v1448, %v1447
        %v1613 = vpack.c.b16 %v1450, %v1449
        %v1614 = vpack.c.b16 %v1452, %v1451
        %v1615 = vpack.c.b16 %v1454, %v1453
        %v1616 = vpack.c.b16 %v1456, %v1455
        %v1617 = vpack.c.b16 %v1458, %v1457
        %v1618 = vpack.c.b16 %v1460, %v1459
        %v1619 = vpack.c.b16 %v1462, %v1461
        %v1620 = vpack.c.b16 %v1464, %v1463
        %v1621 = vpack.c.b16 %v1466, %v1465
        %v1622 = vpack.c.b16 %v1468, %v1467
        %v1623 = vpack.c.b16 %v1470, %v1469
        %v1624 = vpack.c.b16 %v1472, %v1471
        %v1625 = vpack.c.b16 %v1474, %v1473
        %v1626 = vpack.c.b16 %v1476, %v1475
        %v1627 = vpack.c.b16 %v1478, %v1477
        %v1628 = vpack.c.b16 %v1480, %v1479
        %v1629 = vpack.c.b16 %v1482, %v1481
        %v1630 = vpack.c.b16 %v1484, %v1483
        %v1631 = vpack.c.b16 %v1486, %v1485
        %v1632 = vpack.c.b16 %v1488, %v1487
        %v1633 = vpack.c.b16 %v1490, %v1489
        %v1634 = vpack.c.b16 %v1492, %v1491
        %v1635 = vpack.c.b16 %v1494, %v1493
        %v1636 = vpack.c.b16 %v1496, %v1495
        %v1637 = vpack.c.b16 %v1498, %v1497
        %v1638 = vpack.c.b16 %v1500, %v1499
        %v1639 = vpack.c.b16 %v1502, %v1501
        %v1640 = vpack.c.b16 %v1504, %v1503
        %v1641 = vpack.c.b16 %v1506, %v1505
        %v1642 = vpack.c.b16 %v1508, %v1507
        %v1643 = vpack.c.b16 %v1510, %v1509
        %v1644 = vpack.c.b16 %v1512, %v1511
        %v1645 = vpack.c.b16 %v1514, %v1513
        %v1646 = vpack.c.b16 %v1516, %v1515
        %v1647 = vpack.c.b16 %v1518, %v1517
        %v1648 = vpack.c.b16 %v1520, %v1519
        %1777 = vmatprep.subr.bf16.mxu0 0
        %1778 = vmatpush1.bf16.msra.mxu0 %v1521
        %1779 = vmatprep.subr.bf16.mxu0 0
        %1780 = vmatpush1.bf16.msra.mxu0 %v1522
        %1781 = vmatprep.subr.bf16.mxu0 0
        %1782 = vmatpush1.bf16.msra.mxu0 %v1523
        %1783 = vmatprep.subr.bf16.mxu0 0
        %1784 = vmatpush1.bf16.msra.mxu0 %v1524
        %1785 = vmatprep.subr.bf16.mxu0 0
        %1786 = vmatpush1.bf16.msra.mxu0 %v1525
        %1787 = vmatprep.subr.bf16.mxu0 0
        %1788 = vmatpush1.bf16.msra.mxu0 %v1526
        %1789 = vmatprep.subr.bf16.mxu0 0
        %1790 = vmatpush1.bf16.msra.mxu0 %v1527
        %1791 = vmatprep.subr.bf16.mxu0 0
        %1792 = vmatpush1.bf16.msra.mxu0 %v1528
        %1793 = vmatprep.subr.bf16.mxu0 0
        %1794 = vmatpush1.bf16.msra.mxu0 %v1529
        %1795 = vmatprep.subr.bf16.mxu0 0
        %1796 = vmatpush1.bf16.msra.mxu0 %v1530
        %1797 = vmatprep.subr.bf16.mxu0 0
        %1798 = vmatpush1.bf16.msra.mxu0 %v1531
        %1799 = vmatprep.subr.bf16.mxu0 0
        %1800 = vmatpush1.bf16.msra.mxu0 %v1532
        %1801 = vmatprep.subr.bf16.mxu0 0
        %1802 = vmatpush1.bf16.msra.mxu0 %v1533
        %1803 = vmatprep.subr.bf16.mxu0 0
        %1804 = vmatpush1.bf16.msra.mxu0 %v1534
        %1805 = vmatprep.subr.bf16.mxu0 0
        %1806 = vmatpush1.bf16.msra.mxu0 %v1535
        %1807 = vmatprep.subr.bf16.mxu0 0
        %1808 = vmatpush1.bf16.msra.mxu0 %v1536
        %1809 = vmatprep.mubr.bf16.mxu0 %v882
        %1810 = vmatmul.mubr.bf16.gmra.mrb[0].mxu0 %v881
        %v1811 = vpop.f32.mrb[0].mxu0
        %v1812 = vadd.f32 0.0, %v1811
        %v1813 = vpop.f32.mrb[0].mxu0
        %v1814 = vpop.f32.mrb[0].mxu0
        %v1815 = vadd.f32 0.0, %v1814
        %v1816 = vpop.f32.mrb[0].mxu0
        %1817 = vmatprep.mubr.bf16.mxu0 %v898
        %1818 = vmatmul.mubr.bf16.gmra.mrb[0].mxu0 %v897
        %v1819 = vpop.f32.mrb[0].mxu0
        %v1820 = vadd.f32 0.0, %v1819
        %v1821 = vpop.f32.mrb[0].mxu0
        %v1822 = vpop.f32.mrb[0].mxu0
        %v1823 = vadd.f32 0.0, %v1822
        %v1824 = vpop.f32.mrb[0].mxu0
        %1825 = vmatprep.mubr.bf16.mxu0 %v914
        %1826 = vmatmul.mubr.bf16.gmra.mrb[0].mxu0 %v913
        %v1827 = vpop.f32.mrb[0].mxu0
        %v1828 = vadd.f32 0.0, %v1827
        %v1829 = vpop.f32.mrb[0].mxu0
        %v1830 = vpop.f32.mrb[0].mxu0
        %v1831 = vadd.f32 0.0, %v1830
        %v1832 = vpop.f32.mrb[0].mxu0
        %1833 = vmatprep.mubr.bf16.mxu0 %v930
        %1834 = vmatmul.mubr.bf16.gmra.mrb[0].mxu0 %v929
        %v1835 = vpop.f32.mrb[0].mxu0
        %v1836 = vadd.f32 0.0, %v1835
        %v1837 = vpop.f32.mrb[0].mxu0
        %v1838 = vpop.f32.mrb[0].mxu0
        %v1839 = vpop.f32.mrb[0].mxu0
        %1840 = vdwg.mxu0
        %1841 = vmatprep.subr.bf16.mxu0 0
        %1842 = vmatpush1.bf16.msra.mxu0 %v1537
        %1843 = vmatprep.subr.bf16.mxu0 0
        %1844 = vmatpush1.bf16.msra.mxu0 %v1538
        %1845 = vmatprep.subr.bf16.mxu0 0
        %1846 = vmatpush1.bf16.msra.mxu0 %v1539
        %1847 = vmatprep.subr.bf16.mxu0 0
        %1848 = vmatpush1.bf16.msra.mxu0 %v1540
        %1849 = vmatprep.subr.bf16.mxu0 0
        %1850 = vmatpush1.bf16.msra.mxu0 %v1541
        %1851 = vmatprep.subr.bf16.mxu0 0
        %1852 = vmatpush1.bf16.msra.mxu0 %v1542
        %1853 = vmatprep.subr.bf16.mxu0 0
        %1854 = vmatpush1.bf16.msra.mxu0 %v1543
        %1855 = vmatprep.subr.bf16.mxu0 0
        %1856 = vmatpush1.bf16.msra.mxu0 %v1544
        %1857 = vmatprep.subr.bf16.mxu0 0
        %1858 = vmatpush1.bf16.msra.mxu0 %v1545
        %1859 = vmatprep.subr.bf16.mxu0 0
        %1860 = vmatpush1.bf16.msra.mxu0 %v1546
        %1861 = vmatprep.subr.bf16.mxu0 0
        %1862 = vmatpush1.bf16.msra.mxu0 %v1547
        %1863 = vmatprep.subr.bf16.mxu0 0
        %1864 = vmatpush1.bf16.msra.mxu0 %v1548
        %1865 = vmatprep.subr.bf16.mxu0 0
        %1866 = vmatpush1.bf16.msra.mxu0 %v1549
        %1867 = vmatprep.subr.bf16.mxu0 0
        %1868 = vmatpush1.bf16.msra.mxu0 %v1550
        %1869 = vmatprep.subr.bf16.mxu0 0
        %1870 = vmatpush1.bf16.msra.mxu0 %v1551
        %1871 = vmatprep.subr.bf16.mxu0 0
        %1872 = vmatpush1.bf16.msra.mxu0 %v1552
        %1873 = vmatprep.mubr.bf16.mxu0 %v884
        %1874 = vmatmul.mubr.bf16.gmra.mrb[0].mxu0 %v883
        %v1875 = vpop.f32.mrb[0].mxu0
        %v1876 = vadd.f32 %v1812, %v1875
        %v1877 = vpop.f32.mrb[0].mxu0
        %v1878 = vpop.f32.mrb[0].mxu0
        %v1879 = vadd.f32 %v1815, %v1878
        %v1880 = vpop.f32.mrb[0].mxu0
        %1881 = vmatprep.mubr.bf16.mxu0 %v900
        %1882 = vmatmul.mubr.bf16.gmra.mrb[0].mxu0 %v899
        %v1883 = vpop.f32.mrb[0].mxu0
        %v1884 = vadd.f32 %v1820, %v1883
        %v1885 = vpop.f32.mrb[0].mxu0
        %v1886 = vpop.f32.mrb[0].mxu0
        %v1887 = vadd.f32 %v1823, %v1886
        %v1888 = vpop.f32.mrb[0].mxu0
        %1889 = vmatprep.mubr.bf16.mxu0 %v916
        %1890 = vmatmul.mubr.bf16.gmra.mrb[0].mxu0 %v915
        %v1891 = vpop.f32.mrb[0].mxu0
        %v1892 = vadd.f32 %v1828, %v1891
        %v1893 = vpop.f32.mrb[0].mxu0
        %v1894 = vpop.f32.mrb[0].mxu0
        %v1895 = vadd.f32 %v1831, %v1894
        %v1896 = vpop.f32.mrb[0].mxu0
        %1897 = vmatprep.mubr.bf16.mxu0 %v932
        %1898 = vmatmul.mubr.bf16.gmra.mrb[0].mxu0 %v931
        %v1899 = vpop.f32.mrb[0].mxu0
        %v1900 = vadd.f32 %v1836, %v1899
        %v1901 = vpop.f32.mrb[0].mxu0
        %v1902 = vpop.f32.mrb[0].mxu0
        %v1903 = vpop.f32.mrb[0].mxu0
        %1904 = vdwg.mxu0
        %1905 = vmatprep.subr.bf16.mxu0 0
        %1906 = vmatpush1.bf16.msra.mxu0 %v1553
        %1907 = vmatprep.subr.bf16.mxu0 0
        %1908 = vmatpush1.bf16.msra.mxu0 %v1554
        %1909 = vmatprep.subr.bf16.mxu0 0
        %1910 = vmatpush1.bf16.msra.mxu0 %v1555
        %1911 = vmatprep.subr.bf16.mxu0 0
        %1912 = vmatpush1.bf16.msra.mxu0 %v1556
        %1913 = vmatprep.subr.bf16.mxu0 0
        %1914 = vmatpush1.bf16.msra.mxu0 %v1557
        %1915 = vmatprep.subr.bf16.mxu0 0
        %1916 = vmatpush1.bf16.msra.mxu0 %v1558
        %1917 = vmatprep.subr.bf16.mxu0 0
        %1918 = vmatpush1.bf16.msra.mxu0 %v1559
        %1919 = vmatprep.subr.bf16.mxu0 0
        %1920 = vmatpush1.bf16.msra.mxu0 %v1560
        %1921 = vmatprep.subr.bf16.mxu0 0
        %1922 = vmatpush1.bf16.msra.mxu0 %v1561
        %1923 = vmatprep.subr.bf16.mxu0 0
        %1924 = vmatpush1.bf16.msra.mxu0 %v1562
        %1925 = vmatprep.subr.bf16.mxu0 0
        %1926 = vmatpush1.bf16.msra.mxu0 %v1563
        %1927 = vmatprep.subr.bf16.mxu0 0
        %1928 = vmatpush1.bf16.msra.mxu0 %v1564
        %1929 = vmatprep.subr.bf16.mxu0 0
        %1930 = vmatpush1.bf16.msra.mxu0 %v1565
        %1931 = vmatprep.subr.bf16.mxu0 0
        %1932 = vmatpush1.bf16.msra.mxu0 %v1566
        %1933 = vmatprep.subr.bf16.mxu0 0
        %1934 = vmatpush1.bf16.msra.mxu0 %v1567
        %1935 = vmatprep.subr.bf16.mxu0 0
        %1936 = vmatpush1.bf16.msra.mxu0 %v1568
        %1937 = vmatprep.mubr.bf16.mxu0 %v886
        %1938 = vmatmul.mubr.bf16.gmra.mrb[0].mxu0 %v885
        %v1939 = vpop.f32.mrb[0].mxu0
        %v1940 = vadd.f32 %v1876, %v1939
        %v1941 = vpop.f32.mrb[0].mxu0
        %v1942 = vpop.f32.mrb[0].mxu0
        %v1943 = vadd.f32 %v1879, %v1942
        %v1944 = vpop.f32.mrb[0].mxu0
        %1945 = vmatprep.mubr.bf16.mxu0 %v902
        %1946 = vmatmul.mubr.bf16.gmra.mrb[0].mxu0 %v901
        %v1947 = vpop.f32.mrb[0].mxu0
        %v1948 = vadd.f32 %v1884, %v1947
        %v1949 = vpop.f32.mrb[0].mxu0
        %v1950 = vpop.f32.mrb[0].mxu0
        %v1951 = vadd.f32 %v1887, %v1950
        %v1952 = vpop.f32.mrb[0].mxu0
        %1953 = vmatprep.mubr.bf16.mxu0 %v918
        %1954 = vmatmul.mubr.bf16.gmra.mrb[0].mxu0 %v917
        %v1955 = vpop.f32.mrb[0].mxu0
        %v1956 = vadd.f32 %v1892, %v1955
        %v1957 = vpop.f32.mrb[0].mxu0
        %v1958 = vpop.f32.mrb[0].mxu0
        %v1959 = vadd.f32 %v1895, %v1958
        %v1960 = vpop.f32.mrb[0].mxu0
        %1961 = vmatprep.mubr.bf16.mxu0 %v934
        %1962 = vmatmul.mubr.bf16.gmra.mrb[0].mxu0 %v933
        %v1963 = vpop.f32.mrb[0].mxu0
        %v1964 = vadd.f32 %v1900, %v1963
        %v1965 = vpop.f32.mrb[0].mxu0
        %v1966 = vpop.f32.mrb[0].mxu0
        %v1967 = vpop.f32.mrb[0].mxu0
        %1968 = vdwg.mxu0
        %1969 = vmatprep.subr.bf16.mxu0 0
        %1970 = vmatpush1.bf16.msra.mxu0 %v1569
        %1971 = vmatprep.subr.bf16.mxu0 0
        %1972 = vmatpush1.bf16.msra.mxu0 %v1570
        %1973 = vmatprep.subr.bf16.mxu0 0
        %1974 = vmatpush1.bf16.msra.mxu0 %v1571
        %1975 = vmatprep.subr.bf16.mxu0 0
        %1976 = vmatpush1.bf16.msra.mxu0 %v1572
        %1977 = vmatprep.subr.bf16.mxu0 0
        %1978 = vmatpush1.bf16.msra.mxu0 %v1573
        %1979 = vmatprep.subr.bf16.mxu0 0
        %1980 = vmatpush1.bf16.msra.mxu0 %v1574
        %1981 = vmatprep.subr.bf16.mxu0 0
        %1982 = vmatpush1.bf16.msra.mxu0 %v1575
        %1983 = vmatprep.subr.bf16.mxu0 0
        %1984 = vmatpush1.bf16.msra.mxu0 %v1576
        %1985 = vmatprep.subr.bf16.mxu0 0
        %1986 = vmatpush1.bf16.msra.mxu0 %v1577
        %1987 = vmatprep.subr.bf16.mxu0 0
        %1988 = vmatpush1.bf16.msra.mxu0 %v1578
        %1989 = vmatprep.subr.bf16.mxu0 0
        %1990 = vmatpush1.bf16.msra.mxu0 %v1579
        %1991 = vmatprep.subr.bf16.mxu0 0
        %1992 = vmatpush1.bf16.msra.mxu0 %v1580
        %1993 = vmatprep.subr.bf16.mxu0 0
        %1994 = vmatpush1.bf16.msra.mxu0 %v1581
        %1995 = vmatprep.subr.bf16.mxu0 0
        %1996 = vmatpush1.bf16.msra.mxu0 %v1582
        %1997 = vmatprep.subr.bf16.mxu0 0
        %1998 = vmatpush1.bf16.msra.mxu0 %v1583
        %1999 = vmatprep.subr.bf16.mxu0 0
        %2000 = vmatpush1.bf16.msra.mxu0 %v1584
        %2001 = vmatprep.mubr.bf16.mxu0 %v888
        %2002 = vmatmul.mubr.bf16.gmra.mrb[0].mxu0 %v887
        %v2003 = vpop.f32.mrb[0].mxu0
        %v2004 = vadd.f32 %v1940, %v2003
        %v2005 = vpop.f32.mrb[0].mxu0
        %v2006 = vpop.f32.mrb[0].mxu0
        %v2007 = vadd.f32 %v1943, %v2006
        %v2008 = vpop.f32.mrb[0].mxu0
        %2009 = vmatprep.mubr.bf16.mxu0 %v904
        %2010 = vmatmul.mubr.bf16.gmra.mrb[0].mxu0 %v903
        %v2011 = vpop.f32.mrb[0].mxu0
        %v2012 = vadd.f32 %v1948, %v2011
        %v2013 = vpop.f32.mrb[0].mxu0
        %v2014 = vpop.f32.mrb[0].mxu0
        %v2015 = vadd.f32 %v1951, %v2014
        %v2016 = vpop.f32.mrb[0].mxu0
        %2017 = vmatprep.mubr.bf16.mxu0 %v920
        %2018 = vmatmul.mubr.bf16.gmra.mrb[0].mxu0 %v919
        %v2019 = vpop.f32.mrb[0].mxu0
        %v2020 = vadd.f32 %v1956, %v2019
        %v2021 = vpop.f32.mrb[0].mxu0
        %v2022 = vpop.f32.mrb[0].mxu0
        %v2023 = vadd.f32 %v1959, %v2022
        %v2024 = vpop.f32.mrb[0].mxu0
        %2025 = vmatprep.mubr.bf16.mxu0 %v936
        %2026 = vmatmul.mubr.bf16.gmra.mrb[0].mxu0 %v935
        %v2027 = vpop.f32.mrb[0].mxu0
        %v2028 = vadd.f32 %v1964, %v2027
        %v2029 = vpop.f32.mrb[0].mxu0
        %v2030 = vpop.f32.mrb[0].mxu0
        %v2031 = vpop.f32.mrb[0].mxu0
        %2032 = vdwg.mxu0
        %2033 = vmatprep.subr.bf16.mxu0 0
        %2034 = vmatpush1.bf16.msra.mxu0 %v1585
        %2035 = vmatprep.subr.bf16.mxu0 0
        %2036 = vmatpush1.bf16.msra.mxu0 %v1586
        %2037 = vmatprep.subr.bf16.mxu0 0
        %2038 = vmatpush1.bf16.msra.mxu0 %v1587
        %2039 = vmatprep.subr.bf16.mxu0 0
        %2040 = vmatpush1.bf16.msra.mxu0 %v1588
        %2041 = vmatprep.subr.bf16.mxu0 0
        %2042 = vmatpush1.bf16.msra.mxu0 %v1589
        %2043 = vmatprep.subr.bf16.mxu0 0
        %2044 = vmatpush1.bf16.msra.mxu0 %v1590
        %2045 = vmatprep.subr.bf16.mxu0 0
        %2046 = vmatpush1.bf16.msra.mxu0 %v1591
        %2047 = vmatprep.subr.bf16.mxu0 0
        %2048 = vmatpush1.bf16.msra.mxu0 %v1592
        %2049 = vmatprep.subr.bf16.mxu0 0
        %2050 = vmatpush1.bf16.msra.mxu0 %v1593
        %2051 = vmatprep.subr.bf16.mxu0 0
        %2052 = vmatpush1.bf16.msra.mxu0 %v1594
        %2053 = vmatprep.subr.bf16.mxu0 0
        %2054 = vmatpush1.bf16.msra.mxu0 %v1595
        %2055 = vmatprep.subr.bf16.mxu0 0
        %2056 = vmatpush1.bf16.msra.mxu0 %v1596
        %2057 = vmatprep.subr.bf16.mxu0 0
        %2058 = vmatpush1.bf16.msra.mxu0 %v1597
        %2059 = vmatprep.subr.bf16.mxu0 0
        %2060 = vmatpush1.bf16.msra.mxu0 %v1598
        %2061 = vmatprep.subr.bf16.mxu0 0
        %2062 = vmatpush1.bf16.msra.mxu0 %v1599
        %2063 = vmatprep.subr.bf16.mxu0 0
        %2064 = vmatpush1.bf16.msra.mxu0 %v1600
        %2065 = vmatprep.mubr.bf16.mxu0 %v890
        %2066 = vmatmul.mubr.bf16.gmra.mrb[0].mxu0 %v889
        %v2067 = vpop.f32.mrb[0].mxu0
        %v2068 = vadd.f32 %v2004, %v2067
        %v2069 = vpop.f32.mrb[0].mxu0
        %v2070 = vpop.f32.mrb[0].mxu0
        %v2071 = vadd.f32 %v2007, %v2070
        %v2072 = vpop.f32.mrb[0].mxu0
        %2073 = vmatprep.mubr.bf16.mxu0 %v906
        %2074 = vmatmul.mubr.bf16.gmra.mrb[0].mxu0 %v905
        %v2075 = vpop.f32.mrb[0].mxu0
        %v2076 = vadd.f32 %v2012, %v2075
        %v2077 = vpop.f32.mrb[0].mxu0
        %v2078 = vpop.f32.mrb[0].mxu0
        %v2079 = vadd.f32 %v2015, %v2078
        %v2080 = vpop.f32.mrb[0].mxu0
        %2081 = vmatprep.mubr.bf16.mxu0 %v922
        %2082 = vmatmul.mubr.bf16.gmra.mrb[0].mxu0 %v921
        %v2083 = vpop.f32.mrb[0].mxu0
        %v2084 = vadd.f32 %v2020, %v2083
        %v2085 = vpop.f32.mrb[0].mxu0
        %v2086 = vpop.f32.mrb[0].mxu0
        %v2087 = vadd.f32 %v2023, %v2086
        %v2088 = vpop.f32.mrb[0].mxu0
        %2089 = vmatprep.mubr.bf16.mxu0 %v938
        %2090 = vmatmul.mubr.bf16.gmra.mrb[0].mxu0 %v937
        %v2091 = vpop.f32.mrb[0].mxu0
        %v2092 = vadd.f32 %v2028, %v2091
        %v2093 = vpop.f32.mrb[0].mxu0
        %v2094 = vpop.f32.mrb[0].mxu0
        %v2095 = vpop.f32.mrb[0].mxu0
        %2096 = vdwg.mxu0
        %2097 = vmatprep.subr.bf16.mxu0 0
        %2098 = vmatpush1.bf16.msra.mxu0 %v1601
        %2099 = vmatprep.subr.bf16.mxu0 0
        %2100 = vmatpush1.bf16.msra.mxu0 %v1602
        %2101 = vmatprep.subr.bf16.mxu0 0
        %2102 = vmatpush1.bf16.msra.mxu0 %v1603
        %2103 = vmatprep.subr.bf16.mxu0 0
        %2104 = vmatpush1.bf16.msra.mxu0 %v1604
        %2105 = vmatprep.subr.bf16.mxu0 0
        %2106 = vmatpush1.bf16.msra.mxu0 %v1605
        %2107 = vmatprep.subr.bf16.mxu0 0
        %2108 = vmatpush1.bf16.msra.mxu0 %v1606
        %2109 = vmatprep.subr.bf16.mxu0 0
        %2110 = vmatpush1.bf16.msra.mxu0 %v1607
        %2111 = vmatprep.subr.bf16.mxu0 0
        %2112 = vmatpush1.bf16.msra.mxu0 %v1608
        %2113 = vmatprep.subr.bf16.mxu0 0
        %2114 = vmatpush1.bf16.msra.mxu0 %v1609
        %2115 = vmatprep.subr.bf16.mxu0 0
        %2116 = vmatpush1.bf16.msra.mxu0 %v1610
        %2117 = vmatprep.subr.bf16.mxu0 0
        %2118 = vmatpush1.bf16.msra.mxu0 %v1611
        %2119 = vmatprep.subr.bf16.mxu0 0
        %2120 = vmatpush1.bf16.msra.mxu0 %v1612
        %2121 = vmatprep.subr.bf16.mxu0 0
        %2122 = vmatpush1.bf16.msra.mxu0 %v1613
        %2123 = vmatprep.subr.bf16.mxu0 0
        %2124 = vmatpush1.bf16.msra.mxu0 %v1614
        %2125 = vmatprep.subr.bf16.mxu0 0
        %2126 = vmatpush1.bf16.msra.mxu0 %v1615
        %2127 = vmatprep.subr.bf16.mxu0 0
        %2128 = vmatpush1.bf16.msra.mxu0 %v1616
        %2129 = vmatprep.mubr.bf16.mxu0 %v892
        %2130 = vmatmul.mubr.bf16.gmra.mrb[0].mxu0 %v891
        %v2131 = vpop.f32.mrb[0].mxu0
        %v2132 = vadd.f32 %v2068, %v2131
        %v2133 = vpop.f32.mrb[0].mxu0
        %v2134 = vpop.f32.mrb[0].mxu0
        %v2135 = vadd.f32 %v2071, %v2134
        %v2136 = vpop.f32.mrb[0].mxu0
        %2137 = vmatprep.mubr.bf16.mxu0 %v908
        %2138 = vmatmul.mubr.bf16.gmra.mrb[0].mxu0 %v907
        %v2139 = vpop.f32.mrb[0].mxu0
        %v2140 = vadd.f32 %v2076, %v2139
        %v2141 = vpop.f32.mrb[0].mxu0
        %v2142 = vpop.f32.mrb[0].mxu0
        %v2143 = vadd.f32 %v2079, %v2142
        %v2144 = vpop.f32.mrb[0].mxu0
        %2145 = vmatprep.mubr.bf16.mxu0 %v924
        %2146 = vmatmul.mubr.bf16.gmra.mrb[0].mxu0 %v923
        %v2147 = vpop.f32.mrb[0].mxu0
        %v2148 = vadd.f32 %v2084, %v2147
        %v2149 = vpop.f32.mrb[0].mxu0
        %v2150 = vpop.f32.mrb[0].mxu0
        %v2151 = vadd.f32 %v2087, %v2150
        %v2152 = vpop.f32.mrb[0].mxu0
        %2153 = vmatprep.mubr.bf16.mxu0 %v940
        %2154 = vmatmul.mubr.bf16.gmra.mrb[0].mxu0 %v939
        %v2155 = vpop.f32.mrb[0].mxu0
        %v2156 = vadd.f32 %v2092, %v2155
        %v2157 = vpop.f32.mrb[0].mxu0
        %v2158 = vpop.f32.mrb[0].mxu0
        %v2159 = vpop.f32.mrb[0].mxu0
        %2160 = vdwg.mxu0
        %2161 = vmatprep.subr.bf16.mxu0 0
        %2162 = vmatpush1.bf16.msra.mxu0 %v1617
        %2163 = vmatprep.subr.bf16.mxu0 0
        %2164 = vmatpush1.bf16.msra.mxu0 %v1618
        %2165 = vmatprep.subr.bf16.mxu0 0
        %2166 = vmatpush1.bf16.msra.mxu0 %v1619
        %2167 = vmatprep.subr.bf16.mxu0 0
        %2168 = vmatpush1.bf16.msra.mxu0 %v1620
        %2169 = vmatprep.subr.bf16.mxu0 0
        %2170 = vmatpush1.bf16.msra.mxu0 %v1621
        %2171 = vmatprep.subr.bf16.mxu0 0
        %2172 = vmatpush1.bf16.msra.mxu0 %v1622
        %2173 = vmatprep.subr.bf16.mxu0 0
        %2174 = vmatpush1.bf16.msra.mxu0 %v1623
        %2175 = vmatprep.subr.bf16.mxu0 0
        %2176 = vmatpush1.bf16.msra.mxu0 %v1624
        %2177 = vmatprep.subr.bf16.mxu0 0
        %2178 = vmatpush1.bf16.msra.mxu0 %v1625
        %2179 = vmatprep.subr.bf16.mxu0 0
        %2180 = vmatpush1.bf16.msra.mxu0 %v1626
        %2181 = vmatprep.subr.bf16.mxu0 0
        %2182 = vmatpush1.bf16.msra.mxu0 %v1627
        %2183 = vmatprep.subr.bf16.mxu0 0
        %2184 = vmatpush1.bf16.msra.mxu0 %v1628
        %2185 = vmatprep.subr.bf16.mxu0 0
        %2186 = vmatpush1.bf16.msra.mxu0 %v1629
        %2187 = vmatprep.subr.bf16.mxu0 0
        %2188 = vmatpush1.bf16.msra.mxu0 %v1630
        %2189 = vmatprep.subr.bf16.mxu0 0
        %2190 = vmatpush1.bf16.msra.mxu0 %v1631
        %2191 = vmatprep.subr.bf16.mxu0 0
        %2192 = vmatpush1.bf16.msra.mxu0 %v1632
        %2193 = vmatprep.mubr.bf16.mxu0 %v894
        %2194 = vmatmul.mubr.bf16.gmra.mrb[0].mxu0 %v893
        %v2195 = vpop.f32.mrb[0].mxu0
        %v2196 = vadd.f32 %v2132, %v2195
        %v2197 = vpop.f32.mrb[0].mxu0
        %v2198 = vpop.f32.mrb[0].mxu0
        %v2199 = vadd.f32 %v2135, %v2198
        %v2200 = vpop.f32.mrb[0].mxu0
        %2201 = vmatprep.mubr.bf16.mxu0 %v910
        %2202 = vmatmul.mubr.bf16.gmra.mrb[0].mxu0 %v909
        %v2203 = vpop.f32.mrb[0].mxu0
        %v2204 = vadd.f32 %v2140, %v2203
        %v2205 = vpop.f32.mrb[0].mxu0
        %v2206 = vpop.f32.mrb[0].mxu0
        %v2207 = vadd.f32 %v2143, %v2206
        %v2208 = vpop.f32.mrb[0].mxu0
        %2209 = vmatprep.mubr.bf16.mxu0 %v926
        %2210 = vmatmul.mubr.bf16.gmra.mrb[0].mxu0 %v925
        %v2211 = vpop.f32.mrb[0].mxu0
        %v2212 = vadd.f32 %v2148, %v2211
        %v2213 = vpop.f32.mrb[0].mxu0
        %v2214 = vpop.f32.mrb[0].mxu0
        %v2215 = vadd.f32 %v2151, %v2214
        %v2216 = vpop.f32.mrb[0].mxu0
        %2217 = vmatprep.mubr.bf16.mxu0 %v942
        %2218 = vmatmul.mubr.bf16.gmra.mrb[0].mxu0 %v941
        %v2219 = vpop.f32.mrb[0].mxu0
        %v2220 = vadd.f32 %v2156, %v2219
        %v2221 = vpop.f32.mrb[0].mxu0
        %v2222 = vpop.f32.mrb[0].mxu0
        %v2223 = vpop.f32.mrb[0].mxu0
        %2224 = vdwg.mxu0
        %2225 = vmatprep.subr.bf16.mxu0 0
        %2226 = vmatpush1.bf16.msra.mxu0 %v1633
        %2227 = vmatprep.subr.bf16.mxu0 0
        %2228 = vmatpush1.bf16.msra.mxu0 %v1634
        %2229 = vmatprep.subr.bf16.mxu0 0
        %2230 = vmatpush1.bf16.msra.mxu0 %v1635
        %2231 = vmatprep.subr.bf16.mxu0 0
        %2232 = vmatpush1.bf16.msra.mxu0 %v1636
        %2233 = vmatprep.subr.bf16.mxu0 0
        %2234 = vmatpush1.bf16.msra.mxu0 %v1637
        %2235 = vmatprep.subr.bf16.mxu0 0
        %2236 = vmatpush1.bf16.msra.mxu0 %v1638
        %2237 = vmatprep.subr.bf16.mxu0 0
        %2238 = vmatpush1.bf16.msra.mxu0 %v1639
        %2239 = vmatprep.subr.bf16.mxu0 0
        %2240 = vmatpush1.bf16.msra.mxu0 %v1640
        %2241 = vmatprep.subr.bf16.mxu0 0
        %2242 = vmatpush1.bf16.msra.mxu0 %v1641
        %2243 = vmatprep.subr.bf16.mxu0 0
        %2244 = vmatpush1.bf16.msra.mxu0 %v1642
        %2245 = vmatprep.subr.bf16.mxu0 0
        %2246 = vmatpush1.bf16.msra.mxu0 %v1643
        %2247 = vmatprep.subr.bf16.mxu0 0
        %2248 = vmatpush1.bf16.msra.mxu0 %v1644
        %2249 = vmatprep.subr.bf16.mxu0 0
        %2250 = vmatpush1.bf16.msra.mxu0 %v1645
        %2251 = vmatprep.subr.bf16.mxu0 0
        %2252 = vmatpush1.bf16.msra.mxu0 %v1646
        %2253 = vmatprep.subr.bf16.mxu0 0
        %2254 = vmatpush1.bf16.msra.mxu0 %v1647
        %2255 = vmatprep.subr.bf16.mxu0 0
        %2256 = vmatpush1.bf16.msra.mxu0 %v1648
        %2257 = vmatprep.mubr.bf16.mxu0 %v896
        %2258 = vmatmul.mubr.bf16.gmra.mrb[0].mxu0 %v895
        %v2259 = vpop.f32.mrb[0].mxu0
        %v2260 = vadd.f32 %v2196, %v2259
        %v2261 = vpop.f32.mrb[0].mxu0
        %v2262 = vpop.f32.mrb[0].mxu0
        %v2263 = vadd.f32 %v2199, %v2262
        %v2264 = vpop.f32.mrb[0].mxu0
        %2265 = vmatprep.mubr.bf16.mxu0 %v912
        %2266 = vmatmul.mubr.bf16.gmra.mrb[0].mxu0 %v911
        %v2267 = vpop.f32.mrb[0].mxu0
        %v2268 = vadd.f32 %v2204, %v2267
        %v2269 = vpop.f32.mrb[0].mxu0
        %v2270 = vpop.f32.mrb[0].mxu0
        %v2271 = vadd.f32 %v2207, %v2270
        %v2272 = vpop.f32.mrb[0].mxu0
        %2273 = vmatprep.mubr.bf16.mxu0 %v928
        %2274 = vmatmul.mubr.bf16.gmra.mrb[0].mxu0 %v927
        %v2275 = vpop.f32.mrb[0].mxu0
        %v2276 = vadd.f32 %v2212, %v2275
        %v2277 = vpop.f32.mrb[0].mxu0
        %v2278 = vpop.f32.mrb[0].mxu0
        %v2279 = vadd.f32 %v2215, %v2278
        %v2280 = vpop.f32.mrb[0].mxu0
        %2281 = vmatprep.mubr.bf16.mxu0 %v944
        %2282 = vmatmul.mubr.bf16.gmra.mrb[0].mxu0 %v943
        %v2283 = vpop.f32.mrb[0].mxu0
        %v2284 = vadd.f32 %v2220, %v2283
        %v2285 = vpop.f32.mrb[0].mxu0
        %v2286 = vpop.f32.mrb[0].mxu0
        %v2287 = vpop.f32.mrb[0].mxu0
        %2288 = vdwg.mxu0
        %v2289 = vadd.f32 %v394, %v2260
        %v2290 = vadd.f32 %v395, %v2263
        %v2291 = vadd.f32 %v396, %v2268
        %v2292 = vadd.f32 %v397, %v2271
        %v2293 = vadd.f32 %v398, %v2276
        %v2294 = vadd.f32 %v399, %v2279
        %v2295 = vadd.f32 %v400, %v2284
        %2296 = vst [vmem:[#allocation2] sm:$0xff] %v2289
        %2297 = vst [vmem:[#allocation2 + $0x8] sm:$0xff] %v2290
        %2298 = vst [vmem:[#allocation2 + $0x10] sm:$0xff] %v2291
        %2299 = vst [vmem:[#allocation2 + $0x18] sm:$0xff] %v2292
        %2300 = vst [vmem:[#allocation2 + $0x20] sm:$0xff] %v2293
        %2301 = vst [vmem:[#allocation2 + $0x28] sm:$0xff] %v2294
        %2302 = vst [vmem:[#allocation2 + $0x30] sm:$0xff] %v2295
        %p2303 = scmp.eq.s32.totalorder %s21, 3
        // Predicated region
        $region60: #{_lambda_.9} parent=50 // pred_check
          %p2304 = pneg %p2303
        $region61: #{_lambda_.9} parent=50 // pred_check_branch
          %2306 = sbr.rel (%p2304) target = $region63
        $region62: #{_lambda_.9} parent=50 // pred_region
          %v2307 = vld [vmem:[#allocation2] sm:$0xff]
          %v2308 = vld [vmem:[#allocation2 + $0x8] sm:$0xff]
          %v2309 = vld [vmem:[#allocation2 + $0x10] sm:$0xff]
          %v2310 = vld [vmem:[#allocation2 + $0x18] sm:$0xff]
          %v2311 = vld [vmem:[#allocation2 + $0x20] sm:$0xff]
          %v2312 = vld [vmem:[#allocation2 + $0x28] sm:$0xff]
          %v2313 = vld [vmem:[#allocation2 + $0x30] sm:$0xff]
          %v2314 = vld [vmem:[%s2] sm:$0x1]
          %v2316 = vlaneseq
          %v2317 = vshrl.u32 %v2316, 7
          %v2318 = vsub.s32 0, %v2317
          %v2319 = vrot.slane %v2314, %v2318
          %v2321 = vadd.f32 %v2307, %v2319
          %v2322 = vadd.f32 %v2308, %v2319
          %v2323 = vadd.f32 %v2309, %v2319
          %v2324 = vadd.f32 %v2310, %v2319
          %v2325 = vadd.f32 %v2311, %v2319
          %v2326 = vadd.f32 %v2312, %v2319
          %v2327 = vadd.f32 %v2313, %v2319
          %2328 = vst [vmem:[%s375] sm:$0xff] %v2321
          %2329 = vst [vmem:[%s375 + $0x8] sm:$0xff] %v2322
          %2330 = vst [vmem:[%s375 + $0x10] sm:$0xff] %v2323
          %2331 = vst [vmem:[%s375 + $0x18] sm:$0xff] %v2324
          %2332 = vst [vmem:[%s375 + $0x20] sm:$0xff] %v2325
          %2333 = vst [vmem:[%s375 + $0x28] sm:$0xff] %v2326
          %2334 = vst [vmem:[%s375 + $0x30] sm:$0xff] %v2327
          %v2335 = vlaneseq
          %v2336 = vshrl.u32 %v2335, 7
          %v2337 = vadd.s32 %v2336, 8
          %v2338 = vadd.s32 %v2336, 16
          %v2339 = vadd.s32 %v2336, 24
          %v2340 = vadd.s32 %v2336, 32
          %v2341 = vadd.s32 %v2336, 40
          %v2342 = vadd.s32 %v2336, 48
          %v2343 = vstv %s382
          %v2344 = vadd.s32 %v2343, %v2336
          %v2345 = vadd.s32 %v2343, %v2337
          %v2346 = vadd.s32 %v2343, %v2338
          %v2347 = vadd.s32 %v2343, %v2339
          %v2348 = vadd.s32 %v2343, %v2340
          %v2349 = vadd.s32 %v2343, %v2341
          %v2350 = vadd.s32 %v2343, %v2342
          %vm2351 = vcmp.lt.s32.totalorder %v2344, 54
          %vm2352 = vcmp.lt.s32.totalorder %v2345, 54
          %vm2353 = vcmp.lt.s32.totalorder %v2346, 54
          %vm2354 = vcmp.lt.s32.totalorder %v2347, 54
          %vm2355 = vcmp.lt.s32.totalorder %v2348, 54
          %vm2356 = vcmp.lt.s32.totalorder %v2349, 54
          %vm2357 = vcmp.lt.s32.totalorder %v2350, 54
          %v2358 = vsel %vm2351, 1, 0
          %v2359 = vsel %vm2352, 1, 0
          %v2360 = vsel %vm2353, 1, 0
          %v2361 = vsel %vm2354, 1, 0
          %v2362 = vsel %vm2355, 1, 0
          %v2363 = vsel %vm2356, 1, 0
          %v2364 = vsel %vm2357, 1, 0
          %vm2365 = vcmp.eq.s32.totalorder %v2358, 1
          %vm2366 = vcmp.eq.s32.totalorder %v2359, 1
          %vm2367 = vcmp.eq.s32.totalorder %v2360, 1
          %vm2368 = vcmp.eq.s32.totalorder %v2361, 1
          %vm2369 = vcmp.eq.s32.totalorder %v2362, 1
          %vm2370 = vcmp.eq.s32.totalorder %v2363, 1
          %vm2371 = vcmp.eq.s32.totalorder %v2364, 1
          %v2372 = vsel %vm2365, %v2321, 0.0
          %v2373 = vsel %vm2366, %v2322, 0.0
          %v2374 = vsel %vm2367, %v2323, 0.0
          %v2375 = vsel %vm2368, %v2324, 0.0
          %v2376 = vsel %vm2369, %v2325, 0.0
          %v2377 = vsel %vm2370, %v2326, 0.0
          %v2378 = vsel %vm2371, %v2327, 0.0
          %v2379 = vadd.f32 %v2372, %v2373
          %v2380 = vadd.f32 %v2379, %v2374
          %v2381 = vadd.f32 %v2380, %v2375
          %v2382 = vadd.f32 %v2381, %v2376
          %v2383 = vadd.f32 %v2382, %v2377
          %v2384 = vadd.f32 %v2383, %v2378
          %v2385 = vrot.slane %v2384, 4
          %v2386 = vadd.f32 %v2384, %v2385
          %v2387 = vrot.slane %v2386, 2
          %v2388 = vadd.f32 %v2386, %v2387
          %v2389 = vrot.slane %v2388, 1
          %v2390 = vadd.f32 %v2388, %v2389
          %v2391 = vmul.f32 %v2372, %v2372
          %v2392 = vmul.f32 %v2373, %v2373
          %v2393 = vmul.f32 %v2374, %v2374
          %v2394 = vmul.f32 %v2375, %v2375
          %v2395 = vmul.f32 %v2376, %v2376
          %v2396 = vmul.f32 %v2377, %v2377
          %v2397 = vmul.f32 %v2378, %v2378
          %v2398 = vadd.f32 %v2391, %v2392
          %v2399 = vadd.f32 %v2398, %v2393
          %v2400 = vadd.f32 %v2399, %v2394
          %v2401 = vadd.f32 %v2400, %v2395
          %v2402 = vadd.f32 %v2401, %v2396
          %v2403 = vadd.f32 %v2402, %v2397
          %v2404 = vrot.slane %v2403, 4
          %v2405 = vadd.f32 %v2403, %v2404
          %v2406 = vrot.slane %v2405, 2
          %v2407 = vadd.f32 %v2405, %v2406
          %v2408 = vrot.slane %v2407, 1
          %v2409 = vadd.f32 %v2407, %v2408
          %vm2410 = vcmask 1040384
          %v2411 = vsel %vm2410, %v2390, %v2409
          %vm2412 = vcmask 1041408
          %v2413 = vsel %vm2412, %v2411, 0.0
          %2414 = vst [vmem:[%s380] sm:$0xff] %v2413
        $region63: #{_lambda_.9} parent=50 // pred_fallthru
          _
        %s2415 = smul.u32 7, %s20
        %p2416 = scmp.lt.s32.totalorder %s2415, 6
        %s2417 = scalar_select %p2416, %s2415, 6
        %s2418 = smul.addr %s2417, 8
        %s2419 = scalar_lea.vmem %s3, %s2418
        %p2420 = scmp.lt.s32.totalorder %s20, 0
        %s2421 = scalar_select %p2420, %s20, 0
        %s2422 = smul.addr %s2421, 8
        %s2423 = scalar_lea.vmem %s4, %s2422
        // Predicated region
        $region64: #{_lambda_.9} parent=50 // pred_check
          %p2424 = pneg %p121
        $region65: #{_lambda_.9} parent=50 // pred_check_branch
          %2426 = sbr.rel (%p2424) target = $region67
        $region66: #{_lambda_.9} parent=50 // pred_region
          %s2427 = smul.u32 7, %s20
        $region67: #{_lambda_.9} parent=50 // pred_fallthru
          _
        // Predicated region
        $region68: #{_lambda_.9} parent=50 // pred_check
          %p2428 = pneg %p147
        $region69: #{_lambda_.9} parent=50 // pred_check_branch
          %2430 = sbr.rel (%p2428) target = $region71
        $region70: #{_lambda_.9} parent=50 // pred_region
          _
        $region71: #{_lambda_.9} parent=50 // pred_fallthru
          _
        // Predicated region
        $region72: #{_lambda_.9} parent=50 // pred_check
          %p2431 = pneg %p121
        $region73: #{_lambda_.9} parent=50 // pred_check_branch
          %2433 = sbr.rel (%p2431) target = $region75
        $region74: #{_lambda_.9} parent=50 // pred_region
          %s2434 = smul.u32 7, %s20
          %p2435 = scmp.lt.s32.totalorder %s2434, 6
          %s2436 = scalar_select %p2435, %s2434, 6
          %s2437 = smul.addr %s2436, 8
          %s2438 = scalar_lea.vmem %s3, %s2437
        $region75: #{_lambda_.9} parent=50 // pred_fallthru
          _
        // Predicated region
        $region76: #{_lambda_.9} parent=50 // pred_check
          %p2439 = pneg %p147
        $region77: #{_lambda_.9} parent=50 // pred_check_branch
          %2441 = sbr.rel (%p2439) target = $region79
        $region78: #{_lambda_.9} parent=50 // pred_region
          %p2442 = scmp.lt.s32.totalorder %s20, 0
          %s2443 = scalar_select %p2442, %s20, 0
          %s2444 = smul.addr %s2443, 8
          %s2445 = scalar_lea.vmem %s4, %s2444
        $region79: #{_lambda_.9} parent=50 // pred_fallthru
          _
      $region51: #{_lambda_.9} parent=5 // pred_fallthru
        _
      %p2446 = scmp.le.s32.totalorder 2, %s11
      // Predicated region
      $region80: #{_lambda_.9} parent=5 // pred_check
        %p2447 = pneg %p2446
      $region81: #{_lambda_.9} parent=5 // pred_check_branch
        %2449 = sbr.rel (%p2447) target = $region83
      $region82: #{_lambda_.9} parent=5 // pred_region
        %s2450 = ssub.s32 %s11, 2
      $region83: #{_lambda_.9} parent=5 // pred_fallthru
        _
    $region6: #{_lambda_.9} parent=1 // loop_footer
      %s15 = sadd.s32 1, %s11
    $region7: #{_lambda_.9} parent=1 // loop_footer_branch
      %10 = sbr.rel target = $region3
    $region8: #{_lambda_.9} parent=1 // loop_exit
      _

// kernel: _lambda_.12
$region0: #{_lambda_.12}
  #allocation0 [shape = 'u32[]', space=smem, size = 0x4, offset = 0x4, fixed_abs, tag = 'smem constant byte address 0x4 - core index']
  #allocation1 [shape = 'u32[144,128]{1,0:T(1,128)}', space=vmem, size = 0x12000, scoped, tag = 'internal scratch']
  %s0 = inlined_call_operand.vmem [shape: f32[16,128], index: 0, kind: input, shape index: {}]
  %s1 = inlined_call_operand.vmem [shape: f32[1,128], index: 1, kind: input, shape index: {}]
  %s2 = inlined_call_operand.vmem [shape: f32[1,128], index: 2, kind: input, shape index: {}]
  %s3 = inlined_call_operand.vmem [shape: bf16[16,128], index: 3, kind: output, shape index: {}]
  %s4 = sld [smem:[#allocation0]]
  $region22: #{_lambda_.12} parent=0
    _
  %s6 = ssub.s32 1, %s4
  %s7 = scalar_select 0, %s6, %s4
  // Predicated region
  $region2: #{_lambda_.12} parent=0 // pred_check
    _
  $region3: #{_lambda_.12} parent=0 // pred_check_branch
    %9 = sbr.rel (0) target = $region5
  $region4: #{_lambda_.12} parent=0 // pred_region
    _
  $region5: #{_lambda_.12} parent=0 // pred_fallthru
    _
  // Predicated region
  $region6: #{_lambda_.12} parent=0 // pred_check
    _
  $region7: #{_lambda_.12} parent=0 // pred_check_branch
    %11 = sbr.rel (0) target = $region9
  $region8: #{_lambda_.12} parent=0 // pred_region
    _
  $region9: #{_lambda_.12} parent=0 // pred_fallthru
    _
  // Predicated region
  $region10: #{_lambda_.12} parent=0 // pred_check
    _
  $region11: #{_lambda_.12} parent=0 // pred_check_branch
    %13 = sbr.rel (0) target = $region13
  $region12: #{_lambda_.12} parent=0 // pred_region
    _
  $region13: #{_lambda_.12} parent=0 // pred_fallthru
    _
  %v14 = vld [vmem:[%s0] sm:$0xff]
  %v15 = vld [vmem:[%s0 + $0x8] sm:$0xff]
  %v16 = vld [vmem:[%s1] sm:$0x1]
  %v18 = vlaneseq
  %v19 = vshrl.u32 %v18, 7
  %v20 = vsub.s32 0, %v19
  %v21 = vrot.slane %v16, %v20
  %v23 = vmul.f32 %v14, %v21
  %v24 = vmul.f32 %v15, %v21
  %v25 = vld [vmem:[%s2] sm:$0x1]
  %v27 = vlaneseq
  %v28 = vshrl.u32 %v27, 7
  %v29 = vsub.s32 0, %v28
  %v30 = vrot.slane %v25, %v29
  %v32 = vadd.f32 %v23, %v30
  %v33 = vadd.f32 %v24, %v30
  %vm34 = vcmp.ge.f32.partialorder %v32, 0.0
  %vm35 = vcmp.ge.f32.partialorder %v33, 0.0
  %v36 = vmul.f32 %v32, 0.2
  %v37 = vmul.f32 %v33, 0.2
  %v38 = vsel %vm34, %v32, %v36
  %v39 = vsel %vm35, %v33, %v37
  %v40 = vpack.c.bf16 %v39, %v38
  %v42 = vunpack.c.l.b16 %v40
  %v43 = vunpack.c.h.b16 %v40
  %v44 = vpack.c.b16 %v42, %v42
  %v45 = vpack.c.b16 %v43, %v43
  %48 = vst [vmem:[%s3] sm:$0xf] %v44
  %49 = vst [vmem:[%s3 + $0x4] sm:$0xf] %v45
  // Predicated region
  $region14: #{_lambda_.12} parent=0 // pred_check
    _
  $region15: #{_lambda_.12} parent=0 // pred_check_branch
    %51 = sbr.rel (0) target = $region17
  $region16: #{_lambda_.12} parent=0 // pred_region
    _
  $region17: #{_lambda_.12} parent=0 // pred_fallthru
    _
  // Predicated region
  $region18: #{_lambda_.12} parent=0 // pred_check
    _
  $region19: #{_lambda_.12} parent=0 // pred_check_branch
    %53 = sbr.rel (0) target = $region21
  $region20: #{_lambda_.12} parent=0 // pred_region
    _
  $region21: #{_lambda_.12} parent=0 // pred_fallthru
    _

// kernel: _lambda_.11
$region0: #{_lambda_.11}
  #allocation0 [shape = 'u32[]', space=smem, size = 0x4, offset = 0x4, fixed_abs, tag = 'smem constant byte address 0x4 - core index']
  #allocation1 [shape = 'u32[144,128]{1,0:T(1,128)}', space=vmem, size = 0x12000, scoped, tag = 'internal scratch']
  #allocation2 [shape = 'f32[16,128]{1,0:T(8,128)}', space=vmem, size = 0x2000, scoped, tag = 'scratch operand']
  %s0 = inlined_call_operand.vmem [shape: bf16[16,8192], index: 0, kind: input, shape index: {}]
  %s1 = inlined_call_operand.vmem [shape: bf16[8192,128], index: 1, kind: input, shape index: {}]
  %s2 = inlined_call_operand.vmem [shape: f32[1,128], index: 2, kind: input, shape index: {}]
  %s3 = inlined_call_operand.vmem [shape: f32[16,128], index: 3, kind: output, shape index: {0}]
  %s4 = inlined_call_operand.vmem [shape: f32[1,8,128], index: 4, kind: output, shape index: {1}]
  %5 = xla_tuple %s3, %s4
  %s6 = sld [smem:[#allocation0]]
  $region84: #{_lambda_.11} parent=0
    _
  %s8 = ssub.s32 1, %s6
  %s9 = scalar_select 0, %s8, %s6
  $region1: #{_lambda_.11} parent=0
    #allocation3 [shape = 'u8[131072]{0}', space=vmem, size = 0x20000, scoped, tag = 'input window, operand 0']
    loop: start=0, step=1, limit=6
    $region2: #{_lambda_.11} parent=1 // loop_pre_header
      _
    $region3: #{_lambda_.11} parent=1 // loop_header
      %s11 = sphi 0, %s15
      %p12 = scmp.ge.s32.totalorder %s11, 6
      %s18 = sphi 0, %s30
      %s19 = sphi 0, %s26
      %s20 = sphi 0, %s18
      %s21 = sphi 0, %s19
      %s22 = sphi 0, %s20
      %s23 = sphi 0, %s21
      %s35 = sphi 0, %s37
      %s38 = sphi 0, %s35
      %s39 = sphi 0, %s38
      %s55 = sphi 0, %s39
      %s61 = sphi 0, %s63
      %s64 = sphi 0, %s61
      %s65 = sphi 0, %s64
      %s81 = sphi 0, %s65
      %s85 = sphi 0, %s85
      %s87 = sphi 0, %s85
      %s88 = sphi 0, %s87
      %s102 = sphi 0, %s88
      %s108 = sphi 0, %s110
      %s111 = sphi 0, %s108
      %s112 = sphi 0, %s111
      %s128 = sphi 0, %s112
      %s134 = sphi 0, %s136
      %s137 = sphi 0, %s134
      %s138 = sphi 0, %s137
      %s154 = sphi 0, %s138
    $region4: #{_lambda_.11} parent=1 // loop_header_branch
      %14 = sbr.rel (%p12) target = $region8
    $region5: #{_lambda_.11} parent=1 // loop_body
      %s16 = ssub.s32 %s11, 1
      %s17 = ssub.s32 %s11, 2
      %s24 = sadd.s32 1, %s19
      %p25 = scmp.ge.s32.totalorder %s24, 4
      %s26 = scalar_select %p25, 0, %s24
      %s27 = sadd.s32 1, %s18
      %s28 = scalar_select %p25, %s27, %s18
      %p29 = scmp.ge.s32.totalorder %s28, 1
      %s30 = scalar_select %p29, 0, %s28
      %s31 = ssub.s32 %s18, %s30
      %s32 = ssub.s32 %s19, %s26
      %s33 = sor.u32 %s31, %s32
      %p34 = scmp.eq.s32.totalorder %s33, 0
      %s36 = sadd.s32 %s35, 1
      %s37 = scalar_select %p34, %s35, %s36
      %p40 = pneg %p34
      %p41 = scmp.eq.s32.totalorder %s11, 3
      %p42 = por %p40, %p41
      %p43 = scmp.ne.s32.totalorder %s35, %s38
      %p44 = scmp.eq.s32.totalorder %s11, 0
      %p45 = por %p43, %p44
      %p46 = scmp.ne.s32.totalorder %s35, %s38
      %p47 = scmp.eq.s32.totalorder %s16, 3
      %p48 = por %p46, %p47
      %p49 = scmp.ne.s32.totalorder %s38, %s39
      %p50 = scmp.eq.s32.totalorder %s16, 0
      %p51 = por %p49, %p50
      %p52 = scmp.ne.s32.totalorder %s38, %s39
      %p53 = scmp.eq.s32.totalorder %s17, 3
      %p54 = por %p52, %p53
      %p56 = scmp.ne.s32.totalorder %s39, %s55
      %p57 = scmp.eq.s32.totalorder %s17, 0
      %p58 = por %p56, %p57
      %s59 = ssub.s32 %s19, %s26
      %p60 = scmp.eq.s32.totalorder %s59, 0
      %s62 = sadd.s32 %s61, 1
      %s63 = scalar_select %p60, %s61, %s62
      %p66 = pneg %p60
      %p67 = scmp.eq.s32.totalorder %s11, 3
      %p68 = por %p66, %p67
      %p69 = scmp.ne.s32.totalorder %s61, %s64
      %p70 = scmp.eq.s32.totalorder %s11, 0
      %p71 = por %p69, %p70
      %p72 = scmp.ne.s32.totalorder %s61, %s64
      %p73 = scmp.eq.s32.totalorder %s16, 3
      %p74 = por %p72, %p73
      %p75 = scmp.ne.s32.totalorder %s64, %s65
      %p76 = scmp.eq.s32.totalorder %s16, 0
      %p77 = por %p75, %p76
      %p78 = scmp.ne.s32.totalorder %s64, %s65
      %p79 = scmp.eq.s32.totalorder %s17, 3
      %p80 = por %p78, %p79
      %p82 = scmp.ne.s32.totalorder %s65, %s81
      %p83 = scmp.eq.s32.totalorder %s17, 0
      %p84 = por %p82, %p83
      %s86 = sadd.s32 %s85, 1
      %p89 = scmp.eq.s32.totalorder %s11, 3
      %p90 = scmp.ne.s32.totalorder %s85, %s87
      %p91 = scmp.eq.s32.totalorder %s11, 0
      %p92 = por %p90, %p91
      %p93 = scmp.ne.s32.totalorder %s85, %s87
      %p94 = scmp.eq.s32.totalorder %s16, 3
      %p95 = por %p93, %p94
      %p96 = scmp.ne.s32.totalorder %s87, %s88
      %p97 = scmp.eq.s32.totalorder %s16, 0
      %p98 = por %p96, %p97
      %p99 = scmp.ne.s32.totalorder %s87, %s88
      %p100 = scmp.eq.s32.totalorder %s17, 3
      %p101 = por %p99, %p100
      %p103 = scmp.ne.s32.totalorder %s88, %s102
      %p104 = scmp.eq.s32.totalorder %s17, 0
      %p105 = por %p103, %p104
      %s106 = ssub.s32 %s18, %s30
      %p107 = scmp.eq.s32.totalorder %s106, 0
      %s109 = sadd.s32 %s108, 1
      %s110 = scalar_select %p107, %s108, %s109
      %p113 = pneg %p107
      %p114 = scmp.eq.s32.totalorder %s11, 3
      %p115 = por %p113, %p114
      %p116 = scmp.ne.s32.totalorder %s108, %s111
      %p117 = scmp.eq.s32.totalorder %s11, 0
      %p118 = por %p116, %p117
      %p119 = scmp.ne.s32.totalorder %s108, %s111
      %p120 = scmp.eq.s32.totalorder %s16, 3
      %p121 = por %p119, %p120
      %p122 = scmp.ne.s32.totalorder %s111, %s112
      %p123 = scmp.eq.s32.totalorder %s16, 0
      %p124 = por %p122, %p123
      %p125 = scmp.ne.s32.totalorder %s111, %s112
      %p126 = scmp.eq.s32.totalorder %s17, 3
      %p127 = por %p125, %p126
      %p129 = scmp.ne.s32.totalorder %s112, %s128
      %p130 = scmp.eq.s32.totalorder %s17, 0
      %p131 = por %p129, %p130
      %s132 = ssub.s32 %s18, %s30
      %p133 = scmp.eq.s32.totalorder %s132, 0
      %s135 = sadd.s32 %s134, 1
      %s136 = scalar_select %p133, %s134, %s135
      %p139 = pneg %p133
      %p140 = scmp.eq.s32.totalorder %s11, 3
      %p141 = por %p139, %p140
      %p142 = scmp.ne.s32.totalorder %s134, %s137
      %p143 = scmp.eq.s32.totalorder %s11, 0
      %p144 = por %p142, %p143
      %p145 = scmp.ne.s32.totalorder %s134, %s137
      %p146 = scmp.eq.s32.totalorder %s16, 3
      %p147 = por %p145, %p146
      %p148 = scmp.ne.s32.totalorder %s137, %s138
      %p149 = scmp.eq.s32.totalorder %s16, 0
      %p150 = por %p148, %p149
      %p151 = scmp.ne.s32.totalorder %s137, %s138
      %p152 = scmp.eq.s32.totalorder %s17, 3
      %p153 = por %p151, %p152
      %p155 = scmp.ne.s32.totalorder %s138, %s154
      %p156 = scmp.eq.s32.totalorder %s17, 0
      %p157 = por %p155, %p156
      %p158 = scmp.le.s32.totalorder 1, %s11
      %p159 = scmp.lt.s32.totalorder %s11, 5
      %p160 = pnand %p158, %p159
      %p161 = pneg %p160
      // Predicated region
      $region9: #{_lambda_.11} parent=5 // pred_check
        _
      $region10: #{_lambda_.11} parent=5 // pred_check_branch
        %163 = sbr.rel (%p160) target = $region12
      $region11: #{_lambda_.11} parent=5 // pred_region
        %s164 = ssub.s32 %s11, 1
        // Predicated region
        $region13: #{_lambda_.11} parent=11 // pred_check
          %p165 = pneg %p98
        $region14: #{_lambda_.11} parent=11 // pred_check_branch
          %167 = sbr.rel (%p165) target = $region16
        $region15: #{_lambda_.11} parent=11 // pred_region
          _
        $region16: #{_lambda_.11} parent=11 // pred_fallthru
          _
      $region12: #{_lambda_.11} parent=5 // pred_fallthru
        _
      %p168 = scmp.lt.s32.totalorder %s11, 4
      // Predicated region
      $region17: #{_lambda_.11} parent=5 // pred_check
        %p169 = pneg %p168
      $region18: #{_lambda_.11} parent=5 // pred_check_branch
        %171 = sbr.rel (%p169) target = $region20
      $region19: #{_lambda_.11} parent=5 // pred_region
        // Predicated region
        $region21: #{_lambda_.11} parent=19 // pred_check
          %p172 = pneg %p45
        $region22: #{_lambda_.11} parent=19 // pred_check_branch
          %174 = sbr.rel (%p172) target = $region24
        $region23: #{_lambda_.11} parent=19 // pred_region
          %s175 = sand.u32 %s35, 1
          %s176 = sand.u32 %s35, 1
          %s177 = smul.addr %s176, 128
          %s178 = scalar_lea.vmem [#allocation3], %s177
          %s179 = smul.u32 2, %s18
          %s180 = smul.u32 16, %s19
          %s181 = smul.addr %s179, 64
          %s182 = sadd.s32 %s180, %s181
          %s183 = smul.addr %s182, 4
          %s184 = scalar_lea.vmem %s0, %s183
          // Predicated region
          $region25: #{_lambda_.11} parent=23 // pred_check
            _
          $region26: #{_lambda_.11} parent=23 // pred_check_branch
            %186 = sbr.rel (0) target = $region28
          $region27: #{_lambda_.11} parent=23 // pred_region
            // Predicated region
            $region29: #{_lambda_.11} parent=27 // pred_check
              _
            $region30: #{_lambda_.11} parent=27 // pred_check_branch
              %188 = sbr.rel (0) target = $region32
            $region31: #{_lambda_.11} parent=27 // pred_region
              loop: start=0, step=1, limit=1
              $region33: #{_lambda_.11} parent=31 // loop_pre_header
                _
              $region34: #{_lambda_.11} parent=31 // loop_header
                %s190 = sphi 0, %s194
                %p191 = scmp.ge.s32.totalorder %s190, 1
                %s195 = sphi %s184, %s184
                %s196 = sphi %s178, %s178
              $region35: #{_lambda_.11} parent=31 // loop_header_branch
                %193 = sbr.rel (%p191) target = $region39
              $region36: #{_lambda_.11} parent=31 // loop_body
                %v197 = vld [vmem:[%s195] sm:$0xff]
                %198 = vst [vmem:[%s196] sm:$0xff] %v197
                %v199 = vld [vmem:[%s195 + $0x8] sm:$0xff]
                %200 = vst [vmem:[%s196 + $0x8] sm:$0xff] %v199
                %v201 = vld [vmem:[%s195 + $0x10] sm:$0xff]
                %202 = vst [vmem:[%s196 + $0x10] sm:$0xff] %v201
                %v203 = vld [vmem:[%s195 + $0x18] sm:$0xff]
                %204 = vst [vmem:[%s196 + $0x18] sm:$0xff] %v203
                %v205 = vld [vmem:[%s195 + $0x20] sm:$0xff]
                %206 = vst [vmem:[%s196 + $0x20] sm:$0xff] %v205
                %v207 = vld [vmem:[%s195 + $0x28] sm:$0xff]
                %208 = vst [vmem:[%s196 + $0x28] sm:$0xff] %v207
                %v209 = vld [vmem:[%s195 + $0x30] sm:$0xff]
                %210 = vst [vmem:[%s196 + $0x30] sm:$0xff] %v209
                %v211 = vld [vmem:[%s195 + $0x38] sm:$0xff]
                %212 = vst [vmem:[%s196 + $0x38] sm:$0xff] %v211
                %v213 = vld [vmem:[%s195 + $0x100] sm:$0xff]
                %214 = vst [vmem:[%s196 + $0x40] sm:$0xff] %v213
                %v215 = vld [vmem:[%s195 + $0x108] sm:$0xff]
                %216 = vst [vmem:[%s196 + $0x48] sm:$0xff] %v215
                %v217 = vld [vmem:[%s195 + $0x110] sm:$0xff]
                %218 = vst [vmem:[%s196 + $0x50] sm:$0xff] %v217
                %v219 = vld [vmem:[%s195 + $0x118] sm:$0xff]
                %220 = vst [vmem:[%s196 + $0x58] sm:$0xff] %v219
                %v221 = vld [vmem:[%s195 + $0x120] sm:$0xff]
                %222 = vst [vmem:[%s196 + $0x60] sm:$0xff] %v221
                %v223 = vld [vmem:[%s195 + $0x128] sm:$0xff]
                %224 = vst [vmem:[%s196 + $0x68] sm:$0xff] %v223
                %v225 = vld [vmem:[%s195 + $0x130] sm:$0xff]
                %226 = vst [vmem:[%s196 + $0x70] sm:$0xff] %v225
                %v227 = vld [vmem:[%s195 + $0x138] sm:$0xff]
                %228 = vst [vmem:[%s196 + $0x78] sm:$0xff] %v227
              $region37: #{_lambda_.11} parent=31 // loop_footer
                %s194 = sadd.s32 1, %s190
              $region38: #{_lambda_.11} parent=31 // loop_footer_branch
                %189 = sbr.rel target = $region34
              $region39: #{_lambda_.11} parent=31 // loop_exit
                _
            $region32: #{_lambda_.11} parent=27 // pred_fallthru
              _
            // Predicated region
            $region40: #{_lambda_.11} parent=27 // pred_check
              _
            $region41: #{_lambda_.11} parent=27 // pred_check_branch
              %230 = sbr.rel target = $region43
            $region42: #{_lambda_.11} parent=27 // pred_region
              _
            $region43: #{_lambda_.11} parent=27 // pred_fallthru
              _
          $region28: #{_lambda_.11} parent=23 // pred_fallthru
            _
          %231 = vnop
        $region24: #{_lambda_.11} parent=19 // pred_fallthru
          _
        // Predicated region
        $region44: #{_lambda_.11} parent=19 // pred_check
          %p232 = pneg %p71
        $region45: #{_lambda_.11} parent=19 // pred_check_branch
          %234 = sbr.rel (%p232) target = $region47
        $region46: #{_lambda_.11} parent=19 // pred_region
          %s235 = smul.u32 256, %s19
          %p236 = scmp.lt.s32.totalorder %s235, 1023
          %s237 = scalar_select %p236, %s235, 1023
          %s238 = smul.addr %s237, 4
          %s239 = scalar_lea.vmem %s1, %s238
          %s240 = smul.u32 256, %s19
        $region47: #{_lambda_.11} parent=19 // pred_fallthru
          _
      $region20: #{_lambda_.11} parent=5 // pred_fallthru
        _
      %p241 = scmp.le.s32.totalorder 1, %s11
      %p242 = scmp.lt.s32.totalorder %s11, 5
      %p243 = pnand %p241, %p242
      %p244 = pneg %p243
      // Predicated region
      $region48: #{_lambda_.11} parent=5 // pred_check
        _
      $region49: #{_lambda_.11} parent=5 // pred_check_branch
        %246 = sbr.rel (%p243) target = $region51
      $region50: #{_lambda_.11} parent=5 // pred_region
        %s247 = ssub.s32 %s11, 1
        %s248 = sand.u32 %s38, 1
        %s249 = sand.u32 %s38, 1
        %s250 = smul.addr %s249, 128
        %s251 = scalar_lea.vmem [#allocation3], %s250
        // Predicated region
        $region52: #{_lambda_.11} parent=50 // pred_check
          %p252 = pneg %p51
        $region53: #{_lambda_.11} parent=50 // pred_check_branch
          %254 = sbr.rel (%p252) target = $region55
        $region54: #{_lambda_.11} parent=50 // pred_region
          _
        $region55: #{_lambda_.11} parent=50 // pred_fallthru
          _
        %s255 = sand.u32 %s38, 1
        %s256 = sand.u32 %s38, 1
        %s257 = smul.addr %s256, 128
        %s258 = scalar_lea.vmem [#allocation3], %s257
        %p259 = pneg %p51
        %p260 = pneg %p48
        %s261 = smul.u32 256, %s21
        %p262 = scmp.lt.s32.totalorder %s261, 1023
        %s263 = scalar_select %p262, %s261, 1023
        %s264 = smul.addr %s263, 4
        %s265 = scalar_lea.vmem %s1, %s264
        %p266 = pneg %p77
        %p267 = pneg %p74
        %p268 = pneg %p98
        %p269 = pneg %p95
        %p270 = pneg %p124
        %p271 = pneg %p121
        %s272 = smul.u32 2, %s20
        %p273 = scmp.lt.s32.totalorder %s272, 1
        %s274 = scalar_select %p273, %s272, 1
        %s275 = smul.addr %s274, 8
        %s276 = scalar_lea.vmem %s3, %s275
        %p277 = pneg %p150
        %p278 = pneg %p147
        %p279 = scmp.lt.s32.totalorder %s20, 0
        %s280 = scalar_select %p279, %s20, 0
        %s281 = smul.addr %s280, 8
        %s282 = scalar_lea.vmem %s4, %s281
        %s283 = smul.u32 2, %s20
        %s284 = smul.u32 16, %s21
        %s285 = smul.u32 256, %s21
        %p286 = scmp.lt.s32.totalorder %s285, 1023
        %s287 = scalar_select %p286, %s285, 1023
        %s288 = smul.addr %s287, 4
        %s289 = scalar_lea.vmem %s1, %s288
        %s290 = smul.u32 256, %s21
        %s291 = smul.u32 2, %s20
        %p292 = scmp.lt.s32.totalorder %s291, 1
        %s293 = scalar_select %p292, %s291, 1
        %s294 = smul.addr %s293, 8
        %s295 = scalar_lea.vmem %s3, %s294
        %s296 = smul.u32 2, %s20
        %p297 = scmp.lt.s32.totalorder %s20, 0
        %s298 = scalar_select %p297, %s20, 0
        %s299 = smul.addr %s298, 8
        %s300 = scalar_lea.vmem %s4, %s299
        %s302 = smul.u32 %s20, 16
        %p303 = scmp.eq.s32.totalorder %s21, 0
        // Predicated region
        $region56: #{_lambda_.11} parent=50 // pred_check
          %p304 = pneg %p303
        $region57: #{_lambda_.11} parent=50 // pred_check_branch
          %306 = sbr.rel (%p304) target = $region59
        $region58: #{_lambda_.11} parent=50 // pred_region
          %307 = vst [vmem:[#allocation2] sm:$0xff] 0.0
          %308 = vst [vmem:[#allocation2 + $0x8] sm:$0xff] 0.0
        $region59: #{_lambda_.11} parent=50 // pred_fallthru
          _
        %v309 = vld [vmem:[#allocation2] sm:$0xff]
        %v310 = vld [vmem:[#allocation2 + $0x8] sm:$0xff]
        %v311 = vld [vmem:[%s251] sm:$0xff]
        %v312 = vld [vmem:[%s251 + $0x8] sm:$0xff]
        %v313 = vld [vmem:[%s251 + $0x10] sm:$0xff]
        %v314 = vld [vmem:[%s251 + $0x18] sm:$0xff]
        %v315 = vld [vmem:[%s251 + $0x20] sm:$0xff]
        %v316 = vld [vmem:[%s251 + $0x28] sm:$0xff]
        %v317 = vld [vmem:[%s251 + $0x30] sm:$0xff]
        %v318 = vld [vmem:[%s251 + $0x38] sm:$0xff]
        %v319 = vld [vmem:[%s251 + $0x40] sm:$0xff]
        %v320 = vld [vmem:[%s251 + $0x48] sm:$0xff]
        %v321 = vld [vmem:[%s251 + $0x50] sm:$0xff]
        %v322 = vld [vmem:[%s251 + $0x58] sm:$0xff]
        %v323 = vld [vmem:[%s251 + $0x60] sm:$0xff]
        %v324 = vld [vmem:[%s251 + $0x68] sm:$0xff]
        %v325 = vld [vmem:[%s251 + $0x70] sm:$0xff]
        %v326 = vld [vmem:[%s251 + $0x78] sm:$0xff]
        %v327 = vld [vmem:[%s289] sm:$0xf]
        %v328 = vld [vmem:[%s289 + $0x4] sm:$0xf]
        %v329 = vld [vmem:[%s289 + $0x8] sm:$0xf]
        %v330 = vld [vmem:[%s289 + $0xc] sm:$0xf]
        %v331 = vld [vmem:[%s289 + $0x10] sm:$0xf]
        %v332 = vld [vmem:[%s289 + $0x14] sm:$0xf]
        %v333 = vld [vmem:[%s289 + $0x18] sm:$0xf]
        %v334 = vld [vmem:[%s289 + $0x1c] sm:$0xf]
        %v335 = vld [vmem:[%s289 + $0x20] sm:$0xf]
        %v336 = vld [vmem:[%s289 + $0x24] sm:$0xf]
        %v337 = vld [vmem:[%s289 + $0x28] sm:$0xf]
        %v338 = vld [vmem:[%s289 + $0x2c] sm:$0xf]
        %v339 = vld [vmem:[%s289 + $0x30] sm:$0xf]
        %v340 = vld [vmem:[%s289 + $0x34] sm:$0xf]
        %v341 = vld [vmem:[%s289 + $0x38] sm:$0xf]
        %v342 = vld [vmem:[%s289 + $0x3c] sm:$0xf]
        %v343 = vld [vmem:[%s289 + $0x40] sm:$0xf]
        %v344 = vld [vmem:[%s289 + $0x44] sm:$0xf]
        %v345 = vld [vmem:[%s289 + $0x48] sm:$0xf]
        %v346 = vld [vmem:[%s289 + $0x4c] sm:$0xf]
        %v347 = vld [vmem:[%s289 + $0x50] sm:$0xf]
        %v348 = vld [vmem:[%s289 + $0x54] sm:$0xf]
        %v349 = vld [vmem:[%s289 + $0x58] sm:$0xf]
        %v350 = vld [vmem:[%s289 + $0x5c] sm:$0xf]
        %v351 = vld [vmem:[%s289 + $0x60] sm:$0xf]
        %v352 = vld [vmem:[%s289 + $0x64] sm:$0xf]
        %v353 = vld [vmem:[%s289 + $0x68] sm:$0xf]
        %v354 = vld [vmem:[%s289 + $0x6c] sm:$0xf]
        %v355 = vld [vmem:[%s289 + $0x70] sm:$0xf]
        %v356 = vld [vmem:[%s289 + $0x74] sm:$0xf]
        %v357 = vld [vmem:[%s289 + $0x78] sm:$0xf]
        %v358 = vld [vmem:[%s289 + $0x7c] sm:$0xf]
        %v359 = vld [vmem:[%s289 + $0x80] sm:$0xf]
        %v360 = vld [vmem:[%s289 + $0x84] sm:$0xf]
        %v361 = vld [vmem:[%s289 + $0x88] sm:$0xf]
        %v362 = vld [vmem:[%s289 + $0x8c] sm:$0xf]
        %v363 = vld [vmem:[%s289 + $0x90] sm:$0xf]
        %v364 = vld [vmem:[%s289 + $0x94] sm:$0xf]
        %v365 = vld [vmem:[%s289 + $0x98] sm:$0xf]
        %v366 = vld [vmem:[%s289 + $0x9c] sm:$0xf]
        %v367 = vld [vmem:[%s289 + $0xa0] sm:$0xf]
        %v368 = vld [vmem:[%s289 + $0xa4] sm:$0xf]
        %v369 = vld [vmem:[%s289 + $0xa8] sm:$0xf]
        %v370 = vld [vmem:[%s289 + $0xac] sm:$0xf]
        %v371 = vld [vmem:[%s289 + $0xb0] sm:$0xf]
        %v372 = vld [vmem:[%s289 + $0xb4] sm:$0xf]
        %v373 = vld [vmem:[%s289 + $0xb8] sm:$0xf]
        %v374 = vld [vmem:[%s289 + $0xbc] sm:$0xf]
        %v375 = vld [vmem:[%s289 + $0xc0] sm:$0xf]
        %v376 = vld [vmem:[%s289 + $0xc4] sm:$0xf]
        %v377 = vld [vmem:[%s289 + $0xc8] sm:$0xf]
        %v378 = vld [vmem:[%s289 + $0xcc] sm:$0xf]
        %v379 = vld [vmem:[%s289 + $0xd0] sm:$0xf]
        %v380 = vld [vmem:[%s289 + $0xd4] sm:$0xf]
        %v381 = vld [vmem:[%s289 + $0xd8] sm:$0xf]
        %v382 = vld [vmem:[%s289 + $0xdc] sm:$0xf]
        %v383 = vld [vmem:[%s289 + $0xe0] sm:$0xf]
        %v384 = vld [vmem:[%s289 + $0xe4] sm:$0xf]
        %v385 = vld [vmem:[%s289 + $0xe8] sm:$0xf]
        %v386 = vld [vmem:[%s289 + $0xec] sm:$0xf]
        %v387 = vld [vmem:[%s289 + $0xf0] sm:$0xf]
        %v388 = vld [vmem:[%s289 + $0xf4] sm:$0xf]
        %v389 = vld [vmem:[%s289 + $0xf8] sm:$0xf]
        %v390 = vld [vmem:[%s289 + $0xfc] sm:$0xf]
        %v391 = vld [vmem:[%s289 + $0x100] sm:$0xf]
        %v392 = vld [vmem:[%s289 + $0x104] sm:$0xf]
        %v393 = vld [vmem:[%s289 + $0x108] sm:$0xf]
        %v394 = vld [vmem:[%s289 + $0x10c] sm:$0xf]
        %v395 = vld [vmem:[%s289 + $0x110] sm:$0xf]
        %v396 = vld [vmem:[%s289 + $0x114] sm:$0xf]
        %v397 = vld [vmem:[%s289 + $0x118] sm:$0xf]
        %v398 = vld [vmem:[%s289 + $0x11c] sm:$0xf]
        %v399 = vld [vmem:[%s289 + $0x120] sm:$0xf]
        %v400 = vld [vmem:[%s289 + $0x124] sm:$0xf]
        %v401 = vld [vmem:[%s289 + $0x128] sm:$0xf]
        %v402 = vld [vmem:[%s289 + $0x12c] sm:$0xf]
        %v403 = vld [vmem:[%s289 + $0x130] sm:$0xf]
        %v404 = vld [vmem:[%s289 + $0x134] sm:$0xf]
        %v405 = vld [vmem:[%s289 + $0x138] sm:$0xf]
        %v406 = vld [vmem:[%s289 + $0x13c] sm:$0xf]
        %v407 = vld [vmem:[%s289 + $0x140] sm:$0xf]
        %v408 = vld [vmem:[%s289 + $0x144] sm:$0xf]
        %v409 = vld [vmem:[%s289 + $0x148] sm:$0xf]
        %v410 = vld [vmem:[%s289 + $0x14c] sm:$0xf]
        %v411 = vld [vmem:[%s289 + $0x150] sm:$0xf]
        %v412 = vld [vmem:[%s289 + $0x154] sm:$0xf]
        %v413 = vld [vmem:[%s289 + $0x158] sm:$0xf]
        %v414 = vld [vmem:[%s289 + $0x15c] sm:$0xf]
        %v415 = vld [vmem:[%s289 + $0x160] sm:$0xf]
        %v416 = vld [vmem:[%s289 + $0x164] sm:$0xf]
        %v417 = vld [vmem:[%s289 + $0x168] sm:$0xf]
        %v418 = vld [vmem:[%s289 + $0x16c] sm:$0xf]
        %v419 = vld [vmem:[%s289 + $0x170] sm:$0xf]
        %v420 = vld [vmem:[%s289 + $0x174] sm:$0xf]
        %v421 = vld [vmem:[%s289 + $0x178] sm:$0xf]
        %v422 = vld [vmem:[%s289 + $0x17c] sm:$0xf]
        %v423 = vld [vmem:[%s289 + $0x180] sm:$0xf]
        %v424 = vld [vmem:[%s289 + $0x184] sm:$0xf]
        %v425 = vld [vmem:[%s289 + $0x188] sm:$0xf]
        %v426 = vld [vmem:[%s289 + $0x18c] sm:$0xf]
        %v427 = vld [vmem:[%s289 + $0x190] sm:$0xf]
        %v428 = vld [vmem:[%s289 + $0x194] sm:$0xf]
        %v429 = vld [vmem:[%s289 + $0x198] sm:$0xf]
        %v430 = vld [vmem:[%s289 + $0x19c] sm:$0xf]
        %v431 = vld [vmem:[%s289 + $0x1a0] sm:$0xf]
        %v432 = vld [vmem:[%s289 + $0x1a4] sm:$0xf]
        %v433 = vld [vmem:[%s289 + $0x1a8] sm:$0xf]
        %v434 = vld [vmem:[%s289 + $0x1ac] sm:$0xf]
        %v435 = vld [vmem:[%s289 + $0x1b0] sm:$0xf]
        %v436 = vld [vmem:[%s289 + $0x1b4] sm:$0xf]
        %v437 = vld [vmem:[%s289 + $0x1b8] sm:$0xf]
        %v438 = vld [vmem:[%s289 + $0x1bc] sm:$0xf]
        %v439 = vld [vmem:[%s289 + $0x1c0] sm:$0xf]
        %v440 = vld [vmem:[%s289 + $0x1c4] sm:$0xf]
        %v441 = vld [vmem:[%s289 + $0x1c8] sm:$0xf]
        %v442 = vld [vmem:[%s289 + $0x1cc] sm:$0xf]
        %v443 = vld [vmem:[%s289 + $0x1d0] sm:$0xf]
        %v444 = vld [vmem:[%s289 + $0x1d4] sm:$0xf]
        %v445 = vld [vmem:[%s289 + $0x1d8] sm:$0xf]
        %v446 = vld [vmem:[%s289 + $0x1dc] sm:$0xf]
        %v447 = vld [vmem:[%s289 + $0x1e0] sm:$0xf]
        %v448 = vld [vmem:[%s289 + $0x1e4] sm:$0xf]
        %v449 = vld [vmem:[%s289 + $0x1e8] sm:$0xf]
        %v450 = vld [vmem:[%s289 + $0x1ec] sm:$0xf]
        %v451 = vld [vmem:[%s289 + $0x1f0] sm:$0xf]
        %v452 = vld [vmem:[%s289 + $0x1f4] sm:$0xf]
        %v453 = vld [vmem:[%s289 + $0x1f8] sm:$0xf]
        %v454 = vld [vmem:[%s289 + $0x1fc] sm:$0xf]
        %v455 = vld [vmem:[%s289 + $0x200] sm:$0xf]
        %v456 = vld [vmem:[%s289 + $0x204] sm:$0xf]
        %v457 = vld [vmem:[%s289 + $0x208] sm:$0xf]
        %v458 = vld [vmem:[%s289 + $0x20c] sm:$0xf]
        %v459 = vld [vmem:[%s289 + $0x210] sm:$0xf]
        %v460 = vld [vmem:[%s289 + $0x214] sm:$0xf]
        %v461 = vld [vmem:[%s289 + $0x218] sm:$0xf]
        %v462 = vld [vmem:[%s289 + $0x21c] sm:$0xf]
        %v463 = vld [vmem:[%s289 + $0x220] sm:$0xf]
        %v464 = vld [vmem:[%s289 + $0x224] sm:$0xf]
        %v465 = vld [vmem:[%s289 + $0x228] sm:$0xf]
        %v466 = vld [vmem:[%s289 + $0x22c] sm:$0xf]
        %v467 = vld [vmem:[%s289 + $0x230] sm:$0xf]
        %v468 = vld [vmem:[%s289 + $0x234] sm:$0xf]
        %v469 = vld [vmem:[%s289 + $0x238] sm:$0xf]
        %v470 = vld [vmem:[%s289 + $0x23c] sm:$0xf]
        %v471 = vld [vmem:[%s289 + $0x240] sm:$0xf]
        %v472 = vld [vmem:[%s289 + $0x244] sm:$0xf]
        %v473 = vld [vmem:[%s289 + $0x248] sm:$0xf]
        %v474 = vld [vmem:[%s289 + $0x24c] sm:$0xf]
        %v475 = vld [vmem:[%s289 + $0x250] sm:$0xf]
        %v476 = vld [vmem:[%s289 + $0x254] sm:$0xf]
        %v477 = vld [vmem:[%s289 + $0x258] sm:$0xf]
        %v478 = vld [vmem:[%s289 + $0x25c] sm:$0xf]
        %v479 = vld [vmem:[%s289 + $0x260] sm:$0xf]
        %v480 = vld [vmem:[%s289 + $0x264] sm:$0xf]
        %v481 = vld [vmem:[%s289 + $0x268] sm:$0xf]
        %v482 = vld [vmem:[%s289 + $0x26c] sm:$0xf]
        %v483 = vld [vmem:[%s289 + $0x270] sm:$0xf]
        %v484 = vld [vmem:[%s289 + $0x274] sm:$0xf]
        %v485 = vld [vmem:[%s289 + $0x278] sm:$0xf]
        %v486 = vld [vmem:[%s289 + $0x27c] sm:$0xf]
        %v487 = vld [vmem:[%s289 + $0x280] sm:$0xf]
        %v488 = vld [vmem:[%s289 + $0x284] sm:$0xf]
        %v489 = vld [vmem:[%s289 + $0x288] sm:$0xf]
        %v490 = vld [vmem:[%s289 + $0x28c] sm:$0xf]
        %v491 = vld [vmem:[%s289 + $0x290] sm:$0xf]
        %v492 = vld [vmem:[%s289 + $0x294] sm:$0xf]
        %v493 = vld [vmem:[%s289 + $0x298] sm:$0xf]
        %v494 = vld [vmem:[%s289 + $0x29c] sm:$0xf]
        %v495 = vld [vmem:[%s289 + $0x2a0] sm:$0xf]
        %v496 = vld [vmem:[%s289 + $0x2a4] sm:$0xf]
        %v497 = vld [vmem:[%s289 + $0x2a8] sm:$0xf]
        %v498 = vld [vmem:[%s289 + $0x2ac] sm:$0xf]
        %v499 = vld [vmem:[%s289 + $0x2b0] sm:$0xf]
        %v500 = vld [vmem:[%s289 + $0x2b4] sm:$0xf]
        %v501 = vld [vmem:[%s289 + $0x2b8] sm:$0xf]
        %v502 = vld [vmem:[%s289 + $0x2bc] sm:$0xf]
        %v503 = vld [vmem:[%s289 + $0x2c0] sm:$0xf]
        %v504 = vld [vmem:[%s289 + $0x2c4] sm:$0xf]
        %v505 = vld [vmem:[%s289 + $0x2c8] sm:$0xf]
        %v506 = vld [vmem:[%s289 + $0x2cc] sm:$0xf]
        %v507 = vld [vmem:[%s289 + $0x2d0] sm:$0xf]
        %v508 = vld [vmem:[%s289 + $0x2d4] sm:$0xf]
        %v509 = vld [vmem:[%s289 + $0x2d8] sm:$0xf]
        %v510 = vld [vmem:[%s289 + $0x2dc] sm:$0xf]
        %v511 = vld [vmem:[%s289 + $0x2e0] sm:$0xf]
        %v512 = vld [vmem:[%s289 + $0x2e4] sm:$0xf]
        %v513 = vld [vmem:[%s289 + $0x2e8] sm:$0xf]
        %v514 = vld [vmem:[%s289 + $0x2ec] sm:$0xf]
        %v515 = vld [vmem:[%s289 + $0x2f0] sm:$0xf]
        %v516 = vld [vmem:[%s289 + $0x2f4] sm:$0xf]
        %v517 = vld [vmem:[%s289 + $0x2f8] sm:$0xf]
        %v518 = vld [vmem:[%s289 + $0x2fc] sm:$0xf]
        %v519 = vld [vmem:[%s289 + $0x300] sm:$0xf]
        %v520 = vld [vmem:[%s289 + $0x304] sm:$0xf]
        %v521 = vld [vmem:[%s289 + $0x308] sm:$0xf]
        %v522 = vld [vmem:[%s289 + $0x30c] sm:$0xf]
        %v523 = vld [vmem:[%s289 + $0x310] sm:$0xf]
        %v524 = vld [vmem:[%s289 + $0x314] sm:$0xf]
        %v525 = vld [vmem:[%s289 + $0x318] sm:$0xf]
        %v526 = vld [vmem:[%s289 + $0x31c] sm:$0xf]
        %v527 = vld [vmem:[%s289 + $0x320] sm:$0xf]
        %v528 = vld [vmem:[%s289 + $0x324] sm:$0xf]
        %v529 = vld [vmem:[%s289 + $0x328] sm:$0xf]
        %v530 = vld [vmem:[%s289 + $0x32c] sm:$0xf]
        %v531 = vld [vmem:[%s289 + $0x330] sm:$0xf]
        %v532 = vld [vmem:[%s289 + $0x334] sm:$0xf]
        %v533 = vld [vmem:[%s289 + $0x338] sm:$0xf]
        %v534 = vld [vmem:[%s289 + $0x33c] sm:$0xf]
        %v535 = vld [vmem:[%s289 + $0x340] sm:$0xf]
        %v536 = vld [vmem:[%s289 + $0x344] sm:$0xf]
        %v537 = vld [vmem:[%s289 + $0x348] sm:$0xf]
        %v538 = vld [vmem:[%s289 + $0x34c] sm:$0xf]
        %v539 = vld [vmem:[%s289 + $0x350] sm:$0xf]
        %v540 = vld [vmem:[%s289 + $0x354] sm:$0xf]
        %v541 = vld [vmem:[%s289 + $0x358] sm:$0xf]
        %v542 = vld [vmem:[%s289 + $0x35c] sm:$0xf]
        %v543 = vld [vmem:[%s289 + $0x360] sm:$0xf]
        %v544 = vld [vmem:[%s289 + $0x364] sm:$0xf]
        %v545 = vld [vmem:[%s289 + $0x368] sm:$0xf]
        %v546 = vld [vmem:[%s289 + $0x36c] sm:$0xf]
        %v547 = vld [vmem:[%s289 + $0x370] sm:$0xf]
        %v548 = vld [vmem:[%s289 + $0x374] sm:$0xf]
        %v549 = vld [vmem:[%s289 + $0x378] sm:$0xf]
        %v550 = vld [vmem:[%s289 + $0x37c] sm:$0xf]
        %v551 = vld [vmem:[%s289 + $0x380] sm:$0xf]
        %v552 = vld [vmem:[%s289 + $0x384] sm:$0xf]
        %v553 = vld [vmem:[%s289 + $0x388] sm:$0xf]
        %v554 = vld [vmem:[%s289 + $0x38c] sm:$0xf]
        %v555 = vld [vmem:[%s289 + $0x390] sm:$0xf]
        %v556 = vld [vmem:[%s289 + $0x394] sm:$0xf]
        %v557 = vld [vmem:[%s289 + $0x398] sm:$0xf]
        %v558 = vld [vmem:[%s289 + $0x39c] sm:$0xf]
        %v559 = vld [vmem:[%s289 + $0x3a0] sm:$0xf]
        %v560 = vld [vmem:[%s289 + $0x3a4] sm:$0xf]
        %v561 = vld [vmem:[%s289 + $0x3a8] sm:$0xf]
        %v562 = vld [vmem:[%s289 + $0x3ac] sm:$0xf]
        %v563 = vld [vmem:[%s289 + $0x3b0] sm:$0xf]
        %v564 = vld [vmem:[%s289 + $0x3b4] sm:$0xf]
        %v565 = vld [vmem:[%s289 + $0x3b8] sm:$0xf]
        %v566 = vld [vmem:[%s289 + $0x3bc] sm:$0xf]
        %v567 = vld [vmem:[%s289 + $0x3c0] sm:$0xf]
        %v568 = vld [vmem:[%s289 + $0x3c4] sm:$0xf]
        %v569 = vld [vmem:[%s289 + $0x3c8] sm:$0xf]
        %v570 = vld [vmem:[%s289 + $0x3cc] sm:$0xf]
        %v571 = vld [vmem:[%s289 + $0x3d0] sm:$0xf]
        %v572 = vld [vmem:[%s289 + $0x3d4] sm:$0xf]
        %v573 = vld [vmem:[%s289 + $0x3d8] sm:$0xf]
        %v574 = vld [vmem:[%s289 + $0x3dc] sm:$0xf]
        %v575 = vld [vmem:[%s289 + $0x3e0] sm:$0xf]
        %v576 = vld [vmem:[%s289 + $0x3e4] sm:$0xf]
        %v577 = vld [vmem:[%s289 + $0x3e8] sm:$0xf]
        %v578 = vld [vmem:[%s289 + $0x3ec] sm:$0xf]
        %v579 = vld [vmem:[%s289 + $0x3f0] sm:$0xf]
        %v580 = vld [vmem:[%s289 + $0x3f4] sm:$0xf]
        %v581 = vld [vmem:[%s289 + $0x3f8] sm:$0xf]
        %v582 = vld [vmem:[%s289 + $0x3fc] sm:$0xf]
        %v599 = vunpack.c.l.b16 %v311
        %v600 = vunpack.c.h.b16 %v311
        %v601 = vunpack.c.l.b16 %v312
        %v602 = vunpack.c.h.b16 %v312
        %v603 = vunpack.c.l.b16 %v313
        %v604 = vunpack.c.h.b16 %v313
        %v605 = vunpack.c.l.b16 %v314
        %v606 = vunpack.c.h.b16 %v314
        %v607 = vunpack.c.l.b16 %v315
        %v608 = vunpack.c.h.b16 %v315
        %v609 = vunpack.c.l.b16 %v316
        %v610 = vunpack.c.h.b16 %v316
        %v611 = vunpack.c.l.b16 %v317
        %v612 = vunpack.c.h.b16 %v317
        %v613 = vunpack.c.l.b16 %v318
        %v614 = vunpack.c.h.b16 %v318
        %v615 = vunpack.c.l.b16 %v319
        %v616 = vunpack.c.h.b16 %v319
        %v617 = vunpack.c.l.b16 %v320
        %v618 = vunpack.c.h.b16 %v320
        %v619 = vunpack.c.l.b16 %v321
        %v620 = vunpack.c.h.b16 %v321
        %v621 = vunpack.c.l.b16 %v322
        %v622 = vunpack.c.h.b16 %v322
        %v623 = vunpack.c.l.b16 %v323
        %v624 = vunpack.c.h.b16 %v323
        %v625 = vunpack.c.l.b16 %v324
        %v626 = vunpack.c.h.b16 %v324
        %v627 = vunpack.c.l.b16 %v325
        %v628 = vunpack.c.h.b16 %v325
        %v629 = vunpack.c.l.b16 %v326
        %v630 = vunpack.c.h.b16 %v326
        %v631 = vpack.c.b16 %v615, %v599
        %v632 = vpack.c.b16 %v616, %v600
        %v633 = vpack.c.b16 %v617, %v601
        %v634 = vpack.c.b16 %v618, %v602
        %v635 = vpack.c.b16 %v619, %v603
        %v636 = vpack.c.b16 %v620, %v604
        %v637 = vpack.c.b16 %v621, %v605
        %v638 = vpack.c.b16 %v622, %v606
        %v639 = vpack.c.b16 %v623, %v607
        %v640 = vpack.c.b16 %v624, %v608
        %v641 = vpack.c.b16 %v625, %v609
        %v642 = vpack.c.b16 %v626, %v610
        %v643 = vpack.c.b16 %v627, %v611
        %v644 = vpack.c.b16 %v628, %v612
        %v645 = vpack.c.b16 %v629, %v613
        %v646 = vpack.c.b16 %v630, %v614
        %v919 = vunpack.c.l.b16 %v327
        %v920 = vunpack.c.l.b16 %v328
        %v921 = vunpack.c.l.b16 %v329
        %v922 = vunpack.c.l.b16 %v330
        %v923 = vunpack.c.l.b16 %v331
        %v924 = vunpack.c.l.b16 %v332
        %v925 = vunpack.c.l.b16 %v333
        %v926 = vunpack.c.l.b16 %v334
        %v927 = vunpack.c.l.b16 %v335
        %v928 = vunpack.c.l.b16 %v336
        %v929 = vunpack.c.l.b16 %v337
        %v930 = vunpack.c.l.b16 %v338
        %v931 = vunpack.c.l.b16 %v339
        %v932 = vunpack.c.l.b16 %v340
        %v933 = vunpack.c.l.b16 %v341
        %v934 = vunpack.c.l.b16 %v342
        %v935 = vunpack.c.l.b16 %v343
        %v936 = vunpack.c.l.b16 %v344
        %v937 = vunpack.c.l.b16 %v345
        %v938 = vunpack.c.l.b16 %v346
        %v939 = vunpack.c.l.b16 %v347
        %v940 = vunpack.c.l.b16 %v348
        %v941 = vunpack.c.l.b16 %v349
        %v942 = vunpack.c.l.b16 %v350
        %v943 = vunpack.c.l.b16 %v351
        %v944 = vunpack.c.l.b16 %v352
        %v945 = vunpack.c.l.b16 %v353
        %v946 = vunpack.c.l.b16 %v354
        %v947 = vunpack.c.l.b16 %v355
        %v948 = vunpack.c.l.b16 %v356
        %v949 = vunpack.c.l.b16 %v357
        %v950 = vunpack.c.l.b16 %v358
        %v951 = vunpack.c.l.b16 %v359
        %v952 = vunpack.c.l.b16 %v360
        %v953 = vunpack.c.l.b16 %v361
        %v954 = vunpack.c.l.b16 %v362
        %v955 = vunpack.c.l.b16 %v363
        %v956 = vunpack.c.l.b16 %v364
        %v957 = vunpack.c.l.b16 %v365
        %v958 = vunpack.c.l.b16 %v366
        %v959 = vunpack.c.l.b16 %v367
        %v960 = vunpack.c.l.b16 %v368
        %v961 = vunpack.c.l.b16 %v369
        %v962 = vunpack.c.l.b16 %v370
        %v963 = vunpack.c.l.b16 %v371
        %v964 = vunpack.c.l.b16 %v372
        %v965 = vunpack.c.l.b16 %v373
        %v966 = vunpack.c.l.b16 %v374
        %v967 = vunpack.c.l.b16 %v375
        %v968 = vunpack.c.l.b16 %v376
        %v969 = vunpack.c.l.b16 %v377
        %v970 = vunpack.c.l.b16 %v378
        %v971 = vunpack.c.l.b16 %v379
        %v972 = vunpack.c.l.b16 %v380
        %v973 = vunpack.c.l.b16 %v381
        %v974 = vunpack.c.l.b16 %v382
        %v975 = vunpack.c.l.b16 %v383
        %v976 = vunpack.c.l.b16 %v384
        %v977 = vunpack.c.l.b16 %v385
        %v978 = vunpack.c.l.b16 %v386
        %v979 = vunpack.c.l.b16 %v387
        %v980 = vunpack.c.l.b16 %v388
        %v981 = vunpack.c.l.b16 %v389
        %v982 = vunpack.c.l.b16 %v390
        %v983 = vunpack.c.l.b16 %v391
        %v984 = vunpack.c.l.b16 %v392
        %v985 = vunpack.c.l.b16 %v393
        %v986 = vunpack.c.l.b16 %v394
        %v987 = vunpack.c.l.b16 %v395
        %v988 = vunpack.c.l.b16 %v396
        %v989 = vunpack.c.l.b16 %v397
        %v990 = vunpack.c.l.b16 %v398
        %v991 = vunpack.c.l.b16 %v399
        %v992 = vunpack.c.l.b16 %v400
        %v993 = vunpack.c.l.b16 %v401
        %v994 = vunpack.c.l.b16 %v402
        %v995 = vunpack.c.l.b16 %v403
        %v996 = vunpack.c.l.b16 %v404
        %v997 = vunpack.c.l.b16 %v405
        %v998 = vunpack.c.l.b16 %v406
        %v999 = vunpack.c.l.b16 %v407
        %v1000 = vunpack.c.l.b16 %v408
        %v1001 = vunpack.c.l.b16 %v409
        %v1002 = vunpack.c.l.b16 %v410
        %v1003 = vunpack.c.l.b16 %v411
        %v1004 = vunpack.c.l.b16 %v412
        %v1005 = vunpack.c.l.b16 %v413
        %v1006 = vunpack.c.l.b16 %v414
        %v1007 = vunpack.c.l.b16 %v415
        %v1008 = vunpack.c.l.b16 %v416
        %v1009 = vunpack.c.l.b16 %v417
        %v1010 = vunpack.c.l.b16 %v418
        %v1011 = vunpack.c.l.b16 %v419
        %v1012 = vunpack.c.l.b16 %v420
        %v1013 = vunpack.c.l.b16 %v421
        %v1014 = vunpack.c.l.b16 %v422
        %v1015 = vunpack.c.l.b16 %v423
        %v1016 = vunpack.c.l.b16 %v424
        %v1017 = vunpack.c.l.b16 %v425
        %v1018 = vunpack.c.l.b16 %v426
        %v1019 = vunpack.c.l.b16 %v427
        %v1020 = vunpack.c.l.b16 %v428
        %v1021 = vunpack.c.l.b16 %v429
        %v1022 = vunpack.c.l.b16 %v430
        %v1023 = vunpack.c.l.b16 %v431
        %v1024 = vunpack.c.l.b16 %v432
        %v1025 = vunpack.c.l.b16 %v433
        %v1026 = vunpack.c.l.b16 %v434
        %v1027 = vunpack.c.l.b16 %v435
        %v1028 = vunpack.c.l.b16 %v436
        %v1029 = vunpack.c.l.b16 %v437
        %v1030 = vunpack.c.l.b16 %v438
        %v1031 = vunpack.c.l.b16 %v439
        %v1032 = vunpack.c.l.b16 %v440
        %v1033 = vunpack.c.l.b16 %v441
        %v1034 = vunpack.c.l.b16 %v442
        %v1035 = vunpack.c.l.b16 %v443
        %v1036 = vunpack.c.l.b16 %v444
        %v1037 = vunpack.c.l.b16 %v445
        %v1038 = vunpack.c.l.b16 %v446
        %v1039 = vunpack.c.l.b16 %v447
        %v1040 = vunpack.c.l.b16 %v448
        %v1041 = vunpack.c.l.b16 %v449
        %v1042 = vunpack.c.l.b16 %v450
        %v1043 = vunpack.c.l.b16 %v451
        %v1044 = vunpack.c.l.b16 %v452
        %v1045 = vunpack.c.l.b16 %v453
        %v1046 = vunpack.c.l.b16 %v454
        %v1047 = vunpack.c.l.b16 %v455
        %v1048 = vunpack.c.l.b16 %v456
        %v1049 = vunpack.c.l.b16 %v457
        %v1050 = vunpack.c.l.b16 %v458
        %v1051 = vunpack.c.l.b16 %v459
        %v1052 = vunpack.c.l.b16 %v460
        %v1053 = vunpack.c.l.b16 %v461
        %v1054 = vunpack.c.l.b16 %v462
        %v1055 = vunpack.c.l.b16 %v463
        %v1056 = vunpack.c.l.b16 %v464
        %v1057 = vunpack.c.l.b16 %v465
        %v1058 = vunpack.c.l.b16 %v466
        %v1059 = vunpack.c.l.b16 %v467
        %v1060 = vunpack.c.l.b16 %v468
        %v1061 = vunpack.c.l.b16 %v469
        %v1062 = vunpack.c.l.b16 %v470
        %v1063 = vunpack.c.l.b16 %v471
        %v1064 = vunpack.c.l.b16 %v472
        %v1065 = vunpack.c.l.b16 %v473
        %v1066 = vunpack.c.l.b16 %v474
        %v1067 = vunpack.c.l.b16 %v475
        %v1068 = vunpack.c.l.b16 %v476
        %v1069 = vunpack.c.l.b16 %v477
        %v1070 = vunpack.c.l.b16 %v478
        %v1071 = vunpack.c.l.b16 %v479
        %v1072 = vunpack.c.l.b16 %v480
        %v1073 = vunpack.c.l.b16 %v481
        %v1074 = vunpack.c.l.b16 %v482
        %v1075 = vunpack.c.l.b16 %v483
        %v1076 = vunpack.c.l.b16 %v484
        %v1077 = vunpack.c.l.b16 %v485
        %v1078 = vunpack.c.l.b16 %v486
        %v1079 = vunpack.c.l.b16 %v487
        %v1080 = vunpack.c.l.b16 %v488
        %v1081 = vunpack.c.l.b16 %v489
        %v1082 = vunpack.c.l.b16 %v490
        %v1083 = vunpack.c.l.b16 %v491
        %v1084 = vunpack.c.l.b16 %v492
        %v1085 = vunpack.c.l.b16 %v493
        %v1086 = vunpack.c.l.b16 %v494
        %v1087 = vunpack.c.l.b16 %v495
        %v1088 = vunpack.c.l.b16 %v496
        %v1089 = vunpack.c.l.b16 %v497
        %v1090 = vunpack.c.l.b16 %v498
        %v1091 = vunpack.c.l.b16 %v499
        %v1092 = vunpack.c.l.b16 %v500
        %v1093 = vunpack.c.l.b16 %v501
        %v1094 = vunpack.c.l.b16 %v502
        %v1095 = vunpack.c.l.b16 %v503
        %v1096 = vunpack.c.l.b16 %v504
        %v1097 = vunpack.c.l.b16 %v505
        %v1098 = vunpack.c.l.b16 %v506
        %v1099 = vunpack.c.l.b16 %v507
        %v1100 = vunpack.c.l.b16 %v508
        %v1101 = vunpack.c.l.b16 %v509
        %v1102 = vunpack.c.l.b16 %v510
        %v1103 = vunpack.c.l.b16 %v511
        %v1104 = vunpack.c.l.b16 %v512
        %v1105 = vunpack.c.l.b16 %v513
        %v1106 = vunpack.c.l.b16 %v514
        %v1107 = vunpack.c.l.b16 %v515
        %v1108 = vunpack.c.l.b16 %v516
        %v1109 = vunpack.c.l.b16 %v517
        %v1110 = vunpack.c.l.b16 %v518
        %v1111 = vunpack.c.l.b16 %v519
        %v1112 = vunpack.c.l.b16 %v520
        %v1113 = vunpack.c.l.b16 %v521
        %v1114 = vunpack.c.l.b16 %v522
        %v1115 = vunpack.c.l.b16 %v523
        %v1116 = vunpack.c.l.b16 %v524
        %v1117 = vunpack.c.l.b16 %v525
        %v1118 = vunpack.c.l.b16 %v526
        %v1119 = vunpack.c.l.b16 %v527
        %v1120 = vunpack.c.l.b16 %v528
        %v1121 = vunpack.c.l.b16 %v529
        %v1122 = vunpack.c.l.b16 %v530
        %v1123 = vunpack.c.l.b16 %v531
        %v1124 = vunpack.c.l.b16 %v532
        %v1125 = vunpack.c.l.b16 %v533
        %v1126 = vunpack.c.l.b16 %v534
        %v1127 = vunpack.c.l.b16 %v535
        %v1128 = vunpack.c.l.b16 %v536
        %v1129 = vunpack.c.l.b16 %v537
        %v1130 = vunpack.c.l.b16 %v538
        %v1131 = vunpack.c.l.b16 %v539
        %v1132 = vunpack.c.l.b16 %v540
        %v1133 = vunpack.c.l.b16 %v541
        %v1134 = vunpack.c.l.b16 %v542
        %v1135 = vunpack.c.l.b16 %v543
        %v1136 = vunpack.c.l.b16 %v544
        %v1137 = vunpack.c.l.b16 %v545
        %v1138 = vunpack.c.l.b16 %v546
        %v1139 = vunpack.c.l.b16 %v547
        %v1140 = vunpack.c.l.b16 %v548
        %v1141 = vunpack.c.l.b16 %v549
        %v1142 = vunpack.c.l.b16 %v550
        %v1143 = vunpack.c.l.b16 %v551
        %v1144 = vunpack.c.l.b16 %v552
        %v1145 = vunpack.c.l.b16 %v553
        %v1146 = vunpack.c.l.b16 %v554
        %v1147 = vunpack.c.l.b16 %v555
        %v1148 = vunpack.c.l.b16 %v556
        %v1149 = vunpack.c.l.b16 %v557
        %v1150 = vunpack.c.l.b16 %v558
        %v1151 = vunpack.c.l.b16 %v559
        %v1152 = vunpack.c.l.b16 %v560
        %v1153 = vunpack.c.l.b16 %v561
        %v1154 = vunpack.c.l.b16 %v562
        %v1155 = vunpack.c.l.b16 %v563
        %v1156 = vunpack.c.l.b16 %v564
        %v1157 = vunpack.c.l.b16 %v565
        %v1158 = vunpack.c.l.b16 %v566
        %v1159 = vunpack.c.l.b16 %v567
        %v1160 = vunpack.c.l.b16 %v568
        %v1161 = vunpack.c.l.b16 %v569
        %v1162 = vunpack.c.l.b16 %v570
        %v1163 = vunpack.c.l.b16 %v571
        %v1164 = vunpack.c.l.b16 %v572
        %v1165 = vunpack.c.l.b16 %v573
        %v1166 = vunpack.c.l.b16 %v574
        %v1167 = vunpack.c.l.b16 %v575
        %v1168 = vunpack.c.l.b16 %v576
        %v1169 = vunpack.c.l.b16 %v577
        %v1170 = vunpack.c.l.b16 %v578
        %v1171 = vunpack.c.l.b16 %v579
        %v1172 = vunpack.c.l.b16 %v580
        %v1173 = vunpack.c.l.b16 %v581
        %v1174 = vunpack.c.l.b16 %v582
        %v1175 = vpack.c.b16 %v920, %v919
        %v1176 = vpack.c.b16 %v922, %v921
        %v1177 = vpack.c.b16 %v924, %v923
        %v1178 = vpack.c.b16 %v926, %v925
        %v1179 = vpack.c.b16 %v928, %v927
        %v1180 = vpack.c.b16 %v930, %v929
        %v1181 = vpack.c.b16 %v932, %v931
        %v1182 = vpack.c.b16 %v934, %v933
        %v1183 = vpack.c.b16 %v936, %v935
        %v1184 = vpack.c.b16 %v938, %v937
        %v1185 = vpack.c.b16 %v940, %v939
        %v1186 = vpack.c.b16 %v942, %v941
        %v1187 = vpack.c.b16 %v944, %v943
        %v1188 = vpack.c.b16 %v946, %v945
        %v1189 = vpack.c.b16 %v948, %v947
        %v1190 = vpack.c.b16 %v950, %v949
        %v1191 = vpack.c.b16 %v952, %v951
        %v1192 = vpack.c.b16 %v954, %v953
        %v1193 = vpack.c.b16 %v956, %v955
        %v1194 = vpack.c.b16 %v958, %v957
        %v1195 = vpack.c.b16 %v960, %v959
        %v1196 = vpack.c.b16 %v962, %v961
        %v1197 = vpack.c.b16 %v964, %v963
        %v1198 = vpack.c.b16 %v966, %v965
        %v1199 = vpack.c.b16 %v968, %v967
        %v1200 = vpack.c.b16 %v970, %v969
        %v1201 = vpack.c.b16 %v972, %v971
        %v1202 = vpack.c.b16 %v974, %v973
        %v1203 = vpack.c.b16 %v976, %v975
        %v1204 = vpack.c.b16 %v978, %v977
        %v1205 = vpack.c.b16 %v980, %v979
        %v1206 = vpack.c.b16 %v982, %v981
        %v1207 = vpack.c.b16 %v984, %v983
        %v1208 = vpack.c.b16 %v986, %v985
        %v1209 = vpack.c.b16 %v988, %v987
        %v1210 = vpack.c.b16 %v990, %v989
        %v1211 = vpack.c.b16 %v992, %v991
        %v1212 = vpack.c.b16 %v994, %v993
        %v1213 = vpack.c.b16 %v996, %v995
        %v1214 = vpack.c.b16 %v998, %v997
        %v1215 = vpack.c.b16 %v1000, %v999
        %v1216 = vpack.c.b16 %v1002, %v1001
        %v1217 = vpack.c.b16 %v1004, %v1003
        %v1218 = vpack.c.b16 %v1006, %v1005
        %v1219 = vpack.c.b16 %v1008, %v1007
        %v1220 = vpack.c.b16 %v1010, %v1009
        %v1221 = vpack.c.b16 %v1012, %v1011
        %v1222 = vpack.c.b16 %v1014, %v1013
        %v1223 = vpack.c.b16 %v1016, %v1015
        %v1224 = vpack.c.b16 %v1018, %v1017
        %v1225 = vpack.c.b16 %v1020, %v1019
        %v1226 = vpack.c.b16 %v1022, %v1021
        %v1227 = vpack.c.b16 %v1024, %v1023
        %v1228 = vpack.c.b16 %v1026, %v1025
        %v1229 = vpack.c.b16 %v1028, %v1027
        %v1230 = vpack.c.b16 %v1030, %v1029
        %v1231 = vpack.c.b16 %v1032, %v1031
        %v1232 = vpack.c.b16 %v1034, %v1033
        %v1233 = vpack.c.b16 %v1036, %v1035
        %v1234 = vpack.c.b16 %v1038, %v1037
        %v1235 = vpack.c.b16 %v1040, %v1039
        %v1236 = vpack.c.b16 %v1042, %v1041
        %v1237 = vpack.c.b16 %v1044, %v1043
        %v1238 = vpack.c.b16 %v1046, %v1045
        %v1239 = vpack.c.b16 %v1048, %v1047
        %v1240 = vpack.c.b16 %v1050, %v1049
        %v1241 = vpack.c.b16 %v1052, %v1051
        %v1242 = vpack.c.b16 %v1054, %v1053
        %v1243 = vpack.c.b16 %v1056, %v1055
        %v1244 = vpack.c.b16 %v1058, %v1057
        %v1245 = vpack.c.b16 %v1060, %v1059
        %v1246 = vpack.c.b16 %v1062, %v1061
        %v1247 = vpack.c.b16 %v1064, %v1063
        %v1248 = vpack.c.b16 %v1066, %v1065
        %v1249 = vpack.c.b16 %v1068, %v1067
        %v1250 = vpack.c.b16 %v1070, %v1069
        %v1251 = vpack.c.b16 %v1072, %v1071
        %v1252 = vpack.c.b16 %v1074, %v1073
        %v1253 = vpack.c.b16 %v1076, %v1075
        %v1254 = vpack.c.b16 %v1078, %v1077
        %v1255 = vpack.c.b16 %v1080, %v1079
        %v1256 = vpack.c.b16 %v1082, %v1081
        %v1257 = vpack.c.b16 %v1084, %v1083
        %v1258 = vpack.c.b16 %v1086, %v1085
        %v1259 = vpack.c.b16 %v1088, %v1087
        %v1260 = vpack.c.b16 %v1090, %v1089
        %v1261 = vpack.c.b16 %v1092, %v1091
        %v1262 = vpack.c.b16 %v1094, %v1093
        %v1263 = vpack.c.b16 %v1096, %v1095
        %v1264 = vpack.c.b16 %v1098, %v1097
        %v1265 = vpack.c.b16 %v1100, %v1099
        %v1266 = vpack.c.b16 %v1102, %v1101
        %v1267 = vpack.c.b16 %v1104, %v1103
        %v1268 = vpack.c.b16 %v1106, %v1105
        %v1269 = vpack.c.b16 %v1108, %v1107
        %v1270 = vpack.c.b16 %v1110, %v1109
        %v1271 = vpack.c.b16 %v1112, %v1111
        %v1272 = vpack.c.b16 %v1114, %v1113
        %v1273 = vpack.c.b16 %v1116, %v1115
        %v1274 = vpack.c.b16 %v1118, %v1117
        %v1275 = vpack.c.b16 %v1120, %v1119
        %v1276 = vpack.c.b16 %v1122, %v1121
        %v1277 = vpack.c.b16 %v1124, %v1123
        %v1278 = vpack.c.b16 %v1126, %v1125
        %v1279 = vpack.c.b16 %v1128, %v1127
        %v1280 = vpack.c.b16 %v1130, %v1129
        %v1281 = vpack.c.b16 %v1132, %v1131
        %v1282 = vpack.c.b16 %v1134, %v1133
        %v1283 = vpack.c.b16 %v1136, %v1135
        %v1284 = vpack.c.b16 %v1138, %v1137
        %v1285 = vpack.c.b16 %v1140, %v1139
        %v1286 = vpack.c.b16 %v1142, %v1141
        %v1287 = vpack.c.b16 %v1144, %v1143
        %v1288 = vpack.c.b16 %v1146, %v1145
        %v1289 = vpack.c.b16 %v1148, %v1147
        %v1290 = vpack.c.b16 %v1150, %v1149
        %v1291 = vpack.c.b16 %v1152, %v1151
        %v1292 = vpack.c.b16 %v1154, %v1153
        %v1293 = vpack.c.b16 %v1156, %v1155
        %v1294 = vpack.c.b16 %v1158, %v1157
        %v1295 = vpack.c.b16 %v1160, %v1159
        %v1296 = vpack.c.b16 %v1162, %v1161
        %v1297 = vpack.c.b16 %v1164, %v1163
        %v1298 = vpack.c.b16 %v1166, %v1165
        %v1299 = vpack.c.b16 %v1168, %v1167
        %v1300 = vpack.c.b16 %v1170, %v1169
        %v1301 = vpack.c.b16 %v1172, %v1171
        %v1302 = vpack.c.b16 %v1174, %v1173
        %1431 = vmatprep.subr.bf16.mxu0 0
        %1432 = vmatpush1.bf16.msra.mxu0 %v1175
        %1433 = vmatprep.subr.bf16.mxu0 0
        %1434 = vmatpush1.bf16.msra.mxu0 %v1176
        %1435 = vmatprep.subr.bf16.mxu0 0
        %1436 = vmatpush1.bf16.msra.mxu0 %v1177
        %1437 = vmatprep.subr.bf16.mxu0 0
        %1438 = vmatpush1.bf16.msra.mxu0 %v1178
        %1439 = vmatprep.subr.bf16.mxu0 0
        %1440 = vmatpush1.bf16.msra.mxu0 %v1179
        %1441 = vmatprep.subr.bf16.mxu0 0
        %1442 = vmatpush1.bf16.msra.mxu0 %v1180
        %1443 = vmatprep.subr.bf16.mxu0 0
        %1444 = vmatpush1.bf16.msra.mxu0 %v1181
        %1445 = vmatprep.subr.bf16.mxu0 0
        %1446 = vmatpush1.bf16.msra.mxu0 %v1182
        %1447 = vmatprep.subr.bf16.mxu0 0
        %1448 = vmatpush1.bf16.msra.mxu0 %v1183
        %1449 = vmatprep.subr.bf16.mxu0 0
        %1450 = vmatpush1.bf16.msra.mxu0 %v1184
        %1451 = vmatprep.subr.bf16.mxu0 0
        %1452 = vmatpush1.bf16.msra.mxu0 %v1185
        %1453 = vmatprep.subr.bf16.mxu0 0
        %1454 = vmatpush1.bf16.msra.mxu0 %v1186
        %1455 = vmatprep.subr.bf16.mxu0 0
        %1456 = vmatpush1.bf16.msra.mxu0 %v1187
        %1457 = vmatprep.subr.bf16.mxu0 0
        %1458 = vmatpush1.bf16.msra.mxu0 %v1188
        %1459 = vmatprep.subr.bf16.mxu0 0
        %1460 = vmatpush1.bf16.msra.mxu0 %v1189
        %1461 = vmatprep.subr.bf16.mxu0 0
        %1462 = vmatpush1.bf16.msra.mxu0 %v1190
        %1463 = vmatprep.mubr.bf16.mxu0 %v632
        %1464 = vmatmul.mubr.bf16.gmra.mrb[0].mxu0 %v631
        %v1465 = vpop.f32.mrb[0].mxu0
        %v1466 = vadd.f32 0.0, %v1465
        %v1467 = vpop.f32.mrb[0].mxu0
        %v1468 = vpop.f32.mrb[0].mxu0
        %v1469 = vadd.f32 0.0, %v1468
        %v1470 = vpop.f32.mrb[0].mxu0
        %1471 = vdwg.mxu0
        %1472 = vmatprep.subr.bf16.mxu0 0
        %1473 = vmatpush1.bf16.msra.mxu0 %v1191
        %1474 = vmatprep.subr.bf16.mxu0 0
        %1475 = vmatpush1.bf16.msra.mxu0 %v1192
        %1476 = vmatprep.subr.bf16.mxu0 0
        %1477 = vmatpush1.bf16.msra.mxu0 %v1193
        %1478 = vmatprep.subr.bf16.mxu0 0
        %1479 = vmatpush1.bf16.msra.mxu0 %v1194
        %1480 = vmatprep.subr.bf16.mxu0 0
        %1481 = vmatpush1.bf16.msra.mxu0 %v1195
        %1482 = vmatprep.subr.bf16.mxu0 0
        %1483 = vmatpush1.bf16.msra.mxu0 %v1196
        %1484 = vmatprep.subr.bf16.mxu0 0
        %1485 = vmatpush1.bf16.msra.mxu0 %v1197
        %1486 = vmatprep.subr.bf16.mxu0 0
        %1487 = vmatpush1.bf16.msra.mxu0 %v1198
        %1488 = vmatprep.subr.bf16.mxu0 0
        %1489 = vmatpush1.bf16.msra.mxu0 %v1199
        %1490 = vmatprep.subr.bf16.mxu0 0
        %1491 = vmatpush1.bf16.msra.mxu0 %v1200
        %1492 = vmatprep.subr.bf16.mxu0 0
        %1493 = vmatpush1.bf16.msra.mxu0 %v1201
        %1494 = vmatprep.subr.bf16.mxu0 0
        %1495 = vmatpush1.bf16.msra.mxu0 %v1202
        %1496 = vmatprep.subr.bf16.mxu0 0
        %1497 = vmatpush1.bf16.msra.mxu0 %v1203
        %1498 = vmatprep.subr.bf16.mxu0 0
        %1499 = vmatpush1.bf16.msra.mxu0 %v1204
        %1500 = vmatprep.subr.bf16.mxu0 0
        %1501 = vmatpush1.bf16.msra.mxu0 %v1205
        %1502 = vmatprep.subr.bf16.mxu0 0
        %1503 = vmatpush1.bf16.msra.mxu0 %v1206
        %1504 = vmatprep.mubr.bf16.mxu0 %v634
        %1505 = vmatmul.mubr.bf16.gmra.mrb[0].mxu0 %v633
        %v1506 = vpop.f32.mrb[0].mxu0
        %v1507 = vadd.f32 %v1466, %v1506
        %v1508 = vpop.f32.mrb[0].mxu0
        %v1509 = vpop.f32.mrb[0].mxu0
        %v1510 = vadd.f32 %v1469, %v1509
        %v1511 = vpop.f32.mrb[0].mxu0
        %1512 = vdwg.mxu0
        %1513 = vmatprep.subr.bf16.mxu0 0
        %1514 = vmatpush1.bf16.msra.mxu0 %v1207
        %1515 = vmatprep.subr.bf16.mxu0 0
        %1516 = vmatpush1.bf16.msra.mxu0 %v1208
        %1517 = vmatprep.subr.bf16.mxu0 0
        %1518 = vmatpush1.bf16.msra.mxu0 %v1209
        %1519 = vmatprep.subr.bf16.mxu0 0
        %1520 = vmatpush1.bf16.msra.mxu0 %v1210
        %1521 = vmatprep.subr.bf16.mxu0 0
        %1522 = vmatpush1.bf16.msra.mxu0 %v1211
        %1523 = vmatprep.subr.bf16.mxu0 0
        %1524 = vmatpush1.bf16.msra.mxu0 %v1212
        %1525 = vmatprep.subr.bf16.mxu0 0
        %1526 = vmatpush1.bf16.msra.mxu0 %v1213
        %1527 = vmatprep.subr.bf16.mxu0 0
        %1528 = vmatpush1.bf16.msra.mxu0 %v1214
        %1529 = vmatprep.subr.bf16.mxu0 0
        %1530 = vmatpush1.bf16.msra.mxu0 %v1215
        %1531 = vmatprep.subr.bf16.mxu0 0
        %1532 = vmatpush1.bf16.msra.mxu0 %v1216
        %1533 = vmatprep.subr.bf16.mxu0 0
        %1534 = vmatpush1.bf16.msra.mxu0 %v1217
        %1535 = vmatprep.subr.bf16.mxu0 0
        %1536 = vmatpush1.bf16.msra.mxu0 %v1218
        %1537 = vmatprep.subr.bf16.mxu0 0
        %1538 = vmatpush1.bf16.msra.mxu0 %v1219
        %1539 = vmatprep.subr.bf16.mxu0 0
        %1540 = vmatpush1.bf16.msra.mxu0 %v1220
        %1541 = vmatprep.subr.bf16.mxu0 0
        %1542 = vmatpush1.bf16.msra.mxu0 %v1221
        %1543 = vmatprep.subr.bf16.mxu0 0
        %1544 = vmatpush1.bf16.msra.mxu0 %v1222
        %1545 = vmatprep.mubr.bf16.mxu0 %v636
        %1546 = vmatmul.mubr.bf16.gmra.mrb[0].mxu0 %v635
        %v1547 = vpop.f32.mrb[0].mxu0
        %v1548 = vadd.f32 %v1507, %v1547
        %v1549 = vpop.f32.mrb[0].mxu0
        %v1550 = vpop.f32.mrb[0].mxu0
        %v1551 = vadd.f32 %v1510, %v1550
        %v1552 = vpop.f32.mrb[0].mxu0
        %1553 = vdwg.mxu0
        %1554 = vmatprep.subr.bf16.mxu0 0
        %1555 = vmatpush1.bf16.msra.mxu0 %v1223
        %1556 = vmatprep.subr.bf16.mxu0 0
        %1557 = vmatpush1.bf16.msra.mxu0 %v1224
        %1558 = vmatprep.subr.bf16.mxu0 0
        %1559 = vmatpush1.bf16.msra.mxu0 %v1225
        %1560 = vmatprep.subr.bf16.mxu0 0
        %1561 = vmatpush1.bf16.msra.mxu0 %v1226
        %1562 = vmatprep.subr.bf16.mxu0 0
        %1563 = vmatpush1.bf16.msra.mxu0 %v1227
        %1564 = vmatprep.subr.bf16.mxu0 0
        %1565 = vmatpush1.bf16.msra.mxu0 %v1228
        %1566 = vmatprep.subr.bf16.mxu0 0
        %1567 = vmatpush1.bf16.msra.mxu0 %v1229
        %1568 = vmatprep.subr.bf16.mxu0 0
        %1569 = vmatpush1.bf16.msra.mxu0 %v1230
        %1570 = vmatprep.subr.bf16.mxu0 0
        %1571 = vmatpush1.bf16.msra.mxu0 %v1231
        %1572 = vmatprep.subr.bf16.mxu0 0
        %1573 = vmatpush1.bf16.msra.mxu0 %v1232
        %1574 = vmatprep.subr.bf16.mxu0 0
        %1575 = vmatpush1.bf16.msra.mxu0 %v1233
        %1576 = vmatprep.subr.bf16.mxu0 0
        %1577 = vmatpush1.bf16.msra.mxu0 %v1234
        %1578 = vmatprep.subr.bf16.mxu0 0
        %1579 = vmatpush1.bf16.msra.mxu0 %v1235
        %1580 = vmatprep.subr.bf16.mxu0 0
        %1581 = vmatpush1.bf16.msra.mxu0 %v1236
        %1582 = vmatprep.subr.bf16.mxu0 0
        %1583 = vmatpush1.bf16.msra.mxu0 %v1237
        %1584 = vmatprep.subr.bf16.mxu0 0
        %1585 = vmatpush1.bf16.msra.mxu0 %v1238
        %1586 = vmatprep.mubr.bf16.mxu0 %v638
        %1587 = vmatmul.mubr.bf16.gmra.mrb[0].mxu0 %v637
        %v1588 = vpop.f32.mrb[0].mxu0
        %v1589 = vadd.f32 %v1548, %v1588
        %v1590 = vpop.f32.mrb[0].mxu0
        %v1591 = vpop.f32.mrb[0].mxu0
        %v1592 = vadd.f32 %v1551, %v1591
        %v1593 = vpop.f32.mrb[0].mxu0
        %1594 = vdwg.mxu0
        %1595 = vmatprep.subr.bf16.mxu0 0
        %1596 = vmatpush1.bf16.msra.mxu0 %v1239
        %1597 = vmatprep.subr.bf16.mxu0 0
        %1598 = vmatpush1.bf16.msra.mxu0 %v1240
        %1599 = vmatprep.subr.bf16.mxu0 0
        %1600 = vmatpush1.bf16.msra.mxu0 %v1241
        %1601 = vmatprep.subr.bf16.mxu0 0
        %1602 = vmatpush1.bf16.msra.mxu0 %v1242
        %1603 = vmatprep.subr.bf16.mxu0 0
        %1604 = vmatpush1.bf16.msra.mxu0 %v1243
        %1605 = vmatprep.subr.bf16.mxu0 0
        %1606 = vmatpush1.bf16.msra.mxu0 %v1244
        %1607 = vmatprep.subr.bf16.mxu0 0
        %1608 = vmatpush1.bf16.msra.mxu0 %v1245
        %1609 = vmatprep.subr.bf16.mxu0 0
        %1610 = vmatpush1.bf16.msra.mxu0 %v1246
        %1611 = vmatprep.subr.bf16.mxu0 0
        %1612 = vmatpush1.bf16.msra.mxu0 %v1247
        %1613 = vmatprep.subr.bf16.mxu0 0
        %1614 = vmatpush1.bf16.msra.mxu0 %v1248
        %1615 = vmatprep.subr.bf16.mxu0 0
        %1616 = vmatpush1.bf16.msra.mxu0 %v1249
        %1617 = vmatprep.subr.bf16.mxu0 0
        %1618 = vmatpush1.bf16.msra.mxu0 %v1250
        %1619 = vmatprep.subr.bf16.mxu0 0
        %1620 = vmatpush1.bf16.msra.mxu0 %v1251
        %1621 = vmatprep.subr.bf16.mxu0 0
        %1622 = vmatpush1.bf16.msra.mxu0 %v1252
        %1623 = vmatprep.subr.bf16.mxu0 0
        %1624 = vmatpush1.bf16.msra.mxu0 %v1253
        %1625 = vmatprep.subr.bf16.mxu0 0
        %1626 = vmatpush1.bf16.msra.mxu0 %v1254
        %1627 = vmatprep.mubr.bf16.mxu0 %v640
        %1628 = vmatmul.mubr.bf16.gmra.mrb[0].mxu0 %v639
        %v1629 = vpop.f32.mrb[0].mxu0
        %v1630 = vadd.f32 %v1589, %v1629
        %v1631 = vpop.f32.mrb[0].mxu0
        %v1632 = vpop.f32.mrb[0].mxu0
        %v1633 = vadd.f32 %v1592, %v1632
        %v1634 = vpop.f32.mrb[0].mxu0
        %1635 = vdwg.mxu0
        %1636 = vmatprep.subr.bf16.mxu0 0
        %1637 = vmatpush1.bf16.msra.mxu0 %v1255
        %1638 = vmatprep.subr.bf16.mxu0 0
        %1639 = vmatpush1.bf16.msra.mxu0 %v1256
        %1640 = vmatprep.subr.bf16.mxu0 0
        %1641 = vmatpush1.bf16.msra.mxu0 %v1257
        %1642 = vmatprep.subr.bf16.mxu0 0
        %1643 = vmatpush1.bf16.msra.mxu0 %v1258
        %1644 = vmatprep.subr.bf16.mxu0 0
        %1645 = vmatpush1.bf16.msra.mxu0 %v1259
        %1646 = vmatprep.subr.bf16.mxu0 0
        %1647 = vmatpush1.bf16.msra.mxu0 %v1260
        %1648 = vmatprep.subr.bf16.mxu0 0
        %1649 = vmatpush1.bf16.msra.mxu0 %v1261
        %1650 = vmatprep.subr.bf16.mxu0 0
        %1651 = vmatpush1.bf16.msra.mxu0 %v1262
        %1652 = vmatprep.subr.bf16.mxu0 0
        %1653 = vmatpush1.bf16.msra.mxu0 %v1263
        %1654 = vmatprep.subr.bf16.mxu0 0
        %1655 = vmatpush1.bf16.msra.mxu0 %v1264
        %1656 = vmatprep.subr.bf16.mxu0 0
        %1657 = vmatpush1.bf16.msra.mxu0 %v1265
        %1658 = vmatprep.subr.bf16.mxu0 0
        %1659 = vmatpush1.bf16.msra.mxu0 %v1266
        %1660 = vmatprep.subr.bf16.mxu0 0
        %1661 = vmatpush1.bf16.msra.mxu0 %v1267
        %1662 = vmatprep.subr.bf16.mxu0 0
        %1663 = vmatpush1.bf16.msra.mxu0 %v1268
        %1664 = vmatprep.subr.bf16.mxu0 0
        %1665 = vmatpush1.bf16.msra.mxu0 %v1269
        %1666 = vmatprep.subr.bf16.mxu0 0
        %1667 = vmatpush1.bf16.msra.mxu0 %v1270
        %1668 = vmatprep.mubr.bf16.mxu0 %v642
        %1669 = vmatmul.mubr.bf16.gmra.mrb[0].mxu0 %v641
        %v1670 = vpop.f32.mrb[0].mxu0
        %v1671 = vadd.f32 %v1630, %v1670
        %v1672 = vpop.f32.mrb[0].mxu0
        %v1673 = vpop.f32.mrb[0].mxu0
        %v1674 = vadd.f32 %v1633, %v1673
        %v1675 = vpop.f32.mrb[0].mxu0
        %1676 = vdwg.mxu0
        %1677 = vmatprep.subr.bf16.mxu0 0
        %1678 = vmatpush1.bf16.msra.mxu0 %v1271
        %1679 = vmatprep.subr.bf16.mxu0 0
        %1680 = vmatpush1.bf16.msra.mxu0 %v1272
        %1681 = vmatprep.subr.bf16.mxu0 0
        %1682 = vmatpush1.bf16.msra.mxu0 %v1273
        %1683 = vmatprep.subr.bf16.mxu0 0
        %1684 = vmatpush1.bf16.msra.mxu0 %v1274
        %1685 = vmatprep.subr.bf16.mxu0 0
        %1686 = vmatpush1.bf16.msra.mxu0 %v1275
        %1687 = vmatprep.subr.bf16.mxu0 0
        %1688 = vmatpush1.bf16.msra.mxu0 %v1276
        %1689 = vmatprep.subr.bf16.mxu0 0
        %1690 = vmatpush1.bf16.msra.mxu0 %v1277
        %1691 = vmatprep.subr.bf16.mxu0 0
        %1692 = vmatpush1.bf16.msra.mxu0 %v1278
        %1693 = vmatprep.subr.bf16.mxu0 0
        %1694 = vmatpush1.bf16.msra.mxu0 %v1279
        %1695 = vmatprep.subr.bf16.mxu0 0
        %1696 = vmatpush1.bf16.msra.mxu0 %v1280
        %1697 = vmatprep.subr.bf16.mxu0 0
        %1698 = vmatpush1.bf16.msra.mxu0 %v1281
        %1699 = vmatprep.subr.bf16.mxu0 0
        %1700 = vmatpush1.bf16.msra.mxu0 %v1282
        %1701 = vmatprep.subr.bf16.mxu0 0
        %1702 = vmatpush1.bf16.msra.mxu0 %v1283
        %1703 = vmatprep.subr.bf16.mxu0 0
        %1704 = vmatpush1.bf16.msra.mxu0 %v1284
        %1705 = vmatprep.subr.bf16.mxu0 0
        %1706 = vmatpush1.bf16.msra.mxu0 %v1285
        %1707 = vmatprep.subr.bf16.mxu0 0
        %1708 = vmatpush1.bf16.msra.mxu0 %v1286
        %1709 = vmatprep.mubr.bf16.mxu0 %v644
        %1710 = vmatmul.mubr.bf16.gmra.mrb[0].mxu0 %v643
        %v1711 = vpop.f32.mrb[0].mxu0
        %v1712 = vadd.f32 %v1671, %v1711
        %v1713 = vpop.f32.mrb[0].mxu0
        %v1714 = vpop.f32.mrb[0].mxu0
        %v1715 = vadd.f32 %v1674, %v1714
        %v1716 = vpop.f32.mrb[0].mxu0
        %1717 = vdwg.mxu0
        %1718 = vmatprep.subr.bf16.mxu0 0
        %1719 = vmatpush1.bf16.msra.mxu0 %v1287
        %1720 = vmatprep.subr.bf16.mxu0 0
        %1721 = vmatpush1.bf16.msra.mxu0 %v1288
        %1722 = vmatprep.subr.bf16.mxu0 0
        %1723 = vmatpush1.bf16.msra.mxu0 %v1289
        %1724 = vmatprep.subr.bf16.mxu0 0
        %1725 = vmatpush1.bf16.msra.mxu0 %v1290
        %1726 = vmatprep.subr.bf16.mxu0 0
        %1727 = vmatpush1.bf16.msra.mxu0 %v1291
        %1728 = vmatprep.subr.bf16.mxu0 0
        %1729 = vmatpush1.bf16.msra.mxu0 %v1292
        %1730 = vmatprep.subr.bf16.mxu0 0
        %1731 = vmatpush1.bf16.msra.mxu0 %v1293
        %1732 = vmatprep.subr.bf16.mxu0 0
        %1733 = vmatpush1.bf16.msra.mxu0 %v1294
        %1734 = vmatprep.subr.bf16.mxu0 0
        %1735 = vmatpush1.bf16.msra.mxu0 %v1295
        %1736 = vmatprep.subr.bf16.mxu0 0
        %1737 = vmatpush1.bf16.msra.mxu0 %v1296
        %1738 = vmatprep.subr.bf16.mxu0 0
        %1739 = vmatpush1.bf16.msra.mxu0 %v1297
        %1740 = vmatprep.subr.bf16.mxu0 0
        %1741 = vmatpush1.bf16.msra.mxu0 %v1298
        %1742 = vmatprep.subr.bf16.mxu0 0
        %1743 = vmatpush1.bf16.msra.mxu0 %v1299
        %1744 = vmatprep.subr.bf16.mxu0 0
        %1745 = vmatpush1.bf16.msra.mxu0 %v1300
        %1746 = vmatprep.subr.bf16.mxu0 0
        %1747 = vmatpush1.bf16.msra.mxu0 %v1301
        %1748 = vmatprep.subr.bf16.mxu0 0
        %1749 = vmatpush1.bf16.msra.mxu0 %v1302
        %1750 = vmatprep.mubr.bf16.mxu0 %v646
        %1751 = vmatmul.mubr.bf16.gmra.mrb[0].mxu0 %v645
        %v1752 = vpop.f32.mrb[0].mxu0
        %v1753 = vadd.f32 %v1712, %v1752
        %v1754 = vpop.f32.mrb[0].mxu0
        %v1755 = vpop.f32.mrb[0].mxu0
        %v1756 = vadd.f32 %v1715, %v1755
        %v1757 = vpop.f32.mrb[0].mxu0
        %1758 = vdwg.mxu0
        %v1759 = vadd.f32 %v309, %v1753
        %v1760 = vadd.f32 %v310, %v1756
        %1761 = vst [vmem:[#allocation2] sm:$0xff] %v1759
        %1762 = vst [vmem:[#allocation2 + $0x8] sm:$0xff] %v1760
        %p1763 = scmp.eq.s32.totalorder %s21, 3
        // Predicated region
        $region60: #{_lambda_.11} parent=50 // pred_check
          %p1764 = pneg %p1763
        $region61: #{_lambda_.11} parent=50 // pred_check_branch
          %1766 = sbr.rel (%p1764) target = $region63
        $region62: #{_lambda_.11} parent=50 // pred_region
          %v1767 = vld [vmem:[#allocation2] sm:$0xff]
          %v1768 = vld [vmem:[#allocation2 + $0x8] sm:$0xff]
          %v1769 = vld [vmem:[%s2] sm:$0x1]
          %v1771 = vlaneseq
          %v1772 = vshrl.u32 %v1771, 7
          %v1773 = vsub.s32 0, %v1772
          %v1774 = vrot.slane %v1769, %v1773
          %v1776 = vadd.f32 %v1767, %v1774
          %v1777 = vadd.f32 %v1768, %v1774
          %1778 = vst [vmem:[%s295] sm:$0xff] %v1776
          %1779 = vst [vmem:[%s295 + $0x8] sm:$0xff] %v1777
          %v1780 = vlaneseq
          %v1781 = vshrl.u32 %v1780, 7
          %v1782 = vadd.s32 %v1781, 8
          %v1783 = vstv %s302
          %v1784 = vadd.s32 %v1783, %v1781
          %v1785 = vadd.s32 %v1783, %v1782
          %vm1786 = vcmp.lt.s32.totalorder %v1784, 16
          %vm1787 = vcmp.lt.s32.totalorder %v1785, 16
          %v1788 = vsel %vm1786, 1, 0
          %v1789 = vsel %vm1787, 1, 0
          %vm1790 = vcmp.eq.s32.totalorder %v1788, 1
          %vm1791 = vcmp.eq.s32.totalorder %v1789, 1
          %v1792 = vsel %vm1790, %v1776, 0.0
          %v1793 = vsel %vm1791, %v1777, 0.0
          %v1794 = vadd.f32 %v1792, %v1793
          %v1795 = vrot.slane %v1794, 4
          %v1796 = vadd.f32 %v1794, %v1795
          %v1797 = vrot.slane %v1796, 2
          %v1798 = vadd.f32 %v1796, %v1797
          %v1799 = vrot.slane %v1798, 1
          %v1800 = vadd.f32 %v1798, %v1799
          %v1801 = vmul.f32 %v1792, %v1792
          %v1802 = vmul.f32 %v1793, %v1793
          %v1803 = vadd.f32 %v1801, %v1802
          %v1804 = vrot.slane %v1803, 4
          %v1805 = vadd.f32 %v1803, %v1804
          %v1806 = vrot.slane %v1805, 2
          %v1807 = vadd.f32 %v1805, %v1806
          %v1808 = vrot.slane %v1807, 1
          %v1809 = vadd.f32 %v1807, %v1808
          %vm1810 = vcmask 1040384
          %v1811 = vsel %vm1810, %v1800, %v1809
          %vm1812 = vcmask 1041408
          %v1813 = vsel %vm1812, %v1811, 0.0
          %1814 = vst [vmem:[%s300] sm:$0xff] %v1813
        $region63: #{_lambda_.11} parent=50 // pred_fallthru
          _
        %s1815 = smul.u32 2, %s20
        %p1816 = scmp.lt.s32.totalorder %s1815, 1
        %s1817 = scalar_select %p1816, %s1815, 1
        %s1818 = smul.addr %s1817, 8
        %s1819 = scalar_lea.vmem %s3, %s1818
        %p1820 = scmp.lt.s32.totalorder %s20, 0
        %s1821 = scalar_select %p1820, %s20, 0
        %s1822 = smul.addr %s1821, 8
        %s1823 = scalar_lea.vmem %s4, %s1822
        // Predicated region
        $region64: #{_lambda_.11} parent=50 // pred_check
          %p1824 = pneg %p121
        $region65: #{_lambda_.11} parent=50 // pred_check_branch
          %1826 = sbr.rel (%p1824) target = $region67
        $region66: #{_lambda_.11} parent=50 // pred_region
          %s1827 = smul.u32 2, %s20
        $region67: #{_lambda_.11} parent=50 // pred_fallthru
          _
        // Predicated region
        $region68: #{_lambda_.11} parent=50 // pred_check
          %p1828 = pneg %p147
        $region69: #{_lambda_.11} parent=50 // pred_check_branch
          %1830 = sbr.rel (%p1828) target = $region71
        $region70: #{_lambda_.11} parent=50 // pred_region
          _
        $region71: #{_lambda_.11} parent=50 // pred_fallthru
          _
        // Predicated region
        $region72: #{_lambda_.11} parent=50 // pred_check
          %p1831 = pneg %p121
        $region73: #{_lambda_.11} parent=50 // pred_check_branch
          %1833 = sbr.rel (%p1831) target = $region75
        $region74: #{_lambda_.11} parent=50 // pred_region
          %s1834 = smul.u32 2, %s20
          %p1835 = scmp.lt.s32.totalorder %s1834, 1
          %s1836 = scalar_select %p1835, %s1834, 1
          %s1837 = smul.addr %s1836, 8
          %s1838 = scalar_lea.vmem %s3, %s1837
        $region75: #{_lambda_.11} parent=50 // pred_fallthru
          _
        // Predicated region
        $region76: #{_lambda_.11} parent=50 // pred_check
          %p1839 = pneg %p147
        $region77: #{_lambda_.11} parent=50 // pred_check_branch
          %1841 = sbr.rel (%p1839) target = $region79
        $region78: #{_lambda_.11} parent=50 // pred_region
          %p1842 = scmp.lt.s32.totalorder %s20, 0
          %s1843 = scalar_select %p1842, %s20, 0
          %s1844 = smul.addr %s1843, 8
          %s1845 = scalar_lea.vmem %s4, %s1844
        $region79: #{_lambda_.11} parent=50 // pred_fallthru
          _
      $region51: #{_lambda_.11} parent=5 // pred_fallthru
        _
      %p1846 = scmp.le.s32.totalorder 2, %s11
      // Predicated region
      $region80: #{_lambda_.11} parent=5 // pred_check
        %p1847 = pneg %p1846
      $region81: #{_lambda_.11} parent=5 // pred_check_branch
        %1849 = sbr.rel (%p1847) target = $region83
      $region82: #{_lambda_.11} parent=5 // pred_region
        %s1850 = ssub.s32 %s11, 2
      $region83: #{_lambda_.11} parent=5 // pred_fallthru
        _
    $region6: #{_lambda_.11} parent=1 // loop_footer
      %s15 = sadd.s32 1, %s11
    $region7: #{_lambda_.11} parent=1 // loop_footer_branch
      %10 = sbr.rel target = $region3
    $region8: #{_lambda_.11} parent=1 // loop_exit
      _

// kernel: _lambda_.15
$region0: #{_lambda_.15}
  #allocation0 [shape = 'u32[]', space=smem, size = 0x4, offset = 0x4, fixed_abs, tag = 'smem constant byte address 0x4 - core index']
  #allocation1 [shape = 'u32[144,128]{1,0:T(1,128)}', space=vmem, size = 0x12000, scoped, tag = 'internal scratch']
  #allocation2 [shape = 'f32[128,128]{1,0:T(8,128)}', space=vmem, size = 0x10000, scoped, tag = 'scratch operand']
  %s0 = inlined_call_operand.vmem [shape: bf16[128,8192], index: 0, kind: input, shape index: {}]
  %s1 = inlined_call_operand.vmem [shape: bf16[8192,128], index: 1, kind: input, shape index: {}]
  %s2 = inlined_call_operand.vmem [shape: f32[1,128], index: 2, kind: input, shape index: {}]
  %s3 = inlined_call_operand.vmem [shape: f32[128,128], index: 3, kind: output, shape index: {}]
  %s4 = sld [smem:[#allocation0]]
  $region76: #{_lambda_.15} parent=0
    _
  %s6 = ssub.s32 1, %s4
  %s7 = scalar_select 0, %s6, %s4
  $region1: #{_lambda_.15} parent=0
    #allocation3 [shape = 'u8[1048576]{0}', space=vmem, size = 0x100000, scoped, tag = 'input window, operand 0']
    loop: start=0, step=1, limit=6
    $region2: #{_lambda_.15} parent=1 // loop_pre_header
      _
    $region3: #{_lambda_.15} parent=1 // loop_header
      %s9 = sphi 0, %s13
      %p10 = scmp.ge.s32.totalorder %s9, 6
      %s16 = sphi 0, %s28
      %s17 = sphi 0, %s24
      %s18 = sphi 0, %s16
      %s19 = sphi 0, %s17
      %s20 = sphi 0, %s18
      %s21 = sphi 0, %s19
      %s33 = sphi 0, %s35
      %s36 = sphi 0, %s33
      %s37 = sphi 0, %s36
      %s53 = sphi 0, %s37
      %s59 = sphi 0, %s61
      %s62 = sphi 0, %s59
      %s63 = sphi 0, %s62
      %s79 = sphi 0, %s63
      %s83 = sphi 0, %s83
      %s85 = sphi 0, %s83
      %s86 = sphi 0, %s85
      %s100 = sphi 0, %s86
      %s106 = sphi 0, %s108
      %s109 = sphi 0, %s106
      %s110 = sphi 0, %s109
      %s126 = sphi 0, %s110
    $region4: #{_lambda_.15} parent=1 // loop_header_branch
      %12 = sbr.rel (%p10) target = $region8
    $region5: #{_lambda_.15} parent=1 // loop_body
      %s14 = ssub.s32 %s9, 1
      %s15 = ssub.s32 %s9, 2
      %s22 = sadd.s32 1, %s17
      %p23 = scmp.ge.s32.totalorder %s22, 4
      %s24 = scalar_select %p23, 0, %s22
      %s25 = sadd.s32 1, %s16
      %s26 = scalar_select %p23, %s25, %s16
      %p27 = scmp.ge.s32.totalorder %s26, 1
      %s28 = scalar_select %p27, 0, %s26
      %s29 = ssub.s32 %s16, %s28
      %s30 = ssub.s32 %s17, %s24
      %s31 = sor.u32 %s29, %s30
      %p32 = scmp.eq.s32.totalorder %s31, 0
      %s34 = sadd.s32 %s33, 1
      %s35 = scalar_select %p32, %s33, %s34
      %p38 = pneg %p32
      %p39 = scmp.eq.s32.totalorder %s9, 3
      %p40 = por %p38, %p39
      %p41 = scmp.ne.s32.totalorder %s33, %s36
      %p42 = scmp.eq.s32.totalorder %s9, 0
      %p43 = por %p41, %p42
      %p44 = scmp.ne.s32.totalorder %s33, %s36
      %p45 = scmp.eq.s32.totalorder %s14, 3
      %p46 = por %p44, %p45
      %p47 = scmp.ne.s32.totalorder %s36, %s37
      %p48 = scmp.eq.s32.totalorder %s14, 0
      %p49 = por %p47, %p48
      %p50 = scmp.ne.s32.totalorder %s36, %s37
      %p51 = scmp.eq.s32.totalorder %s15, 3
      %p52 = por %p50, %p51
      %p54 = scmp.ne.s32.totalorder %s37, %s53
      %p55 = scmp.eq.s32.totalorder %s15, 0
      %p56 = por %p54, %p55
      %s57 = ssub.s32 %s17, %s24
      %p58 = scmp.eq.s32.totalorder %s57, 0
      %s60 = sadd.s32 %s59, 1
      %s61 = scalar_select %p58, %s59, %s60
      %p64 = pneg %p58
      %p65 = scmp.eq.s32.totalorder %s9, 3
      %p66 = por %p64, %p65
      %p67 = scmp.ne.s32.totalorder %s59, %s62
      %p68 = scmp.eq.s32.totalorder %s9, 0
      %p69 = por %p67, %p68
      %p70 = scmp.ne.s32.totalorder %s59, %s62
      %p71 = scmp.eq.s32.totalorder %s14, 3
      %p72 = por %p70, %p71
      %p73 = scmp.ne.s32.totalorder %s62, %s63
      %p74 = scmp.eq.s32.totalorder %s14, 0
      %p75 = por %p73, %p74
      %p76 = scmp.ne.s32.totalorder %s62, %s63
      %p77 = scmp.eq.s32.totalorder %s15, 3
      %p78 = por %p76, %p77
      %p80 = scmp.ne.s32.totalorder %s63, %s79
      %p81 = scmp.eq.s32.totalorder %s15, 0
      %p82 = por %p80, %p81
      %s84 = sadd.s32 %s83, 1
      %p87 = scmp.eq.s32.totalorder %s9, 3
      %p88 = scmp.ne.s32.totalorder %s83, %s85
      %p89 = scmp.eq.s32.totalorder %s9, 0
      %p90 = por %p88, %p89
      %p91 = scmp.ne.s32.totalorder %s83, %s85
      %p92 = scmp.eq.s32.totalorder %s14, 3
      %p93 = por %p91, %p92
      %p94 = scmp.ne.s32.totalorder %s85, %s86
      %p95 = scmp.eq.s32.totalorder %s14, 0
      %p96 = por %p94, %p95
      %p97 = scmp.ne.s32.totalorder %s85, %s86
      %p98 = scmp.eq.s32.totalorder %s15, 3
      %p99 = por %p97, %p98
      %p101 = scmp.ne.s32.totalorder %s86, %s100
      %p102 = scmp.eq.s32.totalorder %s15, 0
      %p103 = por %p101, %p102
      %s104 = ssub.s32 %s16, %s28
      %p105 = scmp.eq.s32.totalorder %s104, 0
      %s107 = sadd.s32 %s106, 1
      %s108 = scalar_select %p105, %s106, %s107
      %p111 = pneg %p105
      %p112 = scmp.eq.s32.totalorder %s9, 3
      %p113 = por %p111, %p112
      %p114 = scmp.ne.s32.totalorder %s106, %s109
      %p115 = scmp.eq.s32.totalorder %s9, 0
      %p116 = por %p114, %p115
      %p117 = scmp.ne.s32.totalorder %s106, %s109
      %p118 = scmp.eq.s32.totalorder %s14, 3
      %p119 = por %p117, %p118
      %p120 = scmp.ne.s32.totalorder %s109, %s110
      %p121 = scmp.eq.s32.totalorder %s14, 0
      %p122 = por %p120, %p121
      %p123 = scmp.ne.s32.totalorder %s109, %s110
      %p124 = scmp.eq.s32.totalorder %s15, 3
      %p125 = por %p123, %p124
      %p127 = scmp.ne.s32.totalorder %s110, %s126
      %p128 = scmp.eq.s32.totalorder %s15, 0
      %p129 = por %p127, %p128
      %p130 = scmp.le.s32.totalorder 1, %s9
      %p131 = scmp.lt.s32.totalorder %s9, 5
      %p132 = pnand %p130, %p131
      %p133 = pneg %p132
      // Predicated region
      $region9: #{_lambda_.15} parent=5 // pred_check
        _
      $region10: #{_lambda_.15} parent=5 // pred_check_branch
        %135 = sbr.rel (%p132) target = $region12
      $region11: #{_lambda_.15} parent=5 // pred_region
        %s136 = ssub.s32 %s9, 1
        // Predicated region
        $region13: #{_lambda_.15} parent=11 // pred_check
          %p137 = pneg %p96
        $region14: #{_lambda_.15} parent=11 // pred_check_branch
          %139 = sbr.rel (%p137) target = $region16
        $region15: #{_lambda_.15} parent=11 // pred_region
          _
        $region16: #{_lambda_.15} parent=11 // pred_fallthru
          _
      $region12: #{_lambda_.15} parent=5 // pred_fallthru
        _
      %p140 = scmp.lt.s32.totalorder %s9, 4
      // Predicated region
      $region17: #{_lambda_.15} parent=5 // pred_check
        %p141 = pneg %p140
      $region18: #{_lambda_.15} parent=5 // pred_check_branch
        %143 = sbr.rel (%p141) target = $region20
      $region19: #{_lambda_.15} parent=5 // pred_region
        // Predicated region
        $region21: #{_lambda_.15} parent=19 // pred_check
          %p144 = pneg %p43
        $region22: #{_lambda_.15} parent=19 // pred_check_branch
          %146 = sbr.rel (%p144) target = $region24
        $region23: #{_lambda_.15} parent=19 // pred_region
          %s147 = sand.u32 %s33, 1
          %s148 = sand.u32 %s33, 1
          %s149 = smul.addr %s148, 1024
          %s150 = scalar_lea.vmem [#allocation3], %s149
          %s151 = smul.u32 16, %s16
          %s152 = smul.u32 16, %s17
          %s153 = smul.addr %s151, 64
          %s154 = sadd.s32 %s152, %s153
          %s155 = smul.addr %s154, 4
          %s156 = scalar_lea.vmem %s0, %s155
          // Predicated region
          $region25: #{_lambda_.15} parent=23 // pred_check
            _
          $region26: #{_lambda_.15} parent=23 // pred_check_branch
            %158 = sbr.rel (0) target = $region28
          $region27: #{_lambda_.15} parent=23 // pred_region
            // Predicated region
            $region29: #{_lambda_.15} parent=27 // pred_check
              _
            $region30: #{_lambda_.15} parent=27 // pred_check_branch
              %160 = sbr.rel (0) target = $region32
            $region31: #{_lambda_.15} parent=27 // pred_region
              loop: start=0, step=1, limit=1
              $region33: #{_lambda_.15} parent=31 // loop_pre_header
                _
              $region34: #{_lambda_.15} parent=31 // loop_header
                %s162 = sphi 0, %s166
                %p163 = scmp.ge.s32.totalorder %s162, 1
                %s167 = sphi %s156, %s156
                %s168 = sphi %s150, %s150
              $region35: #{_lambda_.15} parent=31 // loop_header_branch
                %165 = sbr.rel (%p163) target = $region39
              $region36: #{_lambda_.15} parent=31 // loop_body
                %v169 = vld [vmem:[%s167] sm:$0xff]
                %170 = vst [vmem:[%s168] sm:$0xff] %v169
                %v171 = vld [vmem:[%s167 + $0x8] sm:$0xff]
                %172 = vst [vmem:[%s168 + $0x8] sm:$0xff] %v171
                %v173 = vld [vmem:[%s167 + $0x10] sm:$0xff]
                %174 = vst [vmem:[%s168 + $0x10] sm:$0xff] %v173
                %v175 = vld [vmem:[%s167 + $0x18] sm:$0xff]
                %176 = vst [vmem:[%s168 + $0x18] sm:$0xff] %v175
                %v177 = vld [vmem:[%s167 + $0x20] sm:$0xff]
                %178 = vst [vmem:[%s168 + $0x20] sm:$0xff] %v177
                %v179 = vld [vmem:[%s167 + $0x28] sm:$0xff]
                %180 = vst [vmem:[%s168 + $0x28] sm:$0xff] %v179
                %v181 = vld [vmem:[%s167 + $0x30] sm:$0xff]
                %182 = vst [vmem:[%s168 + $0x30] sm:$0xff] %v181
                %v183 = vld [vmem:[%s167 + $0x38] sm:$0xff]
                %184 = vst [vmem:[%s168 + $0x38] sm:$0xff] %v183
                %v185 = vld [vmem:[%s167 + $0x100] sm:$0xff]
                %186 = vst [vmem:[%s168 + $0x40] sm:$0xff] %v185
                %v187 = vld [vmem:[%s167 + $0x108] sm:$0xff]
                %188 = vst [vmem:[%s168 + $0x48] sm:$0xff] %v187
                %v189 = vld [vmem:[%s167 + $0x110] sm:$0xff]
                %190 = vst [vmem:[%s168 + $0x50] sm:$0xff] %v189
                %v191 = vld [vmem:[%s167 + $0x118] sm:$0xff]
                %192 = vst [vmem:[%s168 + $0x58] sm:$0xff] %v191
                %v193 = vld [vmem:[%s167 + $0x120] sm:$0xff]
                %194 = vst [vmem:[%s168 + $0x60] sm:$0xff] %v193
                %v195 = vld [vmem:[%s167 + $0x128] sm:$0xff]
                %196 = vst [vmem:[%s168 + $0x68] sm:$0xff] %v195
                %v197 = vld [vmem:[%s167 + $0x130] sm:$0xff]
                %198 = vst [vmem:[%s168 + $0x70] sm:$0xff] %v197
                %v199 = vld [vmem:[%s167 + $0x138] sm:$0xff]
                %200 = vst [vmem:[%s168 + $0x78] sm:$0xff] %v199
                %v201 = vld [vmem:[%s167 + $0x200] sm:$0xff]
                %202 = vst [vmem:[%s168 + $0x80] sm:$0xff] %v201
                %v203 = vld [vmem:[%s167 + $0x208] sm:$0xff]
                %204 = vst [vmem:[%s168 + $0x88] sm:$0xff] %v203
                %v205 = vld [vmem:[%s167 + $0x210] sm:$0xff]
                %206 = vst [vmem:[%s168 + $0x90] sm:$0xff] %v205
                %v207 = vld [vmem:[%s167 + $0x218] sm:$0xff]
                %208 = vst [vmem:[%s168 + $0x98] sm:$0xff] %v207
                %v209 = vld [vmem:[%s167 + $0x220] sm:$0xff]
                %210 = vst [vmem:[%s168 + $0xa0] sm:$0xff] %v209
                %v211 = vld [vmem:[%s167 + $0x228] sm:$0xff]
                %212 = vst [vmem:[%s168 + $0xa8] sm:$0xff] %v211
                %v213 = vld [vmem:[%s167 + $0x230] sm:$0xff]
                %214 = vst [vmem:[%s168 + $0xb0] sm:$0xff] %v213
                %v215 = vld [vmem:[%s167 + $0x238] sm:$0xff]
                %216 = vst [vmem:[%s168 + $0xb8] sm:$0xff] %v215
                %v217 = vld [vmem:[%s167 + $0x300] sm:$0xff]
                %218 = vst [vmem:[%s168 + $0xc0] sm:$0xff] %v217
                %v219 = vld [vmem:[%s167 + $0x308] sm:$0xff]
                %220 = vst [vmem:[%s168 + $0xc8] sm:$0xff] %v219
                %v221 = vld [vmem:[%s167 + $0x310] sm:$0xff]
                %222 = vst [vmem:[%s168 + $0xd0] sm:$0xff] %v221
                %v223 = vld [vmem:[%s167 + $0x318] sm:$0xff]
                %224 = vst [vmem:[%s168 + $0xd8] sm:$0xff] %v223
                %v225 = vld [vmem:[%s167 + $0x320] sm:$0xff]
                %226 = vst [vmem:[%s168 + $0xe0] sm:$0xff] %v225
                %v227 = vld [vmem:[%s167 + $0x328] sm:$0xff]
                %228 = vst [vmem:[%s168 + $0xe8] sm:$0xff] %v227
                %v229 = vld [vmem:[%s167 + $0x330] sm:$0xff]
                %230 = vst [vmem:[%s168 + $0xf0] sm:$0xff] %v229
                %v231 = vld [vmem:[%s167 + $0x338] sm:$0xff]
                %232 = vst [vmem:[%s168 + $0xf8] sm:$0xff] %v231
                %v233 = vld [vmem:[%s167 + $0x400] sm:$0xff]
                %234 = vst [vmem:[%s168 + $0x100] sm:$0xff] %v233
                %v235 = vld [vmem:[%s167 + $0x408] sm:$0xff]
                %236 = vst [vmem:[%s168 + $0x108] sm:$0xff] %v235
                %v237 = vld [vmem:[%s167 + $0x410] sm:$0xff]
                %238 = vst [vmem:[%s168 + $0x110] sm:$0xff] %v237
                %v239 = vld [vmem:[%s167 + $0x418] sm:$0xff]
                %240 = vst [vmem:[%s168 + $0x118] sm:$0xff] %v239
                %v241 = vld [vmem:[%s167 + $0x420] sm:$0xff]
                %242 = vst [vmem:[%s168 + $0x120] sm:$0xff] %v241
                %v243 = vld [vmem:[%s167 + $0x428] sm:$0xff]
                %244 = vst [vmem:[%s168 + $0x128] sm:$0xff] %v243
                %v245 = vld [vmem:[%s167 + $0x430] sm:$0xff]
                %246 = vst [vmem:[%s168 + $0x130] sm:$0xff] %v245
                %v247 = vld [vmem:[%s167 + $0x438] sm:$0xff]
                %248 = vst [vmem:[%s168 + $0x138] sm:$0xff] %v247
                %v249 = vld [vmem:[%s167 + $0x500] sm:$0xff]
                %250 = vst [vmem:[%s168 + $0x140] sm:$0xff] %v249
                %v251 = vld [vmem:[%s167 + $0x508] sm:$0xff]
                %252 = vst [vmem:[%s168 + $0x148] sm:$0xff] %v251
                %v253 = vld [vmem:[%s167 + $0x510] sm:$0xff]
                %254 = vst [vmem:[%s168 + $0x150] sm:$0xff] %v253
                %v255 = vld [vmem:[%s167 + $0x518] sm:$0xff]
                %256 = vst [vmem:[%s168 + $0x158] sm:$0xff] %v255
                %v257 = vld [vmem:[%s167 + $0x520] sm:$0xff]
                %258 = vst [vmem:[%s168 + $0x160] sm:$0xff] %v257
                %v259 = vld [vmem:[%s167 + $0x528] sm:$0xff]
                %260 = vst [vmem:[%s168 + $0x168] sm:$0xff] %v259
                %v261 = vld [vmem:[%s167 + $0x530] sm:$0xff]
                %262 = vst [vmem:[%s168 + $0x170] sm:$0xff] %v261
                %v263 = vld [vmem:[%s167 + $0x538] sm:$0xff]
                %264 = vst [vmem:[%s168 + $0x178] sm:$0xff] %v263
                %v265 = vld [vmem:[%s167 + $0x600] sm:$0xff]
                %266 = vst [vmem:[%s168 + $0x180] sm:$0xff] %v265
                %v267 = vld [vmem:[%s167 + $0x608] sm:$0xff]
                %268 = vst [vmem:[%s168 + $0x188] sm:$0xff] %v267
                %v269 = vld [vmem:[%s167 + $0x610] sm:$0xff]
                %270 = vst [vmem:[%s168 + $0x190] sm:$0xff] %v269
                %v271 = vld [vmem:[%s167 + $0x618] sm:$0xff]
                %272 = vst [vmem:[%s168 + $0x198] sm:$0xff] %v271
                %v273 = vld [vmem:[%s167 + $0x620] sm:$0xff]
                %274 = vst [vmem:[%s168 + $0x1a0] sm:$0xff] %v273
                %v275 = vld [vmem:[%s167 + $0x628] sm:$0xff]
                %276 = vst [vmem:[%s168 + $0x1a8] sm:$0xff] %v275
                %v277 = vld [vmem:[%s167 + $0x630] sm:$0xff]
                %278 = vst [vmem:[%s168 + $0x1b0] sm:$0xff] %v277
                %v279 = vld [vmem:[%s167 + $0x638] sm:$0xff]
                %280 = vst [vmem:[%s168 + $0x1b8] sm:$0xff] %v279
                %v281 = vld [vmem:[%s167 + $0x700] sm:$0xff]
                %282 = vst [vmem:[%s168 + $0x1c0] sm:$0xff] %v281
                %v283 = vld [vmem:[%s167 + $0x708] sm:$0xff]
                %284 = vst [vmem:[%s168 + $0x1c8] sm:$0xff] %v283
                %v285 = vld [vmem:[%s167 + $0x710] sm:$0xff]
                %286 = vst [vmem:[%s168 + $0x1d0] sm:$0xff] %v285
                %v287 = vld [vmem:[%s167 + $0x718] sm:$0xff]
                %288 = vst [vmem:[%s168 + $0x1d8] sm:$0xff] %v287
                %v289 = vld [vmem:[%s167 + $0x720] sm:$0xff]
                %290 = vst [vmem:[%s168 + $0x1e0] sm:$0xff] %v289
                %v291 = vld [vmem:[%s167 + $0x728] sm:$0xff]
                %292 = vst [vmem:[%s168 + $0x1e8] sm:$0xff] %v291
                %v293 = vld [vmem:[%s167 + $0x730] sm:$0xff]
                %294 = vst [vmem:[%s168 + $0x1f0] sm:$0xff] %v293
                %v295 = vld [vmem:[%s167 + $0x738] sm:$0xff]
                %296 = vst [vmem:[%s168 + $0x1f8] sm:$0xff] %v295
                %v297 = vld [vmem:[%s167 + $0x800] sm:$0xff]
                %298 = vst [vmem:[%s168 + $0x200] sm:$0xff] %v297
                %v299 = vld [vmem:[%s167 + $0x808] sm:$0xff]
                %300 = vst [vmem:[%s168 + $0x208] sm:$0xff] %v299
                %v301 = vld [vmem:[%s167 + $0x810] sm:$0xff]
                %302 = vst [vmem:[%s168 + $0x210] sm:$0xff] %v301
                %v303 = vld [vmem:[%s167 + $0x818] sm:$0xff]
                %304 = vst [vmem:[%s168 + $0x218] sm:$0xff] %v303
                %v305 = vld [vmem:[%s167 + $0x820] sm:$0xff]
                %306 = vst [vmem:[%s168 + $0x220] sm:$0xff] %v305
                %v307 = vld [vmem:[%s167 + $0x828] sm:$0xff]
                %308 = vst [vmem:[%s168 + $0x228] sm:$0xff] %v307
                %v309 = vld [vmem:[%s167 + $0x830] sm:$0xff]
                %310 = vst [vmem:[%s168 + $0x230] sm:$0xff] %v309
                %v311 = vld [vmem:[%s167 + $0x838] sm:$0xff]
                %312 = vst [vmem:[%s168 + $0x238] sm:$0xff] %v311
                %v313 = vld [vmem:[%s167 + $0x900] sm:$0xff]
                %314 = vst [vmem:[%s168 + $0x240] sm:$0xff] %v313
                %v315 = vld [vmem:[%s167 + $0x908] sm:$0xff]
                %316 = vst [vmem:[%s168 + $0x248] sm:$0xff] %v315
                %v317 = vld [vmem:[%s167 + $0x910] sm:$0xff]
                %318 = vst [vmem:[%s168 + $0x250] sm:$0xff] %v317
                %v319 = vld [vmem:[%s167 + $0x918] sm:$0xff]
                %320 = vst [vmem:[%s168 + $0x258] sm:$0xff] %v319
                %v321 = vld [vmem:[%s167 + $0x920] sm:$0xff]
                %322 = vst [vmem:[%s168 + $0x260] sm:$0xff] %v321
                %v323 = vld [vmem:[%s167 + $0x928] sm:$0xff]
                %324 = vst [vmem:[%s168 + $0x268] sm:$0xff] %v323
                %v325 = vld [vmem:[%s167 + $0x930] sm:$0xff]
                %326 = vst [vmem:[%s168 + $0x270] sm:$0xff] %v325
                %v327 = vld [vmem:[%s167 + $0x938] sm:$0xff]
                %328 = vst [vmem:[%s168 + $0x278] sm:$0xff] %v327
                %v329 = vld [vmem:[%s167 + $0xa00] sm:$0xff]
                %330 = vst [vmem:[%s168 + $0x280] sm:$0xff] %v329
                %v331 = vld [vmem:[%s167 + $0xa08] sm:$0xff]
                %332 = vst [vmem:[%s168 + $0x288] sm:$0xff] %v331
                %v333 = vld [vmem:[%s167 + $0xa10] sm:$0xff]
                %334 = vst [vmem:[%s168 + $0x290] sm:$0xff] %v333
                %v335 = vld [vmem:[%s167 + $0xa18] sm:$0xff]
                %336 = vst [vmem:[%s168 + $0x298] sm:$0xff] %v335
                %v337 = vld [vmem:[%s167 + $0xa20] sm:$0xff]
                %338 = vst [vmem:[%s168 + $0x2a0] sm:$0xff] %v337
                %v339 = vld [vmem:[%s167 + $0xa28] sm:$0xff]
                %340 = vst [vmem:[%s168 + $0x2a8] sm:$0xff] %v339
                %v341 = vld [vmem:[%s167 + $0xa30] sm:$0xff]
                %342 = vst [vmem:[%s168 + $0x2b0] sm:$0xff] %v341
                %v343 = vld [vmem:[%s167 + $0xa38] sm:$0xff]
                %344 = vst [vmem:[%s168 + $0x2b8] sm:$0xff] %v343
                %v345 = vld [vmem:[%s167 + $0xb00] sm:$0xff]
                %346 = vst [vmem:[%s168 + $0x2c0] sm:$0xff] %v345
                %v347 = vld [vmem:[%s167 + $0xb08] sm:$0xff]
                %348 = vst [vmem:[%s168 + $0x2c8] sm:$0xff] %v347
                %v349 = vld [vmem:[%s167 + $0xb10] sm:$0xff]
                %350 = vst [vmem:[%s168 + $0x2d0] sm:$0xff] %v349
                %v351 = vld [vmem:[%s167 + $0xb18] sm:$0xff]
                %352 = vst [vmem:[%s168 + $0x2d8] sm:$0xff] %v351
                %v353 = vld [vmem:[%s167 + $0xb20] sm:$0xff]
                %354 = vst [vmem:[%s168 + $0x2e0] sm:$0xff] %v353
                %v355 = vld [vmem:[%s167 + $0xb28] sm:$0xff]
                %356 = vst [vmem:[%s168 + $0x2e8] sm:$0xff] %v355
                %v357 = vld [vmem:[%s167 + $0xb30] sm:$0xff]
                %358 = vst [vmem:[%s168 + $0x2f0] sm:$0xff] %v357
                %v359 = vld [vmem:[%s167 + $0xb38] sm:$0xff]
                %360 = vst [vmem:[%s168 + $0x2f8] sm:$0xff] %v359
                %v361 = vld [vmem:[%s167 + $0xc00] sm:$0xff]
                %362 = vst [vmem:[%s168 + $0x300] sm:$0xff] %v361
                %v363 = vld [vmem:[%s167 + $0xc08] sm:$0xff]
                %364 = vst [vmem:[%s168 + $0x308] sm:$0xff] %v363
                %v365 = vld [vmem:[%s167 + $0xc10] sm:$0xff]
                %366 = vst [vmem:[%s168 + $0x310] sm:$0xff] %v365
                %v367 = vld [vmem:[%s167 + $0xc18] sm:$0xff]
                %368 = vst [vmem:[%s168 + $0x318] sm:$0xff] %v367
                %v369 = vld [vmem:[%s167 + $0xc20] sm:$0xff]
                %370 = vst [vmem:[%s168 + $0x320] sm:$0xff] %v369
                %v371 = vld [vmem:[%s167 + $0xc28] sm:$0xff]
                %372 = vst [vmem:[%s168 + $0x328] sm:$0xff] %v371
                %v373 = vld [vmem:[%s167 + $0xc30] sm:$0xff]
                %374 = vst [vmem:[%s168 + $0x330] sm:$0xff] %v373
                %v375 = vld [vmem:[%s167 + $0xc38] sm:$0xff]
                %376 = vst [vmem:[%s168 + $0x338] sm:$0xff] %v375
                %v377 = vld [vmem:[%s167 + $0xd00] sm:$0xff]
                %378 = vst [vmem:[%s168 + $0x340] sm:$0xff] %v377
                %v379 = vld [vmem:[%s167 + $0xd08] sm:$0xff]
                %380 = vst [vmem:[%s168 + $0x348] sm:$0xff] %v379
                %v381 = vld [vmem:[%s167 + $0xd10] sm:$0xff]
                %382 = vst [vmem:[%s168 + $0x350] sm:$0xff] %v381
                %v383 = vld [vmem:[%s167 + $0xd18] sm:$0xff]
                %384 = vst [vmem:[%s168 + $0x358] sm:$0xff] %v383
                %v385 = vld [vmem:[%s167 + $0xd20] sm:$0xff]
                %386 = vst [vmem:[%s168 + $0x360] sm:$0xff] %v385
                %v387 = vld [vmem:[%s167 + $0xd28] sm:$0xff]
                %388 = vst [vmem:[%s168 + $0x368] sm:$0xff] %v387
                %v389 = vld [vmem:[%s167 + $0xd30] sm:$0xff]
                %390 = vst [vmem:[%s168 + $0x370] sm:$0xff] %v389
                %v391 = vld [vmem:[%s167 + $0xd38] sm:$0xff]
                %392 = vst [vmem:[%s168 + $0x378] sm:$0xff] %v391
                %v393 = vld [vmem:[%s167 + $0xe00] sm:$0xff]
                %394 = vst [vmem:[%s168 + $0x380] sm:$0xff] %v393
                %v395 = vld [vmem:[%s167 + $0xe08] sm:$0xff]
                %396 = vst [vmem:[%s168 + $0x388] sm:$0xff] %v395
                %v397 = vld [vmem:[%s167 + $0xe10] sm:$0xff]
                %398 = vst [vmem:[%s168 + $0x390] sm:$0xff] %v397
                %v399 = vld [vmem:[%s167 + $0xe18] sm:$0xff]
                %400 = vst [vmem:[%s168 + $0x398] sm:$0xff] %v399
                %v401 = vld [vmem:[%s167 + $0xe20] sm:$0xff]
                %402 = vst [vmem:[%s168 + $0x3a0] sm:$0xff] %v401
                %v403 = vld [vmem:[%s167 + $0xe28] sm:$0xff]
                %404 = vst [vmem:[%s168 + $0x3a8] sm:$0xff] %v403
                %v405 = vld [vmem:[%s167 + $0xe30] sm:$0xff]
                %406 = vst [vmem:[%s168 + $0x3b0] sm:$0xff] %v405
                %v407 = vld [vmem:[%s167 + $0xe38] sm:$0xff]
                %408 = vst [vmem:[%s168 + $0x3b8] sm:$0xff] %v407
                %v409 = vld [vmem:[%s167 + $0xf00] sm:$0xff]
                %410 = vst [vmem:[%s168 + $0x3c0] sm:$0xff] %v409
                %v411 = vld [vmem:[%s167 + $0xf08] sm:$0xff]
                %412 = vst [vmem:[%s168 + $0x3c8] sm:$0xff] %v411
                %v413 = vld [vmem:[%s167 + $0xf10] sm:$0xff]
                %414 = vst [vmem:[%s168 + $0x3d0] sm:$0xff] %v413
                %v415 = vld [vmem:[%s167 + $0xf18] sm:$0xff]
                %416 = vst [vmem:[%s168 + $0x3d8] sm:$0xff] %v415
                %v417 = vld [vmem:[%s167 + $0xf20] sm:$0xff]
                %418 = vst [vmem:[%s168 + $0x3e0] sm:$0xff] %v417
                %v419 = vld [vmem:[%s167 + $0xf28] sm:$0xff]
                %420 = vst [vmem:[%s168 + $0x3e8] sm:$0xff] %v419
                %v421 = vld [vmem:[%s167 + $0xf30] sm:$0xff]
                %422 = vst [vmem:[%s168 + $0x3f0] sm:$0xff] %v421
                %v423 = vld [vmem:[%s167 + $0xf38] sm:$0xff]
                %424 = vst [vmem:[%s168 + $0x3f8] sm:$0xff] %v423
              $region37: #{_lambda_.15} parent=31 // loop_footer
                %s166 = sadd.s32 1, %s162
              $region38: #{_lambda_.15} parent=31 // loop_footer_branch
                %161 = sbr.rel target = $region34
              $region39: #{_lambda_.15} parent=31 // loop_exit
                _
            $region32: #{_lambda_.15} parent=27 // pred_fallthru
              _
            // Predicated region
            $region40: #{_lambda_.15} parent=27 // pred_check
              _
            $region41: #{_lambda_.15} parent=27 // pred_check_branch
              %426 = sbr.rel target = $region43
            $region42: #{_lambda_.15} parent=27 // pred_region
              _
            $region43: #{_lambda_.15} parent=27 // pred_fallthru
              _
          $region28: #{_lambda_.15} parent=23 // pred_fallthru
            _
          %427 = vnop
        $region24: #{_lambda_.15} parent=19 // pred_fallthru
          _
        // Predicated region
        $region44: #{_lambda_.15} parent=19 // pred_check
          %p428 = pneg %p69
        $region45: #{_lambda_.15} parent=19 // pred_check_branch
          %430 = sbr.rel (%p428) target = $region47
        $region46: #{_lambda_.15} parent=19 // pred_region
          %s431 = smul.u32 256, %s17
          %p432 = scmp.lt.s32.totalorder %s431, 1023
          %s433 = scalar_select %p432, %s431, 1023
          %s434 = smul.addr %s433, 4
          %s435 = scalar_lea.vmem %s1, %s434
          %s436 = smul.u32 256, %s17
        $region47: #{_lambda_.15} parent=19 // pred_fallthru
          _
      $region20: #{_lambda_.15} parent=5 // pred_fallthru
        _
      %p437 = scmp.le.s32.totalorder 1, %s9
      %p438 = scmp.lt.s32.totalorder %s9, 5
      %p439 = pnand %p437, %p438
      %p440 = pneg %p439
      // Predicated region
      $region48: #{_lambda_.15} parent=5 // pred_check
        _
      $region49: #{_lambda_.15} parent=5 // pred_check_branch
        %442 = sbr.rel (%p439) target = $region51
      $region50: #{_lambda_.15} parent=5 // pred_region
        %s443 = ssub.s32 %s9, 1
        %s444 = sand.u32 %s36, 1
        %s445 = sand.u32 %s36, 1
        %s446 = smul.addr %s445, 1024
        %s447 = scalar_lea.vmem [#allocation3], %s446
        // Predicated region
        $region52: #{_lambda_.15} parent=50 // pred_check
          %p448 = pneg %p49
        $region53: #{_lambda_.15} parent=50 // pred_check_branch
          %450 = sbr.rel (%p448) target = $region55
        $region54: #{_lambda_.15} parent=50 // pred_region
          _
        $region55: #{_lambda_.15} parent=50 // pred_fallthru
          _
        %s451 = sand.u32 %s36, 1
        %s452 = sand.u32 %s36, 1
        %s453 = smul.addr %s452, 1024
        %s454 = scalar_lea.vmem [#allocation3], %s453
        %p455 = pneg %p49
        %p456 = pneg %p46
        %s457 = smul.u32 256, %s19
        %p458 = scmp.lt.s32.totalorder %s457, 1023
        %s459 = scalar_select %p458, %s457, 1023
        %s460 = smul.addr %s459, 4
        %s461 = scalar_lea.vmem %s1, %s460
        %p462 = pneg %p75
        %p463 = pneg %p72
        %p464 = pneg %p96
        %p465 = pneg %p93
        %p466 = pneg %p122
        %p467 = pneg %p119
        %s468 = smul.u32 16, %s18
        %p469 = scmp.lt.s32.totalorder %s468, 15
        %s470 = scalar_select %p469, %s468, 15
        %s471 = smul.addr %s470, 8
        %s472 = scalar_lea.vmem %s3, %s471
        %s473 = smul.u32 16, %s18
        %s474 = smul.u32 16, %s19
        %s475 = smul.u32 256, %s19
        %p476 = scmp.lt.s32.totalorder %s475, 1023
        %s477 = scalar_select %p476, %s475, 1023
        %s478 = smul.addr %s477, 4
        %s479 = scalar_lea.vmem %s1, %s478
        %s480 = smul.u32 256, %s19
        %s481 = smul.u32 16, %s18
        %p482 = scmp.lt.s32.totalorder %s481, 15
        %s483 = scalar_select %p482, %s481, 15
        %s484 = smul.addr %s483, 8
        %s485 = scalar_lea.vmem %s3, %s484
        %s486 = smul.u32 16, %s18
        %p488 = scmp.eq.s32.totalorder %s19, 0
        // Predicated region
        $region56: #{_lambda_.15} parent=50 // pred_check
          %p489 = pneg %p488
        $region57: #{_lambda_.15} parent=50 // pred_check_branch
          %491 = sbr.rel (%p489) target = $region59
        $region58: #{_lambda_.15} parent=50 // pred_region
          %492 = vst [vmem:[#allocation2] sm:$0xff] 0.0
          %493 = vst [vmem:[#allocation2 + $0x8] sm:$0xff] 0.0
          %494 = vst [vmem:[#allocation2 + $0x10] sm:$0xff] 0.0
          %495 = vst [vmem:[#allocation2 + $0x18] sm:$0xff] 0.0
          %496 = vst [vmem:[#allocation2 + $0x20] sm:$0xff] 0.0
          %497 = vst [vmem:[#allocation2 + $0x28] sm:$0xff] 0.0
          %498 = vst [vmem:[#allocation2 + $0x30] sm:$0xff] 0.0
          %499 = vst [vmem:[#allocation2 + $0x38] sm:$0xff] 0.0
          %500 = vst [vmem:[#allocation2 + $0x40] sm:$0xff] 0.0
          %501 = vst [vmem:[#allocation2 + $0x48] sm:$0xff] 0.0
          %502 = vst [vmem:[#allocation2 + $0x50] sm:$0xff] 0.0
          %503 = vst [vmem:[#allocation2 + $0x58] sm:$0xff] 0.0
          %504 = vst [vmem:[#allocation2 + $0x60] sm:$0xff] 0.0
          %505 = vst [vmem:[#allocation2 + $0x68] sm:$0xff] 0.0
          %506 = vst [vmem:[#allocation2 + $0x70] sm:$0xff] 0.0
          %507 = vst [vmem:[#allocation2 + $0x78] sm:$0xff] 0.0
        $region59: #{_lambda_.15} parent=50 // pred_fallthru
          _
        %v508 = vld [vmem:[#allocation2] sm:$0xff]
        %v509 = vld [vmem:[#allocation2 + $0x8] sm:$0xff]
        %v510 = vld [vmem:[#allocation2 + $0x10] sm:$0xff]
        %v511 = vld [vmem:[#allocation2 + $0x18] sm:$0xff]
        %v512 = vld [vmem:[#allocation2 + $0x20] sm:$0xff]
        %v513 = vld [vmem:[#allocation2 + $0x28] sm:$0xff]
        %v514 = vld [vmem:[#allocation2 + $0x30] sm:$0xff]
        %v515 = vld [vmem:[#allocation2 + $0x38] sm:$0xff]
        %v516 = vld [vmem:[#allocation2 + $0x40] sm:$0xff]
        %v517 = vld [vmem:[#allocation2 + $0x48] sm:$0xff]
        %v518 = vld [vmem:[#allocation2 + $0x50] sm:$0xff]
        %v519 = vld [vmem:[#allocation2 + $0x58] sm:$0xff]
        %v520 = vld [vmem:[#allocation2 + $0x60] sm:$0xff]
        %v521 = vld [vmem:[#allocation2 + $0x68] sm:$0xff]
        %v522 = vld [vmem:[#allocation2 + $0x70] sm:$0xff]
        %v523 = vld [vmem:[#allocation2 + $0x78] sm:$0xff]
        %v524 = vld [vmem:[%s447] sm:$0xff]
        %v525 = vld [vmem:[%s447 + $0x8] sm:$0xff]
        %v526 = vld [vmem:[%s447 + $0x10] sm:$0xff]
        %v527 = vld [vmem:[%s447 + $0x18] sm:$0xff]
        %v528 = vld [vmem:[%s447 + $0x20] sm:$0xff]
        %v529 = vld [vmem:[%s447 + $0x28] sm:$0xff]
        %v530 = vld [vmem:[%s447 + $0x30] sm:$0xff]
        %v531 = vld [vmem:[%s447 + $0x38] sm:$0xff]
        %v532 = vld [vmem:[%s447 + $0x40] sm:$0xff]
        %v533 = vld [vmem:[%s447 + $0x48] sm:$0xff]
        %v534 = vld [vmem:[%s447 + $0x50] sm:$0xff]
        %v535 = vld [vmem:[%s447 + $0x58] sm:$0xff]
        %v536 = vld [vmem:[%s447 + $0x60] sm:$0xff]
        %v537 = vld [vmem:[%s447 + $0x68] sm:$0xff]
        %v538 = vld [vmem:[%s447 + $0x70] sm:$0xff]
        %v539 = vld [vmem:[%s447 + $0x78] sm:$0xff]
        %v540 = vld [vmem:[%s447 + $0x80] sm:$0xff]
        %v541 = vld [vmem:[%s447 + $0x88] sm:$0xff]
        %v542 = vld [vmem:[%s447 + $0x90] sm:$0xff]
        %v543 = vld [vmem:[%s447 + $0x98] sm:$0xff]
        %v544 = vld [vmem:[%s447 + $0xa0] sm:$0xff]
        %v545 = vld [vmem:[%s447 + $0xa8] sm:$0xff]
        %v546 = vld [vmem:[%s447 + $0xb0] sm:$0xff]
        %v547 = vld [vmem:[%s447 + $0xb8] sm:$0xff]
        %v548 = vld [vmem:[%s447 + $0xc0] sm:$0xff]
        %v549 = vld [vmem:[%s447 + $0xc8] sm:$0xff]
        %v550 = vld [vmem:[%s447 + $0xd0] sm:$0xff]
        %v551 = vld [vmem:[%s447 + $0xd8] sm:$0xff]
        %v552 = vld [vmem:[%s447 + $0xe0] sm:$0xff]
        %v553 = vld [vmem:[%s447 + $0xe8] sm:$0xff]
        %v554 = vld [vmem:[%s447 + $0xf0] sm:$0xff]
        %v555 = vld [vmem:[%s447 + $0xf8] sm:$0xff]
        %v556 = vld [vmem:[%s447 + $0x100] sm:$0xff]
        %v557 = vld [vmem:[%s447 + $0x108] sm:$0xff]
        %v558 = vld [vmem:[%s447 + $0x110] sm:$0xff]
        %v559 = vld [vmem:[%s447 + $0x118] sm:$0xff]
        %v560 = vld [vmem:[%s447 + $0x120] sm:$0xff]
        %v561 = vld [vmem:[%s447 + $0x128] sm:$0xff]
        %v562 = vld [vmem:[%s447 + $0x130] sm:$0xff]
        %v563 = vld [vmem:[%s447 + $0x138] sm:$0xff]
        %v564 = vld [vmem:[%s447 + $0x140] sm:$0xff]
        %v565 = vld [vmem:[%s447 + $0x148] sm:$0xff]
        %v566 = vld [vmem:[%s447 + $0x150] sm:$0xff]
        %v567 = vld [vmem:[%s447 + $0x158] sm:$0xff]
        %v568 = vld [vmem:[%s447 + $0x160] sm:$0xff]
        %v569 = vld [vmem:[%s447 + $0x168] sm:$0xff]
        %v570 = vld [vmem:[%s447 + $0x170] sm:$0xff]
        %v571 = vld [vmem:[%s447 + $0x178] sm:$0xff]
        %v572 = vld [vmem:[%s447 + $0x180] sm:$0xff]
        %v573 = vld [vmem:[%s447 + $0x188] sm:$0xff]
        %v574 = vld [vmem:[%s447 + $0x190] sm:$0xff]
        %v575 = vld [vmem:[%s447 + $0x198] sm:$0xff]
        %v576 = vld [vmem:[%s447 + $0x1a0] sm:$0xff]
        %v577 = vld [vmem:[%s447 + $0x1a8] sm:$0xff]
        %v578 = vld [vmem:[%s447 + $0x1b0] sm:$0xff]
        %v579 = vld [vmem:[%s447 + $0x1b8] sm:$0xff]
        %v580 = vld [vmem:[%s447 + $0x1c0] sm:$0xff]
        %v581 = vld [vmem:[%s447 + $0x1c8] sm:$0xff]
        %v582 = vld [vmem:[%s447 + $0x1d0] sm:$0xff]
        %v583 = vld [vmem:[%s447 + $0x1d8] sm:$0xff]
        %v584 = vld [vmem:[%s447 + $0x1e0] sm:$0xff]
        %v585 = vld [vmem:[%s447 + $0x1e8] sm:$0xff]
        %v586 = vld [vmem:[%s447 + $0x1f0] sm:$0xff]
        %v587 = vld [vmem:[%s447 + $0x1f8] sm:$0xff]
        %v588 = vld [vmem:[%s447 + $0x200] sm:$0xff]
        %v589 = vld [vmem:[%s447 + $0x208] sm:$0xff]
        %v590 = vld [vmem:[%s447 + $0x210] sm:$0xff]
        %v591 = vld [vmem:[%s447 + $0x218] sm:$0xff]
        %v592 = vld [vmem:[%s447 + $0x220] sm:$0xff]
        %v593 = vld [vmem:[%s447 + $0x228] sm:$0xff]
        %v594 = vld [vmem:[%s447 + $0x230] sm:$0xff]
        %v595 = vld [vmem:[%s447 + $0x238] sm:$0xff]
        %v596 = vld [vmem:[%s447 + $0x240] sm:$0xff]
        %v597 = vld [vmem:[%s447 + $0x248] sm:$0xff]
        %v598 = vld [vmem:[%s447 + $0x250] sm:$0xff]
        %v599 = vld [vmem:[%s447 + $0x258] sm:$0xff]
        %v600 = vld [vmem:[%s447 + $0x260] sm:$0xff]
        %v601 = vld [vmem:[%s447 + $0x268] sm:$0xff]
        %v602 = vld [vmem:[%s447 + $0x270] sm:$0xff]
        %v603 = vld [vmem:[%s447 + $0x278] sm:$0xff]
        %v604 = vld [vmem:[%s447 + $0x280] sm:$0xff]
        %v605 = vld [vmem:[%s447 + $0x288] sm:$0xff]
        %v606 = vld [vmem:[%s447 + $0x290] sm:$0xff]
        %v607 = vld [vmem:[%s447 + $0x298] sm:$0xff]
        %v608 = vld [vmem:[%s447 + $0x2a0] sm:$0xff]
        %v609 = vld [vmem:[%s447 + $0x2a8] sm:$0xff]
        %v610 = vld [vmem:[%s447 + $0x2b0] sm:$0xff]
        %v611 = vld [vmem:[%s447 + $0x2b8] sm:$0xff]
        %v612 = vld [vmem:[%s447 + $0x2c0] sm:$0xff]
        %v613 = vld [vmem:[%s447 + $0x2c8] sm:$0xff]
        %v614 = vld [vmem:[%s447 + $0x2d0] sm:$0xff]
        %v615 = vld [vmem:[%s447 + $0x2d8] sm:$0xff]
        %v616 = vld [vmem:[%s447 + $0x2e0] sm:$0xff]
        %v617 = vld [vmem:[%s447 + $0x2e8] sm:$0xff]
        %v618 = vld [vmem:[%s447 + $0x2f0] sm:$0xff]
        %v619 = vld [vmem:[%s447 + $0x2f8] sm:$0xff]
        %v620 = vld [vmem:[%s447 + $0x300] sm:$0xff]
        %v621 = vld [vmem:[%s447 + $0x308] sm:$0xff]
        %v622 = vld [vmem:[%s447 + $0x310] sm:$0xff]
        %v623 = vld [vmem:[%s447 + $0x318] sm:$0xff]
        %v624 = vld [vmem:[%s447 + $0x320] sm:$0xff]
        %v625 = vld [vmem:[%s447 + $0x328] sm:$0xff]
        %v626 = vld [vmem:[%s447 + $0x330] sm:$0xff]
        %v627 = vld [vmem:[%s447 + $0x338] sm:$0xff]
        %v628 = vld [vmem:[%s447 + $0x340] sm:$0xff]
        %v629 = vld [vmem:[%s447 + $0x348] sm:$0xff]
        %v630 = vld [vmem:[%s447 + $0x350] sm:$0xff]
        %v631 = vld [vmem:[%s447 + $0x358] sm:$0xff]
        %v632 = vld [vmem:[%s447 + $0x360] sm:$0xff]
        %v633 = vld [vmem:[%s447 + $0x368] sm:$0xff]
        %v634 = vld [vmem:[%s447 + $0x370] sm:$0xff]
        %v635 = vld [vmem:[%s447 + $0x378] sm:$0xff]
        %v636 = vld [vmem:[%s447 + $0x380] sm:$0xff]
        %v637 = vld [vmem:[%s447 + $0x388] sm:$0xff]
        %v638 = vld [vmem:[%s447 + $0x390] sm:$0xff]
        %v639 = vld [vmem:[%s447 + $0x398] sm:$0xff]
        %v640 = vld [vmem:[%s447 + $0x3a0] sm:$0xff]
        %v641 = vld [vmem:[%s447 + $0x3a8] sm:$0xff]
        %v642 = vld [vmem:[%s447 + $0x3b0] sm:$0xff]
        %v643 = vld [vmem:[%s447 + $0x3b8] sm:$0xff]
        %v644 = vld [vmem:[%s447 + $0x3c0] sm:$0xff]
        %v645 = vld [vmem:[%s447 + $0x3c8] sm:$0xff]
        %v646 = vld [vmem:[%s447 + $0x3d0] sm:$0xff]
        %v647 = vld [vmem:[%s447 + $0x3d8] sm:$0xff]
        %v648 = vld [vmem:[%s447 + $0x3e0] sm:$0xff]
        %v649 = vld [vmem:[%s447 + $0x3e8] sm:$0xff]
        %v650 = vld [vmem:[%s447 + $0x3f0] sm:$0xff]
        %v651 = vld [vmem:[%s447 + $0x3f8] sm:$0xff]
        %v652 = vld [vmem:[%s479] sm:$0xf]
        %v653 = vld [vmem:[%s479 + $0x4] sm:$0xf]
        %v654 = vld [vmem:[%s479 + $0x8] sm:$0xf]
        %v655 = vld [vmem:[%s479 + $0xc] sm:$0xf]
        %v656 = vld [vmem:[%s479 + $0x10] sm:$0xf]
        %v657 = vld [vmem:[%s479 + $0x14] sm:$0xf]
        %v658 = vld [vmem:[%s479 + $0x18] sm:$0xf]
        %v659 = vld [vmem:[%s479 + $0x1c] sm:$0xf]
        %v660 = vld [vmem:[%s479 + $0x20] sm:$0xf]
        %v661 = vld [vmem:[%s479 + $0x24] sm:$0xf]
        %v662 = vld [vmem:[%s479 + $0x28] sm:$0xf]
        %v663 = vld [vmem:[%s479 + $0x2c] sm:$0xf]
        %v664 = vld [vmem:[%s479 + $0x30] sm:$0xf]
        %v665 = vld [vmem:[%s479 + $0x34] sm:$0xf]
        %v666 = vld [vmem:[%s479 + $0x38] sm:$0xf]
        %v667 = vld [vmem:[%s479 + $0x3c] sm:$0xf]
        %v668 = vld [vmem:[%s479 + $0x40] sm:$0xf]
        %v669 = vld [vmem:[%s479 + $0x44] sm:$0xf]
        %v670 = vld [vmem:[%s479 + $0x48] sm:$0xf]
        %v671 = vld [vmem:[%s479 + $0x4c] sm:$0xf]
        %v672 = vld [vmem:[%s479 + $0x50] sm:$0xf]
        %v673 = vld [vmem:[%s479 + $0x54] sm:$0xf]
        %v674 = vld [vmem:[%s479 + $0x58] sm:$0xf]
        %v675 = vld [vmem:[%s479 + $0x5c] sm:$0xf]
        %v676 = vld [vmem:[%s479 + $0x60] sm:$0xf]
        %v677 = vld [vmem:[%s479 + $0x64] sm:$0xf]
        %v678 = vld [vmem:[%s479 + $0x68] sm:$0xf]
        %v679 = vld [vmem:[%s479 + $0x6c] sm:$0xf]
        %v680 = vld [vmem:[%s479 + $0x70] sm:$0xf]
        %v681 = vld [vmem:[%s479 + $0x74] sm:$0xf]
        %v682 = vld [vmem:[%s479 + $0x78] sm:$0xf]
        %v683 = vld [vmem:[%s479 + $0x7c] sm:$0xf]
        %v684 = vld [vmem:[%s479 + $0x80] sm:$0xf]
        %v685 = vld [vmem:[%s479 + $0x84] sm:$0xf]
        %v686 = vld [vmem:[%s479 + $0x88] sm:$0xf]
        %v687 = vld [vmem:[%s479 + $0x8c] sm:$0xf]
        %v688 = vld [vmem:[%s479 + $0x90] sm:$0xf]
        %v689 = vld [vmem:[%s479 + $0x94] sm:$0xf]
        %v690 = vld [vmem:[%s479 + $0x98] sm:$0xf]
        %v691 = vld [vmem:[%s479 + $0x9c] sm:$0xf]
        %v692 = vld [vmem:[%s479 + $0xa0] sm:$0xf]
        %v693 = vld [vmem:[%s479 + $0xa4] sm:$0xf]
        %v694 = vld [vmem:[%s479 + $0xa8] sm:$0xf]
        %v695 = vld [vmem:[%s479 + $0xac] sm:$0xf]
        %v696 = vld [vmem:[%s479 + $0xb0] sm:$0xf]
        %v697 = vld [vmem:[%s479 + $0xb4] sm:$0xf]
        %v698 = vld [vmem:[%s479 + $0xb8] sm:$0xf]
        %v699 = vld [vmem:[%s479 + $0xbc] sm:$0xf]
        %v700 = vld [vmem:[%s479 + $0xc0] sm:$0xf]
        %v701 = vld [vmem:[%s479 + $0xc4] sm:$0xf]
        %v702 = vld [vmem:[%s479 + $0xc8] sm:$0xf]
        %v703 = vld [vmem:[%s479 + $0xcc] sm:$0xf]
        %v704 = vld [vmem:[%s479 + $0xd0] sm:$0xf]
        %v705 = vld [vmem:[%s479 + $0xd4] sm:$0xf]
        %v706 = vld [vmem:[%s479 + $0xd8] sm:$0xf]
        %v707 = vld [vmem:[%s479 + $0xdc] sm:$0xf]
        %v708 = vld [vmem:[%s479 + $0xe0] sm:$0xf]
        %v709 = vld [vmem:[%s479 + $0xe4] sm:$0xf]
        %v710 = vld [vmem:[%s479 + $0xe8] sm:$0xf]
        %v711 = vld [vmem:[%s479 + $0xec] sm:$0xf]
        %v712 = vld [vmem:[%s479 + $0xf0] sm:$0xf]
        %v713 = vld [vmem:[%s479 + $0xf4] sm:$0xf]
        %v714 = vld [vmem:[%s479 + $0xf8] sm:$0xf]
        %v715 = vld [vmem:[%s479 + $0xfc] sm:$0xf]
        %v716 = vld [vmem:[%s479 + $0x100] sm:$0xf]
        %v717 = vld [vmem:[%s479 + $0x104] sm:$0xf]
        %v718 = vld [vmem:[%s479 + $0x108] sm:$0xf]
        %v719 = vld [vmem:[%s479 + $0x10c] sm:$0xf]
        %v720 = vld [vmem:[%s479 + $0x110] sm:$0xf]
        %v721 = vld [vmem:[%s479 + $0x114] sm:$0xf]
        %v722 = vld [vmem:[%s479 + $0x118] sm:$0xf]
        %v723 = vld [vmem:[%s479 + $0x11c] sm:$0xf]
        %v724 = vld [vmem:[%s479 + $0x120] sm:$0xf]
        %v725 = vld [vmem:[%s479 + $0x124] sm:$0xf]
        %v726 = vld [vmem:[%s479 + $0x128] sm:$0xf]
        %v727 = vld [vmem:[%s479 + $0x12c] sm:$0xf]
        %v728 = vld [vmem:[%s479 + $0x130] sm:$0xf]
        %v729 = vld [vmem:[%s479 + $0x134] sm:$0xf]
        %v730 = vld [vmem:[%s479 + $0x138] sm:$0xf]
        %v731 = vld [vmem:[%s479 + $0x13c] sm:$0xf]
        %v732 = vld [vmem:[%s479 + $0x140] sm:$0xf]
        %v733 = vld [vmem:[%s479 + $0x144] sm:$0xf]
        %v734 = vld [vmem:[%s479 + $0x148] sm:$0xf]
        %v735 = vld [vmem:[%s479 + $0x14c] sm:$0xf]
        %v736 = vld [vmem:[%s479 + $0x150] sm:$0xf]
        %v737 = vld [vmem:[%s479 + $0x154] sm:$0xf]
        %v738 = vld [vmem:[%s479 + $0x158] sm:$0xf]
        %v739 = vld [vmem:[%s479 + $0x15c] sm:$0xf]
        %v740 = vld [vmem:[%s479 + $0x160] sm:$0xf]
        %v741 = vld [vmem:[%s479 + $0x164] sm:$0xf]
        %v742 = vld [vmem:[%s479 + $0x168] sm:$0xf]
        %v743 = vld [vmem:[%s479 + $0x16c] sm:$0xf]
        %v744 = vld [vmem:[%s479 + $0x170] sm:$0xf]
        %v745 = vld [vmem:[%s479 + $0x174] sm:$0xf]
        %v746 = vld [vmem:[%s479 + $0x178] sm:$0xf]
        %v747 = vld [vmem:[%s479 + $0x17c] sm:$0xf]
        %v748 = vld [vmem:[%s479 + $0x180] sm:$0xf]
        %v749 = vld [vmem:[%s479 + $0x184] sm:$0xf]
        %v750 = vld [vmem:[%s479 + $0x188] sm:$0xf]
        %v751 = vld [vmem:[%s479 + $0x18c] sm:$0xf]
        %v752 = vld [vmem:[%s479 + $0x190] sm:$0xf]
        %v753 = vld [vmem:[%s479 + $0x194] sm:$0xf]
        %v754 = vld [vmem:[%s479 + $0x198] sm:$0xf]
        %v755 = vld [vmem:[%s479 + $0x19c] sm:$0xf]
        %v756 = vld [vmem:[%s479 + $0x1a0] sm:$0xf]
        %v757 = vld [vmem:[%s479 + $0x1a4] sm:$0xf]
        %v758 = vld [vmem:[%s479 + $0x1a8] sm:$0xf]
        %v759 = vld [vmem:[%s479 + $0x1ac] sm:$0xf]
        %v760 = vld [vmem:[%s479 + $0x1b0] sm:$0xf]
        %v761 = vld [vmem:[%s479 + $0x1b4] sm:$0xf]
        %v762 = vld [vmem:[%s479 + $0x1b8] sm:$0xf]
        %v763 = vld [vmem:[%s479 + $0x1bc] sm:$0xf]
        %v764 = vld [vmem:[%s479 + $0x1c0] sm:$0xf]
        %v765 = vld [vmem:[%s479 + $0x1c4] sm:$0xf]
        %v766 = vld [vmem:[%s479 + $0x1c8] sm:$0xf]
        %v767 = vld [vmem:[%s479 + $0x1cc] sm:$0xf]
        %v768 = vld [vmem:[%s479 + $0x1d0] sm:$0xf]
        %v769 = vld [vmem:[%s479 + $0x1d4] sm:$0xf]
        %v770 = vld [vmem:[%s479 + $0x1d8] sm:$0xf]
        %v771 = vld [vmem:[%s479 + $0x1dc] sm:$0xf]
        %v772 = vld [vmem:[%s479 + $0x1e0] sm:$0xf]
        %v773 = vld [vmem:[%s479 + $0x1e4] sm:$0xf]
        %v774 = vld [vmem:[%s479 + $0x1e8] sm:$0xf]
        %v775 = vld [vmem:[%s479 + $0x1ec] sm:$0xf]
        %v776 = vld [vmem:[%s479 + $0x1f0] sm:$0xf]
        %v777 = vld [vmem:[%s479 + $0x1f4] sm:$0xf]
        %v778 = vld [vmem:[%s479 + $0x1f8] sm:$0xf]
        %v779 = vld [vmem:[%s479 + $0x1fc] sm:$0xf]
        %v780 = vld [vmem:[%s479 + $0x200] sm:$0xf]
        %v781 = vld [vmem:[%s479 + $0x204] sm:$0xf]
        %v782 = vld [vmem:[%s479 + $0x208] sm:$0xf]
        %v783 = vld [vmem:[%s479 + $0x20c] sm:$0xf]
        %v784 = vld [vmem:[%s479 + $0x210] sm:$0xf]
        %v785 = vld [vmem:[%s479 + $0x214] sm:$0xf]
        %v786 = vld [vmem:[%s479 + $0x218] sm:$0xf]
        %v787 = vld [vmem:[%s479 + $0x21c] sm:$0xf]
        %v788 = vld [vmem:[%s479 + $0x220] sm:$0xf]
        %v789 = vld [vmem:[%s479 + $0x224] sm:$0xf]
        %v790 = vld [vmem:[%s479 + $0x228] sm:$0xf]
        %v791 = vld [vmem:[%s479 + $0x22c] sm:$0xf]
        %v792 = vld [vmem:[%s479 + $0x230] sm:$0xf]
        %v793 = vld [vmem:[%s479 + $0x234] sm:$0xf]
        %v794 = vld [vmem:[%s479 + $0x238] sm:$0xf]
        %v795 = vld [vmem:[%s479 + $0x23c] sm:$0xf]
        %v796 = vld [vmem:[%s479 + $0x240] sm:$0xf]
        %v797 = vld [vmem:[%s479 + $0x244] sm:$0xf]
        %v798 = vld [vmem:[%s479 + $0x248] sm:$0xf]
        %v799 = vld [vmem:[%s479 + $0x24c] sm:$0xf]
        %v800 = vld [vmem:[%s479 + $0x250] sm:$0xf]
        %v801 = vld [vmem:[%s479 + $0x254] sm:$0xf]
        %v802 = vld [vmem:[%s479 + $0x258] sm:$0xf]
        %v803 = vld [vmem:[%s479 + $0x25c] sm:$0xf]
        %v804 = vld [vmem:[%s479 + $0x260] sm:$0xf]
        %v805 = vld [vmem:[%s479 + $0x264] sm:$0xf]
        %v806 = vld [vmem:[%s479 + $0x268] sm:$0xf]
        %v807 = vld [vmem:[%s479 + $0x26c] sm:$0xf]
        %v808 = vld [vmem:[%s479 + $0x270] sm:$0xf]
        %v809 = vld [vmem:[%s479 + $0x274] sm:$0xf]
        %v810 = vld [vmem:[%s479 + $0x278] sm:$0xf]
        %v811 = vld [vmem:[%s479 + $0x27c] sm:$0xf]
        %v812 = vld [vmem:[%s479 + $0x280] sm:$0xf]
        %v813 = vld [vmem:[%s479 + $0x284] sm:$0xf]
        %v814 = vld [vmem:[%s479 + $0x288] sm:$0xf]
        %v815 = vld [vmem:[%s479 + $0x28c] sm:$0xf]
        %v816 = vld [vmem:[%s479 + $0x290] sm:$0xf]
        %v817 = vld [vmem:[%s479 + $0x294] sm:$0xf]
        %v818 = vld [vmem:[%s479 + $0x298] sm:$0xf]
        %v819 = vld [vmem:[%s479 + $0x29c] sm:$0xf]
        %v820 = vld [vmem:[%s479 + $0x2a0] sm:$0xf]
        %v821 = vld [vmem:[%s479 + $0x2a4] sm:$0xf]
        %v822 = vld [vmem:[%s479 + $0x2a8] sm:$0xf]
        %v823 = vld [vmem:[%s479 + $0x2ac] sm:$0xf]
        %v824 = vld [vmem:[%s479 + $0x2b0] sm:$0xf]
        %v825 = vld [vmem:[%s479 + $0x2b4] sm:$0xf]
        %v826 = vld [vmem:[%s479 + $0x2b8] sm:$0xf]
        %v827 = vld [vmem:[%s479 + $0x2bc] sm:$0xf]
        %v828 = vld [vmem:[%s479 + $0x2c0] sm:$0xf]
        %v829 = vld [vmem:[%s479 + $0x2c4] sm:$0xf]
        %v830 = vld [vmem:[%s479 + $0x2c8] sm:$0xf]
        %v831 = vld [vmem:[%s479 + $0x2cc] sm:$0xf]
        %v832 = vld [vmem:[%s479 + $0x2d0] sm:$0xf]
        %v833 = vld [vmem:[%s479 + $0x2d4] sm:$0xf]
        %v834 = vld [vmem:[%s479 + $0x2d8] sm:$0xf]
        %v835 = vld [vmem:[%s479 + $0x2dc] sm:$0xf]
        %v836 = vld [vmem:[%s479 + $0x2e0] sm:$0xf]
        %v837 = vld [vmem:[%s479 + $0x2e4] sm:$0xf]
        %v838 = vld [vmem:[%s479 + $0x2e8] sm:$0xf]
        %v839 = vld [vmem:[%s479 + $0x2ec] sm:$0xf]
        %v840 = vld [vmem:[%s479 + $0x2f0] sm:$0xf]
        %v841 = vld [vmem:[%s479 + $0x2f4] sm:$0xf]
        %v842 = vld [vmem:[%s479 + $0x2f8] sm:$0xf]
        %v843 = vld [vmem:[%s479 + $0x2fc] sm:$0xf]
        %v844 = vld [vmem:[%s479 + $0x300] sm:$0xf]
        %v845 = vld [vmem:[%s479 + $0x304] sm:$0xf]
        %v846 = vld [vmem:[%s479 + $0x308] sm:$0xf]
        %v847 = vld [vmem:[%s479 + $0x30c] sm:$0xf]
        %v848 = vld [vmem:[%s479 + $0x310] sm:$0xf]
        %v849 = vld [vmem:[%s479 + $0x314] sm:$0xf]
        %v850 = vld [vmem:[%s479 + $0x318] sm:$0xf]
        %v851 = vld [vmem:[%s479 + $0x31c] sm:$0xf]
        %v852 = vld [vmem:[%s479 + $0x320] sm:$0xf]
        %v853 = vld [vmem:[%s479 + $0x324] sm:$0xf]
        %v854 = vld [vmem:[%s479 + $0x328] sm:$0xf]
        %v855 = vld [vmem:[%s479 + $0x32c] sm:$0xf]
        %v856 = vld [vmem:[%s479 + $0x330] sm:$0xf]
        %v857 = vld [vmem:[%s479 + $0x334] sm:$0xf]
        %v858 = vld [vmem:[%s479 + $0x338] sm:$0xf]
        %v859 = vld [vmem:[%s479 + $0x33c] sm:$0xf]
        %v860 = vld [vmem:[%s479 + $0x340] sm:$0xf]
        %v861 = vld [vmem:[%s479 + $0x344] sm:$0xf]
        %v862 = vld [vmem:[%s479 + $0x348] sm:$0xf]
        %v863 = vld [vmem:[%s479 + $0x34c] sm:$0xf]
        %v864 = vld [vmem:[%s479 + $0x350] sm:$0xf]
        %v865 = vld [vmem:[%s479 + $0x354] sm:$0xf]
        %v866 = vld [vmem:[%s479 + $0x358] sm:$0xf]
        %v867 = vld [vmem:[%s479 + $0x35c] sm:$0xf]
        %v868 = vld [vmem:[%s479 + $0x360] sm:$0xf]
        %v869 = vld [vmem:[%s479 + $0x364] sm:$0xf]
        %v870 = vld [vmem:[%s479 + $0x368] sm:$0xf]
        %v871 = vld [vmem:[%s479 + $0x36c] sm:$0xf]
        %v872 = vld [vmem:[%s479 + $0x370] sm:$0xf]
        %v873 = vld [vmem:[%s479 + $0x374] sm:$0xf]
        %v874 = vld [vmem:[%s479 + $0x378] sm:$0xf]
        %v875 = vld [vmem:[%s479 + $0x37c] sm:$0xf]
        %v876 = vld [vmem:[%s479 + $0x380] sm:$0xf]
        %v877 = vld [vmem:[%s479 + $0x384] sm:$0xf]
        %v878 = vld [vmem:[%s479 + $0x388] sm:$0xf]
        %v879 = vld [vmem:[%s479 + $0x38c] sm:$0xf]
        %v880 = vld [vmem:[%s479 + $0x390] sm:$0xf]
        %v881 = vld [vmem:[%s479 + $0x394] sm:$0xf]
        %v882 = vld [vmem:[%s479 + $0x398] sm:$0xf]
        %v883 = vld [vmem:[%s479 + $0x39c] sm:$0xf]
        %v884 = vld [vmem:[%s479 + $0x3a0] sm:$0xf]
        %v885 = vld [vmem:[%s479 + $0x3a4] sm:$0xf]
        %v886 = vld [vmem:[%s479 + $0x3a8] sm:$0xf]
        %v887 = vld [vmem:[%s479 + $0x3ac] sm:$0xf]
        %v888 = vld [vmem:[%s479 + $0x3b0] sm:$0xf]
        %v889 = vld [vmem:[%s479 + $0x3b4] sm:$0xf]
        %v890 = vld [vmem:[%s479 + $0x3b8] sm:$0xf]
        %v891 = vld [vmem:[%s479 + $0x3bc] sm:$0xf]
        %v892 = vld [vmem:[%s479 + $0x3c0] sm:$0xf]
        %v893 = vld [vmem:[%s479 + $0x3c4] sm:$0xf]
        %v894 = vld [vmem:[%s479 + $0x3c8] sm:$0xf]
        %v895 = vld [vmem:[%s479 + $0x3cc] sm:$0xf]
        %v896 = vld [vmem:[%s479 + $0x3d0] sm:$0xf]
        %v897 = vld [vmem:[%s479 + $0x3d4] sm:$0xf]
        %v898 = vld [vmem:[%s479 + $0x3d8] sm:$0xf]
        %v899 = vld [vmem:[%s479 + $0x3dc] sm:$0xf]
        %v900 = vld [vmem:[%s479 + $0x3e0] sm:$0xf]
        %v901 = vld [vmem:[%s479 + $0x3e4] sm:$0xf]
        %v902 = vld [vmem:[%s479 + $0x3e8] sm:$0xf]
        %v903 = vld [vmem:[%s479 + $0x3ec] sm:$0xf]
        %v904 = vld [vmem:[%s479 + $0x3f0] sm:$0xf]
        %v905 = vld [vmem:[%s479 + $0x3f4] sm:$0xf]
        %v906 = vld [vmem:[%s479 + $0x3f8] sm:$0xf]
        %v907 = vld [vmem:[%s479 + $0x3fc] sm:$0xf]
        %v1036 = vunpack.c.l.b16 %v524
        %v1037 = vunpack.c.h.b16 %v524
        %v1038 = vunpack.c.l.b16 %v525
        %v1039 = vunpack.c.h.b16 %v525
        %v1040 = vunpack.c.l.b16 %v526
        %v1041 = vunpack.c.h.b16 %v526
        %v1042 = vunpack.c.l.b16 %v527
        %v1043 = vunpack.c.h.b16 %v527
        %v1044 = vunpack.c.l.b16 %v528
        %v1045 = vunpack.c.h.b16 %v528
        %v1046 = vunpack.c.l.b16 %v529
        %v1047 = vunpack.c.h.b16 %v529
        %v1048 = vunpack.c.l.b16 %v530
        %v1049 = vunpack.c.h.b16 %v530
        %v1050 = vunpack.c.l.b16 %v531
        %v1051 = vunpack.c.h.b16 %v531
        %v1052 = vunpack.c.l.b16 %v532
        %v1053 = vunpack.c.h.b16 %v532
        %v1054 = vunpack.c.l.b16 %v533
        %v1055 = vunpack.c.h.b16 %v533
        %v1056 = vunpack.c.l.b16 %v534
        %v1057 = vunpack.c.h.b16 %v534
        %v1058 = vunpack.c.l.b16 %v535
        %v1059 = vunpack.c.h.b16 %v535
        %v1060 = vunpack.c.l.b16 %v536
        %v1061 = vunpack.c.h.b16 %v536
        %v1062 = vunpack.c.l.b16 %v537
        %v1063 = vunpack.c.h.b16 %v537
        %v1064 = vunpack.c.l.b16 %v538
        %v1065 = vunpack.c.h.b16 %v538
        %v1066 = vunpack.c.l.b16 %v539
        %v1067 = vunpack.c.h.b16 %v539
        %v1068 = vunpack.c.l.b16 %v540
        %v1069 = vunpack.c.h.b16 %v540
        %v1070 = vunpack.c.l.b16 %v541
        %v1071 = vunpack.c.h.b16 %v541
        %v1072 = vunpack.c.l.b16 %v542
        %v1073 = vunpack.c.h.b16 %v542
        %v1074 = vunpack.c.l.b16 %v543
        %v1075 = vunpack.c.h.b16 %v543
        %v1076 = vunpack.c.l.b16 %v544
        %v1077 = vunpack.c.h.b16 %v544
        %v1078 = vunpack.c.l.b16 %v545
        %v1079 = vunpack.c.h.b16 %v545
        %v1080 = vunpack.c.l.b16 %v546
        %v1081 = vunpack.c.h.b16 %v546
        %v1082 = vunpack.c.l.b16 %v547
        %v1083 = vunpack.c.h.b16 %v547
        %v1084 = vunpack.c.l.b16 %v548
        %v1085 = vunpack.c.h.b16 %v548
        %v1086 = vunpack.c.l.b16 %v549
        %v1087 = vunpack.c.h.b16 %v549
        %v1088 = vunpack.c.l.b16 %v550
        %v1089 = vunpack.c.h.b16 %v550
        %v1090 = vunpack.c.l.b16 %v551
        %v1091 = vunpack.c.h.b16 %v551
        %v1092 = vunpack.c.l.b16 %v552
        %v1093 = vunpack.c.h.b16 %v552
        %v1094 = vunpack.c.l.b16 %v553
        %v1095 = vunpack.c.h.b16 %v553
        %v1096 = vunpack.c.l.b16 %v554
        %v1097 = vunpack.c.h.b16 %v554
        %v1098 = vunpack.c.l.b16 %v555
        %v1099 = vunpack.c.h.b16 %v555
        %v1100 = vunpack.c.l.b16 %v556
        %v1101 = vunpack.c.h.b16 %v556
        %v1102 = vunpack.c.l.b16 %v557
        %v1103 = vunpack.c.h.b16 %v557
        %v1104 = vunpack.c.l.b16 %v558
        %v1105 = vunpack.c.h.b16 %v558
        %v1106 = vunpack.c.l.b16 %v559
        %v1107 = vunpack.c.h.b16 %v559
        %v1108 = vunpack.c.l.b16 %v560
        %v1109 = vunpack.c.h.b16 %v560
        %v1110 = vunpack.c.l.b16 %v561
        %v1111 = vunpack.c.h.b16 %v561
        %v1112 = vunpack.c.l.b16 %v562
        %v1113 = vunpack.c.h.b16 %v562
        %v1114 = vunpack.c.l.b16 %v563
        %v1115 = vunpack.c.h.b16 %v563
        %v1116 = vunpack.c.l.b16 %v564
        %v1117 = vunpack.c.h.b16 %v564
        %v1118 = vunpack.c.l.b16 %v565
        %v1119 = vunpack.c.h.b16 %v565
        %v1120 = vunpack.c.l.b16 %v566
        %v1121 = vunpack.c.h.b16 %v566
        %v1122 = vunpack.c.l.b16 %v567
        %v1123 = vunpack.c.h.b16 %v567
        %v1124 = vunpack.c.l.b16 %v568
        %v1125 = vunpack.c.h.b16 %v568
        %v1126 = vunpack.c.l.b16 %v569
        %v1127 = vunpack.c.h.b16 %v569
        %v1128 = vunpack.c.l.b16 %v570
        %v1129 = vunpack.c.h.b16 %v570
        %v1130 = vunpack.c.l.b16 %v571
        %v1131 = vunpack.c.h.b16 %v571
        %v1132 = vunpack.c.l.b16 %v572
        %v1133 = vunpack.c.h.b16 %v572
        %v1134 = vunpack.c.l.b16 %v573
        %v1135 = vunpack.c.h.b16 %v573
        %v1136 = vunpack.c.l.b16 %v574
        %v1137 = vunpack.c.h.b16 %v574
        %v1138 = vunpack.c.l.b16 %v575
        %v1139 = vunpack.c.h.b16 %v575
        %v1140 = vunpack.c.l.b16 %v576
        %v1141 = vunpack.c.h.b16 %v576
        %v1142 = vunpack.c.l.b16 %v577
        %v1143 = vunpack.c.h.b16 %v577
        %v1144 = vunpack.c.l.b16 %v578
        %v1145 = vunpack.c.h.b16 %v578
        %v1146 = vunpack.c.l.b16 %v579
        %v1147 = vunpack.c.h.b16 %v579
        %v1148 = vunpack.c.l.b16 %v580
        %v1149 = vunpack.c.h.b16 %v580
        %v1150 = vunpack.c.l.b16 %v581
        %v1151 = vunpack.c.h.b16 %v581
        %v1152 = vunpack.c.l.b16 %v582
        %v1153 = vunpack.c.h.b16 %v582
        %v1154 = vunpack.c.l.b16 %v583
        %v1155 = vunpack.c.h.b16 %v583
        %v1156 = vunpack.c.l.b16 %v584
        %v1157 = vunpack.c.h.b16 %v584
        %v1158 = vunpack.c.l.b16 %v585
        %v1159 = vunpack.c.h.b16 %v585
        %v1160 = vunpack.c.l.b16 %v586
        %v1161 = vunpack.c.h.b16 %v586
        %v1162 = vunpack.c.l.b16 %v587
        %v1163 = vunpack.c.h.b16 %v587
        %v1164 = vunpack.c.l.b16 %v588
        %v1165 = vunpack.c.h.b16 %v588
        %v1166 = vunpack.c.l.b16 %v589
        %v1167 = vunpack.c.h.b16 %v589
        %v1168 = vunpack.c.l.b16 %v590
        %v1169 = vunpack.c.h.b16 %v590
        %v1170 = vunpack.c.l.b16 %v591
        %v1171 = vunpack.c.h.b16 %v591
        %v1172 = vunpack.c.l.b16 %v592
        %v1173 = vunpack.c.h.b16 %v592
        %v1174 = vunpack.c.l.b16 %v593
        %v1175 = vunpack.c.h.b16 %v593
        %v1176 = vunpack.c.l.b16 %v594
        %v1177 = vunpack.c.h.b16 %v594
        %v1178 = vunpack.c.l.b16 %v595
        %v1179 = vunpack.c.h.b16 %v595
        %v1180 = vunpack.c.l.b16 %v596
        %v1181 = vunpack.c.h.b16 %v596
        %v1182 = vunpack.c.l.b16 %v597
        %v1183 = vunpack.c.h.b16 %v597
        %v1184 = vunpack.c.l.b16 %v598
        %v1185 = vunpack.c.h.b16 %v598
        %v1186 = vunpack.c.l.b16 %v599
        %v1187 = vunpack.c.h.b16 %v599
        %v1188 = vunpack.c.l.b16 %v600
        %v1189 = vunpack.c.h.b16 %v600
        %v1190 = vunpack.c.l.b16 %v601
        %v1191 = vunpack.c.h.b16 %v601
        %v1192 = vunpack.c.l.b16 %v602
        %v1193 = vunpack.c.h.b16 %v602
        %v1194 = vunpack.c.l.b16 %v603
        %v1195 = vunpack.c.h.b16 %v603
        %v1196 = vunpack.c.l.b16 %v604
        %v1197 = vunpack.c.h.b16 %v604
        %v1198 = vunpack.c.l.b16 %v605
        %v1199 = vunpack.c.h.b16 %v605
        %v1200 = vunpack.c.l.b16 %v606
        %v1201 = vunpack.c.h.b16 %v606
        %v1202 = vunpack.c.l.b16 %v607
        %v1203 = vunpack.c.h.b16 %v607
        %v1204 = vunpack.c.l.b16 %v608
        %v1205 = vunpack.c.h.b16 %v608
        %v1206 = vunpack.c.l.b16 %v609
        %v1207 = vunpack.c.h.b16 %v609
        %v1208 = vunpack.c.l.b16 %v610
        %v1209 = vunpack.c.h.b16 %v610
        %v1210 = vunpack.c.l.b16 %v611
        %v1211 = vunpack.c.h.b16 %v611
        %v1212 = vunpack.c.l.b16 %v612
        %v1213 = vunpack.c.h.b16 %v612
        %v1214 = vunpack.c.l.b16 %v613
        %v1215 = vunpack.c.h.b16 %v613
        %v1216 = vunpack.c.l.b16 %v614
        %v1217 = vunpack.c.h.b16 %v614
        %v1218 = vunpack.c.l.b16 %v615
        %v1219 = vunpack.c.h.b16 %v615
        %v1220 = vunpack.c.l.b16 %v616
        %v1221 = vunpack.c.h.b16 %v616
        %v1222 = vunpack.c.l.b16 %v617
        %v1223 = vunpack.c.h.b16 %v617
        %v1224 = vunpack.c.l.b16 %v618
        %v1225 = vunpack.c.h.b16 %v618
        %v1226 = vunpack.c.l.b16 %v619
        %v1227 = vunpack.c.h.b16 %v619
        %v1228 = vunpack.c.l.b16 %v620
        %v1229 = vunpack.c.h.b16 %v620
        %v1230 = vunpack.c.l.b16 %v621
        %v1231 = vunpack.c.h.b16 %v621
        %v1232 = vunpack.c.l.b16 %v622
        %v1233 = vunpack.c.h.b16 %v622
        %v1234 = vunpack.c.l.b16 %v623
        %v1235 = vunpack.c.h.b16 %v623
        %v1236 = vunpack.c.l.b16 %v624
        %v1237 = vunpack.c.h.b16 %v624
        %v1238 = vunpack.c.l.b16 %v625
        %v1239 = vunpack.c.h.b16 %v625
        %v1240 = vunpack.c.l.b16 %v626
        %v1241 = vunpack.c.h.b16 %v626
        %v1242 = vunpack.c.l.b16 %v627
        %v1243 = vunpack.c.h.b16 %v627
        %v1244 = vunpack.c.l.b16 %v628
        %v1245 = vunpack.c.h.b16 %v628
        %v1246 = vunpack.c.l.b16 %v629
        %v1247 = vunpack.c.h.b16 %v629
        %v1248 = vunpack.c.l.b16 %v630
        %v1249 = vunpack.c.h.b16 %v630
        %v1250 = vunpack.c.l.b16 %v631
        %v1251 = vunpack.c.h.b16 %v631
        %v1252 = vunpack.c.l.b16 %v632
        %v1253 = vunpack.c.h.b16 %v632
        %v1254 = vunpack.c.l.b16 %v633
        %v1255 = vunpack.c.h.b16 %v633
        %v1256 = vunpack.c.l.b16 %v634
        %v1257 = vunpack.c.h.b16 %v634
        %v1258 = vunpack.c.l.b16 %v635
        %v1259 = vunpack.c.h.b16 %v635
        %v1260 = vunpack.c.l.b16 %v636
        %v1261 = vunpack.c.h.b16 %v636
        %v1262 = vunpack.c.l.b16 %v637
        %v1263 = vunpack.c.h.b16 %v637
        %v1264 = vunpack.c.l.b16 %v638
        %v1265 = vunpack.c.h.b16 %v638
        %v1266 = vunpack.c.l.b16 %v639
        %v1267 = vunpack.c.h.b16 %v639
        %v1268 = vunpack.c.l.b16 %v640
        %v1269 = vunpack.c.h.b16 %v640
        %v1270 = vunpack.c.l.b16 %v641
        %v1271 = vunpack.c.h.b16 %v641
        %v1272 = vunpack.c.l.b16 %v642
        %v1273 = vunpack.c.h.b16 %v642
        %v1274 = vunpack.c.l.b16 %v643
        %v1275 = vunpack.c.h.b16 %v643
        %v1276 = vunpack.c.l.b16 %v644
        %v1277 = vunpack.c.h.b16 %v644
        %v1278 = vunpack.c.l.b16 %v645
        %v1279 = vunpack.c.h.b16 %v645
        %v1280 = vunpack.c.l.b16 %v646
        %v1281 = vunpack.c.h.b16 %v646
        %v1282 = vunpack.c.l.b16 %v647
        %v1283 = vunpack.c.h.b16 %v647
        %v1284 = vunpack.c.l.b16 %v648
        %v1285 = vunpack.c.h.b16 %v648
        %v1286 = vunpack.c.l.b16 %v649
        %v1287 = vunpack.c.h.b16 %v649
        %v1288 = vunpack.c.l.b16 %v650
        %v1289 = vunpack.c.h.b16 %v650
        %v1290 = vunpack.c.l.b16 %v651
        %v1291 = vunpack.c.h.b16 %v651
        %v1292 = vpack.c.b16 %v1052, %v1036
        %v1293 = vpack.c.b16 %v1053, %v1037
        %v1294 = vpack.c.b16 %v1054, %v1038
        %v1295 = vpack.c.b16 %v1055, %v1039
        %v1296 = vpack.c.b16 %v1056, %v1040
        %v1297 = vpack.c.b16 %v1057, %v1041
        %v1298 = vpack.c.b16 %v1058, %v1042
        %v1299 = vpack.c.b16 %v1059, %v1043
        %v1300 = vpack.c.b16 %v1060, %v1044
        %v1301 = vpack.c.b16 %v1061, %v1045
        %v1302 = vpack.c.b16 %v1062, %v1046
        %v1303 = vpack.c.b16 %v1063, %v1047
        %v1304 = vpack.c.b16 %v1064, %v1048
        %v1305 = vpack.c.b16 %v1065, %v1049
        %v1306 = vpack.c.b16 %v1066, %v1050
        %v1307 = vpack.c.b16 %v1067, %v1051
        %v1308 = vpack.c.b16 %v1084, %v1068
        %v1309 = vpack.c.b16 %v1085, %v1069
        %v1310 = vpack.c.b16 %v1086, %v1070
        %v1311 = vpack.c.b16 %v1087, %v1071
        %v1312 = vpack.c.b16 %v1088, %v1072
        %v1313 = vpack.c.b16 %v1089, %v1073
        %v1314 = vpack.c.b16 %v1090, %v1074
        %v1315 = vpack.c.b16 %v1091, %v1075
        %v1316 = vpack.c.b16 %v1092, %v1076
        %v1317 = vpack.c.b16 %v1093, %v1077
        %v1318 = vpack.c.b16 %v1094, %v1078
        %v1319 = vpack.c.b16 %v1095, %v1079
        %v1320 = vpack.c.b16 %v1096, %v1080
        %v1321 = vpack.c.b16 %v1097, %v1081
        %v1322 = vpack.c.b16 %v1098, %v1082
        %v1323 = vpack.c.b16 %v1099, %v1083
        %v1324 = vpack.c.b16 %v1116, %v1100
        %v1325 = vpack.c.b16 %v1117, %v1101
        %v1326 = vpack.c.b16 %v1118, %v1102
        %v1327 = vpack.c.b16 %v1119, %v1103
        %v1328 = vpack.c.b16 %v1120, %v1104
        %v1329 = vpack.c.b16 %v1121, %v1105
        %v1330 = vpack.c.b16 %v1122, %v1106
        %v1331 = vpack.c.b16 %v1123, %v1107
        %v1332 = vpack.c.b16 %v1124, %v1108
        %v1333 = vpack.c.b16 %v1125, %v1109
        %v1334 = vpack.c.b16 %v1126, %v1110
        %v1335 = vpack.c.b16 %v1127, %v1111
        %v1336 = vpack.c.b16 %v1128, %v1112
        %v1337 = vpack.c.b16 %v1129, %v1113
        %v1338 = vpack.c.b16 %v1130, %v1114
        %v1339 = vpack.c.b16 %v1131, %v1115
        %v1340 = vpack.c.b16 %v1148, %v1132
        %v1341 = vpack.c.b16 %v1149, %v1133
        %v1342 = vpack.c.b16 %v1150, %v1134
        %v1343 = vpack.c.b16 %v1151, %v1135
        %v1344 = vpack.c.b16 %v1152, %v1136
        %v1345 = vpack.c.b16 %v1153, %v1137
        %v1346 = vpack.c.b16 %v1154, %v1138
        %v1347 = vpack.c.b16 %v1155, %v1139
        %v1348 = vpack.c.b16 %v1156, %v1140
        %v1349 = vpack.c.b16 %v1157, %v1141
        %v1350 = vpack.c.b16 %v1158, %v1142
        %v1351 = vpack.c.b16 %v1159, %v1143
        %v1352 = vpack.c.b16 %v1160, %v1144
        %v1353 = vpack.c.b16 %v1161, %v1145
        %v1354 = vpack.c.b16 %v1162, %v1146
        %v1355 = vpack.c.b16 %v1163, %v1147
        %v1356 = vpack.c.b16 %v1180, %v1164
        %v1357 = vpack.c.b16 %v1181, %v1165
        %v1358 = vpack.c.b16 %v1182, %v1166
        %v1359 = vpack.c.b16 %v1183, %v1167
        %v1360 = vpack.c.b16 %v1184, %v1168
        %v1361 = vpack.c.b16 %v1185, %v1169
        %v1362 = vpack.c.b16 %v1186, %v1170
        %v1363 = vpack.c.b16 %v1187, %v1171
        %v1364 = vpack.c.b16 %v1188, %v1172
        %v1365 = vpack.c.b16 %v1189, %v1173
        %v1366 = vpack.c.b16 %v1190, %v1174
        %v1367 = vpack.c.b16 %v1191, %v1175
        %v1368 = vpack.c.b16 %v1192, %v1176
        %v1369 = vpack.c.b16 %v1193, %v1177
        %v1370 = vpack.c.b16 %v1194, %v1178
        %v1371 = vpack.c.b16 %v1195, %v1179
        %v1372 = vpack.c.b16 %v1212, %v1196
        %v1373 = vpack.c.b16 %v1213, %v1197
        %v1374 = vpack.c.b16 %v1214, %v1198
        %v1375 = vpack.c.b16 %v1215, %v1199
        %v1376 = vpack.c.b16 %v1216, %v1200
        %v1377 = vpack.c.b16 %v1217, %v1201
        %v1378 = vpack.c.b16 %v1218, %v1202
        %v1379 = vpack.c.b16 %v1219, %v1203
        %v1380 = vpack.c.b16 %v1220, %v1204
        %v1381 = vpack.c.b16 %v1221, %v1205
        %v1382 = vpack.c.b16 %v1222, %v1206
        %v1383 = vpack.c.b16 %v1223, %v1207
        %v1384 = vpack.c.b16 %v1224, %v1208
        %v1385 = vpack.c.b16 %v1225, %v1209
        %v1386 = vpack.c.b16 %v1226, %v1210
        %v1387 = vpack.c.b16 %v1227, %v1211
        %v1388 = vpack.c.b16 %v1244, %v1228
        %v1389 = vpack.c.b16 %v1245, %v1229
        %v1390 = vpack.c.b16 %v1246, %v1230
        %v1391 = vpack.c.b16 %v1247, %v1231
        %v1392 = vpack.c.b16 %v1248, %v1232
        %v1393 = vpack.c.b16 %v1249, %v1233
        %v1394 = vpack.c.b16 %v1250, %v1234
        %v1395 = vpack.c.b16 %v1251, %v1235
        %v1396 = vpack.c.b16 %v1252, %v1236
        %v1397 = vpack.c.b16 %v1253, %v1237
        %v1398 = vpack.c.b16 %v1254, %v1238
        %v1399 = vpack.c.b16 %v1255, %v1239
        %v1400 = vpack.c.b16 %v1256, %v1240
        %v1401 = vpack.c.b16 %v1257, %v1241
        %v1402 = vpack.c.b16 %v1258, %v1242
        %v1403 = vpack.c.b16 %v1259, %v1243
        %v1404 = vpack.c.b16 %v1276, %v1260
        %v1405 = vpack.c.b16 %v1277, %v1261
        %v1406 = vpack.c.b16 %v1278, %v1262
        %v1407 = vpack.c.b16 %v1279, %v1263
        %v1408 = vpack.c.b16 %v1280, %v1264
        %v1409 = vpack.c.b16 %v1281, %v1265
        %v1410 = vpack.c.b16 %v1282, %v1266
        %v1411 = vpack.c.b16 %v1283, %v1267
        %v1412 = vpack.c.b16 %v1284, %v1268
        %v1413 = vpack.c.b16 %v1285, %v1269
        %v1414 = vpack.c.b16 %v1286, %v1270
        %v1415 = vpack.c.b16 %v1287, %v1271
        %v1416 = vpack.c.b16 %v1288, %v1272
        %v1417 = vpack.c.b16 %v1289, %v1273
        %v1418 = vpack.c.b16 %v1290, %v1274
        %v1419 = vpack.c.b16 %v1291, %v1275
        %v1804 = vunpack.c.l.b16 %v652
        %v1805 = vunpack.c.l.b16 %v653
        %v1806 = vunpack.c.l.b16 %v654
        %v1807 = vunpack.c.l.b16 %v655
        %v1808 = vunpack.c.l.b16 %v656
        %v1809 = vunpack.c.l.b16 %v657
        %v1810 = vunpack.c.l.b16 %v658
        %v1811 = vunpack.c.l.b16 %v659
        %v1812 = vunpack.c.l.b16 %v660
        %v1813 = vunpack.c.l.b16 %v661
        %v1814 = vunpack.c.l.b16 %v662
        %v1815 = vunpack.c.l.b16 %v663
        %v1816 = vunpack.c.l.b16 %v664
        %v1817 = vunpack.c.l.b16 %v665
        %v1818 = vunpack.c.l.b16 %v666
        %v1819 = vunpack.c.l.b16 %v667
        %v1820 = vunpack.c.l.b16 %v668
        %v1821 = vunpack.c.l.b16 %v669
        %v1822 = vunpack.c.l.b16 %v670
        %v1823 = vunpack.c.l.b16 %v671
        %v1824 = vunpack.c.l.b16 %v672
        %v1825 = vunpack.c.l.b16 %v673
        %v1826 = vunpack.c.l.b16 %v674
        %v1827 = vunpack.c.l.b16 %v675
        %v1828 = vunpack.c.l.b16 %v676
        %v1829 = vunpack.c.l.b16 %v677
        %v1830 = vunpack.c.l.b16 %v678
        %v1831 = vunpack.c.l.b16 %v679
        %v1832 = vunpack.c.l.b16 %v680
        %v1833 = vunpack.c.l.b16 %v681
        %v1834 = vunpack.c.l.b16 %v682
        %v1835 = vunpack.c.l.b16 %v683
        %v1836 = vunpack.c.l.b16 %v684
        %v1837 = vunpack.c.l.b16 %v685
        %v1838 = vunpack.c.l.b16 %v686
        %v1839 = vunpack.c.l.b16 %v687
        %v1840 = vunpack.c.l.b16 %v688
        %v1841 = vunpack.c.l.b16 %v689
        %v1842 = vunpack.c.l.b16 %v690
        %v1843 = vunpack.c.l.b16 %v691
        %v1844 = vunpack.c.l.b16 %v692
        %v1845 = vunpack.c.l.b16 %v693
        %v1846 = vunpack.c.l.b16 %v694
        %v1847 = vunpack.c.l.b16 %v695
        %v1848 = vunpack.c.l.b16 %v696
        %v1849 = vunpack.c.l.b16 %v697
        %v1850 = vunpack.c.l.b16 %v698
        %v1851 = vunpack.c.l.b16 %v699
        %v1852 = vunpack.c.l.b16 %v700
        %v1853 = vunpack.c.l.b16 %v701
        %v1854 = vunpack.c.l.b16 %v702
        %v1855 = vunpack.c.l.b16 %v703
        %v1856 = vunpack.c.l.b16 %v704
        %v1857 = vunpack.c.l.b16 %v705
        %v1858 = vunpack.c.l.b16 %v706
        %v1859 = vunpack.c.l.b16 %v707
        %v1860 = vunpack.c.l.b16 %v708
        %v1861 = vunpack.c.l.b16 %v709
        %v1862 = vunpack.c.l.b16 %v710
        %v1863 = vunpack.c.l.b16 %v711
        %v1864 = vunpack.c.l.b16 %v712
        %v1865 = vunpack.c.l.b16 %v713
        %v1866 = vunpack.c.l.b16 %v714
        %v1867 = vunpack.c.l.b16 %v715
        %v1868 = vunpack.c.l.b16 %v716
        %v1869 = vunpack.c.l.b16 %v717
        %v1870 = vunpack.c.l.b16 %v718
        %v1871 = vunpack.c.l.b16 %v719
        %v1872 = vunpack.c.l.b16 %v720
        %v1873 = vunpack.c.l.b16 %v721
        %v1874 = vunpack.c.l.b16 %v722
        %v1875 = vunpack.c.l.b16 %v723
        %v1876 = vunpack.c.l.b16 %v724
        %v1877 = vunpack.c.l.b16 %v725
        %v1878 = vunpack.c.l.b16 %v726
        %v1879 = vunpack.c.l.b16 %v727
        %v1880 = vunpack.c.l.b16 %v728
        %v1881 = vunpack.c.l.b16 %v729
        %v1882 = vunpack.c.l.b16 %v730
        %v1883 = vunpack.c.l.b16 %v731
        %v1884 = vunpack.c.l.b16 %v732
        %v1885 = vunpack.c.l.b16 %v733
        %v1886 = vunpack.c.l.b16 %v734
        %v1887 = vunpack.c.l.b16 %v735
        %v1888 = vunpack.c.l.b16 %v736
        %v1889 = vunpack.c.l.b16 %v737
        %v1890 = vunpack.c.l.b16 %v738
        %v1891 = vunpack.c.l.b16 %v739
        %v1892 = vunpack.c.l.b16 %v740
        %v1893 = vunpack.c.l.b16 %v741
        %v1894 = vunpack.c.l.b16 %v742
        %v1895 = vunpack.c.l.b16 %v743
        %v1896 = vunpack.c.l.b16 %v744
        %v1897 = vunpack.c.l.b16 %v745
        %v1898 = vunpack.c.l.b16 %v746
        %v1899 = vunpack.c.l.b16 %v747
        %v1900 = vunpack.c.l.b16 %v748
        %v1901 = vunpack.c.l.b16 %v749
        %v1902 = vunpack.c.l.b16 %v750
        %v1903 = vunpack.c.l.b16 %v751
        %v1904 = vunpack.c.l.b16 %v752
        %v1905 = vunpack.c.l.b16 %v753
        %v1906 = vunpack.c.l.b16 %v754
        %v1907 = vunpack.c.l.b16 %v755
        %v1908 = vunpack.c.l.b16 %v756
        %v1909 = vunpack.c.l.b16 %v757
        %v1910 = vunpack.c.l.b16 %v758
        %v1911 = vunpack.c.l.b16 %v759
        %v1912 = vunpack.c.l.b16 %v760
        %v1913 = vunpack.c.l.b16 %v761
        %v1914 = vunpack.c.l.b16 %v762
        %v1915 = vunpack.c.l.b16 %v763
        %v1916 = vunpack.c.l.b16 %v764
        %v1917 = vunpack.c.l.b16 %v765
        %v1918 = vunpack.c.l.b16 %v766
        %v1919 = vunpack.c.l.b16 %v767
        %v1920 = vunpack.c.l.b16 %v768
        %v1921 = vunpack.c.l.b16 %v769
        %v1922 = vunpack.c.l.b16 %v770
        %v1923 = vunpack.c.l.b16 %v771
        %v1924 = vunpack.c.l.b16 %v772
        %v1925 = vunpack.c.l.b16 %v773
        %v1926 = vunpack.c.l.b16 %v774
        %v1927 = vunpack.c.l.b16 %v775
        %v1928 = vunpack.c.l.b16 %v776
        %v1929 = vunpack.c.l.b16 %v777
        %v1930 = vunpack.c.l.b16 %v778
        %v1931 = vunpack.c.l.b16 %v779
        %v1932 = vunpack.c.l.b16 %v780
        %v1933 = vunpack.c.l.b16 %v781
        %v1934 = vunpack.c.l.b16 %v782
        %v1935 = vunpack.c.l.b16 %v783
        %v1936 = vunpack.c.l.b16 %v784
        %v1937 = vunpack.c.l.b16 %v785
        %v1938 = vunpack.c.l.b16 %v786
        %v1939 = vunpack.c.l.b16 %v787
        %v1940 = vunpack.c.l.b16 %v788
        %v1941 = vunpack.c.l.b16 %v789
        %v1942 = vunpack.c.l.b16 %v790
        %v1943 = vunpack.c.l.b16 %v791
        %v1944 = vunpack.c.l.b16 %v792
        %v1945 = vunpack.c.l.b16 %v793
        %v1946 = vunpack.c.l.b16 %v794
        %v1947 = vunpack.c.l.b16 %v795
        %v1948 = vunpack.c.l.b16 %v796
        %v1949 = vunpack.c.l.b16 %v797
        %v1950 = vunpack.c.l.b16 %v798
        %v1951 = vunpack.c.l.b16 %v799
        %v1952 = vunpack.c.l.b16 %v800
        %v1953 = vunpack.c.l.b16 %v801
        %v1954 = vunpack.c.l.b16 %v802
        %v1955 = vunpack.c.l.b16 %v803
        %v1956 = vunpack.c.l.b16 %v804
        %v1957 = vunpack.c.l.b16 %v805
        %v1958 = vunpack.c.l.b16 %v806
        %v1959 = vunpack.c.l.b16 %v807
        %v1960 = vunpack.c.l.b16 %v808
        %v1961 = vunpack.c.l.b16 %v809
        %v1962 = vunpack.c.l.b16 %v810
        %v1963 = vunpack.c.l.b16 %v811
        %v1964 = vunpack.c.l.b16 %v812
        %v1965 = vunpack.c.l.b16 %v813
        %v1966 = vunpack.c.l.b16 %v814
        %v1967 = vunpack.c.l.b16 %v815
        %v1968 = vunpack.c.l.b16 %v816
        %v1969 = vunpack.c.l.b16 %v817
        %v1970 = vunpack.c.l.b16 %v818
        %v1971 = vunpack.c.l.b16 %v819
        %v1972 = vunpack.c.l.b16 %v820
        %v1973 = vunpack.c.l.b16 %v821
        %v1974 = vunpack.c.l.b16 %v822
        %v1975 = vunpack.c.l.b16 %v823
        %v1976 = vunpack.c.l.b16 %v824
        %v1977 = vunpack.c.l.b16 %v825
        %v1978 = vunpack.c.l.b16 %v826
        %v1979 = vunpack.c.l.b16 %v827
        %v1980 = vunpack.c.l.b16 %v828
        %v1981 = vunpack.c.l.b16 %v829
        %v1982 = vunpack.c.l.b16 %v830
        %v1983 = vunpack.c.l.b16 %v831
        %v1984 = vunpack.c.l.b16 %v832
        %v1985 = vunpack.c.l.b16 %v833
        %v1986 = vunpack.c.l.b16 %v834
        %v1987 = vunpack.c.l.b16 %v835
        %v1988 = vunpack.c.l.b16 %v836
        %v1989 = vunpack.c.l.b16 %v837
        %v1990 = vunpack.c.l.b16 %v838
        %v1991 = vunpack.c.l.b16 %v839
        %v1992 = vunpack.c.l.b16 %v840
        %v1993 = vunpack.c.l.b16 %v841
        %v1994 = vunpack.c.l.b16 %v842
        %v1995 = vunpack.c.l.b16 %v843
        %v1996 = vunpack.c.l.b16 %v844
        %v1997 = vunpack.c.l.b16 %v845
        %v1998 = vunpack.c.l.b16 %v846
        %v1999 = vunpack.c.l.b16 %v847
        %v2000 = vunpack.c.l.b16 %v848
        %v2001 = vunpack.c.l.b16 %v849
        %v2002 = vunpack.c.l.b16 %v850
        %v2003 = vunpack.c.l.b16 %v851
        %v2004 = vunpack.c.l.b16 %v852
        %v2005 = vunpack.c.l.b16 %v853
        %v2006 = vunpack.c.l.b16 %v854
        %v2007 = vunpack.c.l.b16 %v855
        %v2008 = vunpack.c.l.b16 %v856
        %v2009 = vunpack.c.l.b16 %v857
        %v2010 = vunpack.c.l.b16 %v858
        %v2011 = vunpack.c.l.b16 %v859
        %v2012 = vunpack.c.l.b16 %v860
        %v2013 = vunpack.c.l.b16 %v861
        %v2014 = vunpack.c.l.b16 %v862
        %v2015 = vunpack.c.l.b16 %v863
        %v2016 = vunpack.c.l.b16 %v864
        %v2017 = vunpack.c.l.b16 %v865
        %v2018 = vunpack.c.l.b16 %v866
        %v2019 = vunpack.c.l.b16 %v867
        %v2020 = vunpack.c.l.b16 %v868
        %v2021 = vunpack.c.l.b16 %v869
        %v2022 = vunpack.c.l.b16 %v870
        %v2023 = vunpack.c.l.b16 %v871
        %v2024 = vunpack.c.l.b16 %v872
        %v2025 = vunpack.c.l.b16 %v873
        %v2026 = vunpack.c.l.b16 %v874
        %v2027 = vunpack.c.l.b16 %v875
        %v2028 = vunpack.c.l.b16 %v876
        %v2029 = vunpack.c.l.b16 %v877
        %v2030 = vunpack.c.l.b16 %v878
        %v2031 = vunpack.c.l.b16 %v879
        %v2032 = vunpack.c.l.b16 %v880
        %v2033 = vunpack.c.l.b16 %v881
        %v2034 = vunpack.c.l.b16 %v882
        %v2035 = vunpack.c.l.b16 %v883
        %v2036 = vunpack.c.l.b16 %v884
        %v2037 = vunpack.c.l.b16 %v885
        %v2038 = vunpack.c.l.b16 %v886
        %v2039 = vunpack.c.l.b16 %v887
        %v2040 = vunpack.c.l.b16 %v888
        %v2041 = vunpack.c.l.b16 %v889
        %v2042 = vunpack.c.l.b16 %v890
        %v2043 = vunpack.c.l.b16 %v891
        %v2044 = vunpack.c.l.b16 %v892
        %v2045 = vunpack.c.l.b16 %v893
        %v2046 = vunpack.c.l.b16 %v894
        %v2047 = vunpack.c.l.b16 %v895
        %v2048 = vunpack.c.l.b16 %v896
        %v2049 = vunpack.c.l.b16 %v897
        %v2050 = vunpack.c.l.b16 %v898
        %v2051 = vunpack.c.l.b16 %v899
        %v2052 = vunpack.c.l.b16 %v900
        %v2053 = vunpack.c.l.b16 %v901
        %v2054 = vunpack.c.l.b16 %v902
        %v2055 = vunpack.c.l.b16 %v903
        %v2056 = vunpack.c.l.b16 %v904
        %v2057 = vunpack.c.l.b16 %v905
        %v2058 = vunpack.c.l.b16 %v906
        %v2059 = vunpack.c.l.b16 %v907
        %v2060 = vpack.c.b16 %v1805, %v1804
        %v2061 = vpack.c.b16 %v1807, %v1806
        %v2062 = vpack.c.b16 %v1809, %v1808
        %v2063 = vpack.c.b16 %v1811, %v1810
        %v2064 = vpack.c.b16 %v1813, %v1812
        %v2065 = vpack.c.b16 %v1815, %v1814
        %v2066 = vpack.c.b16 %v1817, %v1816
        %v2067 = vpack.c.b16 %v1819, %v1818
        %v2068 = vpack.c.b16 %v1821, %v1820
        %v2069 = vpack.c.b16 %v1823, %v1822
        %v2070 = vpack.c.b16 %v1825, %v1824
        %v2071 = vpack.c.b16 %v1827, %v1826
        %v2072 = vpack.c.b16 %v1829, %v1828
        %v2073 = vpack.c.b16 %v1831, %v1830
        %v2074 = vpack.c.b16 %v1833, %v1832
        %v2075 = vpack.c.b16 %v1835, %v1834
        %v2076 = vpack.c.b16 %v1837, %v1836
        %v2077 = vpack.c.b16 %v1839, %v1838
        %v2078 = vpack.c.b16 %v1841, %v1840
        %v2079 = vpack.c.b16 %v1843, %v1842
        %v2080 = vpack.c.b16 %v1845, %v1844
        %v2081 = vpack.c.b16 %v1847, %v1846
        %v2082 = vpack.c.b16 %v1849, %v1848
        %v2083 = vpack.c.b16 %v1851, %v1850
        %v2084 = vpack.c.b16 %v1853, %v1852
        %v2085 = vpack.c.b16 %v1855, %v1854
        %v2086 = vpack.c.b16 %v1857, %v1856
        %v2087 = vpack.c.b16 %v1859, %v1858
        %v2088 = vpack.c.b16 %v1861, %v1860
        %v2089 = vpack.c.b16 %v1863, %v1862
        %v2090 = vpack.c.b16 %v1865, %v1864
        %v2091 = vpack.c.b16 %v1867, %v1866
        %v2092 = vpack.c.b16 %v1869, %v1868
        %v2093 = vpack.c.b16 %v1871, %v1870
        %v2094 = vpack.c.b16 %v1873, %v1872
        %v2095 = vpack.c.b16 %v1875, %v1874
        %v2096 = vpack.c.b16 %v1877, %v1876
        %v2097 = vpack.c.b16 %v1879, %v1878
        %v2098 = vpack.c.b16 %v1881, %v1880
        %v2099 = vpack.c.b16 %v1883, %v1882
        %v2100 = vpack.c.b16 %v1885, %v1884
        %v2101 = vpack.c.b16 %v1887, %v1886
        %v2102 = vpack.c.b16 %v1889, %v1888
        %v2103 = vpack.c.b16 %v1891, %v1890
        %v2104 = vpack.c.b16 %v1893, %v1892
        %v2105 = vpack.c.b16 %v1895, %v1894
        %v2106 = vpack.c.b16 %v1897, %v1896
        %v2107 = vpack.c.b16 %v1899, %v1898
        %v2108 = vpack.c.b16 %v1901, %v1900
        %v2109 = vpack.c.b16 %v1903, %v1902
        %v2110 = vpack.c.b16 %v1905, %v1904
        %v2111 = vpack.c.b16 %v1907, %v1906
        %v2112 = vpack.c.b16 %v1909, %v1908
        %v2113 = vpack.c.b16 %v1911, %v1910
        %v2114 = vpack.c.b16 %v1913, %v1912
        %v2115 = vpack.c.b16 %v1915, %v1914
        %v2116 = vpack.c.b16 %v1917, %v1916
        %v2117 = vpack.c.b16 %v1919, %v1918
        %v2118 = vpack.c.b16 %v1921, %v1920
        %v2119 = vpack.c.b16 %v1923, %v1922
        %v2120 = vpack.c.b16 %v1925, %v1924
        %v2121 = vpack.c.b16 %v1927, %v1926
        %v2122 = vpack.c.b16 %v1929, %v1928
        %v2123 = vpack.c.b16 %v1931, %v1930
        %v2124 = vpack.c.b16 %v1933, %v1932
        %v2125 = vpack.c.b16 %v1935, %v1934
        %v2126 = vpack.c.b16 %v1937, %v1936
        %v2127 = vpack.c.b16 %v1939, %v1938
        %v2128 = vpack.c.b16 %v1941, %v1940
        %v2129 = vpack.c.b16 %v1943, %v1942
        %v2130 = vpack.c.b16 %v1945, %v1944
        %v2131 = vpack.c.b16 %v1947, %v1946
        %v2132 = vpack.c.b16 %v1949, %v1948
        %v2133 = vpack.c.b16 %v1951, %v1950
        %v2134 = vpack.c.b16 %v1953, %v1952
        %v2135 = vpack.c.b16 %v1955, %v1954
        %v2136 = vpack.c.b16 %v1957, %v1956
        %v2137 = vpack.c.b16 %v1959, %v1958
        %v2138 = vpack.c.b16 %v1961, %v1960
        %v2139 = vpack.c.b16 %v1963, %v1962
        %v2140 = vpack.c.b16 %v1965, %v1964
        %v2141 = vpack.c.b16 %v1967, %v1966
        %v2142 = vpack.c.b16 %v1969, %v1968
        %v2143 = vpack.c.b16 %v1971, %v1970
        %v2144 = vpack.c.b16 %v1973, %v1972
        %v2145 = vpack.c.b16 %v1975, %v1974
        %v2146 = vpack.c.b16 %v1977, %v1976
        %v2147 = vpack.c.b16 %v1979, %v1978
        %v2148 = vpack.c.b16 %v1981, %v1980
        %v2149 = vpack.c.b16 %v1983, %v1982
        %v2150 = vpack.c.b16 %v1985, %v1984
        %v2151 = vpack.c.b16 %v1987, %v1986
        %v2152 = vpack.c.b16 %v1989, %v1988
        %v2153 = vpack.c.b16 %v1991, %v1990
        %v2154 = vpack.c.b16 %v1993, %v1992
        %v2155 = vpack.c.b16 %v1995, %v1994
        %v2156 = vpack.c.b16 %v1997, %v1996
        %v2157 = vpack.c.b16 %v1999, %v1998
        %v2158 = vpack.c.b16 %v2001, %v2000
        %v2159 = vpack.c.b16 %v2003, %v2002
        %v2160 = vpack.c.b16 %v2005, %v2004
        %v2161 = vpack.c.b16 %v2007, %v2006
        %v2162 = vpack.c.b16 %v2009, %v2008
        %v2163 = vpack.c.b16 %v2011, %v2010
        %v2164 = vpack.c.b16 %v2013, %v2012
        %v2165 = vpack.c.b16 %v2015, %v2014
        %v2166 = vpack.c.b16 %v2017, %v2016
        %v2167 = vpack.c.b16 %v2019, %v2018
        %v2168 = vpack.c.b16 %v2021, %v2020
        %v2169 = vpack.c.b16 %v2023, %v2022
        %v2170 = vpack.c.b16 %v2025, %v2024
        %v2171 = vpack.c.b16 %v2027, %v2026
        %v2172 = vpack.c.b16 %v2029, %v2028
        %v2173 = vpack.c.b16 %v2031, %v2030
        %v2174 = vpack.c.b16 %v2033, %v2032
        %v2175 = vpack.c.b16 %v2035, %v2034
        %v2176 = vpack.c.b16 %v2037, %v2036
        %v2177 = vpack.c.b16 %v2039, %v2038
        %v2178 = vpack.c.b16 %v2041, %v2040
        %v2179 = vpack.c.b16 %v2043, %v2042
        %v2180 = vpack.c.b16 %v2045, %v2044
        %v2181 = vpack.c.b16 %v2047, %v2046
        %v2182 = vpack.c.b16 %v2049, %v2048
        %v2183 = vpack.c.b16 %v2051, %v2050
        %v2184 = vpack.c.b16 %v2053, %v2052
        %v2185 = vpack.c.b16 %v2055, %v2054
        %v2186 = vpack.c.b16 %v2057, %v2056
        %v2187 = vpack.c.b16 %v2059, %v2058
        %2316 = vmatprep.subr.bf16.mxu0 0
        %2317 = vmatpush1.bf16.msra.mxu0 %v2060
        %2318 = vmatprep.subr.bf16.mxu0 0
        %2319 = vmatpush1.bf16.msra.mxu0 %v2061
        %2320 = vmatprep.subr.bf16.mxu0 0
        %2321 = vmatpush1.bf16.msra.mxu0 %v2062
        %2322 = vmatprep.subr.bf16.mxu0 0
        %2323 = vmatpush1.bf16.msra.mxu0 %v2063
        %2324 = vmatprep.subr.bf16.mxu0 0
        %2325 = vmatpush1.bf16.msra.mxu0 %v2064
        %2326 = vmatprep.subr.bf16.mxu0 0
        %2327 = vmatpush1.bf16.msra.mxu0 %v2065
        %2328 = vmatprep.subr.bf16.mxu0 0
        %2329 = vmatpush1.bf16.msra.mxu0 %v2066
        %2330 = vmatprep.subr.bf16.mxu0 0
        %2331 = vmatpush1.bf16.msra.mxu0 %v2067
        %2332 = vmatprep.subr.bf16.mxu0 0
        %2333 = vmatpush1.bf16.msra.mxu0 %v2068
        %2334 = vmatprep.subr.bf16.mxu0 0
        %2335 = vmatpush1.bf16.msra.mxu0 %v2069
        %2336 = vmatprep.subr.bf16.mxu0 0
        %2337 = vmatpush1.bf16.msra.mxu0 %v2070
        %2338 = vmatprep.subr.bf16.mxu0 0
        %2339 = vmatpush1.bf16.msra.mxu0 %v2071
        %2340 = vmatprep.subr.bf16.mxu0 0
        %2341 = vmatpush1.bf16.msra.mxu0 %v2072
        %2342 = vmatprep.subr.bf16.mxu0 0
        %2343 = vmatpush1.bf16.msra.mxu0 %v2073
        %2344 = vmatprep.subr.bf16.mxu0 0
        %2345 = vmatpush1.bf16.msra.mxu0 %v2074
        %2346 = vmatprep.subr.bf16.mxu0 0
        %2347 = vmatpush1.bf16.msra.mxu0 %v2075
        %2348 = vmatprep.mubr.bf16.mxu0 %v1293
        %2349 = vmatmul.mubr.bf16.gmra.mrb[0].mxu0 %v1292
        %v2350 = vpop.f32.mrb[0].mxu0
        %v2351 = vadd.f32 0.0, %v2350
        %v2352 = vpop.f32.mrb[0].mxu0
        %v2353 = vpop.f32.mrb[0].mxu0
        %v2354 = vadd.f32 0.0, %v2353
        %v2355 = vpop.f32.mrb[0].mxu0
        %2356 = vmatprep.mubr.bf16.mxu0 %v1309
        %2357 = vmatmul.mubr.bf16.gmra.mrb[0].mxu0 %v1308
        %v2358 = vpop.f32.mrb[0].mxu0
        %v2359 = vadd.f32 0.0, %v2358
        %v2360 = vpop.f32.mrb[0].mxu0
        %v2361 = vpop.f32.mrb[0].mxu0
        %v2362 = vadd.f32 0.0, %v2361
        %v2363 = vpop.f32.mrb[0].mxu0
        %2364 = vmatprep.mubr.bf16.mxu0 %v1325
        %2365 = vmatmul.mubr.bf16.gmra.mrb[0].mxu0 %v1324
        %v2366 = vpop.f32.mrb[0].mxu0
        %v2367 = vadd.f32 0.0, %v2366
        %v2368 = vpop.f32.mrb[0].mxu0
        %v2369 = vpop.f32.mrb[0].mxu0
        %v2370 = vadd.f32 0.0, %v2369
        %v2371 = vpop.f32.mrb[0].mxu0
        %2372 = vmatprep.mubr.bf16.mxu0 %v1341
        %2373 = vmatmul.mubr.bf16.gmra.mrb[0].mxu0 %v1340
        %v2374 = vpop.f32.mrb[0].mxu0
        %v2375 = vadd.f32 0.0, %v2374
        %v2376 = vpop.f32.mrb[0].mxu0
        %v2377 = vpop.f32.mrb[0].mxu0
        %v2378 = vadd.f32 0.0, %v2377
        %v2379 = vpop.f32.mrb[0].mxu0
        %2380 = vmatprep.mubr.bf16.mxu0 %v1357
        %2381 = vmatmul.mubr.bf16.gmra.mrb[0].mxu0 %v1356
        %v2382 = vpop.f32.mrb[0].mxu0
        %v2383 = vadd.f32 0.0, %v2382
        %v2384 = vpop.f32.mrb[0].mxu0
        %v2385 = vpop.f32.mrb[0].mxu0
        %v2386 = vadd.f32 0.0, %v2385
        %v2387 = vpop.f32.mrb[0].mxu0
        %2388 = vmatprep.mubr.bf16.mxu0 %v1373
        %2389 = vmatmul.mubr.bf16.gmra.mrb[0].mxu0 %v1372
        %v2390 = vpop.f32.mrb[0].mxu0
        %v2391 = vadd.f32 0.0, %v2390
        %v2392 = vpop.f32.mrb[0].mxu0
        %v2393 = vpop.f32.mrb[0].mxu0
        %v2394 = vadd.f32 0.0, %v2393
        %v2395 = vpop.f32.mrb[0].mxu0
        %2396 = vmatprep.mubr.bf16.mxu0 %v1389
        %2397 = vmatmul.mubr.bf16.gmra.mrb[0].mxu0 %v1388
        %v2398 = vpop.f32.mrb[0].mxu0
        %v2399 = vadd.f32 0.0, %v2398
        %v2400 = vpop.f32.mrb[0].mxu0
        %v2401 = vpop.f32.mrb[0].mxu0
        %v2402 = vadd.f32 0.0, %v2401
        %v2403 = vpop.f32.mrb[0].mxu0
        %2404 = vmatprep.mubr.bf16.mxu0 %v1405
        %2405 = vmatmul.mubr.bf16.gmra.mrb[0].mxu0 %v1404
        %v2406 = vpop.f32.mrb[0].mxu0
        %v2407 = vadd.f32 0.0, %v2406
        %v2408 = vpop.f32.mrb[0].mxu0
        %v2409 = vpop.f32.mrb[0].mxu0
        %v2410 = vadd.f32 0.0, %v2409
        %v2411 = vpop.f32.mrb[0].mxu0
        %2412 = vdwg.mxu0
        %2413 = vmatprep.subr.bf16.mxu0 0
        %2414 = vmatpush1.bf16.msra.mxu0 %v2076
        %2415 = vmatprep.subr.bf16.mxu0 0
        %2416 = vmatpush1.bf16.msra.mxu0 %v2077
        %2417 = vmatprep.subr.bf16.mxu0 0
        %2418 = vmatpush1.bf16.msra.mxu0 %v2078
        %2419 = vmatprep.subr.bf16.mxu0 0
        %2420 = vmatpush1.bf16.msra.mxu0 %v2079
        %2421 = vmatprep.subr.bf16.mxu0 0
        %2422 = vmatpush1.bf16.msra.mxu0 %v2080
        %2423 = vmatprep.subr.bf16.mxu0 0
        %2424 = vmatpush1.bf16.msra.mxu0 %v2081
        %2425 = vmatprep.subr.bf16.mxu0 0
        %2426 = vmatpush1.bf16.msra.mxu0 %v2082
        %2427 = vmatprep.subr.bf16.mxu0 0
        %2428 = vmatpush1.bf16.msra.mxu0 %v2083
        %2429 = vmatprep.subr.bf16.mxu0 0
        %2430 = vmatpush1.bf16.msra.mxu0 %v2084
        %2431 = vmatprep.subr.bf16.mxu0 0
        %2432 = vmatpush1.bf16.msra.mxu0 %v2085
        %2433 = vmatprep.subr.bf16.mxu0 0
        %2434 = vmatpush1.bf16.msra.mxu0 %v2086
        %2435 = vmatprep.subr.bf16.mxu0 0
        %2436 = vmatpush1.bf16.msra.mxu0 %v2087
        %2437 = vmatprep.subr.bf16.mxu0 0
        %2438 = vmatpush1.bf16.msra.mxu0 %v2088
        %2439 = vmatprep.subr.bf16.mxu0 0
        %2440 = vmatpush1.bf16.msra.mxu0 %v2089
        %2441 = vmatprep.subr.bf16.mxu0 0
        %2442 = vmatpush1.bf16.msra.mxu0 %v2090
        %2443 = vmatprep.subr.bf16.mxu0 0
        %2444 = vmatpush1.bf16.msra.mxu0 %v2091
        %2445 = vmatprep.mubr.bf16.mxu0 %v1295
        %2446 = vmatmul.mubr.bf16.gmra.mrb[0].mxu0 %v1294
        %v2447 = vpop.f32.mrb[0].mxu0
        %v2448 = vadd.f32 %v2351, %v2447
        %v2449 = vpop.f32.mrb[0].mxu0
        %v2450 = vpop.f32.mrb[0].mxu0
        %v2451 = vadd.f32 %v2354, %v2450
        %v2452 = vpop.f32.mrb[0].mxu0
        %2453 = vmatprep.mubr.bf16.mxu0 %v1311
        %2454 = vmatmul.mubr.bf16.gmra.mrb[0].mxu0 %v1310
        %v2455 = vpop.f32.mrb[0].mxu0
        %v2456 = vadd.f32 %v2359, %v2455
        %v2457 = vpop.f32.mrb[0].mxu0
        %v2458 = vpop.f32.mrb[0].mxu0
        %v2459 = vadd.f32 %v2362, %v2458
        %v2460 = vpop.f32.mrb[0].mxu0
        %2461 = vmatprep.mubr.bf16.mxu0 %v1327
        %2462 = vmatmul.mubr.bf16.gmra.mrb[0].mxu0 %v1326
        %v2463 = vpop.f32.mrb[0].mxu0
        %v2464 = vadd.f32 %v2367, %v2463
        %v2465 = vpop.f32.mrb[0].mxu0
        %v2466 = vpop.f32.mrb[0].mxu0
        %v2467 = vadd.f32 %v2370, %v2466
        %v2468 = vpop.f32.mrb[0].mxu0
        %2469 = vmatprep.mubr.bf16.mxu0 %v1343
        %2470 = vmatmul.mubr.bf16.gmra.mrb[0].mxu0 %v1342
        %v2471 = vpop.f32.mrb[0].mxu0
        %v2472 = vadd.f32 %v2375, %v2471
        %v2473 = vpop.f32.mrb[0].mxu0
        %v2474 = vpop.f32.mrb[0].mxu0
        %v2475 = vadd.f32 %v2378, %v2474
        %v2476 = vpop.f32.mrb[0].mxu0
        %2477 = vmatprep.mubr.bf16.mxu0 %v1359
        %2478 = vmatmul.mubr.bf16.gmra.mrb[0].mxu0 %v1358
        %v2479 = vpop.f32.mrb[0].mxu0
        %v2480 = vadd.f32 %v2383, %v2479
        %v2481 = vpop.f32.mrb[0].mxu0
        %v2482 = vpop.f32.mrb[0].mxu0
        %v2483 = vadd.f32 %v2386, %v2482
        %v2484 = vpop.f32.mrb[0].mxu0
        %2485 = vmatprep.mubr.bf16.mxu0 %v1375
        %2486 = vmatmul.mubr.bf16.gmra.mrb[0].mxu0 %v1374
        %v2487 = vpop.f32.mrb[0].mxu0
        %v2488 = vadd.f32 %v2391, %v2487
        %v2489 = vpop.f32.mrb[0].mxu0
        %v2490 = vpop.f32.mrb[0].mxu0
        %v2491 = vadd.f32 %v2394, %v2490
        %v2492 = vpop.f32.mrb[0].mxu0
        %2493 = vmatprep.mubr.bf16.mxu0 %v1391
        %2494 = vmatmul.mubr.bf16.gmra.mrb[0].mxu0 %v1390
        %v2495 = vpop.f32.mrb[0].mxu0
        %v2496 = vadd.f32 %v2399, %v2495
        %v2497 = vpop.f32.mrb[0].mxu0
        %v2498 = vpop.f32.mrb[0].mxu0
        %v2499 = vadd.f32 %v2402, %v2498
        %v2500 = vpop.f32.mrb[0].mxu0
        %2501 = vmatprep.mubr.bf16.mxu0 %v1407
        %2502 = vmatmul.mubr.bf16.gmra.mrb[0].mxu0 %v1406
        %v2503 = vpop.f32.mrb[0].mxu0
        %v2504 = vadd.f32 %v2407, %v2503
        %v2505 = vpop.f32.mrb[0].mxu0
        %v2506 = vpop.f32.mrb[0].mxu0
        %v2507 = vadd.f32 %v2410, %v2506
        %v2508 = vpop.f32.mrb[0].mxu0
        %2509 = vdwg.mxu0
        %2510 = vmatprep.subr.bf16.mxu0 0
        %2511 = vmatpush1.bf16.msra.mxu0 %v2092
        %2512 = vmatprep.subr.bf16.mxu0 0
        %2513 = vmatpush1.bf16.msra.mxu0 %v2093
        %2514 = vmatprep.subr.bf16.mxu0 0
        %2515 = vmatpush1.bf16.msra.mxu0 %v2094
        %2516 = vmatprep.subr.bf16.mxu0 0
        %2517 = vmatpush1.bf16.msra.mxu0 %v2095
        %2518 = vmatprep.subr.bf16.mxu0 0
        %2519 = vmatpush1.bf16.msra.mxu0 %v2096
        %2520 = vmatprep.subr.bf16.mxu0 0
        %2521 = vmatpush1.bf16.msra.mxu0 %v2097
        %2522 = vmatprep.subr.bf16.mxu0 0
        %2523 = vmatpush1.bf16.msra.mxu0 %v2098
        %2524 = vmatprep.subr.bf16.mxu0 0
        %2525 = vmatpush1.bf16.msra.mxu0 %v2099
        %2526 = vmatprep.subr.bf16.mxu0 0
        %2527 = vmatpush1.bf16.msra.mxu0 %v2100
        %2528 = vmatprep.subr.bf16.mxu0 0
        %2529 = vmatpush1.bf16.msra.mxu0 %v2101
        %2530 = vmatprep.subr.bf16.mxu0 0
        %2531 = vmatpush1.bf16.msra.mxu0 %v2102
        %2532 = vmatprep.subr.bf16.mxu0 0
        %2533 = vmatpush1.bf16.msra.mxu0 %v2103
        %2534 = vmatprep.subr.bf16.mxu0 0
        %2535 = vmatpush1.bf16.msra.mxu0 %v2104
        %2536 = vmatprep.subr.bf16.mxu0 0
        %2537 = vmatpush1.bf16.msra.mxu0 %v2105
        %2538 = vmatprep.subr.bf16.mxu0 0
        %2539 = vmatpush1.bf16.msra.mxu0 %v2106
        %2540 = vmatprep.subr.bf16.mxu0 0
        %2541 = vmatpush1.bf16.msra.mxu0 %v2107
        %2542 = vmatprep.mubr.bf16.mxu0 %v1297
        %2543 = vmatmul.mubr.bf16.gmra.mrb[0].mxu0 %v1296
        %v2544 = vpop.f32.mrb[0].mxu0
        %v2545 = vadd.f32 %v2448, %v2544
        %v2546 = vpop.f32.mrb[0].mxu0
        %v2547 = vpop.f32.mrb[0].mxu0
        %v2548 = vadd.f32 %v2451, %v2547
        %v2549 = vpop.f32.mrb[0].mxu0
        %2550 = vmatprep.mubr.bf16.mxu0 %v1313
        %2551 = vmatmul.mubr.bf16.gmra.mrb[0].mxu0 %v1312
        %v2552 = vpop.f32.mrb[0].mxu0
        %v2553 = vadd.f32 %v2456, %v2552
        %v2554 = vpop.f32.mrb[0].mxu0
        %v2555 = vpop.f32.mrb[0].mxu0
        %v2556 = vadd.f32 %v2459, %v2555
        %v2557 = vpop.f32.mrb[0].mxu0
        %2558 = vmatprep.mubr.bf16.mxu0 %v1329
        %2559 = vmatmul.mubr.bf16.gmra.mrb[0].mxu0 %v1328
        %v2560 = vpop.f32.mrb[0].mxu0
        %v2561 = vadd.f32 %v2464, %v2560
        %v2562 = vpop.f32.mrb[0].mxu0
        %v2563 = vpop.f32.mrb[0].mxu0
        %v2564 = vadd.f32 %v2467, %v2563
        %v2565 = vpop.f32.mrb[0].mxu0
        %2566 = vmatprep.mubr.bf16.mxu0 %v1345
        %2567 = vmatmul.mubr.bf16.gmra.mrb[0].mxu0 %v1344
        %v2568 = vpop.f32.mrb[0].mxu0
        %v2569 = vadd.f32 %v2472, %v2568
        %v2570 = vpop.f32.mrb[0].mxu0
        %v2571 = vpop.f32.mrb[0].mxu0
        %v2572 = vadd.f32 %v2475, %v2571
        %v2573 = vpop.f32.mrb[0].mxu0
        %2574 = vmatprep.mubr.bf16.mxu0 %v1361
        %2575 = vmatmul.mubr.bf16.gmra.mrb[0].mxu0 %v1360
        %v2576 = vpop.f32.mrb[0].mxu0
        %v2577 = vadd.f32 %v2480, %v2576
        %v2578 = vpop.f32.mrb[0].mxu0
        %v2579 = vpop.f32.mrb[0].mxu0
        %v2580 = vadd.f32 %v2483, %v2579
        %v2581 = vpop.f32.mrb[0].mxu0
        %2582 = vmatprep.mubr.bf16.mxu0 %v1377
        %2583 = vmatmul.mubr.bf16.gmra.mrb[0].mxu0 %v1376
        %v2584 = vpop.f32.mrb[0].mxu0
        %v2585 = vadd.f32 %v2488, %v2584
        %v2586 = vpop.f32.mrb[0].mxu0
        %v2587 = vpop.f32.mrb[0].mxu0
        %v2588 = vadd.f32 %v2491, %v2587
        %v2589 = vpop.f32.mrb[0].mxu0
        %2590 = vmatprep.mubr.bf16.mxu0 %v1393
        %2591 = vmatmul.mubr.bf16.gmra.mrb[0].mxu0 %v1392
        %v2592 = vpop.f32.mrb[0].mxu0
        %v2593 = vadd.f32 %v2496, %v2592
        %v2594 = vpop.f32.mrb[0].mxu0
        %v2595 = vpop.f32.mrb[0].mxu0
        %v2596 = vadd.f32 %v2499, %v2595
        %v2597 = vpop.f32.mrb[0].mxu0
        %2598 = vmatprep.mubr.bf16.mxu0 %v1409
        %2599 = vmatmul.mubr.bf16.gmra.mrb[0].mxu0 %v1408
        %v2600 = vpop.f32.mrb[0].mxu0
        %v2601 = vadd.f32 %v2504, %v2600
        %v2602 = vpop.f32.mrb[0].mxu0
        %v2603 = vpop.f32.mrb[0].mxu0
        %v2604 = vadd.f32 %v2507, %v2603
        %v2605 = vpop.f32.mrb[0].mxu0
        %2606 = vdwg.mxu0
        %2607 = vmatprep.subr.bf16.mxu0 0
        %2608 = vmatpush1.bf16.msra.mxu0 %v2108
        %2609 = vmatprep.subr.bf16.mxu0 0
        %2610 = vmatpush1.bf16.msra.mxu0 %v2109
        %2611 = vmatprep.subr.bf16.mxu0 0
        %2612 = vmatpush1.bf16.msra.mxu0 %v2110
        %2613 = vmatprep.subr.bf16.mxu0 0
        %2614 = vmatpush1.bf16.msra.mxu0 %v2111
        %2615 = vmatprep.subr.bf16.mxu0 0
        %2616 = vmatpush1.bf16.msra.mxu0 %v2112
        %2617 = vmatprep.subr.bf16.mxu0 0
        %2618 = vmatpush1.bf16.msra.mxu0 %v2113
        %2619 = vmatprep.subr.bf16.mxu0 0
        %2620 = vmatpush1.bf16.msra.mxu0 %v2114
        %2621 = vmatprep.subr.bf16.mxu0 0
        %2622 = vmatpush1.bf16.msra.mxu0 %v2115
        %2623 = vmatprep.subr.bf16.mxu0 0
        %2624 = vmatpush1.bf16.msra.mxu0 %v2116
        %2625 = vmatprep.subr.bf16.mxu0 0
        %2626 = vmatpush1.bf16.msra.mxu0 %v2117
        %2627 = vmatprep.subr.bf16.mxu0 0
        %2628 = vmatpush1.bf16.msra.mxu0 %v2118
        %2629 = vmatprep.subr.bf16.mxu0 0
        %2630 = vmatpush1.bf16.msra.mxu0 %v2119
        %2631 = vmatprep.subr.bf16.mxu0 0
        %2632 = vmatpush1.bf16.msra.mxu0 %v2120
        %2633 = vmatprep.subr.bf16.mxu0 0
        %2634 = vmatpush1.bf16.msra.mxu0 %v2121
        %2635 = vmatprep.subr.bf16.mxu0 0
        %2636 = vmatpush1.bf16.msra.mxu0 %v2122
        %2637 = vmatprep.subr.bf16.mxu0 0
        %2638 = vmatpush1.bf16.msra.mxu0 %v2123
        %2639 = vmatprep.mubr.bf16.mxu0 %v1299
        %2640 = vmatmul.mubr.bf16.gmra.mrb[0].mxu0 %v1298
        %v2641 = vpop.f32.mrb[0].mxu0
        %v2642 = vadd.f32 %v2545, %v2641
        %v2643 = vpop.f32.mrb[0].mxu0
        %v2644 = vpop.f32.mrb[0].mxu0
        %v2645 = vadd.f32 %v2548, %v2644
        %v2646 = vpop.f32.mrb[0].mxu0
        %2647 = vmatprep.mubr.bf16.mxu0 %v1315
        %2648 = vmatmul.mubr.bf16.gmra.mrb[0].mxu0 %v1314
        %v2649 = vpop.f32.mrb[0].mxu0
        %v2650 = vadd.f32 %v2553, %v2649
        %v2651 = vpop.f32.mrb[0].mxu0
        %v2652 = vpop.f32.mrb[0].mxu0
        %v2653 = vadd.f32 %v2556, %v2652
        %v2654 = vpop.f32.mrb[0].mxu0
        %2655 = vmatprep.mubr.bf16.mxu0 %v1331
        %2656 = vmatmul.mubr.bf16.gmra.mrb[0].mxu0 %v1330
        %v2657 = vpop.f32.mrb[0].mxu0
        %v2658 = vadd.f32 %v2561, %v2657
        %v2659 = vpop.f32.mrb[0].mxu0
        %v2660 = vpop.f32.mrb[0].mxu0
        %v2661 = vadd.f32 %v2564, %v2660
        %v2662 = vpop.f32.mrb[0].mxu0
        %2663 = vmatprep.mubr.bf16.mxu0 %v1347
        %2664 = vmatmul.mubr.bf16.gmra.mrb[0].mxu0 %v1346
        %v2665 = vpop.f32.mrb[0].mxu0
        %v2666 = vadd.f32 %v2569, %v2665
        %v2667 = vpop.f32.mrb[0].mxu0
        %v2668 = vpop.f32.mrb[0].mxu0
        %v2669 = vadd.f32 %v2572, %v2668
        %v2670 = vpop.f32.mrb[0].mxu0
        %2671 = vmatprep.mubr.bf16.mxu0 %v1363
        %2672 = vmatmul.mubr.bf16.gmra.mrb[0].mxu0 %v1362
        %v2673 = vpop.f32.mrb[0].mxu0
        %v2674 = vadd.f32 %v2577, %v2673
        %v2675 = vpop.f32.mrb[0].mxu0
        %v2676 = vpop.f32.mrb[0].mxu0
        %v2677 = vadd.f32 %v2580, %v2676
        %v2678 = vpop.f32.mrb[0].mxu0
        %2679 = vmatprep.mubr.bf16.mxu0 %v1379
        %2680 = vmatmul.mubr.bf16.gmra.mrb[0].mxu0 %v1378
        %v2681 = vpop.f32.mrb[0].mxu0
        %v2682 = vadd.f32 %v2585, %v2681
        %v2683 = vpop.f32.mrb[0].mxu0
        %v2684 = vpop.f32.mrb[0].mxu0
        %v2685 = vadd.f32 %v2588, %v2684
        %v2686 = vpop.f32.mrb[0].mxu0
        %2687 = vmatprep.mubr.bf16.mxu0 %v1395
        %2688 = vmatmul.mubr.bf16.gmra.mrb[0].mxu0 %v1394
        %v2689 = vpop.f32.mrb[0].mxu0
        %v2690 = vadd.f32 %v2593, %v2689
        %v2691 = vpop.f32.mrb[0].mxu0
        %v2692 = vpop.f32.mrb[0].mxu0
        %v2693 = vadd.f32 %v2596, %v2692
        %v2694 = vpop.f32.mrb[0].mxu0
        %2695 = vmatprep.mubr.bf16.mxu0 %v1411
        %2696 = vmatmul.mubr.bf16.gmra.mrb[0].mxu0 %v1410
        %v2697 = vpop.f32.mrb[0].mxu0
        %v2698 = vadd.f32 %v2601, %v2697
        %v2699 = vpop.f32.mrb[0].mxu0
        %v2700 = vpop.f32.mrb[0].mxu0
        %v2701 = vadd.f32 %v2604, %v2700
        %v2702 = vpop.f32.mrb[0].mxu0
        %2703 = vdwg.mxu0
        %2704 = vmatprep.subr.bf16.mxu0 0
        %2705 = vmatpush1.bf16.msra.mxu0 %v2124
        %2706 = vmatprep.subr.bf16.mxu0 0
        %2707 = vmatpush1.bf16.msra.mxu0 %v2125
        %2708 = vmatprep.subr.bf16.mxu0 0
        %2709 = vmatpush1.bf16.msra.mxu0 %v2126
        %2710 = vmatprep.subr.bf16.mxu0 0
        %2711 = vmatpush1.bf16.msra.mxu0 %v2127
        %2712 = vmatprep.subr.bf16.mxu0 0
        %2713 = vmatpush1.bf16.msra.mxu0 %v2128
        %2714 = vmatprep.subr.bf16.mxu0 0
        %2715 = vmatpush1.bf16.msra.mxu0 %v2129
        %2716 = vmatprep.subr.bf16.mxu0 0
        %2717 = vmatpush1.bf16.msra.mxu0 %v2130
        %2718 = vmatprep.subr.bf16.mxu0 0
        %2719 = vmatpush1.bf16.msra.mxu0 %v2131
        %2720 = vmatprep.subr.bf16.mxu0 0
        %2721 = vmatpush1.bf16.msra.mxu0 %v2132
        %2722 = vmatprep.subr.bf16.mxu0 0
        %2723 = vmatpush1.bf16.msra.mxu0 %v2133
        %2724 = vmatprep.subr.bf16.mxu0 0
        %2725 = vmatpush1.bf16.msra.mxu0 %v2134
        %2726 = vmatprep.subr.bf16.mxu0 0
        %2727 = vmatpush1.bf16.msra.mxu0 %v2135
        %2728 = vmatprep.subr.bf16.mxu0 0
        %2729 = vmatpush1.bf16.msra.mxu0 %v2136
        %2730 = vmatprep.subr.bf16.mxu0 0
        %2731 = vmatpush1.bf16.msra.mxu0 %v2137
        %2732 = vmatprep.subr.bf16.mxu0 0
        %2733 = vmatpush1.bf16.msra.mxu0 %v2138
        %2734 = vmatprep.subr.bf16.mxu0 0
        %2735 = vmatpush1.bf16.msra.mxu0 %v2139
        %2736 = vmatprep.mubr.bf16.mxu0 %v1301
        %2737 = vmatmul.mubr.bf16.gmra.mrb[0].mxu0 %v1300
        %v2738 = vpop.f32.mrb[0].mxu0
        %v2739 = vadd.f32 %v2642, %v2738
        %v2740 = vpop.f32.mrb[0].mxu0
        %v2741 = vpop.f32.mrb[0].mxu0
        %v2742 = vadd.f32 %v2645, %v2741
        %v2743 = vpop.f32.mrb[0].mxu0
        %2744 = vmatprep.mubr.bf16.mxu0 %v1317
        %2745 = vmatmul.mubr.bf16.gmra.mrb[0].mxu0 %v1316
        %v2746 = vpop.f32.mrb[0].mxu0
        %v2747 = vadd.f32 %v2650, %v2746
        %v2748 = vpop.f32.mrb[0].mxu0
        %v2749 = vpop.f32.mrb[0].mxu0
        %v2750 = vadd.f32 %v2653, %v2749
        %v2751 = vpop.f32.mrb[0].mxu0
        %2752 = vmatprep.mubr.bf16.mxu0 %v1333
        %2753 = vmatmul.mubr.bf16.gmra.mrb[0].mxu0 %v1332
        %v2754 = vpop.f32.mrb[0].mxu0
        %v2755 = vadd.f32 %v2658, %v2754
        %v2756 = vpop.f32.mrb[0].mxu0
        %v2757 = vpop.f32.mrb[0].mxu0
        %v2758 = vadd.f32 %v2661, %v2757
        %v2759 = vpop.f32.mrb[0].mxu0
        %2760 = vmatprep.mubr.bf16.mxu0 %v1349
        %2761 = vmatmul.mubr.bf16.gmra.mrb[0].mxu0 %v1348
        %v2762 = vpop.f32.mrb[0].mxu0
        %v2763 = vadd.f32 %v2666, %v2762
        %v2764 = vpop.f32.mrb[0].mxu0
        %v2765 = vpop.f32.mrb[0].mxu0
        %v2766 = vadd.f32 %v2669, %v2765
        %v2767 = vpop.f32.mrb[0].mxu0
        %2768 = vmatprep.mubr.bf16.mxu0 %v1365
        %2769 = vmatmul.mubr.bf16.gmra.mrb[0].mxu0 %v1364
        %v2770 = vpop.f32.mrb[0].mxu0
        %v2771 = vadd.f32 %v2674, %v2770
        %v2772 = vpop.f32.mrb[0].mxu0
        %v2773 = vpop.f32.mrb[0].mxu0
        %v2774 = vadd.f32 %v2677, %v2773
        %v2775 = vpop.f32.mrb[0].mxu0
        %2776 = vmatprep.mubr.bf16.mxu0 %v1381
        %2777 = vmatmul.mubr.bf16.gmra.mrb[0].mxu0 %v1380
        %v2778 = vpop.f32.mrb[0].mxu0
        %v2779 = vadd.f32 %v2682, %v2778
        %v2780 = vpop.f32.mrb[0].mxu0
        %v2781 = vpop.f32.mrb[0].mxu0
        %v2782 = vadd.f32 %v2685, %v2781
        %v2783 = vpop.f32.mrb[0].mxu0
        %2784 = vmatprep.mubr.bf16.mxu0 %v1397
        %2785 = vmatmul.mubr.bf16.gmra.mrb[0].mxu0 %v1396
        %v2786 = vpop.f32.mrb[0].mxu0
        %v2787 = vadd.f32 %v2690, %v2786
        %v2788 = vpop.f32.mrb[0].mxu0
        %v2789 = vpop.f32.mrb[0].mxu0
        %v2790 = vadd.f32 %v2693, %v2789
        %v2791 = vpop.f32.mrb[0].mxu0
        %2792 = vmatprep.mubr.bf16.mxu0 %v1413
        %2793 = vmatmul.mubr.bf16.gmra.mrb[0].mxu0 %v1412
        %v2794 = vpop.f32.mrb[0].mxu0
        %v2795 = vadd.f32 %v2698, %v2794
        %v2796 = vpop.f32.mrb[0].mxu0
        %v2797 = vpop.f32.mrb[0].mxu0
        %v2798 = vadd.f32 %v2701, %v2797
        %v2799 = vpop.f32.mrb[0].mxu0
        %2800 = vdwg.mxu0
        %2801 = vmatprep.subr.bf16.mxu0 0
        %2802 = vmatpush1.bf16.msra.mxu0 %v2140
        %2803 = vmatprep.subr.bf16.mxu0 0
        %2804 = vmatpush1.bf16.msra.mxu0 %v2141
        %2805 = vmatprep.subr.bf16.mxu0 0
        %2806 = vmatpush1.bf16.msra.mxu0 %v2142
        %2807 = vmatprep.subr.bf16.mxu0 0
        %2808 = vmatpush1.bf16.msra.mxu0 %v2143
        %2809 = vmatprep.subr.bf16.mxu0 0
        %2810 = vmatpush1.bf16.msra.mxu0 %v2144
        %2811 = vmatprep.subr.bf16.mxu0 0
        %2812 = vmatpush1.bf16.msra.mxu0 %v2145
        %2813 = vmatprep.subr.bf16.mxu0 0
        %2814 = vmatpush1.bf16.msra.mxu0 %v2146
        %2815 = vmatprep.subr.bf16.mxu0 0
        %2816 = vmatpush1.bf16.msra.mxu0 %v2147
        %2817 = vmatprep.subr.bf16.mxu0 0
        %2818 = vmatpush1.bf16.msra.mxu0 %v2148
        %2819 = vmatprep.subr.bf16.mxu0 0
        %2820 = vmatpush1.bf16.msra.mxu0 %v2149
        %2821 = vmatprep.subr.bf16.mxu0 0
        %2822 = vmatpush1.bf16.msra.mxu0 %v2150
        %2823 = vmatprep.subr.bf16.mxu0 0
        %2824 = vmatpush1.bf16.msra.mxu0 %v2151
        %2825 = vmatprep.subr.bf16.mxu0 0
        %2826 = vmatpush1.bf16.msra.mxu0 %v2152
        %2827 = vmatprep.subr.bf16.mxu0 0
        %2828 = vmatpush1.bf16.msra.mxu0 %v2153
        %2829 = vmatprep.subr.bf16.mxu0 0
        %2830 = vmatpush1.bf16.msra.mxu0 %v2154
        %2831 = vmatprep.subr.bf16.mxu0 0
        %2832 = vmatpush1.bf16.msra.mxu0 %v2155
        %2833 = vmatprep.mubr.bf16.mxu0 %v1303
        %2834 = vmatmul.mubr.bf16.gmra.mrb[0].mxu0 %v1302
        %v2835 = vpop.f32.mrb[0].mxu0
        %v2836 = vadd.f32 %v2739, %v2835
        %v2837 = vpop.f32.mrb[0].mxu0
        %v2838 = vpop.f32.mrb[0].mxu0
        %v2839 = vadd.f32 %v2742, %v2838
        %v2840 = vpop.f32.mrb[0].mxu0
        %2841 = vmatprep.mubr.bf16.mxu0 %v1319
        %2842 = vmatmul.mubr.bf16.gmra.mrb[0].mxu0 %v1318
        %v2843 = vpop.f32.mrb[0].mxu0
        %v2844 = vadd.f32 %v2747, %v2843
        %v2845 = vpop.f32.mrb[0].mxu0
        %v2846 = vpop.f32.mrb[0].mxu0
        %v2847 = vadd.f32 %v2750, %v2846
        %v2848 = vpop.f32.mrb[0].mxu0
        %2849 = vmatprep.mubr.bf16.mxu0 %v1335
        %2850 = vmatmul.mubr.bf16.gmra.mrb[0].mxu0 %v1334
        %v2851 = vpop.f32.mrb[0].mxu0
        %v2852 = vadd.f32 %v2755, %v2851
        %v2853 = vpop.f32.mrb[0].mxu0
        %v2854 = vpop.f32.mrb[0].mxu0
        %v2855 = vadd.f32 %v2758, %v2854
        %v2856 = vpop.f32.mrb[0].mxu0
        %2857 = vmatprep.mubr.bf16.mxu0 %v1351
        %2858 = vmatmul.mubr.bf16.gmra.mrb[0].mxu0 %v1350
        %v2859 = vpop.f32.mrb[0].mxu0
        %v2860 = vadd.f32 %v2763, %v2859
        %v2861 = vpop.f32.mrb[0].mxu0
        %v2862 = vpop.f32.mrb[0].mxu0
        %v2863 = vadd.f32 %v2766, %v2862
        %v2864 = vpop.f32.mrb[0].mxu0
        %2865 = vmatprep.mubr.bf16.mxu0 %v1367
        %2866 = vmatmul.mubr.bf16.gmra.mrb[0].mxu0 %v1366
        %v2867 = vpop.f32.mrb[0].mxu0
        %v2868 = vadd.f32 %v2771, %v2867
        %v2869 = vpop.f32.mrb[0].mxu0
        %v2870 = vpop.f32.mrb[0].mxu0
        %v2871 = vadd.f32 %v2774, %v2870
        %v2872 = vpop.f32.mrb[0].mxu0
        %2873 = vmatprep.mubr.bf16.mxu0 %v1383
        %2874 = vmatmul.mubr.bf16.gmra.mrb[0].mxu0 %v1382
        %v2875 = vpop.f32.mrb[0].mxu0
        %v2876 = vadd.f32 %v2779, %v2875
        %v2877 = vpop.f32.mrb[0].mxu0
        %v2878 = vpop.f32.mrb[0].mxu0
        %v2879 = vadd.f32 %v2782, %v2878
        %v2880 = vpop.f32.mrb[0].mxu0
        %2881 = vmatprep.mubr.bf16.mxu0 %v1399
        %2882 = vmatmul.mubr.bf16.gmra.mrb[0].mxu0 %v1398
        %v2883 = vpop.f32.mrb[0].mxu0
        %v2884 = vadd.f32 %v2787, %v2883
        %v2885 = vpop.f32.mrb[0].mxu0
        %v2886 = vpop.f32.mrb[0].mxu0
        %v2887 = vadd.f32 %v2790, %v2886
        %v2888 = vpop.f32.mrb[0].mxu0
        %2889 = vmatprep.mubr.bf16.mxu0 %v1415
        %2890 = vmatmul.mubr.bf16.gmra.mrb[0].mxu0 %v1414
        %v2891 = vpop.f32.mrb[0].mxu0
        %v2892 = vadd.f32 %v2795, %v2891
        %v2893 = vpop.f32.mrb[0].mxu0
        %v2894 = vpop.f32.mrb[0].mxu0
        %v2895 = vadd.f32 %v2798, %v2894
        %v2896 = vpop.f32.mrb[0].mxu0
        %2897 = vdwg.mxu0
        %2898 = vmatprep.subr.bf16.mxu0 0
        %2899 = vmatpush1.bf16.msra.mxu0 %v2156
        %2900 = vmatprep.subr.bf16.mxu0 0
        %2901 = vmatpush1.bf16.msra.mxu0 %v2157
        %2902 = vmatprep.subr.bf16.mxu0 0
        %2903 = vmatpush1.bf16.msra.mxu0 %v2158
        %2904 = vmatprep.subr.bf16.mxu0 0
        %2905 = vmatpush1.bf16.msra.mxu0 %v2159
        %2906 = vmatprep.subr.bf16.mxu0 0
        %2907 = vmatpush1.bf16.msra.mxu0 %v2160
        %2908 = vmatprep.subr.bf16.mxu0 0
        %2909 = vmatpush1.bf16.msra.mxu0 %v2161
        %2910 = vmatprep.subr.bf16.mxu0 0
        %2911 = vmatpush1.bf16.msra.mxu0 %v2162
        %2912 = vmatprep.subr.bf16.mxu0 0
        %2913 = vmatpush1.bf16.msra.mxu0 %v2163
        %2914 = vmatprep.subr.bf16.mxu0 0
        %2915 = vmatpush1.bf16.msra.mxu0 %v2164
        %2916 = vmatprep.subr.bf16.mxu0 0
        %2917 = vmatpush1.bf16.msra.mxu0 %v2165
        %2918 = vmatprep.subr.bf16.mxu0 0
        %2919 = vmatpush1.bf16.msra.mxu0 %v2166
        %2920 = vmatprep.subr.bf16.mxu0 0
        %2921 = vmatpush1.bf16.msra.mxu0 %v2167
        %2922 = vmatprep.subr.bf16.mxu0 0
        %2923 = vmatpush1.bf16.msra.mxu0 %v2168
        %2924 = vmatprep.subr.bf16.mxu0 0
        %2925 = vmatpush1.bf16.msra.mxu0 %v2169
        %2926 = vmatprep.subr.bf16.mxu0 0
        %2927 = vmatpush1.bf16.msra.mxu0 %v2170
        %2928 = vmatprep.subr.bf16.mxu0 0
        %2929 = vmatpush1.bf16.msra.mxu0 %v2171
        %2930 = vmatprep.mubr.bf16.mxu0 %v1305
        %2931 = vmatmul.mubr.bf16.gmra.mrb[0].mxu0 %v1304
        %v2932 = vpop.f32.mrb[0].mxu0
        %v2933 = vadd.f32 %v2836, %v2932
        %v2934 = vpop.f32.mrb[0].mxu0
        %v2935 = vpop.f32.mrb[0].mxu0
        %v2936 = vadd.f32 %v2839, %v2935
        %v2937 = vpop.f32.mrb[0].mxu0
        %2938 = vmatprep.mubr.bf16.mxu0 %v1321
        %2939 = vmatmul.mubr.bf16.gmra.mrb[0].mxu0 %v1320
        %v2940 = vpop.f32.mrb[0].mxu0
        %v2941 = vadd.f32 %v2844, %v2940
        %v2942 = vpop.f32.mrb[0].mxu0
        %v2943 = vpop.f32.mrb[0].mxu0
        %v2944 = vadd.f32 %v2847, %v2943
        %v2945 = vpop.f32.mrb[0].mxu0
        %2946 = vmatprep.mubr.bf16.mxu0 %v1337
        %2947 = vmatmul.mubr.bf16.gmra.mrb[0].mxu0 %v1336
        %v2948 = vpop.f32.mrb[0].mxu0
        %v2949 = vadd.f32 %v2852, %v2948
        %v2950 = vpop.f32.mrb[0].mxu0
        %v2951 = vpop.f32.mrb[0].mxu0
        %v2952 = vadd.f32 %v2855, %v2951
        %v2953 = vpop.f32.mrb[0].mxu0
        %2954 = vmatprep.mubr.bf16.mxu0 %v1353
        %2955 = vmatmul.mubr.bf16.gmra.mrb[0].mxu0 %v1352
        %v2956 = vpop.f32.mrb[0].mxu0
        %v2957 = vadd.f32 %v2860, %v2956
        %v2958 = vpop.f32.mrb[0].mxu0
        %v2959 = vpop.f32.mrb[0].mxu0
        %v2960 = vadd.f32 %v2863, %v2959
        %v2961 = vpop.f32.mrb[0].mxu0
        %2962 = vmatprep.mubr.bf16.mxu0 %v1369
        %2963 = vmatmul.mubr.bf16.gmra.mrb[0].mxu0 %v1368
        %v2964 = vpop.f32.mrb[0].mxu0
        %v2965 = vadd.f32 %v2868, %v2964
        %v2966 = vpop.f32.mrb[0].mxu0
        %v2967 = vpop.f32.mrb[0].mxu0
        %v2968 = vadd.f32 %v2871, %v2967
        %v2969 = vpop.f32.mrb[0].mxu0
        %2970 = vmatprep.mubr.bf16.mxu0 %v1385
        %2971 = vmatmul.mubr.bf16.gmra.mrb[0].mxu0 %v1384
        %v2972 = vpop.f32.mrb[0].mxu0
        %v2973 = vadd.f32 %v2876, %v2972
        %v2974 = vpop.f32.mrb[0].mxu0
        %v2975 = vpop.f32.mrb[0].mxu0
        %v2976 = vadd.f32 %v2879, %v2975
        %v2977 = vpop.f32.mrb[0].mxu0
        %2978 = vmatprep.mubr.bf16.mxu0 %v1401
        %2979 = vmatmul.mubr.bf16.gmra.mrb[0].mxu0 %v1400
        %v2980 = vpop.f32.mrb[0].mxu0
        %v2981 = vadd.f32 %v2884, %v2980
        %v2982 = vpop.f32.mrb[0].mxu0
        %v2983 = vpop.f32.mrb[0].mxu0
        %v2984 = vadd.f32 %v2887, %v2983
        %v2985 = vpop.f32.mrb[0].mxu0
        %2986 = vmatprep.mubr.bf16.mxu0 %v1417
        %2987 = vmatmul.mubr.bf16.gmra.mrb[0].mxu0 %v1416
        %v2988 = vpop.f32.mrb[0].mxu0
        %v2989 = vadd.f32 %v2892, %v2988
        %v2990 = vpop.f32.mrb[0].mxu0
        %v2991 = vpop.f32.mrb[0].mxu0
        %v2992 = vadd.f32 %v2895, %v2991
        %v2993 = vpop.f32.mrb[0].mxu0
        %2994 = vdwg.mxu0
        %2995 = vmatprep.subr.bf16.mxu0 0
        %2996 = vmatpush1.bf16.msra.mxu0 %v2172
        %2997 = vmatprep.subr.bf16.mxu0 0
        %2998 = vmatpush1.bf16.msra.mxu0 %v2173
        %2999 = vmatprep.subr.bf16.mxu0 0
        %3000 = vmatpush1.bf16.msra.mxu0 %v2174
        %3001 = vmatprep.subr.bf16.mxu0 0
        %3002 = vmatpush1.bf16.msra.mxu0 %v2175
        %3003 = vmatprep.subr.bf16.mxu0 0
        %3004 = vmatpush1.bf16.msra.mxu0 %v2176
        %3005 = vmatprep.subr.bf16.mxu0 0
        %3006 = vmatpush1.bf16.msra.mxu0 %v2177
        %3007 = vmatprep.subr.bf16.mxu0 0
        %3008 = vmatpush1.bf16.msra.mxu0 %v2178
        %3009 = vmatprep.subr.bf16.mxu0 0
        %3010 = vmatpush1.bf16.msra.mxu0 %v2179
        %3011 = vmatprep.subr.bf16.mxu0 0
        %3012 = vmatpush1.bf16.msra.mxu0 %v2180
        %3013 = vmatprep.subr.bf16.mxu0 0
        %3014 = vmatpush1.bf16.msra.mxu0 %v2181
        %3015 = vmatprep.subr.bf16.mxu0 0
        %3016 = vmatpush1.bf16.msra.mxu0 %v2182
        %3017 = vmatprep.subr.bf16.mxu0 0
        %3018 = vmatpush1.bf16.msra.mxu0 %v2183
        %3019 = vmatprep.subr.bf16.mxu0 0
        %3020 = vmatpush1.bf16.msra.mxu0 %v2184
        %3021 = vmatprep.subr.bf16.mxu0 0
        %3022 = vmatpush1.bf16.msra.mxu0 %v2185
        %3023 = vmatprep.subr.bf16.mxu0 0
        %3024 = vmatpush1.bf16.msra.mxu0 %v2186
        %3025 = vmatprep.subr.bf16.mxu0 0
        %3026 = vmatpush1.bf16.msra.mxu0 %v2187
        %3027 = vmatprep.mubr.bf16.mxu0 %v1307
        %3028 = vmatmul.mubr.bf16.gmra.mrb[0].mxu0 %v1306
        %v3029 = vpop.f32.mrb[0].mxu0
        %v3030 = vadd.f32 %v2933, %v3029
        %v3031 = vpop.f32.mrb[0].mxu0
        %v3032 = vpop.f32.mrb[0].mxu0
        %v3033 = vadd.f32 %v2936, %v3032
        %v3034 = vpop.f32.mrb[0].mxu0
        %3035 = vmatprep.mubr.bf16.mxu0 %v1323
        %3036 = vmatmul.mubr.bf16.gmra.mrb[0].mxu0 %v1322
        %v3037 = vpop.f32.mrb[0].mxu0
        %v3038 = vadd.f32 %v2941, %v3037
        %v3039 = vpop.f32.mrb[0].mxu0
        %v3040 = vpop.f32.mrb[0].mxu0
        %v3041 = vadd.f32 %v2944, %v3040
        %v3042 = vpop.f32.mrb[0].mxu0
        %3043 = vmatprep.mubr.bf16.mxu0 %v1339
        %3044 = vmatmul.mubr.bf16.gmra.mrb[0].mxu0 %v1338
        %v3045 = vpop.f32.mrb[0].mxu0
        %v3046 = vadd.f32 %v2949, %v3045
        %v3047 = vpop.f32.mrb[0].mxu0
        %v3048 = vpop.f32.mrb[0].mxu0
        %v3049 = vadd.f32 %v2952, %v3048
        %v3050 = vpop.f32.mrb[0].mxu0
        %3051 = vmatprep.mubr.bf16.mxu0 %v1355
        %3052 = vmatmul.mubr.bf16.gmra.mrb[0].mxu0 %v1354
        %v3053 = vpop.f32.mrb[0].mxu0
        %v3054 = vadd.f32 %v2957, %v3053
        %v3055 = vpop.f32.mrb[0].mxu0
        %v3056 = vpop.f32.mrb[0].mxu0
        %v3057 = vadd.f32 %v2960, %v3056
        %v3058 = vpop.f32.mrb[0].mxu0
        %3059 = vmatprep.mubr.bf16.mxu0 %v1371
        %3060 = vmatmul.mubr.bf16.gmra.mrb[0].mxu0 %v1370
        %v3061 = vpop.f32.mrb[0].mxu0
        %v3062 = vadd.f32 %v2965, %v3061
        %v3063 = vpop.f32.mrb[0].mxu0
        %v3064 = vpop.f32.mrb[0].mxu0
        %v3065 = vadd.f32 %v2968, %v3064
        %v3066 = vpop.f32.mrb[0].mxu0
        %3067 = vmatprep.mubr.bf16.mxu0 %v1387
        %3068 = vmatmul.mubr.bf16.gmra.mrb[0].mxu0 %v1386
        %v3069 = vpop.f32.mrb[0].mxu0
        %v3070 = vadd.f32 %v2973, %v3069
        %v3071 = vpop.f32.mrb[0].mxu0
        %v3072 = vpop.f32.mrb[0].mxu0
        %v3073 = vadd.f32 %v2976, %v3072
        %v3074 = vpop.f32.mrb[0].mxu0
        %3075 = vmatprep.mubr.bf16.mxu0 %v1403
        %3076 = vmatmul.mubr.bf16.gmra.mrb[0].mxu0 %v1402
        %v3077 = vpop.f32.mrb[0].mxu0
        %v3078 = vadd.f32 %v2981, %v3077
        %v3079 = vpop.f32.mrb[0].mxu0
        %v3080 = vpop.f32.mrb[0].mxu0
        %v3081 = vadd.f32 %v2984, %v3080
        %v3082 = vpop.f32.mrb[0].mxu0
        %3083 = vmatprep.mubr.bf16.mxu0 %v1419
        %3084 = vmatmul.mubr.bf16.gmra.mrb[0].mxu0 %v1418
        %v3085 = vpop.f32.mrb[0].mxu0
        %v3086 = vadd.f32 %v2989, %v3085
        %v3087 = vpop.f32.mrb[0].mxu0
        %v3088 = vpop.f32.mrb[0].mxu0
        %v3089 = vadd.f32 %v2992, %v3088
        %v3090 = vpop.f32.mrb[0].mxu0
        %3091 = vdwg.mxu0
        %v3092 = vadd.f32 %v508, %v3030
        %v3093 = vadd.f32 %v509, %v3033
        %v3094 = vadd.f32 %v510, %v3038
        %v3095 = vadd.f32 %v511, %v3041
        %v3096 = vadd.f32 %v512, %v3046
        %v3097 = vadd.f32 %v513, %v3049
        %v3098 = vadd.f32 %v514, %v3054
        %v3099 = vadd.f32 %v515, %v3057
        %v3100 = vadd.f32 %v516, %v3062
        %v3101 = vadd.f32 %v517, %v3065
        %v3102 = vadd.f32 %v518, %v3070
        %v3103 = vadd.f32 %v519, %v3073
        %v3104 = vadd.f32 %v520, %v3078
        %v3105 = vadd.f32 %v521, %v3081
        %v3106 = vadd.f32 %v522, %v3086
        %v3107 = vadd.f32 %v523, %v3089
        %3108 = vst [vmem:[#allocation2] sm:$0xff] %v3092
        %3109 = vst [vmem:[#allocation2 + $0x8] sm:$0xff] %v3093
        %3110 = vst [vmem:[#allocation2 + $0x10] sm:$0xff] %v3094
        %3111 = vst [vmem:[#allocation2 + $0x18] sm:$0xff] %v3095
        %3112 = vst [vmem:[#allocation2 + $0x20] sm:$0xff] %v3096
        %3113 = vst [vmem:[#allocation2 + $0x28] sm:$0xff] %v3097
        %3114 = vst [vmem:[#allocation2 + $0x30] sm:$0xff] %v3098
        %3115 = vst [vmem:[#allocation2 + $0x38] sm:$0xff] %v3099
        %3116 = vst [vmem:[#allocation2 + $0x40] sm:$0xff] %v3100
        %3117 = vst [vmem:[#allocation2 + $0x48] sm:$0xff] %v3101
        %3118 = vst [vmem:[#allocation2 + $0x50] sm:$0xff] %v3102
        %3119 = vst [vmem:[#allocation2 + $0x58] sm:$0xff] %v3103
        %3120 = vst [vmem:[#allocation2 + $0x60] sm:$0xff] %v3104
        %3121 = vst [vmem:[#allocation2 + $0x68] sm:$0xff] %v3105
        %3122 = vst [vmem:[#allocation2 + $0x70] sm:$0xff] %v3106
        %3123 = vst [vmem:[#allocation2 + $0x78] sm:$0xff] %v3107
        %p3124 = scmp.eq.s32.totalorder %s19, 3
        // Predicated region
        $region60: #{_lambda_.15} parent=50 // pred_check
          %p3125 = pneg %p3124
        $region61: #{_lambda_.15} parent=50 // pred_check_branch
          %3127 = sbr.rel (%p3125) target = $region63
        $region62: #{_lambda_.15} parent=50 // pred_region
          %v3128 = vld [vmem:[#allocation2] sm:$0xff]
          %v3129 = vld [vmem:[#allocation2 + $0x8] sm:$0xff]
          %v3130 = vld [vmem:[#allocation2 + $0x10] sm:$0xff]
          %v3131 = vld [vmem:[#allocation2 + $0x18] sm:$0xff]
          %v3132 = vld [vmem:[#allocation2 + $0x20] sm:$0xff]
          %v3133 = vld [vmem:[#allocation2 + $0x28] sm:$0xff]
          %v3134 = vld [vmem:[#allocation2 + $0x30] sm:$0xff]
          %v3135 = vld [vmem:[#allocation2 + $0x38] sm:$0xff]
          %v3136 = vld [vmem:[#allocation2 + $0x40] sm:$0xff]
          %v3137 = vld [vmem:[#allocation2 + $0x48] sm:$0xff]
          %v3138 = vld [vmem:[#allocation2 + $0x50] sm:$0xff]
          %v3139 = vld [vmem:[#allocation2 + $0x58] sm:$0xff]
          %v3140 = vld [vmem:[#allocation2 + $0x60] sm:$0xff]
          %v3141 = vld [vmem:[#allocation2 + $0x68] sm:$0xff]
          %v3142 = vld [vmem:[#allocation2 + $0x70] sm:$0xff]
          %v3143 = vld [vmem:[#allocation2 + $0x78] sm:$0xff]
          %v3144 = vld [vmem:[%s2] sm:$0x1]
          %v3146 = vlaneseq
          %v3147 = vshrl.u32 %v3146, 7
          %v3148 = vsub.s32 0, %v3147
          %v3149 = vrot.slane %v3144, %v3148
          %v3151 = vadd.f32 %v3128, %v3149
          %v3152 = vadd.f32 %v3129, %v3149
          %v3153 = vadd.f32 %v3130, %v3149
          %v3154 = vadd.f32 %v3131, %v3149
          %v3155 = vadd.f32 %v3132, %v3149
          %v3156 = vadd.f32 %v3133, %v3149
          %v3157 = vadd.f32 %v3134, %v3149
          %v3158 = vadd.f32 %v3135, %v3149
          %v3159 = vadd.f32 %v3136, %v3149
          %v3160 = vadd.f32 %v3137, %v3149
          %v3161 = vadd.f32 %v3138, %v3149
          %v3162 = vadd.f32 %v3139, %v3149
          %v3163 = vadd.f32 %v3140, %v3149
          %v3164 = vadd.f32 %v3141, %v3149
          %v3165 = vadd.f32 %v3142, %v3149
          %v3166 = vadd.f32 %v3143, %v3149
          %3167 = vst [vmem:[%s485] sm:$0xff] %v3151
          %3168 = vst [vmem:[%s485 + $0x8] sm:$0xff] %v3152
          %3169 = vst [vmem:[%s485 + $0x10] sm:$0xff] %v3153
          %3170 = vst [vmem:[%s485 + $0x18] sm:$0xff] %v3154
          %3171 = vst [vmem:[%s485 + $0x20] sm:$0xff] %v3155
          %3172 = vst [vmem:[%s485 + $0x28] sm:$0xff] %v3156
          %3173 = vst [vmem:[%s485 + $0x30] sm:$0xff] %v3157
          %3174 = vst [vmem:[%s485 + $0x38] sm:$0xff] %v3158
          %3175 = vst [vmem:[%s485 + $0x40] sm:$0xff] %v3159
          %3176 = vst [vmem:[%s485 + $0x48] sm:$0xff] %v3160
          %3177 = vst [vmem:[%s485 + $0x50] sm:$0xff] %v3161
          %3178 = vst [vmem:[%s485 + $0x58] sm:$0xff] %v3162
          %3179 = vst [vmem:[%s485 + $0x60] sm:$0xff] %v3163
          %3180 = vst [vmem:[%s485 + $0x68] sm:$0xff] %v3164
          %3181 = vst [vmem:[%s485 + $0x70] sm:$0xff] %v3165
          %3182 = vst [vmem:[%s485 + $0x78] sm:$0xff] %v3166
        $region63: #{_lambda_.15} parent=50 // pred_fallthru
          _
        %s3183 = smul.u32 16, %s18
        %p3184 = scmp.lt.s32.totalorder %s3183, 15
        %s3185 = scalar_select %p3184, %s3183, 15
        %s3186 = smul.addr %s3185, 8
        %s3187 = scalar_lea.vmem %s3, %s3186
        // Predicated region
        $region64: #{_lambda_.15} parent=50 // pred_check
          %p3188 = pneg %p119
        $region65: #{_lambda_.15} parent=50 // pred_check_branch
          %3190 = sbr.rel (%p3188) target = $region67
        $region66: #{_lambda_.15} parent=50 // pred_region
          %s3191 = smul.u32 16, %s18
        $region67: #{_lambda_.15} parent=50 // pred_fallthru
          _
        // Predicated region
        $region68: #{_lambda_.15} parent=50 // pred_check
          %p3192 = pneg %p119
        $region69: #{_lambda_.15} parent=50 // pred_check_branch
          %3194 = sbr.rel (%p3192) target = $region71
        $region70: #{_lambda_.15} parent=50 // pred_region
          %s3195 = smul.u32 16, %s18
          %p3196 = scmp.lt.s32.totalorder %s3195, 15
          %s3197 = scalar_select %p3196, %s3195, 15
          %s3198 = smul.addr %s3197, 8
          %s3199 = scalar_lea.vmem %s3, %s3198
        $region71: #{_lambda_.15} parent=50 // pred_fallthru
          _
      $region51: #{_lambda_.15} parent=5 // pred_fallthru
        _
      %p3200 = scmp.le.s32.totalorder 2, %s9
      // Predicated region
      $region72: #{_lambda_.15} parent=5 // pred_check
        %p3201 = pneg %p3200
      $region73: #{_lambda_.15} parent=5 // pred_check_branch
        %3203 = sbr.rel (%p3201) target = $region75
      $region74: #{_lambda_.15} parent=5 // pred_region
        %s3204 = ssub.s32 %s9, 2
      $region75: #{_lambda_.15} parent=5 // pred_fallthru
        _
    $region6: #{_lambda_.15} parent=1 // loop_footer
      %s13 = sadd.s32 1, %s9
    $region7: #{_lambda_.15} parent=1 // loop_footer_branch
      %8 = sbr.rel target = $region3
    $region8: #{_lambda_.15} parent=1 // loop_exit
      _

</llo_original>
